<compile_context>
chip_gen: v7x
topology: tpu7x:2x2x1
jax: 0.10.0
libtpu: 0.0.40
codegen_flags: <defaults>
</compile_context>

<pallas_src>
import functools

import jax
import jax.numpy as jnp
from jax.experimental import pallas as pl
from jax.experimental.pallas import tpu as pltpu


# --------------------------------------------------------------------------
# small helpers
# --------------------------------------------------------------------------
def _round_up(x, m):
    return ((x + m - 1) // m) * m


def _pad2(x, rows, cols):
    return jnp.pad(x, ((0, rows - x.shape[0]), (0, cols - x.shape[1])))


# --------------------------------------------------------------------------
# Pallas kernels
# --------------------------------------------------------------------------
def _mm_epilogue(acc, s, t, r, activation):
    y = acc * s + t
    if r is not None:
        y = y + r
    if activation == "relu":
        y = jnp.maximum(y, 0.0)
    elif activation == "sigmoid":
        y = jax.nn.sigmoid(y)
    return y


def _fused_matmul_kernel(a_ref, b_ref, s_ref, t_ref, o_ref, acc_ref, *, activation):
    @pl.when(pl.program_id(2) == 0)
    def _init():
        acc_ref[...] = jnp.zeros_like(acc_ref)

    acc_ref[...] += jnp.dot(a_ref[...], b_ref[...],
                            preferred_element_type=jnp.float32)

    @pl.when(pl.program_id(2) == pl.num_programs(2) - 1)
    def _done():
        o_ref[...] = _mm_epilogue(acc_ref[...], s_ref[...], t_ref[...],
                                  None, activation).astype(o_ref.dtype)


def _fused_matmul_res_kernel(a_ref, b_ref, s_ref, t_ref, r_ref, o_ref, acc_ref,
                             *, activation):
    @pl.when(pl.program_id(2) == 0)
    def _init():
        acc_ref[...] = jnp.zeros_like(acc_ref)

    acc_ref[...] += jnp.dot(a_ref[...], b_ref[...],
                            preferred_element_type=jnp.float32)

    @pl.when(pl.program_id(2) == pl.num_programs(2) - 1)
    def _done():
        o_ref[...] = _mm_epilogue(acc_ref[...], s_ref[...], t_ref[...],
                                  r_ref[...], activation).astype(o_ref.dtype)


def _window_max_kernel(x_ref, o_ref):
    # x: [kh*kw, tm, C] -> max over window axis
    o_ref[...] = jnp.max(x_ref[...], axis=0)


def _gap_kernel(x_ref, o_ref, acc_ref, *, inv_hw):
    # grid axis = spatial tiles; output-resident sum accumulator.
    @pl.when(pl.program_id(0) == 0)
    def _init():
        acc_ref[...] = jnp.zeros_like(acc_ref)

    acc_ref[...] += jnp.sum(x_ref[...], axis=1)

    @pl.when(pl.program_id(0) == pl.num_programs(0) - 1)
    def _done():
        o_ref[...] = (acc_ref[...] * inv_hw).astype(o_ref.dtype)


# --------------------------------------------------------------------------
# Pallas wrappers
# --------------------------------------------------------------------------
def fused_matmul(a, b, scale, shift, activation="none", residual=None):
    """act((a @ b) * scale + shift [+ residual]).

    a:[M,K] b:[K,N] scale/shift:[N] residual:[M,N] or None.
    A/B are fed to the MXU in bf16; accumulation and epilogue in f32.
    All dims are zero-padded to tile multiples (lane-dense output tiles).
    """
    M, K = a.shape
    K2, N = b.shape
    assert K == K2

    tm = 256 if M >= 256 else 128
    tn = 256 if N >= 256 else 128
    tk = 256 if K >= 256 else 128
    Mp, Kp, Np = _round_up(M, tm), _round_up(K, tk), _round_up(N, tn)

    a_p = _pad2(a.astype(jnp.float32), Mp, Kp).astype(jnp.bfloat16)
    b_p = _pad2(b.astype(jnp.float32), Kp, Np).astype(jnp.bfloat16)
    s_p = _pad2(scale.reshape(1, N).astype(jnp.float32), 1, Np)
    t_p = _pad2(shift.reshape(1, N).astype(jnp.float32), 1, Np)

    in_specs = [
        pl.BlockSpec((tm, tk), lambda i, j, k: (i, k)),
        pl.BlockSpec((tk, tn), lambda i, j, k: (k, j)),
        pl.BlockSpec((1, tn), lambda i, j, k: (0, j)),
        pl.BlockSpec((1, tn), lambda i, j, k: (0, j)),
    ]
    inputs = [a_p, b_p, s_p, t_p]
    if residual is not None:
        r_p = _pad2(residual.astype(jnp.float32), Mp, Np)
        in_specs.append(pl.BlockSpec((tm, tn), lambda i, j, k: (i, j)))
        inputs.append(r_p)
        kernel = functools.partial(_fused_matmul_res_kernel, activation=activation)
    else:
        kernel = functools.partial(_fused_matmul_kernel, activation=activation)

    out = pl.pallas_call(
        kernel,
        out_shape=jax.ShapeDtypeStruct((Mp, Np), jnp.float32),
        grid=(Mp // tm, Np // tn, Kp // tk),
        in_specs=in_specs,
        out_specs=pl.BlockSpec((tm, tn), lambda i, j, k: (i, j)),
        scratch_shapes=[pltpu.VMEM((tm, tn), jnp.float32)],
        compiler_params=pltpu.CompilerParams(
            dimension_semantics=("parallel", "parallel", "arbitrary"),
            vmem_limit_bytes=32 * 1024 * 1024),
    )(*inputs)
    return out[:M, :N]


def conv_bn_act(x, p, *, stride, padding, activation):
    """Conv2d (no bias) + folded BatchNorm + activation via fused matmul.

    1x1 convs skip im2col entirely; kxk convs build an im2col matrix in JAX
    glue and run the same tiled Pallas matmul.
    """
    N, H, W, C = x.shape
    kh, kw, _, cout = p["w"].shape
    if kh == 1 and kw == 1:
        xs = x[:, ::stride, ::stride, :] if stride > 1 else x
        Ho, Wo = xs.shape[1], xs.shape[2]
        a = xs.reshape(N * Ho * Wo, C)
    else:
        Ho = (H + 2 * padding - kh) // stride + 1
        Wo = (W + 2 * padding - kw) // stride + 1
        xp = jnp.pad(x, ((0, 0), (padding, padding), (padding, padding), (0, 0)))
        patches = [xp[:, i:i + stride * Ho:stride, j:j + stride * Wo:stride, :]
                   for i in range(kh) for j in range(kw)]
        a = jnp.stack(patches, axis=3).reshape(N * Ho * Wo, kh * kw * C)
    b = p["w"].reshape(kh * kw * C, cout)
    y = fused_matmul(a, b, p["scale"], p["shift"], activation)
    return y.reshape(N, Ho, Wo, cout)


def maxpool_3x3_s2_p1(x):
    N, H, W, C = x.shape
    k, stride, padding = 3, 2, 1
    Ho = (H + 2 * padding - k) // stride + 1
    Wo = (W + 2 * padding - k) // stride + 1
    xp = jnp.pad(x, ((0, 0), (1, 1), (1, 1), (0, 0)), constant_values=-1e30)
    wins = [xp[:, i:i + stride * Ho:stride, j:j + stride * Wo:stride, :]
            for i in range(k) for j in range(k)]
    M = N * Ho * Wo
    stacked = jnp.stack(wins, axis=0).reshape(k * k, M, C)

    tm = 512 if M >= 512 else _round_up(M, 8)
    Mp = _round_up(M, tm)
    stacked = jnp.pad(stacked, ((0, 0), (0, Mp - M), (0, 0)))

    out = pl.pallas_call(
        _window_max_kernel,
        out_shape=jax.ShapeDtypeStruct((Mp, C), jnp.float32),
        grid=(Mp // tm,),
        in_specs=[pl.BlockSpec((k * k, tm, C), lambda m: (0, m, 0))],
        out_specs=pl.BlockSpec((tm, C), lambda m: (m, 0)),
        compiler_params=pltpu.CompilerParams(
            dimension_semantics=("parallel",)),
    )(stacked)
    return out[:M].reshape(N, Ho, Wo, C)


def global_avg_pool(x):
    N, H, W, C = x.shape
    HW = H * W
    x3 = x.reshape(N, HW, C)
    ts = 512 if HW >= 512 else _round_up(HW, 8)
    HWp = _round_up(HW, ts)
    x3 = jnp.pad(x3, ((0, 0), (0, HWp - HW), (0, 0)))
    return pl.pallas_call(
        functools.partial(_gap_kernel, inv_hw=1.0 / HW),
        out_shape=jax.ShapeDtypeStruct((N, C), jnp.float32),
        grid=(HWp // ts,),
        in_specs=[pl.BlockSpec((N, ts, C), lambda s: (0, s, 0))],
        out_specs=pl.BlockSpec((N, C), lambda s: (0, 0)),
        scratch_shapes=[pltpu.VMEM((N, C), jnp.float32)],
        compiler_params=pltpu.CompilerParams(
            dimension_semantics=("arbitrary",)),
    )(x3)


# --------------------------------------------------------------------------
# Parameter construction (deterministic, synthetic)
# --------------------------------------------------------------------------
def build_params(key, in_ch=3, widths=(8, 16, 32, 64), blocks=(1, 1, 1, 1),
                 expansion=4, num_classes=10):
    keys = iter(jax.random.split(key, 256))

    def nxt():
        return next(keys)

    def conv_bn_params(cin, cout, kh, kw):
        w = jax.random.normal(nxt(), (kh, kw, cin, cout), jnp.float32) \
            * jnp.sqrt(2.0 / (kh * kw * cin))
        gamma = 1.0 + 0.1 * jax.random.normal(nxt(), (cout,), jnp.float32)
        beta = 0.05 * jax.random.normal(nxt(), (cout,), jnp.float32)
        mean = 0.05 * jax.random.normal(nxt(), (cout,), jnp.float32)
        var = 1.0 + 0.1 * jax.random.uniform(nxt(), (cout,), jnp.float32)
        scale = gamma / jnp.sqrt(var + 1e-5)      # eval-mode BN folded
        shift = beta - mean * scale
        return {"w": w, "scale": scale, "shift": shift}

    def linear_params(cin, cout):
        w = jax.random.normal(nxt(), (cin, cout), jnp.float32) * jnp.sqrt(2.0 / cin)
        b = 0.01 * jax.random.normal(nxt(), (cout,), jnp.float32)
        return {"w": w, "b": b}

    params = {"conv1": conv_bn_params(in_ch, widths[0], 7, 7)}
    cin = widths[0]
    for li, (w, nb) in enumerate(zip(widths, blocks)):
        layer = []
        for bi in range(nb):
            stride = 2 if (li > 0 and bi == 0) else 1
            cout = w * expansion
            blk = {
                "stride": stride,
                "conv1": conv_bn_params(cin, w, 1, 1),
                "conv2": conv_bn_params(w, w, 3, 3),
                "conv3": conv_bn_params(w, cout, 1, 1),
            }
            if stride != 1 or cin != cout:
                blk["downsample"] = conv_bn_params(cin, cout, 1, 1)
            layer.append(blk)
            cin = cout
        params[f"layer{li + 1}"] = layer
    feat_dim = cin  # = widths[-1] * expansion
    # classifier = 'mlp-1'  -> MLPHead(feat_dim, sf=1, num_classes)
    params["classifier"] = {"fc1": linear_params(feat_dim, feat_dim),
                            "fc2": linear_params(feat_dim, num_classes)}
    # proba_head = MLPHead(feat_dim, sf=1, 3) + Sigmoid
    params["proba"] = {"fc1": linear_params(feat_dim, feat_dim),
                       "fc2": linear_params(feat_dim, 3)}
    params["feat_dim"] = feat_dim
    return params


# --------------------------------------------------------------------------
# Forward pass
# --------------------------------------------------------------------------
def bottleneck(x, p):
    stride = p["stride"]
    if "downsample" in p:
        identity = conv_bn_act(x, p["downsample"], stride=stride, padding=0,
                               activation="none")
    else:
        identity = x
    out = conv_bn_act(x, p["conv1"], stride=1, padding=0, activation="relu")
    out = conv_bn_act(out, p["conv2"], stride=stride, padding=1, activation="relu")
    # conv3 (1x1) + BN + residual add + ReLU fused into a single Pallas matmul.
    N, Ho, Wo, Cm = out.shape
    cout = p["conv3"]["w"].shape[-1]
    a = out.reshape(N * Ho * Wo, Cm)
    b = p["conv3"]["w"].reshape(Cm, cout)
    r = identity.reshape(N * Ho * Wo, cout)
    y = fused_matmul(a, b, p["conv3"]["scale"], p["conv3"]["shift"],
                     activation="relu", residual=r)
    return y.reshape(N, Ho, Wo, cout)


def mlp_head(feat, p, final_activation):
    n1 = p["fc1"]["w"].shape[1]
    h = fused_matmul(feat, p["fc1"]["w"], jnp.ones((n1,), jnp.float32),
                     p["fc1"]["b"], "relu")
    n2 = p["fc2"]["w"].shape[1]
    return fused_matmul(h, p["fc2"]["w"], jnp.ones((n2,), jnp.float32),
                        p["fc2"]["b"], final_activation)


def resnet_forward(params, x_nchw):
    n = x_nchw.shape[0]
    x = jnp.transpose(x_nchw, (0, 2, 3, 1)).astype(jnp.float32)  # -> NHWC
    # backbone: conv1 + bn1 + relu + maxpool + layer1..layer4
    x = conv_bn_act(x, params["conv1"], stride=2, padding=3, activation="relu")
    x = maxpool_3x3_s2_p1(x)
    for name in ("layer1", "layer2", "layer3", "layer4"):
        for blk in params[name]:
            x = bottleneck(x, blk)
    # neck: AdaptiveAvgPool2d((1,1)) + view(N, -1)
    feat = global_avg_pool(x).reshape(n, -1)
    logits = mlp_head(feat, params["classifier"], "none")
    prob = mlp_head(feat, params["proba"], "sigmoid")
    return {"logits": logits, "prob": prob}


# --------------------------------------------------------------------------
if __name__ == "__main__":
    key = jax.random.PRNGKey(0)
    pkey, xkey = jax.random.split(key)
    params = build_params(pkey, num_classes=10)

    # small NCHW input, as PyTorch would receive
    x = jax.random.normal(xkey, (2, 3, 32, 32), jnp.float32)

    fwd = jax.jit(lambda inp: resnet_forward(params, inp))
    out = fwd(x)
    jax.block_until_ready(out)

    assert out["logits"].shape == (2, 10), out["logits"].shape
    assert out["prob"].shape == (2, 3), out["prob"].shape
    assert bool(jnp.all(jnp.isfinite(out["logits"])))
    assert bool(jnp.all((out["prob"] >= 0.0) & (out["prob"] <= 1.0)))

    print("KERNEL_OK")
</pallas_src>

<mosaic_0001>
module attributes {stable_mosaic.version = 11 : i64} {
  func.func @_fused_matmul_kernel(%arg0: i32, %arg1: i32, %arg2: i32, %arg3: memref<256x128xbf16, #tpu.memory_space<vmem>>, %arg4: memref<128x128xbf16, #tpu.memory_space<vmem>>, %arg5: memref<1x128xf32, #tpu.memory_space<vmem>>, %arg6: memref<1x128xf32, #tpu.memory_space<vmem>>, %arg7: memref<256x128xf32, #tpu.memory_space<vmem>>, %arg8: memref<256x128xf32, #tpu.memory_space<vmem>>) attributes {dimension_semantics = [#tpu.dimension_semantics<parallel>, #tpu.dimension_semantics<parallel>, #tpu.dimension_semantics<arbitrary>], iteration_bounds = array<i64: 2, 1, 2>, scalar_prefetch = 0 : i64, scratch_operands = 1 : i64, tpu.core_type = #tpu.core_type<tc>, window_params = [{transform_indices = @transform_0, window_bounds = array<i64: 256, 128>}, {transform_indices = @transform_1, window_bounds = array<i64: 128, 128>}, {transform_indices = @transform_2, window_bounds = array<i64: 1, 128>}, {transform_indices = @transform_3, window_bounds = array<i64: 1, 128>}, {transform_indices = @transform_4, window_bounds = array<i64: 256, 128>}]} {
    %c0_i32 = arith.constant 0 : i32
    %0 = arith.cmpi eq, %arg2, %c0_i32 : i32
    %1 = arith.extui %0 : i1 to i32
    %c0_i32_0 = arith.constant 0 : i32
    %2 = arith.cmpi ne, %1, %c0_i32_0 : i32
    scf.if %2 {
      %cst_9 = arith.constant 0.000000e+00 : f32
      %12 = vector.broadcast %cst_9 : f32 to vector<256x128xf32>
      %c0_10 = arith.constant 0 : index
      %c0_11 = arith.constant 0 : index
      %13 = vector.load %arg8[%c0_10, %c0_11] : memref<256x128xf32, #tpu.memory_space<vmem>>, vector<256x128xf32>
      tpu.vector_store %arg8[%c0_10, %c0_11], %12 {strides = array<i32>} : memref<256x128xf32, #tpu.memory_space<vmem>>, vector<256x128xf32>,
    } else {
    }
    %c0 = arith.constant 0 : index
    %c0_1 = arith.constant 0 : index
    %3 = vector.load %arg8[%c0, %c0_1] : memref<256x128xf32, #tpu.memory_space<vmem>>, vector<256x128xf32>
    %c0_2 = arith.constant 0 : index
    %c0_3 = arith.constant 0 : index
    %4 = vector.load %arg3[%c0_2, %c0_3] : memref<256x128xbf16, #tpu.memory_space<vmem>>, vector<256x128xbf16>
    %c0_4 = arith.constant 0 : index
    %c0_5 = arith.constant 0 : index
    %5 = vector.load %arg4[%c0_4, %c0_5] : memref<128x128xbf16, #tpu.memory_space<vmem>>, vector<128x128xbf16>
    %cst = arith.constant dense<0.000000e+00> : vector<256x128xf32>
    %6 = tpu.matmul %4, %5, %cst {dimension_numbers = #tpu.dot_dimension_numbers<[1], [0], [0], [1], [0, 0, 1, 1], [], []>} : vector<256x128xbf16>, vector<128x128xbf16>, vector<256x128xf32> -> vector<256x128xf32>
    %7 = arith.addf %3, %6 : vector<256x128xf32>
    %c0_6 = arith.constant 0 : index
    %c0_7 = arith.constant 0 : index
    %8 = vector.load %arg8[%c0_6, %c0_7] : memref<256x128xf32, #tpu.memory_space<vmem>>, vector<256x128xf32>
    tpu.vector_store %arg8[%c0_6, %c0_7], %7 {strides = array<i32>} : memref<256x128xf32, #tpu.memory_space<vmem>>, vector<256x128xf32>,
    %c1_i32 = arith.constant 1 : i32
    %9 = arith.cmpi eq, %arg2, %c1_i32 : i32
    %10 = arith.extui %9 : i1 to i32
    %c0_i32_8 = arith.constant 0 : i32
    %11 = arith.cmpi ne, %10, %c0_i32_8 : i32
    scf.if %11 {
      %c0_9 = arith.constant 0 : index
      %c0_10 = arith.constant 0 : index
      %12 = vector.load %arg8[%c0_9, %c0_10] : memref<256x128xf32, #tpu.memory_space<vmem>>, vector<256x128xf32>
      %c0_11 = arith.constant 0 : index
      %c0_12 = arith.constant 0 : index
      %13 = vector.load %arg5[%c0_11, %c0_12] : memref<1x128xf32, #tpu.memory_space<vmem>>, vector<1x128xf32>
      %c0_13 = arith.constant 0 : index
      %c0_14 = arith.constant 0 : index
      %14 = vector.load %arg6[%c0_13, %c0_14] : memref<1x128xf32, #tpu.memory_space<vmem>>, vector<1x128xf32>
      %15 = vector.broadcast %13 : vector<1x128xf32> to vector<256x128xf32>
      %16 = arith.mulf %12, %15 : vector<256x128xf32>
      %17 = vector.broadcast %14 : vector<1x128xf32> to vector<256x128xf32>
      %18 = arith.addf %16, %17 : vector<256x128xf32>
      %cst_15 = arith.constant 0.000000e+00 : f32
      %19 = vector.broadcast %cst_15 : f32 to vector<256x128xf32>
      %20 = arith.maximumf %18, %19 : vector<256x128xf32>
      %c0_16 = arith.constant 0 : index
      %c0_17 = arith.constant 0 : index
      %21 = vector.load %arg7[%c0_16, %c0_17] : memref<256x128xf32, #tpu.memory_space<vmem>>, vector<256x128xf32>
      tpu.vector_store %arg7[%c0_16, %c0_17], %20 {strides = array<i32>} : memref<256x128xf32, #tpu.memory_space<vmem>>, vector<256x128xf32>,
    } else {
    }
    return
  }
  func.func @transform_0(%arg0: i32, %arg1: i32, %arg2: i32) -> (i32, i32) {
    %c0_i32 = arith.constant 0 : i32
    return %arg0, %arg2 : i32, i32
  }
  func.func @transform_1(%arg0: i32, %arg1: i32, %arg2: i32) -> (i32, i32) {
    %c0_i32 = arith.constant 0 : i32
    return %arg2, %arg1 : i32, i32
  }
  func.func @transform_2(%arg0: i32, %arg1: i32, %arg2: i32) -> (i32, i32) {
    %c0_i32 = arith.constant 0 : i32
    %c0_i32_0 = arith.constant 0 : i32
    return %c0_i32, %arg1 : i32, i32
  }
  func.func @transform_3(%arg0: i32, %arg1: i32, %arg2: i32) -> (i32, i32) {
    %c0_i32 = arith.constant 0 : i32
    %c0_i32_0 = arith.constant 0 : i32
    return %c0_i32, %arg1 : i32, i32
  }
  func.func @transform_4(%arg0: i32, %arg1: i32, %arg2: i32) -> (i32, i32) {
    %c0_i32 = arith.constant 0 : i32
    return %arg0, %arg1 : i32, i32
  }
}

module attributes {stable_mosaic.version = 11 : i64} {
  func.func @_window_max_kernel(%arg0: i32, %arg1: memref<9x128x8xf32, #tpu.memory_space<vmem>>, %arg2: memref<128x8xf32, #tpu.memory_space<vmem>>) attributes {dimension_semantics = [#tpu.dimension_semantics<parallel>], iteration_bounds = array<i64: 1>, scalar_prefetch = 0 : i64, scratch_operands = 0 : i64, tpu.core_type = #tpu.core_type<tc>, window_params = [{transform_indices = @transform_0, window_bounds = array<i64: 9, 128, 8>}, {transform_indices = @transform_1, window_bounds = array<i64: 128, 8>}]} {
    %c0 = arith.constant 0 : index
    %c0_0 = arith.constant 0 : index
    %c0_1 = arith.constant 0 : index
    %0 = vector.load %arg1[%c0, %c0_0, %c0_1] : memref<9x128x8xf32, #tpu.memory_space<vmem>>, vector<9x128x8xf32>
    %cst = arith.constant dense<0xFF800000> : vector<128x8xf32>
    %1 = vector.multi_reduction <maximumf>, %0, %cst [0] : vector<9x128x8xf32> to vector<128x8xf32>
    %c0_2 = arith.constant 0 : index
    %c0_3 = arith.constant 0 : index
    %2 = vector.load %arg2[%c0_2, %c0_3] : memref<128x8xf32, #tpu.memory_space<vmem>>, vector<128x8xf32>
    tpu.vector_store %arg2[%c0_2, %c0_3], %1 {strides = array<i32>} : memref<128x8xf32, #tpu.memory_space<vmem>>, vector<128x8xf32>,
    return
  }
  func.func @transform_0(%arg0: i32) -> (i32, i32, i32) {
    %c0_i32 = arith.constant 0 : i32
    %c0_i32_0 = arith.constant 0 : i32
    %c0_i32_1 = arith.constant 0 : i32
    return %c0_i32, %arg0, %c0_i32_0 : i32, i32, i32
  }
  func.func @transform_1(%arg0: i32) -> (i32, i32) {
    %c0_i32 = arith.constant 0 : i32
    %c0_i32_0 = arith.constant 0 : i32
    return %arg0, %c0_i32 : i32, i32
  }
}

module attributes {stable_mosaic.version = 11 : i64} {
  func.func @_fused_matmul_kernel(%arg0: i32, %arg1: i32, %arg2: i32, %arg3: memref<128x128xbf16, #tpu.memory_space<vmem>>, %arg4: memref<128x128xbf16, #tpu.memory_space<vmem>>, %arg5: memref<1x128xf32, #tpu.memory_space<vmem>>, %arg6: memref<1x128xf32, #tpu.memory_space<vmem>>, %arg7: memref<128x128xf32, #tpu.memory_space<vmem>>, %arg8: memref<128x128xf32, #tpu.memory_space<vmem>>) attributes {dimension_semantics = [#tpu.dimension_semantics<parallel>, #tpu.dimension_semantics<parallel>, #tpu.dimension_semantics<arbitrary>], iteration_bounds = array<i64: 1, 1, 1>, scalar_prefetch = 0 : i64, scratch_operands = 1 : i64, tpu.core_type = #tpu.core_type<tc>, window_params = [{transform_indices = @transform_0, window_bounds = array<i64: 128, 128>}, {transform_indices = @transform_1, window_bounds = array<i64: 128, 128>}, {transform_indices = @transform_2, window_bounds = array<i64: 1, 128>}, {transform_indices = @transform_3, window_bounds = array<i64: 1, 128>}, {transform_indices = @transform_4, window_bounds = array<i64: 128, 128>}]} {
    %c0_i32 = arith.constant 0 : i32
    %0 = arith.cmpi eq, %arg2, %c0_i32 : i32
    %1 = arith.extui %0 : i1 to i32
    %c0_i32_0 = arith.constant 0 : i32
    %2 = arith.cmpi ne, %1, %c0_i32_0 : i32
    scf.if %2 {
      %cst_10 = arith.constant 0.000000e+00 : f32
      %12 = vector.broadcast %cst_10 : f32 to vector<128x128xf32>
      %c0_11 = arith.constant 0 : index
      %c0_12 = arith.constant 0 : index
      %13 = vector.load %arg8[%c0_11, %c0_12] : memref<128x128xf32, #tpu.memory_space<vmem>>, vector<128x128xf32>
      tpu.vector_store %arg8[%c0_11, %c0_12], %12 {strides = array<i32>} : memref<128x128xf32, #tpu.memory_space<vmem>>, vector<128x128xf32>,
    } else {
    }
    %c0 = arith.constant 0 : index
    %c0_1 = arith.constant 0 : index
    %3 = vector.load %arg8[%c0, %c0_1] : memref<128x128xf32, #tpu.memory_space<vmem>>, vector<128x128xf32>
    %c0_2 = arith.constant 0 : index
    %c0_3 = arith.constant 0 : index
    %4 = vector.load %arg3[%c0_2, %c0_3] : memref<128x128xbf16, #tpu.memory_space<vmem>>, vector<128x128xbf16>
    %c0_4 = arith.constant 0 : index
    %c0_5 = arith.constant 0 : index
    %5 = vector.load %arg4[%c0_4, %c0_5] : memref<128x128xbf16, #tpu.memory_space<vmem>>, vector<128x128xbf16>
    %cst = arith.constant dense<0.000000e+00> : vector<128x128xf32>
    %6 = tpu.matmul %4, %5, %cst {dimension_numbers = #tpu.dot_dimension_numbers<[1], [0], [0], [1], [0, 0, 1, 1], [], []>} : vector<128x128xbf16>, vector<128x128xbf16>, vector<128x128xf32> -> vector<128x128xf32>
    %7 = arith.addf %3, %6 : vector<128x128xf32>
    %c0_6 = arith.constant 0 : index
    %c0_7 = arith.constant 0 : index
    %8 = vector.load %arg8[%c0_6, %c0_7] : memref<128x128xf32, #tpu.memory_space<vmem>>, vector<128x128xf32>
    tpu.vector_store %arg8[%c0_6, %c0_7], %7 {strides = array<i32>} : memref<128x128xf32, #tpu.memory_space<vmem>>, vector<128x128xf32>,
    %c0_i32_8 = arith.constant 0 : i32
    %9 = arith.cmpi eq, %arg2, %c0_i32_8 : i32
    %10 = arith.extui %9 : i1 to i32
    %c0_i32_9 = arith.constant 0 : i32
    %11 = arith.cmpi ne, %10, %c0_i32_9 : i32
    scf.if %11 {
      %c0_10 = arith.constant 0 : index
      %c0_11 = arith.constant 0 : index
      %12 = vector.load %arg8[%c0_10, %c0_11] : memref<128x128xf32, #tpu.memory_space<vmem>>, vector<128x128xf32>
      %c0_12 = arith.constant 0 : index
      %c0_13 = arith.constant 0 : index
      %13 = vector.load %arg5[%c0_12, %c0_13] : memref<1x128xf32, #tpu.memory_space<vmem>>, vector<1x128xf32>
      %c0_14 = arith.constant 0 : index
      %c0_15 = arith.constant 0 : index
      %14 = vector.load %arg6[%c0_14, %c0_15] : memref<1x128xf32, #tpu.memory_space<vmem>>, vector<1x128xf32>
      %15 = vector.broadcast %13 : vector<1x128xf32> to vector<128x128xf32>
      %16 = arith.mulf %12, %15 : vector<128x128xf32>
      %17 = vector.broadcast %14 : vector<1x128xf32> to vector<128x128xf32>
      %18 = arith.addf %16, %17 : vector<128x128xf32>
      %cst_16 = arith.constant 0.000000e+00 : f32
      %19 = vector.broadcast %cst_16 : f32 to vector<128x128xf32>
      %20 = arith.maximumf %18, %19 : vector<128x128xf32>
      %c0_17 = arith.constant 0 : index
      %c0_18 = arith.constant 0 : index
      %21 = vector.load %arg7[%c0_17, %c0_18] : memref<128x128xf32, #tpu.memory_space<vmem>>, vector<128x128xf32>
      tpu.vector_store %arg7[%c0_17, %c0_18], %20 {strides = array<i32>} : memref<128x128xf32, #tpu.memory_space<vmem>>, vector<128x128xf32>,
    } else {
    }
    return
  }
  func.func @transform_0(%arg0: i32, %arg1: i32, %arg2: i32) -> (i32, i32) {
    %c0_i32 = arith.constant 0 : i32
    return %arg0, %arg2 : i32, i32
  }
  func.func @transform_1(%arg0: i32, %arg1: i32, %arg2: i32) -> (i32, i32) {
    %c0_i32 = arith.constant 0 : i32
    return %arg2, %arg1 : i32, i32
  }
  func.func @transform_2(%arg0: i32, %arg1: i32, %arg2: i32) -> (i32, i32) {
    %c0_i32 = arith.constant 0 : i32
    %c0_i32_0 = arith.constant 0 : i32
    return %c0_i32, %arg1 : i32, i32
  }
  func.func @transform_3(%arg0: i32, %arg1: i32, %arg2: i32) -> (i32, i32) {
    %c0_i32 = arith.constant 0 : i32
    %c0_i32_0 = arith.constant 0 : i32
    return %c0_i32, %arg1 : i32, i32
  }
  func.func @transform_4(%arg0: i32, %arg1: i32, %arg2: i32) -> (i32, i32) {
    %c0_i32 = arith.constant 0 : i32
    return %arg0, %arg1 : i32, i32
  }
}

module attributes {stable_mosaic.version = 11 : i64} {
  func.func @_fused_matmul_kernel(%arg0: i32, %arg1: i32, %arg2: i32, %arg3: memref<128x128xbf16, #tpu.memory_space<vmem>>, %arg4: memref<128x128xbf16, #tpu.memory_space<vmem>>, %arg5: memref<1x128xf32, #tpu.memory_space<vmem>>, %arg6: memref<1x128xf32, #tpu.memory_space<vmem>>, %arg7: memref<128x128xf32, #tpu.memory_space<vmem>>, %arg8: memref<128x128xf32, #tpu.memory_space<vmem>>) attributes {dimension_semantics = [#tpu.dimension_semantics<parallel>, #tpu.dimension_semantics<parallel>, #tpu.dimension_semantics<arbitrary>], iteration_bounds = array<i64: 1, 1, 1>, scalar_prefetch = 0 : i64, scratch_operands = 1 : i64, tpu.core_type = #tpu.core_type<tc>, window_params = [{transform_indices = @transform_0, window_bounds = array<i64: 128, 128>}, {transform_indices = @transform_1, window_bounds = array<i64: 128, 128>}, {transform_indices = @transform_2, window_bounds = array<i64: 1, 128>}, {transform_indices = @transform_3, window_bounds = array<i64: 1, 128>}, {transform_indices = @transform_4, window_bounds = array<i64: 128, 128>}]} {
    %c0_i32 = arith.constant 0 : i32
    %0 = arith.cmpi eq, %arg2, %c0_i32 : i32
    %1 = arith.extui %0 : i1 to i32
    %c0_i32_0 = arith.constant 0 : i32
    %2 = arith.cmpi ne, %1, %c0_i32_0 : i32
    scf.if %2 {
      %cst_10 = arith.constant 0.000000e+00 : f32
      %12 = vector.broadcast %cst_10 : f32 to vector<128x128xf32>
      %c0_11 = arith.constant 0 : index
      %c0_12 = arith.constant 0 : index
      %13 = vector.load %arg8[%c0_11, %c0_12] : memref<128x128xf32, #tpu.memory_space<vmem>>, vector<128x128xf32>
      tpu.vector_store %arg8[%c0_11, %c0_12], %12 {strides = array<i32>} : memref<128x128xf32, #tpu.memory_space<vmem>>, vector<128x128xf32>,
    } else {
    }
    %c0 = arith.constant 0 : index
    %c0_1 = arith.constant 0 : index
    %3 = vector.load %arg8[%c0, %c0_1] : memref<128x128xf32, #tpu.memory_space<vmem>>, vector<128x128xf32>
    %c0_2 = arith.constant 0 : index
    %c0_3 = arith.constant 0 : index
    %4 = vector.load %arg3[%c0_2, %c0_3] : memref<128x128xbf16, #tpu.memory_space<vmem>>, vector<128x128xbf16>
    %c0_4 = arith.constant 0 : index
    %c0_5 = arith.constant 0 : index
    %5 = vector.load %arg4[%c0_4, %c0_5] : memref<128x128xbf16, #tpu.memory_space<vmem>>, vector<128x128xbf16>
    %cst = arith.constant dense<0.000000e+00> : vector<128x128xf32>
    %6 = tpu.matmul %4, %5, %cst {dimension_numbers = #tpu.dot_dimension_numbers<[1], [0], [0], [1], [0, 0, 1, 1], [], []>} : vector<128x128xbf16>, vector<128x128xbf16>, vector<128x128xf32> -> vector<128x128xf32>
    %7 = arith.addf %3, %6 : vector<128x128xf32>
    %c0_6 = arith.constant 0 : index
    %c0_7 = arith.constant 0 : index
    %8 = vector.load %arg8[%c0_6, %c0_7] : memref<128x128xf32, #tpu.memory_space<vmem>>, vector<128x128xf32>
    tpu.vector_store %arg8[%c0_6, %c0_7], %7 {strides = array<i32>} : memref<128x128xf32, #tpu.memory_space<vmem>>, vector<128x128xf32>,
    %c0_i32_8 = arith.constant 0 : i32
    %9 = arith.cmpi eq, %arg2, %c0_i32_8 : i32
    %10 = arith.extui %9 : i1 to i32
    %c0_i32_9 = arith.constant 0 : i32
    %11 = arith.cmpi ne, %10, %c0_i32_9 : i32
    scf.if %11 {
      %c0_10 = arith.constant 0 : index
      %c0_11 = arith.constant 0 : index
      %12 = vector.load %arg8[%c0_10, %c0_11] : memref<128x128xf32, #tpu.memory_space<vmem>>, vector<128x128xf32>
      %c0_12 = arith.constant 0 : index
      %c0_13 = arith.constant 0 : index
      %13 = vector.load %arg5[%c0_12, %c0_13] : memref<1x128xf32, #tpu.memory_space<vmem>>, vector<1x128xf32>
      %c0_14 = arith.constant 0 : index
      %c0_15 = arith.constant 0 : index
      %14 = vector.load %arg6[%c0_14, %c0_15] : memref<1x128xf32, #tpu.memory_space<vmem>>, vector<1x128xf32>
      %15 = vector.broadcast %13 : vector<1x128xf32> to vector<128x128xf32>
      %16 = arith.mulf %12, %15 : vector<128x128xf32>
      %17 = vector.broadcast %14 : vector<1x128xf32> to vector<128x128xf32>
      %18 = arith.addf %16, %17 : vector<128x128xf32>
      %c0_16 = arith.constant 0 : index
      %c0_17 = arith.constant 0 : index
      %19 = vector.load %arg7[%c0_16, %c0_17] : memref<128x128xf32, #tpu.memory_space<vmem>>, vector<128x128xf32>
      tpu.vector_store %arg7[%c0_16, %c0_17], %18 {strides = array<i32>} : memref<128x128xf32, #tpu.memory_space<vmem>>, vector<128x128xf32>,
    } else {
    }
    return
  }
  func.func @transform_0(%arg0: i32, %arg1: i32, %arg2: i32) -> (i32, i32) {
    %c0_i32 = arith.constant 0 : i32
    return %arg0, %arg2 : i32, i32
  }
  func.func @transform_1(%arg0: i32, %arg1: i32, %arg2: i32) -> (i32, i32) {
    %c0_i32 = arith.constant 0 : i32
    return %arg2, %arg1 : i32, i32
  }
  func.func @transform_2(%arg0: i32, %arg1: i32, %arg2: i32) -> (i32, i32) {
    %c0_i32 = arith.constant 0 : i32
    %c0_i32_0 = arith.constant 0 : i32
    return %c0_i32, %arg1 : i32, i32
  }
  func.func @transform_3(%arg0: i32, %arg1: i32, %arg2: i32) -> (i32, i32) {
    %c0_i32 = arith.constant 0 : i32
    %c0_i32_0 = arith.constant 0 : i32
    return %c0_i32, %arg1 : i32, i32
  }
  func.func @transform_4(%arg0: i32, %arg1: i32, %arg2: i32) -> (i32, i32) {
    %c0_i32 = arith.constant 0 : i32
    return %arg0, %arg1 : i32, i32
  }
}

module attributes {stable_mosaic.version = 11 : i64} {
  func.func @_fused_matmul_res_kernel(%arg0: i32, %arg1: i32, %arg2: i32, %arg3: memref<128x128xbf16, #tpu.memory_space<vmem>>, %arg4: memref<128x128xbf16, #tpu.memory_space<vmem>>, %arg5: memref<1x128xf32, #tpu.memory_space<vmem>>, %arg6: memref<1x128xf32, #tpu.memory_space<vmem>>, %arg7: memref<128x128xf32, #tpu.memory_space<vmem>>, %arg8: memref<128x128xf32, #tpu.memory_space<vmem>>, %arg9: memref<128x128xf32, #tpu.memory_space<vmem>>) attributes {dimension_semantics = [#tpu.dimension_semantics<parallel>, #tpu.dimension_semantics<parallel>, #tpu.dimension_semantics<arbitrary>], iteration_bounds = array<i64: 1, 1, 1>, scalar_prefetch = 0 : i64, scratch_operands = 1 : i64, tpu.core_type = #tpu.core_type<tc>, window_params = [{transform_indices = @transform_0, window_bounds = array<i64: 128, 128>}, {transform_indices = @transform_1, window_bounds = array<i64: 128, 128>}, {transform_indices = @transform_2, window_bounds = array<i64: 1, 128>}, {transform_indices = @transform_3, window_bounds = array<i64: 1, 128>}, {transform_indices = @transform_4, window_bounds = array<i64: 128, 128>}, {transform_indices = @transform_5, window_bounds = array<i64: 128, 128>}]} {
    %c0_i32 = arith.constant 0 : i32
    %0 = arith.cmpi eq, %arg2, %c0_i32 : i32
    %1 = arith.extui %0 : i1 to i32
    %c0_i32_0 = arith.constant 0 : i32
    %2 = arith.cmpi ne, %1, %c0_i32_0 : i32
    scf.if %2 {
      %cst_10 = arith.constant 0.000000e+00 : f32
      %12 = vector.broadcast %cst_10 : f32 to vector<128x128xf32>
      %c0_11 = arith.constant 0 : index
      %c0_12 = arith.constant 0 : index
      %13 = vector.load %arg9[%c0_11, %c0_12] : memref<128x128xf32, #tpu.memory_space<vmem>>, vector<128x128xf32>
      tpu.vector_store %arg9[%c0_11, %c0_12], %12 {strides = array<i32>} : memref<128x128xf32, #tpu.memory_space<vmem>>, vector<128x128xf32>,
    } else {
    }
    %c0 = arith.constant 0 : index
    %c0_1 = arith.constant 0 : index
    %3 = vector.load %arg9[%c0, %c0_1] : memref<128x128xf32, #tpu.memory_space<vmem>>, vector<128x128xf32>
    %c0_2 = arith.constant 0 : index
    %c0_3 = arith.constant 0 : index
    %4 = vector.load %arg3[%c0_2, %c0_3] : memref<128x128xbf16, #tpu.memory_space<vmem>>, vector<128x128xbf16>
    %c0_4 = arith.constant 0 : index
    %c0_5 = arith.constant 0 : index
    %5 = vector.load %arg4[%c0_4, %c0_5] : memref<128x128xbf16, #tpu.memory_space<vmem>>, vector<128x128xbf16>
    %cst = arith.constant dense<0.000000e+00> : vector<128x128xf32>
    %6 = tpu.matmul %4, %5, %cst {dimension_numbers = #tpu.dot_dimension_numbers<[1], [0], [0], [1], [0, 0, 1, 1], [], []>} : vector<128x128xbf16>, vector<128x128xbf16>, vector<128x128xf32> -> vector<128x128xf32>
    %7 = arith.addf %3, %6 : vector<128x128xf32>
    %c0_6 = arith.constant 0 : index
    %c0_7 = arith.constant 0 : index
    %8 = vector.load %arg9[%c0_6, %c0_7] : memref<128x128xf32, #tpu.memory_space<vmem>>, vector<128x128xf32>
    tpu.vector_store %arg9[%c0_6, %c0_7], %7 {strides = array<i32>} : memref<128x128xf32, #tpu.memory_space<vmem>>, vector<128x128xf32>,
    %c0_i32_8 = arith.constant 0 : i32
    %9 = arith.cmpi eq, %arg2, %c0_i32_8 : i32
    %10 = arith.extui %9 : i1 to i32
    %c0_i32_9 = arith.constant 0 : i32
    %11 = arith.cmpi ne, %10, %c0_i32_9 : i32
    scf.if %11 {
      %c0_10 = arith.constant 0 : index
      %c0_11 = arith.constant 0 : index
      %12 = vector.load %arg9[%c0_10, %c0_11] : memref<128x128xf32, #tpu.memory_space<vmem>>, vector<128x128xf32>
      %c0_12 = arith.constant 0 : index
      %c0_13 = arith.constant 0 : index
      %13 = vector.load %arg5[%c0_12, %c0_13] : memref<1x128xf32, #tpu.memory_space<vmem>>, vector<1x128xf32>
      %c0_14 = arith.constant 0 : index
      %c0_15 = arith.constant 0 : index
      %14 = vector.load %arg6[%c0_14, %c0_15] : memref<1x128xf32, #tpu.memory_space<vmem>>, vector<1x128xf32>
      %c0_16 = arith.constant 0 : index
      %c0_17 = arith.constant 0 : index
      %15 = vector.load %arg7[%c0_16, %c0_17] : memref<128x128xf32, #tpu.memory_space<vmem>>, vector<128x128xf32>
      %16 = vector.broadcast %13 : vector<1x128xf32> to vector<128x128xf32>
      %17 = arith.mulf %12, %16 : vector<128x128xf32>
      %18 = vector.broadcast %14 : vector<1x128xf32> to vector<128x128xf32>
      %19 = arith.addf %17, %18 : vector<128x128xf32>
      %20 = arith.addf %19, %15 : vector<128x128xf32>
      %cst_18 = arith.constant 0.000000e+00 : f32
      %21 = vector.broadcast %cst_18 : f32 to vector<128x128xf32>
      %22 = arith.maximumf %20, %21 : vector<128x128xf32>
      %c0_19 = arith.constant 0 : index
      %c0_20 = arith.constant 0 : index
      %23 = vector.load %arg8[%c0_19, %c0_20] : memref<128x128xf32, #tpu.memory_space<vmem>>, vector<128x128xf32>
      tpu.vector_store %arg8[%c0_19, %c0_20], %22 {strides = array<i32>} : memref<128x128xf32, #tpu.memory_space<vmem>>, vector<128x128xf32>,
    } else {
    }
    return
  }
  func.func @transform_0(%arg0: i32, %arg1: i32, %arg2: i32) -> (i32, i32) {
    %c0_i32 = arith.constant 0 : i32
    return %arg0, %arg2 : i32, i32
  }
  func.func @transform_1(%arg0: i32, %arg1: i32, %arg2: i32) -> (i32, i32) {
    %c0_i32 = arith.constant 0 : i32
    return %arg2, %arg1 : i32, i32
  }
  func.func @transform_2(%arg0: i32, %arg1: i32, %arg2: i32) -> (i32, i32) {
    %c0_i32 = arith.constant 0 : i32
    %c0_i32_0 = arith.constant 0 : i32
    return %c0_i32, %arg1 : i32, i32
  }
  func.func @transform_3(%arg0: i32, %arg1: i32, %arg2: i32) -> (i32, i32) {
    %c0_i32 = arith.constant 0 : i32
    %c0_i32_0 = arith.constant 0 : i32
    return %c0_i32, %arg1 : i32, i32
  }
  func.func @transform_4(%arg0: i32, %arg1: i32, %arg2: i32) -> (i32, i32) {
    %c0_i32 = arith.constant 0 : i32
    return %arg0, %arg1 : i32, i32
  }
  func.func @transform_5(%arg0: i32, %arg1: i32, %arg2: i32) -> (i32, i32) {
    %c0_i32 = arith.constant 0 : i32
    return %arg0, %arg1 : i32, i32
  }
}

module attributes {stable_mosaic.version = 11 : i64} {
  func.func @_fused_matmul_kernel(%arg0: i32, %arg1: i32, %arg2: i32, %arg3: memref<128x128xbf16, #tpu.memory_space<vmem>>, %arg4: memref<128x128xbf16, #tpu.memory_space<vmem>>, %arg5: memref<1x128xf32, #tpu.memory_space<vmem>>, %arg6: memref<1x128xf32, #tpu.memory_space<vmem>>, %arg7: memref<128x128xf32, #tpu.memory_space<vmem>>, %arg8: memref<128x128xf32, #tpu.memory_space<vmem>>) attributes {dimension_semantics = [#tpu.dimension_semantics<parallel>, #tpu.dimension_semantics<parallel>, #tpu.dimension_semantics<arbitrary>], iteration_bounds = array<i64: 1, 1, 2>, scalar_prefetch = 0 : i64, scratch_operands = 1 : i64, tpu.core_type = #tpu.core_type<tc>, window_params = [{transform_indices = @transform_0, window_bounds = array<i64: 128, 128>}, {transform_indices = @transform_1, window_bounds = array<i64: 128, 128>}, {transform_indices = @transform_2, window_bounds = array<i64: 1, 128>}, {transform_indices = @transform_3, window_bounds = array<i64: 1, 128>}, {transform_indices = @transform_4, window_bounds = array<i64: 128, 128>}]} {
    %c0_i32 = arith.constant 0 : i32
    %0 = arith.cmpi eq, %arg2, %c0_i32 : i32
    %1 = arith.extui %0 : i1 to i32
    %c0_i32_0 = arith.constant 0 : i32
    %2 = arith.cmpi ne, %1, %c0_i32_0 : i32
    scf.if %2 {
      %cst_9 = arith.constant 0.000000e+00 : f32
      %12 = vector.broadcast %cst_9 : f32 to vector<128x128xf32>
      %c0_10 = arith.constant 0 : index
      %c0_11 = arith.constant 0 : index
      %13 = vector.load %arg8[%c0_10, %c0_11] : memref<128x128xf32, #tpu.memory_space<vmem>>, vector<128x128xf32>
      tpu.vector_store %arg8[%c0_10, %c0_11], %12 {strides = array<i32>} : memref<128x128xf32, #tpu.memory_space<vmem>>, vector<128x128xf32>,
    } else {
    }
    %c0 = arith.constant 0 : index
    %c0_1 = arith.constant 0 : index
    %3 = vector.load %arg8[%c0, %c0_1] : memref<128x128xf32, #tpu.memory_space<vmem>>, vector<128x128xf32>
    %c0_2 = arith.constant 0 : index
    %c0_3 = arith.constant 0 : index
    %4 = vector.load %arg3[%c0_2, %c0_3] : memref<128x128xbf16, #tpu.memory_space<vmem>>, vector<128x128xbf16>
    %c0_4 = arith.constant 0 : index
    %c0_5 = arith.constant 0 : index
    %5 = vector.load %arg4[%c0_4, %c0_5] : memref<128x128xbf16, #tpu.memory_space<vmem>>, vector<128x128xbf16>
    %cst = arith.constant dense<0.000000e+00> : vector<128x128xf32>
    %6 = tpu.matmul %4, %5, %cst {dimension_numbers = #tpu.dot_dimension_numbers<[1], [0], [0], [1], [0, 0, 1, 1], [], []>} : vector<128x128xbf16>, vector<128x128xbf16>, vector<128x128xf32> -> vector<128x128xf32>
    %7 = arith.addf %3, %6 : vector<128x128xf32>
    %c0_6 = arith.constant 0 : index
    %c0_7 = arith.constant 0 : index
    %8 = vector.load %arg8[%c0_6, %c0_7] : memref<128x128xf32, #tpu.memory_space<vmem>>, vector<128x128xf32>
    tpu.vector_store %arg8[%c0_6, %c0_7], %7 {strides = array<i32>} : memref<128x128xf32, #tpu.memory_space<vmem>>, vector<128x128xf32>,
    %c1_i32 = arith.constant 1 : i32
    %9 = arith.cmpi eq, %arg2, %c1_i32 : i32
    %10 = arith.extui %9 : i1 to i32
    %c0_i32_8 = arith.constant 0 : i32
    %11 = arith.cmpi ne, %10, %c0_i32_8 : i32
    scf.if %11 {
      %c0_9 = arith.constant 0 : index
      %c0_10 = arith.constant 0 : index
      %12 = vector.load %arg8[%c0_9, %c0_10] : memref<128x128xf32, #tpu.memory_space<vmem>>, vector<128x128xf32>
      %c0_11 = arith.constant 0 : index
      %c0_12 = arith.constant 0 : index
      %13 = vector.load %arg5[%c0_11, %c0_12] : memref<1x128xf32, #tpu.memory_space<vmem>>, vector<1x128xf32>
      %c0_13 = arith.constant 0 : index
      %c0_14 = arith.constant 0 : index
      %14 = vector.load %arg6[%c0_13, %c0_14] : memref<1x128xf32, #tpu.memory_space<vmem>>, vector<1x128xf32>
      %15 = vector.broadcast %13 : vector<1x128xf32> to vector<128x128xf32>
      %16 = arith.mulf %12, %15 : vector<128x128xf32>
      %17 = vector.broadcast %14 : vector<1x128xf32> to vector<128x128xf32>
      %18 = arith.addf %16, %17 : vector<128x128xf32>
      %cst_15 = arith.constant 0.000000e+00 : f32
      %19 = vector.broadcast %cst_15 : f32 to vector<128x128xf32>
      %20 = arith.maximumf %18, %19 : vector<128x128xf32>
      %c0_16 = arith.constant 0 : index
      %c0_17 = arith.constant 0 : index
      %21 = vector.load %arg7[%c0_16, %c0_17] : memref<128x128xf32, #tpu.memory_space<vmem>>, vector<128x128xf32>
      tpu.vector_store %arg7[%c0_16, %c0_17], %20 {strides = array<i32>} : memref<128x128xf32, #tpu.memory_space<vmem>>, vector<128x128xf32>,
    } else {
    }
    return
  }
  func.func @transform_0(%arg0: i32, %arg1: i32, %arg2: i32) -> (i32, i32) {
    %c0_i32 = arith.constant 0 : i32
    return %arg0, %arg2 : i32, i32
  }
  func.func @transform_1(%arg0: i32, %arg1: i32, %arg2: i32) -> (i32, i32) {
    %c0_i32 = arith.constant 0 : i32
    return %arg2, %arg1 : i32, i32
  }
  func.func @transform_2(%arg0: i32, %arg1: i32, %arg2: i32) -> (i32, i32) {
    %c0_i32 = arith.constant 0 : i32
    %c0_i32_0 = arith.constant 0 : i32
    return %c0_i32, %arg1 : i32, i32
  }
  func.func @transform_3(%arg0: i32, %arg1: i32, %arg2: i32) -> (i32, i32) {
    %c0_i32 = arith.constant 0 : i32
    %c0_i32_0 = arith.constant 0 : i32
    return %c0_i32, %arg1 : i32, i32
  }
  func.func @transform_4(%arg0: i32, %arg1: i32, %arg2: i32) -> (i32, i32) {
    %c0_i32 = arith.constant 0 : i32
    return %arg0, %arg1 : i32, i32
  }
}

module attributes {stable_mosaic.version = 11 : i64} {
  func.func @_fused_matmul_kernel(%arg0: i32, %arg1: i32, %arg2: i32, %arg3: memref<128x256xbf16, #tpu.memory_space<vmem>>, %arg4: memref<256x128xbf16, #tpu.memory_space<vmem>>, %arg5: memref<1x128xf32, #tpu.memory_space<vmem>>, %arg6: memref<1x128xf32, #tpu.memory_space<vmem>>, %arg7: memref<128x128xf32, #tpu.memory_space<vmem>>, %arg8: memref<128x128xf32, #tpu.memory_space<vmem>>) attributes {dimension_semantics = [#tpu.dimension_semantics<parallel>, #tpu.dimension_semantics<parallel>, #tpu.dimension_semantics<arbitrary>], iteration_bounds = array<i64: 1, 1, 2>, scalar_prefetch = 0 : i64, scratch_operands = 1 : i64, tpu.core_type = #tpu.core_type<tc>, window_params = [{transform_indices = @transform_0, window_bounds = array<i64: 128, 256>}, {transform_indices = @transform_1, window_bounds = array<i64: 256, 128>}, {transform_indices = @transform_2, window_bounds = array<i64: 1, 128>}, {transform_indices = @transform_3, window_bounds = array<i64: 1, 128>}, {transform_indices = @transform_4, window_bounds = array<i64: 128, 128>}]} {
    %c0_i32 = arith.constant 0 : i32
    %0 = arith.cmpi eq, %arg2, %c0_i32 : i32
    %1 = arith.extui %0 : i1 to i32
    %c0_i32_0 = arith.constant 0 : i32
    %2 = arith.cmpi ne, %1, %c0_i32_0 : i32
    scf.if %2 {
      %cst_9 = arith.constant 0.000000e+00 : f32
      %12 = vector.broadcast %cst_9 : f32 to vector<128x128xf32>
      %c0_10 = arith.constant 0 : index
      %c0_11 = arith.constant 0 : index
      %13 = vector.load %arg8[%c0_10, %c0_11] : memref<128x128xf32, #tpu.memory_space<vmem>>, vector<128x128xf32>
      tpu.vector_store %arg8[%c0_10, %c0_11], %12 {strides = array<i32>} : memref<128x128xf32, #tpu.memory_space<vmem>>, vector<128x128xf32>,
    } else {
    }
    %c0 = arith.constant 0 : index
    %c0_1 = arith.constant 0 : index
    %3 = vector.load %arg8[%c0, %c0_1] : memref<128x128xf32, #tpu.memory_space<vmem>>, vector<128x128xf32>
    %c0_2 = arith.constant 0 : index
    %c0_3 = arith.constant 0 : index
    %4 = vector.load %arg3[%c0_2, %c0_3] : memref<128x256xbf16, #tpu.memory_space<vmem>>, vector<128x256xbf16>
    %c0_4 = arith.constant 0 : index
    %c0_5 = arith.constant 0 : index
    %5 = vector.load %arg4[%c0_4, %c0_5] : memref<256x128xbf16, #tpu.memory_space<vmem>>, vector<256x128xbf16>
    %cst = arith.constant dense<0.000000e+00> : vector<128x128xf32>
    %6 = tpu.matmul %4, %5, %cst {dimension_numbers = #tpu.dot_dimension_numbers<[1], [0], [0], [1], [0, 0, 1, 1], [], []>} : vector<128x256xbf16>, vector<256x128xbf16>, vector<128x128xf32> -> vector<128x128xf32>
    %7 = arith.addf %3, %6 : vector<128x128xf32>
    %c0_6 = arith.constant 0 : index
    %c0_7 = arith.constant 0 : index
    %8 = vector.load %arg8[%c0_6, %c0_7] : memref<128x128xf32, #tpu.memory_space<vmem>>, vector<128x128xf32>
    tpu.vector_store %arg8[%c0_6, %c0_7], %7 {strides = array<i32>} : memref<128x128xf32, #tpu.memory_space<vmem>>, vector<128x128xf32>,
    %c1_i32 = arith.constant 1 : i32
    %9 = arith.cmpi eq, %arg2, %c1_i32 : i32
    %10 = arith.extui %9 : i1 to i32
    %c0_i32_8 = arith.constant 0 : i32
    %11 = arith.cmpi ne, %10, %c0_i32_8 : i32
    scf.if %11 {
      %c0_9 = arith.constant 0 : index
      %c0_10 = arith.constant 0 : index
      %12 = vector.load %arg8[%c0_9, %c0_10] : memref<128x128xf32, #tpu.memory_space<vmem>>, vector<128x128xf32>
      %c0_11 = arith.constant 0 : index
      %c0_12 = arith.constant 0 : index
      %13 = vector.load %arg5[%c0_11, %c0_12] : memref<1x128xf32, #tpu.memory_space<vmem>>, vector<1x128xf32>
      %c0_13 = arith.constant 0 : index
      %c0_14 = arith.constant 0 : index
      %14 = vector.load %arg6[%c0_13, %c0_14] : memref<1x128xf32, #tpu.memory_space<vmem>>, vector<1x128xf32>
      %15 = vector.broadcast %13 : vector<1x128xf32> to vector<128x128xf32>
      %16 = arith.mulf %12, %15 : vector<128x128xf32>
      %17 = vector.broadcast %14 : vector<1x128xf32> to vector<128x128xf32>
      %18 = arith.addf %16, %17 : vector<128x128xf32>
      %cst_15 = arith.constant 0.000000e+00 : f32
      %19 = vector.broadcast %cst_15 : f32 to vector<128x128xf32>
      %20 = arith.maximumf %18, %19 : vector<128x128xf32>
      %c0_16 = arith.constant 0 : index
      %c0_17 = arith.constant 0 : index
      %21 = vector.load %arg7[%c0_16, %c0_17] : memref<128x128xf32, #tpu.memory_space<vmem>>, vector<128x128xf32>
      tpu.vector_store %arg7[%c0_16, %c0_17], %20 {strides = array<i32>} : memref<128x128xf32, #tpu.memory_space<vmem>>, vector<128x128xf32>,
    } else {
    }
    return
  }
  func.func @transform_0(%arg0: i32, %arg1: i32, %arg2: i32) -> (i32, i32) {
    %c0_i32 = arith.constant 0 : i32
    return %arg0, %arg2 : i32, i32
  }
  func.func @transform_1(%arg0: i32, %arg1: i32, %arg2: i32) -> (i32, i32) {
    %c0_i32 = arith.constant 0 : i32
    return %arg2, %arg1 : i32, i32
  }
  func.func @transform_2(%arg0: i32, %arg1: i32, %arg2: i32) -> (i32, i32) {
    %c0_i32 = arith.constant 0 : i32
    %c0_i32_0 = arith.constant 0 : i32
    return %c0_i32, %arg1 : i32, i32
  }
  func.func @transform_3(%arg0: i32, %arg1: i32, %arg2: i32) -> (i32, i32) {
    %c0_i32 = arith.constant 0 : i32
    %c0_i32_0 = arith.constant 0 : i32
    return %c0_i32, %arg1 : i32, i32
  }
  func.func @transform_4(%arg0: i32, %arg1: i32, %arg2: i32) -> (i32, i32) {
    %c0_i32 = arith.constant 0 : i32
    return %arg0, %arg1 : i32, i32
  }
}

module attributes {stable_mosaic.version = 11 : i64} {
  func.func @_fused_matmul_kernel(%arg0: i32, %arg1: i32, %arg2: i32, %arg3: memref<128x256xbf16, #tpu.memory_space<vmem>>, %arg4: memref<256x128xbf16, #tpu.memory_space<vmem>>, %arg5: memref<1x128xf32, #tpu.memory_space<vmem>>, %arg6: memref<1x128xf32, #tpu.memory_space<vmem>>, %arg7: memref<128x128xf32, #tpu.memory_space<vmem>>, %arg8: memref<128x128xf32, #tpu.memory_space<vmem>>) attributes {dimension_semantics = [#tpu.dimension_semantics<parallel>, #tpu.dimension_semantics<parallel>, #tpu.dimension_semantics<arbitrary>], iteration_bounds = array<i64: 1, 1, 3>, scalar_prefetch = 0 : i64, scratch_operands = 1 : i64, tpu.core_type = #tpu.core_type<tc>, window_params = [{transform_indices = @transform_0, window_bounds = array<i64: 128, 256>}, {transform_indices = @transform_1, window_bounds = array<i64: 256, 128>}, {transform_indices = @transform_2, window_bounds = array<i64: 1, 128>}, {transform_indices = @transform_3, window_bounds = array<i64: 1, 128>}, {transform_indices = @transform_4, window_bounds = array<i64: 128, 128>}]} {
    %c0_i32 = arith.constant 0 : i32
    %0 = arith.cmpi eq, %arg2, %c0_i32 : i32
    %1 = arith.extui %0 : i1 to i32
    %c0_i32_0 = arith.constant 0 : i32
    %2 = arith.cmpi ne, %1, %c0_i32_0 : i32
    scf.if %2 {
      %cst_9 = arith.constant 0.000000e+00 : f32
      %12 = vector.broadcast %cst_9 : f32 to vector<128x128xf32>
      %c0_10 = arith.constant 0 : index
      %c0_11 = arith.constant 0 : index
      %13 = vector.load %arg8[%c0_10, %c0_11] : memref<128x128xf32, #tpu.memory_space<vmem>>, vector<128x128xf32>
      tpu.vector_store %arg8[%c0_10, %c0_11], %12 {strides = array<i32>} : memref<128x128xf32, #tpu.memory_space<vmem>>, vector<128x128xf32>,
    } else {
    }
    %c0 = arith.constant 0 : index
    %c0_1 = arith.constant 0 : index
    %3 = vector.load %arg8[%c0, %c0_1] : memref<128x128xf32, #tpu.memory_space<vmem>>, vector<128x128xf32>
    %c0_2 = arith.constant 0 : index
    %c0_3 = arith.constant 0 : index
    %4 = vector.load %arg3[%c0_2, %c0_3] : memref<128x256xbf16, #tpu.memory_space<vmem>>, vector<128x256xbf16>
    %c0_4 = arith.constant 0 : index
    %c0_5 = arith.constant 0 : index
    %5 = vector.load %arg4[%c0_4, %c0_5] : memref<256x128xbf16, #tpu.memory_space<vmem>>, vector<256x128xbf16>
    %cst = arith.constant dense<0.000000e+00> : vector<128x128xf32>
    %6 = tpu.matmul %4, %5, %cst {dimension_numbers = #tpu.dot_dimension_numbers<[1], [0], [0], [1], [0, 0, 1, 1], [], []>} : vector<128x256xbf16>, vector<256x128xbf16>, vector<128x128xf32> -> vector<128x128xf32>
    %7 = arith.addf %3, %6 : vector<128x128xf32>
    %c0_6 = arith.constant 0 : index
    %c0_7 = arith.constant 0 : index
    %8 = vector.load %arg8[%c0_6, %c0_7] : memref<128x128xf32, #tpu.memory_space<vmem>>, vector<128x128xf32>
    tpu.vector_store %arg8[%c0_6, %c0_7], %7 {strides = array<i32>} : memref<128x128xf32, #tpu.memory_space<vmem>>, vector<128x128xf32>,
    %c2_i32 = arith.constant 2 : i32
    %9 = arith.cmpi eq, %arg2, %c2_i32 : i32
    %10 = arith.extui %9 : i1 to i32
    %c0_i32_8 = arith.constant 0 : i32
    %11 = arith.cmpi ne, %10, %c0_i32_8 : i32
    scf.if %11 {
      %c0_9 = arith.constant 0 : index
      %c0_10 = arith.constant 0 : index
      %12 = vector.load %arg8[%c0_9, %c0_10] : memref<128x128xf32, #tpu.memory_space<vmem>>, vector<128x128xf32>
      %c0_11 = arith.constant 0 : index
      %c0_12 = arith.constant 0 : index
      %13 = vector.load %arg5[%c0_11, %c0_12] : memref<1x128xf32, #tpu.memory_space<vmem>>, vector<1x128xf32>
      %c0_13 = arith.constant 0 : index
      %c0_14 = arith.constant 0 : index
      %14 = vector.load %arg6[%c0_13, %c0_14] : memref<1x128xf32, #tpu.memory_space<vmem>>, vector<1x128xf32>
      %15 = vector.broadcast %13 : vector<1x128xf32> to vector<128x128xf32>
      %16 = arith.mulf %12, %15 : vector<128x128xf32>
      %17 = vector.broadcast %14 : vector<1x128xf32> to vector<128x128xf32>
      %18 = arith.addf %16, %17 : vector<128x128xf32>
      %cst_15 = arith.constant 0.000000e+00 : f32
      %19 = vector.broadcast %cst_15 : f32 to vector<128x128xf32>
      %20 = arith.maximumf %18, %19 : vector<128x128xf32>
      %c0_16 = arith.constant 0 : index
      %c0_17 = arith.constant 0 : index
      %21 = vector.load %arg7[%c0_16, %c0_17] : memref<128x128xf32, #tpu.memory_space<vmem>>, vector<128x128xf32>
      tpu.vector_store %arg7[%c0_16, %c0_17], %20 {strides = array<i32>} : memref<128x128xf32, #tpu.memory_space<vmem>>, vector<128x128xf32>,
    } else {
    }
    return
  }
  func.func @transform_0(%arg0: i32, %arg1: i32, %arg2: i32) -> (i32, i32) {
    %c0_i32 = arith.constant 0 : i32
    return %arg0, %arg2 : i32, i32
  }
  func.func @transform_1(%arg0: i32, %arg1: i32, %arg2: i32) -> (i32, i32) {
    %c0_i32 = arith.constant 0 : i32
    return %arg2, %arg1 : i32, i32
  }
  func.func @transform_2(%arg0: i32, %arg1: i32, %arg2: i32) -> (i32, i32) {
    %c0_i32 = arith.constant 0 : i32
    %c0_i32_0 = arith.constant 0 : i32
    return %c0_i32, %arg1 : i32, i32
  }
  func.func @transform_3(%arg0: i32, %arg1: i32, %arg2: i32) -> (i32, i32) {
    %c0_i32 = arith.constant 0 : i32
    %c0_i32_0 = arith.constant 0 : i32
    return %c0_i32, %arg1 : i32, i32
  }
  func.func @transform_4(%arg0: i32, %arg1: i32, %arg2: i32) -> (i32, i32) {
    %c0_i32 = arith.constant 0 : i32
    return %arg0, %arg1 : i32, i32
  }
}

module attributes {stable_mosaic.version = 11 : i64} {
  func.func @_fused_matmul_kernel(%arg0: i32, %arg1: i32, %arg2: i32, %arg3: memref<128x128xbf16, #tpu.memory_space<vmem>>, %arg4: memref<128x256xbf16, #tpu.memory_space<vmem>>, %arg5: memref<1x256xf32, #tpu.memory_space<vmem>>, %arg6: memref<1x256xf32, #tpu.memory_space<vmem>>, %arg7: memref<128x256xf32, #tpu.memory_space<vmem>>, %arg8: memref<128x256xf32, #tpu.memory_space<vmem>>) attributes {dimension_semantics = [#tpu.dimension_semantics<parallel>, #tpu.dimension_semantics<parallel>, #tpu.dimension_semantics<arbitrary>], iteration_bounds = array<i64: 1, 1, 1>, scalar_prefetch = 0 : i64, scratch_operands = 1 : i64, tpu.core_type = #tpu.core_type<tc>, window_params = [{transform_indices = @transform_0, window_bounds = array<i64: 128, 128>}, {transform_indices = @transform_1, window_bounds = array<i64: 128, 256>}, {transform_indices = @transform_2, window_bounds = array<i64: 1, 256>}, {transform_indices = @transform_3, window_bounds = array<i64: 1, 256>}, {transform_indices = @transform_4, window_bounds = array<i64: 128, 256>}]} {
    %c0_i32 = arith.constant 0 : i32
    %0 = arith.cmpi eq, %arg2, %c0_i32 : i32
    %1 = arith.extui %0 : i1 to i32
    %c0_i32_0 = arith.constant 0 : i32
    %2 = arith.cmpi ne, %1, %c0_i32_0 : i32
    scf.if %2 {
      %cst_10 = arith.constant 0.000000e+00 : f32
      %12 = vector.broadcast %cst_10 : f32 to vector<128x256xf32>
      %c0_11 = arith.constant 0 : index
      %c0_12 = arith.constant 0 : index
      %13 = vector.load %arg8[%c0_11, %c0_12] : memref<128x256xf32, #tpu.memory_space<vmem>>, vector<128x256xf32>
      tpu.vector_store %arg8[%c0_11, %c0_12], %12 {strides = array<i32>} : memref<128x256xf32, #tpu.memory_space<vmem>>, vector<128x256xf32>,
    } else {
    }
    %c0 = arith.constant 0 : index
    %c0_1 = arith.constant 0 : index
    %3 = vector.load %arg8[%c0, %c0_1] : memref<128x256xf32, #tpu.memory_space<vmem>>, vector<128x256xf32>
    %c0_2 = arith.constant 0 : index
    %c0_3 = arith.constant 0 : index
    %4 = vector.load %arg3[%c0_2, %c0_3] : memref<128x128xbf16, #tpu.memory_space<vmem>>, vector<128x128xbf16>
    %c0_4 = arith.constant 0 : index
    %c0_5 = arith.constant 0 : index
    %5 = vector.load %arg4[%c0_4, %c0_5] : memref<128x256xbf16, #tpu.memory_space<vmem>>, vector<128x256xbf16>
    %cst = arith.constant dense<0.000000e+00> : vector<128x256xf32>
    %6 = tpu.matmul %4, %5, %cst {dimension_numbers = #tpu.dot_dimension_numbers<[1], [0], [0], [1], [0, 0, 1, 1], [], []>} : vector<128x128xbf16>, vector<128x256xbf16>, vector<128x256xf32> -> vector<128x256xf32>
    %7 = arith.addf %3, %6 : vector<128x256xf32>
    %c0_6 = arith.constant 0 : index
    %c0_7 = arith.constant 0 : index
    %8 = vector.load %arg8[%c0_6, %c0_7] : memref<128x256xf32, #tpu.memory_space<vmem>>, vector<128x256xf32>
    tpu.vector_store %arg8[%c0_6, %c0_7], %7 {strides = array<i32>} : memref<128x256xf32, #tpu.memory_space<vmem>>, vector<128x256xf32>,
    %c0_i32_8 = arith.constant 0 : i32
    %9 = arith.cmpi eq, %arg2, %c0_i32_8 : i32
    %10 = arith.extui %9 : i1 to i32
    %c0_i32_9 = arith.constant 0 : i32
    %11 = arith.cmpi ne, %10, %c0_i32_9 : i32
    scf.if %11 {
      %c0_10 = arith.constant 0 : index
      %c0_11 = arith.constant 0 : index
      %12 = vector.load %arg8[%c0_10, %c0_11] : memref<128x256xf32, #tpu.memory_space<vmem>>, vector<128x256xf32>
      %c0_12 = arith.constant 0 : index
      %c0_13 = arith.constant 0 : index
      %13 = vector.load %arg5[%c0_12, %c0_13] : memref<1x256xf32, #tpu.memory_space<vmem>>, vector<1x256xf32>
      %c0_14 = arith.constant 0 : index
      %c0_15 = arith.constant 0 : index
      %14 = vector.load %arg6[%c0_14, %c0_15] : memref<1x256xf32, #tpu.memory_space<vmem>>, vector<1x256xf32>
      %15 = vector.broadcast %13 : vector<1x256xf32> to vector<128x256xf32>
      %16 = arith.mulf %12, %15 : vector<128x256xf32>
      %17 = vector.broadcast %14 : vector<1x256xf32> to vector<128x256xf32>
      %18 = arith.addf %16, %17 : vector<128x256xf32>
      %c0_16 = arith.constant 0 : index
      %c0_17 = arith.constant 0 : index
      %19 = vector.load %arg7[%c0_16, %c0_17] : memref<128x256xf32, #tpu.memory_space<vmem>>, vector<128x256xf32>
      tpu.vector_store %arg7[%c0_16, %c0_17], %18 {strides = array<i32>} : memref<128x256xf32, #tpu.memory_space<vmem>>, vector<128x256xf32>,
    } else {
    }
    return
  }
  func.func @transform_0(%arg0: i32, %arg1: i32, %arg2: i32) -> (i32, i32) {
    %c0_i32 = arith.constant 0 : i32
    return %arg0, %arg2 : i32, i32
  }
  func.func @transform_1(%arg0: i32, %arg1: i32, %arg2: i32) -> (i32, i32) {
    %c0_i32 = arith.constant 0 : i32
    return %arg2, %arg1 : i32, i32
  }
  func.func @transform_2(%arg0: i32, %arg1: i32, %arg2: i32) -> (i32, i32) {
    %c0_i32 = arith.constant 0 : i32
    %c0_i32_0 = arith.constant 0 : i32
    return %c0_i32, %arg1 : i32, i32
  }
  func.func @transform_3(%arg0: i32, %arg1: i32, %arg2: i32) -> (i32, i32) {
    %c0_i32 = arith.constant 0 : i32
    %c0_i32_0 = arith.constant 0 : i32
    return %c0_i32, %arg1 : i32, i32
  }
  func.func @transform_4(%arg0: i32, %arg1: i32, %arg2: i32) -> (i32, i32) {
    %c0_i32 = arith.constant 0 : i32
    return %arg0, %arg1 : i32, i32
  }
}

module attributes {stable_mosaic.version = 11 : i64} {
  func.func @_fused_matmul_res_kernel(%arg0: i32, %arg1: i32, %arg2: i32, %arg3: memref<128x128xbf16, #tpu.memory_space<vmem>>, %arg4: memref<128x256xbf16, #tpu.memory_space<vmem>>, %arg5: memref<1x256xf32, #tpu.memory_space<vmem>>, %arg6: memref<1x256xf32, #tpu.memory_space<vmem>>, %arg7: memref<128x256xf32, #tpu.memory_space<vmem>>, %arg8: memref<128x256xf32, #tpu.memory_space<vmem>>, %arg9: memref<128x256xf32, #tpu.memory_space<vmem>>) attributes {dimension_semantics = [#tpu.dimension_semantics<parallel>, #tpu.dimension_semantics<parallel>, #tpu.dimension_semantics<arbitrary>], iteration_bounds = array<i64: 1, 1, 1>, scalar_prefetch = 0 : i64, scratch_operands = 1 : i64, tpu.core_type = #tpu.core_type<tc>, window_params = [{transform_indices = @transform_0, window_bounds = array<i64: 128, 128>}, {transform_indices = @transform_1, window_bounds = array<i64: 128, 256>}, {transform_indices = @transform_2, window_bounds = array<i64: 1, 256>}, {transform_indices = @transform_3, window_bounds = array<i64: 1, 256>}, {transform_indices = @transform_4, window_bounds = array<i64: 128, 256>}, {transform_indices = @transform_5, window_bounds = array<i64: 128, 256>}]} {
    %c0_i32 = arith.constant 0 : i32
    %0 = arith.cmpi eq, %arg2, %c0_i32 : i32
    %1 = arith.extui %0 : i1 to i32
    %c0_i32_0 = arith.constant 0 : i32
    %2 = arith.cmpi ne, %1, %c0_i32_0 : i32
    scf.if %2 {
      %cst_10 = arith.constant 0.000000e+00 : f32
      %12 = vector.broadcast %cst_10 : f32 to vector<128x256xf32>
      %c0_11 = arith.constant 0 : index
      %c0_12 = arith.constant 0 : index
      %13 = vector.load %arg9[%c0_11, %c0_12] : memref<128x256xf32, #tpu.memory_space<vmem>>, vector<128x256xf32>
      tpu.vector_store %arg9[%c0_11, %c0_12], %12 {strides = array<i32>} : memref<128x256xf32, #tpu.memory_space<vmem>>, vector<128x256xf32>,
    } else {
    }
    %c0 = arith.constant 0 : index
    %c0_1 = arith.constant 0 : index
    %3 = vector.load %arg9[%c0, %c0_1] : memref<128x256xf32, #tpu.memory_space<vmem>>, vector<128x256xf32>
    %c0_2 = arith.constant 0 : index
    %c0_3 = arith.constant 0 : index
    %4 = vector.load %arg3[%c0_2, %c0_3] : memref<128x128xbf16, #tpu.memory_space<vmem>>, vector<128x128xbf16>
    %c0_4 = arith.constant 0 : index
    %c0_5 = arith.constant 0 : index
    %5 = vector.load %arg4[%c0_4, %c0_5] : memref<128x256xbf16, #tpu.memory_space<vmem>>, vector<128x256xbf16>
    %cst = arith.constant dense<0.000000e+00> : vector<128x256xf32>
    %6 = tpu.matmul %4, %5, %cst {dimension_numbers = #tpu.dot_dimension_numbers<[1], [0], [0], [1], [0, 0, 1, 1], [], []>} : vector<128x128xbf16>, vector<128x256xbf16>, vector<128x256xf32> -> vector<128x256xf32>
    %7 = arith.addf %3, %6 : vector<128x256xf32>
    %c0_6 = arith.constant 0 : index
    %c0_7 = arith.constant 0 : index
    %8 = vector.load %arg9[%c0_6, %c0_7] : memref<128x256xf32, #tpu.memory_space<vmem>>, vector<128x256xf32>
    tpu.vector_store %arg9[%c0_6, %c0_7], %7 {strides = array<i32>} : memref<128x256xf32, #tpu.memory_space<vmem>>, vector<128x256xf32>,
    %c0_i32_8 = arith.constant 0 : i32
    %9 = arith.cmpi eq, %arg2, %c0_i32_8 : i32
    %10 = arith.extui %9 : i1 to i32
    %c0_i32_9 = arith.constant 0 : i32
    %11 = arith.cmpi ne, %10, %c0_i32_9 : i32
    scf.if %11 {
      %c0_10 = arith.constant 0 : index
      %c0_11 = arith.constant 0 : index
      %12 = vector.load %arg9[%c0_10, %c0_11] : memref<128x256xf32, #tpu.memory_space<vmem>>, vector<128x256xf32>
      %c0_12 = arith.constant 0 : index
      %c0_13 = arith.constant 0 : index
      %13 = vector.load %arg5[%c0_12, %c0_13] : memref<1x256xf32, #tpu.memory_space<vmem>>, vector<1x256xf32>
      %c0_14 = arith.constant 0 : index
      %c0_15 = arith.constant 0 : index
      %14 = vector.load %arg6[%c0_14, %c0_15] : memref<1x256xf32, #tpu.memory_space<vmem>>, vector<1x256xf32>
      %c0_16 = arith.constant 0 : index
      %c0_17 = arith.constant 0 : index
      %15 = vector.load %arg7[%c0_16, %c0_17] : memref<128x256xf32, #tpu.memory_space<vmem>>, vector<128x256xf32>
      %16 = vector.broadcast %13 : vector<1x256xf32> to vector<128x256xf32>
      %17 = arith.mulf %12, %16 : vector<128x256xf32>
      %18 = vector.broadcast %14 : vector<1x256xf32> to vector<128x256xf32>
      %19 = arith.addf %17, %18 : vector<128x256xf32>
      %20 = arith.addf %19, %15 : vector<128x256xf32>
      %cst_18 = arith.constant 0.000000e+00 : f32
      %21 = vector.broadcast %cst_18 : f32 to vector<128x256xf32>
      %22 = arith.maximumf %20, %21 : vector<128x256xf32>
      %c0_19 = arith.constant 0 : index
      %c0_20 = arith.constant 0 : index
      %23 = vector.load %arg8[%c0_19, %c0_20] : memref<128x256xf32, #tpu.memory_space<vmem>>, vector<128x256xf32>
      tpu.vector_store %arg8[%c0_19, %c0_20], %22 {strides = array<i32>} : memref<128x256xf32, #tpu.memory_space<vmem>>, vector<128x256xf32>,
    } else {
    }
    return
  }
  func.func @transform_0(%arg0: i32, %arg1: i32, %arg2: i32) -> (i32, i32) {
    %c0_i32 = arith.constant 0 : i32
    return %arg0, %arg2 : i32, i32
  }
  func.func @transform_1(%arg0: i32, %arg1: i32, %arg2: i32) -> (i32, i32) {
    %c0_i32 = arith.constant 0 : i32
    return %arg2, %arg1 : i32, i32
  }
  func.func @transform_2(%arg0: i32, %arg1: i32, %arg2: i32) -> (i32, i32) {
    %c0_i32 = arith.constant 0 : i32
    %c0_i32_0 = arith.constant 0 : i32
    return %c0_i32, %arg1 : i32, i32
  }
  func.func @transform_3(%arg0: i32, %arg1: i32, %arg2: i32) -> (i32, i32) {
    %c0_i32 = arith.constant 0 : i32
    %c0_i32_0 = arith.constant 0 : i32
    return %c0_i32, %arg1 : i32, i32
  }
  func.func @transform_4(%arg0: i32, %arg1: i32, %arg2: i32) -> (i32, i32) {
    %c0_i32 = arith.constant 0 : i32
    return %arg0, %arg1 : i32, i32
  }
  func.func @transform_5(%arg0: i32, %arg1: i32, %arg2: i32) -> (i32, i32) {
    %c0_i32 = arith.constant 0 : i32
    return %arg0, %arg1 : i32, i32
  }
}

module attributes {stable_mosaic.version = 11 : i64} {
  func.func @_gap_kernel(%arg0: i32, %arg1: memref<2x8x256xf32, #tpu.memory_space<vmem>>, %arg2: memref<2x256xf32, #tpu.memory_space<vmem>>, %arg3: memref<2x256xf32, #tpu.memory_space<vmem>>) attributes {dimension_semantics = [#tpu.dimension_semantics<arbitrary>], iteration_bounds = array<i64: 1>, scalar_prefetch = 0 : i64, scratch_operands = 1 : i64, tpu.core_type = #tpu.core_type<tc>, window_params = [{transform_indices = @transform_0, window_bounds = array<i64: 2, 8, 256>}, {pipeline_mode = #tpu.pipeline_mode<synchronous>, transform_indices = @transform_1, window_bounds = array<i64: 2, 256>}]} {
    %c0_i32 = arith.constant 0 : i32
    %0 = arith.cmpi eq, %arg0, %c0_i32 : i32
    %1 = arith.extui %0 : i1 to i32
    %c0_i32_0 = arith.constant 0 : i32
    %2 = arith.cmpi ne, %1, %c0_i32_0 : i32
    scf.if %2 {
      %cst_9 = arith.constant 0.000000e+00 : f32
      %11 = vector.broadcast %cst_9 : f32 to vector<2x256xf32>
      %c0_10 = arith.constant 0 : index
      %c0_11 = arith.constant 0 : index
      %12 = vector.load %arg3[%c0_10, %c0_11] : memref<2x256xf32, #tpu.memory_space<vmem>>, vector<2x256xf32>
      tpu.vector_store %arg3[%c0_10, %c0_11], %11 {strides = array<i32>} : memref<2x256xf32, #tpu.memory_space<vmem>>, vector<2x256xf32>,
    } else {
    }
    %c0 = arith.constant 0 : index
    %c0_1 = arith.constant 0 : index
    %3 = vector.load %arg3[%c0, %c0_1] : memref<2x256xf32, #tpu.memory_space<vmem>>, vector<2x256xf32>
    %c0_2 = arith.constant 0 : index
    %c0_3 = arith.constant 0 : index
    %c0_4 = arith.constant 0 : index
    %4 = vector.load %arg1[%c0_2, %c0_3, %c0_4] : memref<2x8x256xf32, #tpu.memory_space<vmem>>, vector<2x8x256xf32>
    %cst = arith.constant dense<0.000000e+00> : vector<2x256xf32>
    %5 = vector.multi_reduction <add>, %4, %cst [1] : vector<2x8x256xf32> to vector<2x256xf32>
    %6 = arith.addf %3, %5 : vector<2x256xf32>
    %c0_5 = arith.constant 0 : index
    %c0_6 = arith.constant 0 : index
    %7 = vector.load %arg3[%c0_5, %c0_6] : memref<2x256xf32, #tpu.memory_space<vmem>>, vector<2x256xf32>
    tpu.vector_store %arg3[%c0_5, %c0_6], %6 {strides = array<i32>} : memref<2x256xf32, #tpu.memory_space<vmem>>, vector<2x256xf32>,
    %c0_i32_7 = arith.constant 0 : i32
    %8 = arith.cmpi eq, %arg0, %c0_i32_7 : i32
    %9 = arith.extui %8 : i1 to i32
    %c0_i32_8 = arith.constant 0 : i32
    %10 = arith.cmpi ne, %9, %c0_i32_8 : i32
    scf.if %10 {
      %c0_9 = arith.constant 0 : index
      %c0_10 = arith.constant 0 : index
      %11 = vector.load %arg3[%c0_9, %c0_10] : memref<2x256xf32, #tpu.memory_space<vmem>>, vector<2x256xf32>
      %cst_11 = arith.constant 1.000000e+00 : f32
      %12 = vector.broadcast %cst_11 : f32 to vector<2x256xf32>
      %13 = arith.mulf %11, %12 : vector<2x256xf32>
      %c0_12 = arith.constant 0 : index
      %c0_13 = arith.constant 0 : index
      %14 = vector.load %arg2[%c0_12, %c0_13] : memref<2x256xf32, #tpu.memory_space<vmem>>, vector<2x256xf32>
      tpu.vector_store %arg2[%c0_12, %c0_13], %13 {strides = array<i32>} : memref<2x256xf32, #tpu.memory_space<vmem>>, vector<2x256xf32>,
    } else {
    }
    return
  }
  func.func @transform_0(%arg0: i32) -> (i32, i32, i32) {
    %c0_i32 = arith.constant 0 : i32
    %c0_i32_0 = arith.constant 0 : i32
    %c0_i32_1 = arith.constant 0 : i32
    return %c0_i32, %arg0, %c0_i32_0 : i32, i32, i32
  }
  func.func @transform_1(%arg0: i32) -> (i32, i32) {
    %c0_i32 = arith.constant 0 : i32
    %c0_i32_0 = arith.constant 0 : i32
    %c0_i32_1 = arith.constant 0 : i32
    return %c0_i32, %c0_i32_0 : i32, i32
  }
}

module attributes {stable_mosaic.version = 11 : i64} {
  func.func @_fused_matmul_kernel(%arg0: i32, %arg1: i32, %arg2: i32, %arg3: memref<128x256xbf16, #tpu.memory_space<vmem>>, %arg4: memref<256x256xbf16, #tpu.memory_space<vmem>>, %arg5: memref<1x256xf32, #tpu.memory_space<vmem>>, %arg6: memref<1x256xf32, #tpu.memory_space<vmem>>, %arg7: memref<128x256xf32, #tpu.memory_space<vmem>>, %arg8: memref<128x256xf32, #tpu.memory_space<vmem>>) attributes {dimension_semantics = [#tpu.dimension_semantics<parallel>, #tpu.dimension_semantics<parallel>, #tpu.dimension_semantics<arbitrary>], iteration_bounds = array<i64: 1, 1, 1>, scalar_prefetch = 0 : i64, scratch_operands = 1 : i64, tpu.core_type = #tpu.core_type<tc>, window_params = [{transform_indices = @transform_0, window_bounds = array<i64: 128, 256>}, {transform_indices = @transform_1, window_bounds = array<i64: 256, 256>}, {transform_indices = @transform_2, window_bounds = array<i64: 1, 256>}, {transform_indices = @transform_3, window_bounds = array<i64: 1, 256>}, {transform_indices = @transform_4, window_bounds = array<i64: 128, 256>}]} {
    %c0_i32 = arith.constant 0 : i32
    %0 = arith.cmpi eq, %arg2, %c0_i32 : i32
    %1 = arith.extui %0 : i1 to i32
    %c0_i32_0 = arith.constant 0 : i32
    %2 = arith.cmpi ne, %1, %c0_i32_0 : i32
    scf.if %2 {
      %cst_10 = arith.constant 0.000000e+00 : f32
      %12 = vector.broadcast %cst_10 : f32 to vector<128x256xf32>
      %c0_11 = arith.constant 0 : index
      %c0_12 = arith.constant 0 : index
      %13 = vector.load %arg8[%c0_11, %c0_12] : memref<128x256xf32, #tpu.memory_space<vmem>>, vector<128x256xf32>
      tpu.vector_store %arg8[%c0_11, %c0_12], %12 {strides = array<i32>} : memref<128x256xf32, #tpu.memory_space<vmem>>, vector<128x256xf32>,
    } else {
    }
    %c0 = arith.constant 0 : index
    %c0_1 = arith.constant 0 : index
    %3 = vector.load %arg8[%c0, %c0_1] : memref<128x256xf32, #tpu.memory_space<vmem>>, vector<128x256xf32>
    %c0_2 = arith.constant 0 : index
    %c0_3 = arith.constant 0 : index
    %4 = vector.load %arg3[%c0_2, %c0_3] : memref<128x256xbf16, #tpu.memory_space<vmem>>, vector<128x256xbf16>
    %c0_4 = arith.constant 0 : index
    %c0_5 = arith.constant 0 : index
    %5 = vector.load %arg4[%c0_4, %c0_5] : memref<256x256xbf16, #tpu.memory_space<vmem>>, vector<256x256xbf16>
    %cst = arith.constant dense<0.000000e+00> : vector<128x256xf32>
    %6 = tpu.matmul %4, %5, %cst {dimension_numbers = #tpu.dot_dimension_numbers<[1], [0], [0], [1], [0, 0, 1, 1], [], []>} : vector<128x256xbf16>, vector<256x256xbf16>, vector<128x256xf32> -> vector<128x256xf32>
    %7 = arith.addf %3, %6 : vector<128x256xf32>
    %c0_6 = arith.constant 0 : index
    %c0_7 = arith.constant 0 : index
    %8 = vector.load %arg8[%c0_6, %c0_7] : memref<128x256xf32, #tpu.memory_space<vmem>>, vector<128x256xf32>
    tpu.vector_store %arg8[%c0_6, %c0_7], %7 {strides = array<i32>} : memref<128x256xf32, #tpu.memory_space<vmem>>, vector<128x256xf32>,
    %c0_i32_8 = arith.constant 0 : i32
    %9 = arith.cmpi eq, %arg2, %c0_i32_8 : i32
    %10 = arith.extui %9 : i1 to i32
    %c0_i32_9 = arith.constant 0 : i32
    %11 = arith.cmpi ne, %10, %c0_i32_9 : i32
    scf.if %11 {
      %c0_10 = arith.constant 0 : index
      %c0_11 = arith.constant 0 : index
      %12 = vector.load %arg8[%c0_10, %c0_11] : memref<128x256xf32, #tpu.memory_space<vmem>>, vector<128x256xf32>
      %c0_12 = arith.constant 0 : index
      %c0_13 = arith.constant 0 : index
      %13 = vector.load %arg5[%c0_12, %c0_13] : memref<1x256xf32, #tpu.memory_space<vmem>>, vector<1x256xf32>
      %c0_14 = arith.constant 0 : index
      %c0_15 = arith.constant 0 : index
      %14 = vector.load %arg6[%c0_14, %c0_15] : memref<1x256xf32, #tpu.memory_space<vmem>>, vector<1x256xf32>
      %15 = vector.broadcast %13 : vector<1x256xf32> to vector<128x256xf32>
      %16 = arith.mulf %12, %15 : vector<128x256xf32>
      %17 = vector.broadcast %14 : vector<1x256xf32> to vector<128x256xf32>
      %18 = arith.addf %16, %17 : vector<128x256xf32>
      %cst_16 = arith.constant 0.000000e+00 : f32
      %19 = vector.broadcast %cst_16 : f32 to vector<128x256xf32>
      %20 = arith.maximumf %18, %19 : vector<128x256xf32>
      %c0_17 = arith.constant 0 : index
      %c0_18 = arith.constant 0 : index
      %21 = vector.load %arg7[%c0_17, %c0_18] : memref<128x256xf32, #tpu.memory_space<vmem>>, vector<128x256xf32>
      tpu.vector_store %arg7[%c0_17, %c0_18], %20 {strides = array<i32>} : memref<128x256xf32, #tpu.memory_space<vmem>>, vector<128x256xf32>,
    } else {
    }
    return
  }
  func.func @transform_0(%arg0: i32, %arg1: i32, %arg2: i32) -> (i32, i32) {
    %c0_i32 = arith.constant 0 : i32
    return %arg0, %arg2 : i32, i32
  }
  func.func @transform_1(%arg0: i32, %arg1: i32, %arg2: i32) -> (i32, i32) {
    %c0_i32 = arith.constant 0 : i32
    return %arg2, %arg1 : i32, i32
  }
  func.func @transform_2(%arg0: i32, %arg1: i32, %arg2: i32) -> (i32, i32) {
    %c0_i32 = arith.constant 0 : i32
    %c0_i32_0 = arith.constant 0 : i32
    return %c0_i32, %arg1 : i32, i32
  }
  func.func @transform_3(%arg0: i32, %arg1: i32, %arg2: i32) -> (i32, i32) {
    %c0_i32 = arith.constant 0 : i32
    %c0_i32_0 = arith.constant 0 : i32
    return %c0_i32, %arg1 : i32, i32
  }
  func.func @transform_4(%arg0: i32, %arg1: i32, %arg2: i32) -> (i32, i32) {
    %c0_i32 = arith.constant 0 : i32
    return %arg0, %arg1 : i32, i32
  }
}

module attributes {stable_mosaic.version = 11 : i64} {
  func.func @_fused_matmul_kernel(%arg0: i32, %arg1: i32, %arg2: i32, %arg3: memref<128x256xbf16, #tpu.memory_space<vmem>>, %arg4: memref<256x128xbf16, #tpu.memory_space<vmem>>, %arg5: memref<1x128xf32, #tpu.memory_space<vmem>>, %arg6: memref<1x128xf32, #tpu.memory_space<vmem>>, %arg7: memref<128x128xf32, #tpu.memory_space<vmem>>, %arg8: memref<128x128xf32, #tpu.memory_space<vmem>>) attributes {dimension_semantics = [#tpu.dimension_semantics<parallel>, #tpu.dimension_semantics<parallel>, #tpu.dimension_semantics<arbitrary>], iteration_bounds = array<i64: 1, 1, 1>, scalar_prefetch = 0 : i64, scratch_operands = 1 : i64, tpu.core_type = #tpu.core_type<tc>, window_params = [{transform_indices = @transform_0, window_bounds = array<i64: 128, 256>}, {transform_indices = @transform_1, window_bounds = array<i64: 256, 128>}, {transform_indices = @transform_2, window_bounds = array<i64: 1, 128>}, {transform_indices = @transform_3, window_bounds = array<i64: 1, 128>}, {transform_indices = @transform_4, window_bounds = array<i64: 128, 128>}]} {
    %c0_i32 = arith.constant 0 : i32
    %0 = arith.cmpi eq, %arg2, %c0_i32 : i32
    %1 = arith.extui %0 : i1 to i32
    %c0_i32_0 = arith.constant 0 : i32
    %2 = arith.cmpi ne, %1, %c0_i32_0 : i32
    scf.if %2 {
      %cst_10 = arith.constant 0.000000e+00 : f32
      %12 = vector.broadcast %cst_10 : f32 to vector<128x128xf32>
      %c0_11 = arith.constant 0 : index
      %c0_12 = arith.constant 0 : index
      %13 = vector.load %arg8[%c0_11, %c0_12] : memref<128x128xf32, #tpu.memory_space<vmem>>, vector<128x128xf32>
      tpu.vector_store %arg8[%c0_11, %c0_12], %12 {strides = array<i32>} : memref<128x128xf32, #tpu.memory_space<vmem>>, vector<128x128xf32>,
    } else {
    }
    %c0 = arith.constant 0 : index
    %c0_1 = arith.constant 0 : index
    %3 = vector.load %arg8[%c0, %c0_1] : memref<128x128xf32, #tpu.memory_space<vmem>>, vector<128x128xf32>
    %c0_2 = arith.constant 0 : index
    %c0_3 = arith.constant 0 : index
    %4 = vector.load %arg3[%c0_2, %c0_3] : memref<128x256xbf16, #tpu.memory_space<vmem>>, vector<128x256xbf16>
    %c0_4 = arith.constant 0 : index
    %c0_5 = arith.constant 0 : index
    %5 = vector.load %arg4[%c0_4, %c0_5] : memref<256x128xbf16, #tpu.memory_space<vmem>>, vector<256x128xbf16>
    %cst = arith.constant dense<0.000000e+00> : vector<128x128xf32>
    %6 = tpu.matmul %4, %5, %cst {dimension_numbers = #tpu.dot_dimension_numbers<[1], [0], [0], [1], [0, 0, 1, 1], [], []>} : vector<128x256xbf16>, vector<256x128xbf16>, vector<128x128xf32> -> vector<128x128xf32>
    %7 = arith.addf %3, %6 : vector<128x128xf32>
    %c0_6 = arith.constant 0 : index
    %c0_7 = arith.constant 0 : index
    %8 = vector.load %arg8[%c0_6, %c0_7] : memref<128x128xf32, #tpu.memory_space<vmem>>, vector<128x128xf32>
    tpu.vector_store %arg8[%c0_6, %c0_7], %7 {strides = array<i32>} : memref<128x128xf32, #tpu.memory_space<vmem>>, vector<128x128xf32>,
    %c0_i32_8 = arith.constant 0 : i32
    %9 = arith.cmpi eq, %arg2, %c0_i32_8 : i32
    %10 = arith.extui %9 : i1 to i32
    %c0_i32_9 = arith.constant 0 : i32
    %11 = arith.cmpi ne, %10, %c0_i32_9 : i32
    scf.if %11 {
      %c0_10 = arith.constant 0 : index
      %c0_11 = arith.constant 0 : index
      %12 = vector.load %arg8[%c0_10, %c0_11] : memref<128x128xf32, #tpu.memory_space<vmem>>, vector<128x128xf32>
      %c0_12 = arith.constant 0 : index
      %c0_13 = arith.constant 0 : index
      %13 = vector.load %arg5[%c0_12, %c0_13] : memref<1x128xf32, #tpu.memory_space<vmem>>, vector<1x128xf32>
      %c0_14 = arith.constant 0 : index
      %c0_15 = arith.constant 0 : index
      %14 = vector.load %arg6[%c0_14, %c0_15] : memref<1x128xf32, #tpu.memory_space<vmem>>, vector<1x128xf32>
      %15 = vector.broadcast %13 : vector<1x128xf32> to vector<128x128xf32>
      %16 = arith.mulf %12, %15 : vector<128x128xf32>
      %17 = vector.broadcast %14 : vector<1x128xf32> to vector<128x128xf32>
      %18 = arith.addf %16, %17 : vector<128x128xf32>
      %19 = arith.negf %18 : vector<128x128xf32>
      %20 = math.exp %19 : vector<128x128xf32>
      %cst_16 = arith.constant 1.000000e+00 : f32
      %21 = vector.broadcast %cst_16 : f32 to vector<128x128xf32>
      %22 = arith.addf %21, %20 : vector<128x128xf32>
      %23 = arith.divf %21, %22 : vector<128x128xf32>
      %c0_17 = arith.constant 0 : index
      %c0_18 = arith.constant 0 : index
      %24 = vector.load %arg7[%c0_17, %c0_18] : memref<128x128xf32, #tpu.memory_space<vmem>>, vector<128x128xf32>
      tpu.vector_store %arg7[%c0_17, %c0_18], %23 {strides = array<i32>} : memref<128x128xf32, #tpu.memory_space<vmem>>, vector<128x128xf32>,
    } else {
    }
    return
  }
  func.func @transform_0(%arg0: i32, %arg1: i32, %arg2: i32) -> (i32, i32) {
    %c0_i32 = arith.constant 0 : i32
    return %arg0, %arg2 : i32, i32
  }
  func.func @transform_1(%arg0: i32, %arg1: i32, %arg2: i32) -> (i32, i32) {
    %c0_i32 = arith.constant 0 : i32
    return %arg2, %arg1 : i32, i32
  }
  func.func @transform_2(%arg0: i32, %arg1: i32, %arg2: i32) -> (i32, i32) {
    %c0_i32 = arith.constant 0 : i32
    %c0_i32_0 = arith.constant 0 : i32
    return %c0_i32, %arg1 : i32, i32
  }
  func.func @transform_3(%arg0: i32, %arg1: i32, %arg2: i32) -> (i32, i32) {
    %c0_i32 = arith.constant 0 : i32
    %c0_i32_0 = arith.constant 0 : i32
    return %c0_i32, %arg1 : i32, i32
  }
  func.func @transform_4(%arg0: i32, %arg1: i32, %arg2: i32) -> (i32, i32) {
    %c0_i32 = arith.constant 0 : i32
    return %arg0, %arg1 : i32, i32
  }
}

module attributes {stable_mosaic.version = 11 : i64} {
  func.func @_fused_matmul_kernel(%arg0: i32, %arg1: i32, %arg2: i32, %arg3: memref<128x256xbf16, #tpu.memory_space<vmem>>, %arg4: memref<256x128xbf16, #tpu.memory_space<vmem>>, %arg5: memref<1x128xf32, #tpu.memory_space<vmem>>, %arg6: memref<1x128xf32, #tpu.memory_space<vmem>>, %arg7: memref<128x128xf32, #tpu.memory_space<vmem>>, %arg8: memref<128x128xf32, #tpu.memory_space<vmem>>) attributes {dimension_semantics = [#tpu.dimension_semantics<parallel>, #tpu.dimension_semantics<parallel>, #tpu.dimension_semantics<arbitrary>], iteration_bounds = array<i64: 1, 1, 1>, scalar_prefetch = 0 : i64, scratch_operands = 1 : i64, tpu.core_type = #tpu.core_type<tc>, window_params = [{transform_indices = @transform_0, window_bounds = array<i64: 128, 256>}, {transform_indices = @transform_1, window_bounds = array<i64: 256, 128>}, {transform_indices = @transform_2, window_bounds = array<i64: 1, 128>}, {transform_indices = @transform_3, window_bounds = array<i64: 1, 128>}, {transform_indices = @transform_4, window_bounds = array<i64: 128, 128>}]} {
    %c0_i32 = arith.constant 0 : i32
    %0 = arith.cmpi eq, %arg2, %c0_i32 : i32
    %1 = arith.extui %0 : i1 to i32
    %c0_i32_0 = arith.constant 0 : i32
    %2 = arith.cmpi ne, %1, %c0_i32_0 : i32
    scf.if %2 {
      %cst_10 = arith.constant 0.000000e+00 : f32
      %12 = vector.broadcast %cst_10 : f32 to vector<128x128xf32>
      %c0_11 = arith.constant 0 : index
      %c0_12 = arith.constant 0 : index
      %13 = vector.load %arg8[%c0_11, %c0_12] : memref<128x128xf32, #tpu.memory_space<vmem>>, vector<128x128xf32>
      tpu.vector_store %arg8[%c0_11, %c0_12], %12 {strides = array<i32>} : memref<128x128xf32, #tpu.memory_space<vmem>>, vector<128x128xf32>,
    } else {
    }
    %c0 = arith.constant 0 : index
    %c0_1 = arith.constant 0 : index
    %3 = vector.load %arg8[%c0, %c0_1] : memref<128x128xf32, #tpu.memory_space<vmem>>, vector<128x128xf32>
    %c0_2 = arith.constant 0 : index
    %c0_3 = arith.constant 0 : index
    %4 = vector.load %arg3[%c0_2, %c0_3] : memref<128x256xbf16, #tpu.memory_space<vmem>>, vector<128x256xbf16>
    %c0_4 = arith.constant 0 : index
    %c0_5 = arith.constant 0 : index
    %5 = vector.load %arg4[%c0_4, %c0_5] : memref<256x128xbf16, #tpu.memory_space<vmem>>, vector<256x128xbf16>
    %cst = arith.constant dense<0.000000e+00> : vector<128x128xf32>
    %6 = tpu.matmul %4, %5, %cst {dimension_numbers = #tpu.dot_dimension_numbers<[1], [0], [0], [1], [0, 0, 1, 1], [], []>} : vector<128x256xbf16>, vector<256x128xbf16>, vector<128x128xf32> -> vector<128x128xf32>
    %7 = arith.addf %3, %6 : vector<128x128xf32>
    %c0_6 = arith.constant 0 : index
    %c0_7 = arith.constant 0 : index
    %8 = vector.load %arg8[%c0_6, %c0_7] : memref<128x128xf32, #tpu.memory_space<vmem>>, vector<128x128xf32>
    tpu.vector_store %arg8[%c0_6, %c0_7], %7 {strides = array<i32>} : memref<128x128xf32, #tpu.memory_space<vmem>>, vector<128x128xf32>,
    %c0_i32_8 = arith.constant 0 : i32
    %9 = arith.cmpi eq, %arg2, %c0_i32_8 : i32
    %10 = arith.extui %9 : i1 to i32
    %c0_i32_9 = arith.constant 0 : i32
    %11 = arith.cmpi ne, %10, %c0_i32_9 : i32
    scf.if %11 {
      %c0_10 = arith.constant 0 : index
      %c0_11 = arith.constant 0 : index
      %12 = vector.load %arg8[%c0_10, %c0_11] : memref<128x128xf32, #tpu.memory_space<vmem>>, vector<128x128xf32>
      %c0_12 = arith.constant 0 : index
      %c0_13 = arith.constant 0 : index
      %13 = vector.load %arg5[%c0_12, %c0_13] : memref<1x128xf32, #tpu.memory_space<vmem>>, vector<1x128xf32>
      %c0_14 = arith.constant 0 : index
      %c0_15 = arith.constant 0 : index
      %14 = vector.load %arg6[%c0_14, %c0_15] : memref<1x128xf32, #tpu.memory_space<vmem>>, vector<1x128xf32>
      %15 = vector.broadcast %13 : vector<1x128xf32> to vector<128x128xf32>
      %16 = arith.mulf %12, %15 : vector<128x128xf32>
      %17 = vector.broadcast %14 : vector<1x128xf32> to vector<128x128xf32>
      %18 = arith.addf %16, %17 : vector<128x128xf32>
      %c0_16 = arith.constant 0 : index
      %c0_17 = arith.constant 0 : index
      %19 = vector.load %arg7[%c0_16, %c0_17] : memref<128x128xf32, #tpu.memory_space<vmem>>, vector<128x128xf32>
      tpu.vector_store %arg7[%c0_16, %c0_17], %18 {strides = array<i32>} : memref<128x128xf32, #tpu.memory_space<vmem>>, vector<128x128xf32>,
    } else {
    }
    return
  }
  func.func @transform_0(%arg0: i32, %arg1: i32, %arg2: i32) -> (i32, i32) {
    %c0_i32 = arith.constant 0 : i32
    return %arg0, %arg2 : i32, i32
  }
  func.func @transform_1(%arg0: i32, %arg1: i32, %arg2: i32) -> (i32, i32) {
    %c0_i32 = arith.constant 0 : i32
    return %arg2, %arg1 : i32, i32
  }
  func.func @transform_2(%arg0: i32, %arg1: i32, %arg2: i32) -> (i32, i32) {
    %c0_i32 = arith.constant 0 : i32
    %c0_i32_0 = arith.constant 0 : i32
    return %c0_i32, %arg1 : i32, i32
  }
  func.func @transform_3(%arg0: i32, %arg1: i32, %arg2: i32) -> (i32, i32) {
    %c0_i32 = arith.constant 0 : i32
    %c0_i32_0 = arith.constant 0 : i32
    return %c0_i32, %arg1 : i32, i32
  }
  func.func @transform_4(%arg0: i32, %arg1: i32, %arg2: i32) -> (i32, i32) {
    %c0_i32 = arith.constant 0 : i32
    return %arg0, %arg1 : i32, i32
  }
}

</mosaic_0001>

<llo_original>
// kernel: _lambda_.23
$region0: #{_lambda_.23}
  #allocation0 [shape = 'u32[]', space=smem, size = 0x4, offset = 0x4, fixed_abs, tag = 'smem constant byte address 0x4 - core index']
  #allocation1 [shape = 'u32[144,128]{1,0:T(1,128)}', space=vmem, size = 0x12000, scoped, tag = 'internal scratch']
  #allocation2 [shape = 'f32[256,128]{1,0:T(8,128)}', space=vmem, size = 0x20000, scoped, tag = 'scratch operand']
  %s0 = inlined_call_operand.vmem [shape: bf16[512,256], index: 0, kind: input, shape index: {}]
  %s1 = inlined_call_operand.vmem [shape: bf16[256,128], index: 1, kind: input, shape index: {}]
  %s2 = inlined_call_operand.vmem [shape: f32[1,128], index: 2, kind: input, shape index: {}]
  %s3 = inlined_call_operand.vmem [shape: f32[1,128], index: 3, kind: input, shape index: {}]
  %s4 = inlined_call_operand.vmem [shape: f32[512,128], index: 4, kind: output, shape index: {}]
  %s5 = sld [smem:[#allocation0]]
  $region98: #{_lambda_.23} parent=0
    _
  %s7 = ssub.s32 1, %s5
  %s8 = scalar_select 0, %s7, %s5
  $region1: #{_lambda_.23} parent=0
    #allocation3 [shape = 'u8[131072]{0}', space=vmem, size = 0x20000, scoped, tag = 'input window, operand 0']
    loop: start=0, step=1, limit=6
    $region2: #{_lambda_.23} parent=1 // loop_pre_header
      _
    $region3: #{_lambda_.23} parent=1 // loop_header
      %s10 = sphi 0, %s14
      %p11 = scmp.ge.s32.totalorder %s10, 6
      %s17 = sphi 0, %s36
      %s18 = sphi 0, %s32
      %s19 = sphi 0, %s28
      %s20 = sphi 0, %s17
      %s21 = sphi 0, %s18
      %s22 = sphi 0, %s19
      %s23 = sphi 0, %s20
      %s24 = sphi 0, %s21
      %s25 = sphi 0, %s22
      %s41 = sphi 0, %s43
      %s44 = sphi 0, %s41
      %s45 = sphi 0, %s44
      %s61 = sphi 0, %s45
      %s69 = sphi 0, %s71
      %s72 = sphi 0, %s69
      %s73 = sphi 0, %s72
      %s89 = sphi 0, %s73
      %s95 = sphi 0, %s97
      %s98 = sphi 0, %s95
      %s99 = sphi 0, %s98
      %s115 = sphi 0, %s99
      %s121 = sphi 0, %s123
      %s124 = sphi 0, %s121
      %s125 = sphi 0, %s124
      %s141 = sphi 0, %s125
      %s149 = sphi 0, %s151
      %s152 = sphi 0, %s149
      %s153 = sphi 0, %s152
      %s169 = sphi 0, %s153
    $region4: #{_lambda_.23} parent=1 // loop_header_branch
      %13 = sbr.rel (%p11) target = $region8
    $region5: #{_lambda_.23} parent=1 // loop_body
      %s15 = ssub.s32 %s10, 1
      %s16 = ssub.s32 %s10, 2
      %s26 = sadd.s32 1, %s19
      %p27 = scmp.ge.s32.totalorder %s26, 2
      %s28 = scalar_select %p27, 0, %s26
      %s29 = sadd.s32 1, %s18
      %s30 = scalar_select %p27, %s29, %s18
      %p31 = scmp.ge.s32.totalorder %s30, 1
      %s32 = scalar_select %p31, 0, %s30
      %s33 = sadd.s32 1, %s17
      %s34 = scalar_select %p31, %s33, %s17
      %p35 = scmp.ge.s32.totalorder %s34, 2
      %s36 = scalar_select %p35, 0, %s34
      %s37 = ssub.s32 %s17, %s36
      %s38 = ssub.s32 %s19, %s28
      %s39 = sor.u32 %s37, %s38
      %p40 = scmp.eq.s32.totalorder %s39, 0
      %s42 = sadd.s32 %s41, 1
      %s43 = scalar_select %p40, %s41, %s42
      %p46 = pneg %p40
      %p47 = scmp.eq.s32.totalorder %s10, 3
      %p48 = por %p46, %p47
      %p49 = scmp.ne.s32.totalorder %s41, %s44
      %p50 = scmp.eq.s32.totalorder %s10, 0
      %p51 = por %p49, %p50
      %p52 = scmp.ne.s32.totalorder %s41, %s44
      %p53 = scmp.eq.s32.totalorder %s15, 3
      %p54 = por %p52, %p53
      %p55 = scmp.ne.s32.totalorder %s44, %s45
      %p56 = scmp.eq.s32.totalorder %s15, 0
      %p57 = por %p55, %p56
      %p58 = scmp.ne.s32.totalorder %s44, %s45
      %p59 = scmp.eq.s32.totalorder %s16, 3
      %p60 = por %p58, %p59
      %p62 = scmp.ne.s32.totalorder %s45, %s61
      %p63 = scmp.eq.s32.totalorder %s16, 0
      %p64 = por %p62, %p63
      %s65 = ssub.s32 %s19, %s28
      %s66 = ssub.s32 %s18, %s32
      %s67 = sor.u32 %s65, %s66
      %p68 = scmp.eq.s32.totalorder %s67, 0
      %s70 = sadd.s32 %s69, 1
      %s71 = scalar_select %p68, %s69, %s70
      %p74 = pneg %p68
      %p75 = scmp.eq.s32.totalorder %s10, 3
      %p76 = por %p74, %p75
      %p77 = scmp.ne.s32.totalorder %s69, %s72
      %p78 = scmp.eq.s32.totalorder %s10, 0
      %p79 = por %p77, %p78
      %p80 = scmp.ne.s32.totalorder %s69, %s72
      %p81 = scmp.eq.s32.totalorder %s15, 3
      %p82 = por %p80, %p81
      %p83 = scmp.ne.s32.totalorder %s72, %s73
      %p84 = scmp.eq.s32.totalorder %s15, 0
      %p85 = por %p83, %p84
      %p86 = scmp.ne.s32.totalorder %s72, %s73
      %p87 = scmp.eq.s32.totalorder %s16, 3
      %p88 = por %p86, %p87
      %p90 = scmp.ne.s32.totalorder %s73, %s89
      %p91 = scmp.eq.s32.totalorder %s16, 0
      %p92 = por %p90, %p91
      %s93 = ssub.s32 %s18, %s32
      %p94 = scmp.eq.s32.totalorder %s93, 0
      %s96 = sadd.s32 %s95, 1
      %s97 = scalar_select %p94, %s95, %s96
      %p100 = pneg %p94
      %p101 = scmp.eq.s32.totalorder %s10, 3
      %p102 = por %p100, %p101
      %p103 = scmp.ne.s32.totalorder %s95, %s98
      %p104 = scmp.eq.s32.totalorder %s10, 0
      %p105 = por %p103, %p104
      %p106 = scmp.ne.s32.totalorder %s95, %s98
      %p107 = scmp.eq.s32.totalorder %s15, 3
      %p108 = por %p106, %p107
      %p109 = scmp.ne.s32.totalorder %s98, %s99
      %p110 = scmp.eq.s32.totalorder %s15, 0
      %p111 = por %p109, %p110
      %p112 = scmp.ne.s32.totalorder %s98, %s99
      %p113 = scmp.eq.s32.totalorder %s16, 3
      %p114 = por %p112, %p113
      %p116 = scmp.ne.s32.totalorder %s99, %s115
      %p117 = scmp.eq.s32.totalorder %s16, 0
      %p118 = por %p116, %p117
      %s119 = ssub.s32 %s18, %s32
      %p120 = scmp.eq.s32.totalorder %s119, 0
      %s122 = sadd.s32 %s121, 1
      %s123 = scalar_select %p120, %s121, %s122
      %p126 = pneg %p120
      %p127 = scmp.eq.s32.totalorder %s10, 3
      %p128 = por %p126, %p127
      %p129 = scmp.ne.s32.totalorder %s121, %s124
      %p130 = scmp.eq.s32.totalorder %s10, 0
      %p131 = por %p129, %p130
      %p132 = scmp.ne.s32.totalorder %s121, %s124
      %p133 = scmp.eq.s32.totalorder %s15, 3
      %p134 = por %p132, %p133
      %p135 = scmp.ne.s32.totalorder %s124, %s125
      %p136 = scmp.eq.s32.totalorder %s15, 0
      %p137 = por %p135, %p136
      %p138 = scmp.ne.s32.totalorder %s124, %s125
      %p139 = scmp.eq.s32.totalorder %s16, 3
      %p140 = por %p138, %p139
      %p142 = scmp.ne.s32.totalorder %s125, %s141
      %p143 = scmp.eq.s32.totalorder %s16, 0
      %p144 = por %p142, %p143
      %s145 = ssub.s32 %s17, %s36
      %s146 = ssub.s32 %s18, %s32
      %s147 = sor.u32 %s145, %s146
      %p148 = scmp.eq.s32.totalorder %s147, 0
      %s150 = sadd.s32 %s149, 1
      %s151 = scalar_select %p148, %s149, %s150
      %p154 = pneg %p148
      %p155 = scmp.eq.s32.totalorder %s10, 3
      %p156 = por %p154, %p155
      %p157 = scmp.ne.s32.totalorder %s149, %s152
      %p158 = scmp.eq.s32.totalorder %s10, 0
      %p159 = por %p157, %p158
      %p160 = scmp.ne.s32.totalorder %s149, %s152
      %p161 = scmp.eq.s32.totalorder %s15, 3
      %p162 = por %p160, %p161
      %p163 = scmp.ne.s32.totalorder %s152, %s153
      %p164 = scmp.eq.s32.totalorder %s15, 0
      %p165 = por %p163, %p164
      %p166 = scmp.ne.s32.totalorder %s152, %s153
      %p167 = scmp.eq.s32.totalorder %s16, 3
      %p168 = por %p166, %p167
      %p170 = scmp.ne.s32.totalorder %s153, %s169
      %p171 = scmp.eq.s32.totalorder %s16, 0
      %p172 = por %p170, %p171
      %p173 = scmp.le.s32.totalorder 1, %s10
      %p174 = scmp.lt.s32.totalorder %s10, 5
      %p175 = pnand %p173, %p174
      %p176 = pneg %p175
      // Predicated region
      $region9: #{_lambda_.23} parent=5 // pred_check
        _
      $region10: #{_lambda_.23} parent=5 // pred_check_branch
        %178 = sbr.rel (%p175) target = $region12
      $region11: #{_lambda_.23} parent=5 // pred_region
        %s179 = ssub.s32 %s10, 1
        // Predicated region
        $region13: #{_lambda_.23} parent=11 // pred_check
          %p180 = pneg %p111
        $region14: #{_lambda_.23} parent=11 // pred_check_branch
          %182 = sbr.rel (%p180) target = $region16
        $region15: #{_lambda_.23} parent=11 // pred_region
          %p183 = scmp.lt.s32.totalorder %s21, 0
          %s184 = scalar_select %p183, %s21, 0
          %s185 = scalar_lea.vmem %s2, %s184
        $region16: #{_lambda_.23} parent=11 // pred_fallthru
          _
        // Predicated region
        $region17: #{_lambda_.23} parent=11 // pred_check
          %p186 = pneg %p137
        $region18: #{_lambda_.23} parent=11 // pred_check_branch
          %188 = sbr.rel (%p186) target = $region20
        $region19: #{_lambda_.23} parent=11 // pred_region
          %p189 = scmp.lt.s32.totalorder %s21, 0
          %s190 = scalar_select %p189, %s21, 0
          %s191 = scalar_lea.vmem %s3, %s190
        $region20: #{_lambda_.23} parent=11 // pred_fallthru
          _
      $region12: #{_lambda_.23} parent=5 // pred_fallthru
        _
      %p192 = scmp.lt.s32.totalorder %s10, 4
      // Predicated region
      $region21: #{_lambda_.23} parent=5 // pred_check
        %p193 = pneg %p192
      $region22: #{_lambda_.23} parent=5 // pred_check_branch
        %195 = sbr.rel (%p193) target = $region24
      $region23: #{_lambda_.23} parent=5 // pred_region
        // Predicated region
        $region25: #{_lambda_.23} parent=23 // pred_check
          %p196 = pneg %p51
        $region26: #{_lambda_.23} parent=23 // pred_check_branch
          %198 = sbr.rel (%p196) target = $region28
        $region27: #{_lambda_.23} parent=23 // pred_region
          %s199 = sand.u32 %s41, 1
          %s200 = sand.u32 %s41, 1
          %s201 = smul.addr %s200, 128
          %s202 = scalar_lea.vmem [#allocation3], %s201
          %s203 = smul.u32 32, %s17
          %s204 = smul.addr %s203, 2
          %s205 = sadd.s32 %s19, %s204
          %s206 = smul.addr %s205, 4
          %s207 = scalar_lea.vmem %s0, %s206
          // Predicated region
          $region29: #{_lambda_.23} parent=27 // pred_check
            _
          $region30: #{_lambda_.23} parent=27 // pred_check_branch
            %209 = sbr.rel (0) target = $region32
          $region31: #{_lambda_.23} parent=27 // pred_region
            // Predicated region
            $region33: #{_lambda_.23} parent=31 // pred_check
              _
            $region34: #{_lambda_.23} parent=31 // pred_check_branch
              %211 = sbr.rel target = $region36
            $region35: #{_lambda_.23} parent=31 // pred_region
              // Predicated region
              $region48: #{_lambda_.23} parent=35 // pred_check
                _
              $region49: #{_lambda_.23} parent=35 // pred_check_branch
                %288 = sbr.rel (0) target = $region51
              $region50: #{_lambda_.23} parent=35 // pred_region
                loop: start=0, step=1, limit=1
                $region52: #{_lambda_.23} parent=50 // loop_pre_header
                  _
                $region53: #{_lambda_.23} parent=50 // loop_header
                  %s290 = sphi 0, %s294
                  %p291 = scmp.ge.s32.totalorder %s290, 1
                  %s295 = sphi %s207, %s207
                  %s296 = sphi %s202, %s202
                $region54: #{_lambda_.23} parent=50 // loop_header_branch
                  %293 = sbr.rel (%p291) target = $region58
                $region55: #{_lambda_.23} parent=50 // loop_body
                  _
                $region56: #{_lambda_.23} parent=50 // loop_footer
                  %s294 = sadd.s32 1, %s290
                $region57: #{_lambda_.23} parent=50 // loop_footer_branch
                  %289 = sbr.rel target = $region53
                $region58: #{_lambda_.23} parent=50 // loop_exit
                  _
                loop: start=0, step=1, limit=1
                $region59: #{_lambda_.23} parent=50 // loop_pre_header
                  _
                $region60: #{_lambda_.23} parent=50 // loop_header
                  %s299 = sphi 0, %s303
                  %p300 = scmp.ge.s32.totalorder %s299, 1
                  %s304 = sphi %s207, %s207
                  %s305 = sphi %s202, %s202
                $region61: #{_lambda_.23} parent=50 // loop_header_branch
                  %302 = sbr.rel (%p300) target = $region65
                $region62: #{_lambda_.23} parent=50 // loop_body
                  %v306 = vld [vmem:[%s304] sm:$0xf]
                  %307 = vst [vmem:[%s305] sm:$0xf] %v306
                  %v308 = vld [vmem:[%s304 + $0x8] sm:$0xf]
                  %309 = vst [vmem:[%s305 + $0x4] sm:$0xf] %v308
                  %v310 = vld [vmem:[%s304 + $0x10] sm:$0xf]
                  %311 = vst [vmem:[%s305 + $0x8] sm:$0xf] %v310
                  %v312 = vld [vmem:[%s304 + $0x18] sm:$0xf]
                  %313 = vst [vmem:[%s305 + $0xc] sm:$0xf] %v312
                  %v314 = vld [vmem:[%s304 + $0x20] sm:$0xf]
                  %315 = vst [vmem:[%s305 + $0x10] sm:$0xf] %v314
                  %v316 = vld [vmem:[%s304 + $0x28] sm:$0xf]
                  %317 = vst [vmem:[%s305 + $0x14] sm:$0xf] %v316
                  %v318 = vld [vmem:[%s304 + $0x30] sm:$0xf]
                  %319 = vst [vmem:[%s305 + $0x18] sm:$0xf] %v318
                  %v320 = vld [vmem:[%s304 + $0x38] sm:$0xf]
                  %321 = vst [vmem:[%s305 + $0x1c] sm:$0xf] %v320
                  %v322 = vld [vmem:[%s304 + $0x40] sm:$0xf]
                  %323 = vst [vmem:[%s305 + $0x20] sm:$0xf] %v322
                  %v324 = vld [vmem:[%s304 + $0x48] sm:$0xf]
                  %325 = vst [vmem:[%s305 + $0x24] sm:$0xf] %v324
                  %v326 = vld [vmem:[%s304 + $0x50] sm:$0xf]
                  %327 = vst [vmem:[%s305 + $0x28] sm:$0xf] %v326
                  %v328 = vld [vmem:[%s304 + $0x58] sm:$0xf]
                  %329 = vst [vmem:[%s305 + $0x2c] sm:$0xf] %v328
                  %v330 = vld [vmem:[%s304 + $0x60] sm:$0xf]
                  %331 = vst [vmem:[%s305 + $0x30] sm:$0xf] %v330
                  %v332 = vld [vmem:[%s304 + $0x68] sm:$0xf]
                  %333 = vst [vmem:[%s305 + $0x34] sm:$0xf] %v332
                  %v334 = vld [vmem:[%s304 + $0x70] sm:$0xf]
                  %335 = vst [vmem:[%s305 + $0x38] sm:$0xf] %v334
                  %v336 = vld [vmem:[%s304 + $0x78] sm:$0xf]
                  %337 = vst [vmem:[%s305 + $0x3c] sm:$0xf] %v336
                  %v338 = vld [vmem:[%s304 + $0x80] sm:$0xf]
                  %339 = vst [vmem:[%s305 + $0x40] sm:$0xf] %v338
                  %v340 = vld [vmem:[%s304 + $0x88] sm:$0xf]
                  %341 = vst [vmem:[%s305 + $0x44] sm:$0xf] %v340
                  %v342 = vld [vmem:[%s304 + $0x90] sm:$0xf]
                  %343 = vst [vmem:[%s305 + $0x48] sm:$0xf] %v342
                  %v344 = vld [vmem:[%s304 + $0x98] sm:$0xf]
                  %345 = vst [vmem:[%s305 + $0x4c] sm:$0xf] %v344
                  %v346 = vld [vmem:[%s304 + $0xa0] sm:$0xf]
                  %347 = vst [vmem:[%s305 + $0x50] sm:$0xf] %v346
                  %v348 = vld [vmem:[%s304 + $0xa8] sm:$0xf]
                  %349 = vst [vmem:[%s305 + $0x54] sm:$0xf] %v348
                  %v350 = vld [vmem:[%s304 + $0xb0] sm:$0xf]
                  %351 = vst [vmem:[%s305 + $0x58] sm:$0xf] %v350
                  %v352 = vld [vmem:[%s304 + $0xb8] sm:$0xf]
                  %353 = vst [vmem:[%s305 + $0x5c] sm:$0xf] %v352
                  %v354 = vld [vmem:[%s304 + $0xc0] sm:$0xf]
                  %355 = vst [vmem:[%s305 + $0x60] sm:$0xf] %v354
                  %v356 = vld [vmem:[%s304 + $0xc8] sm:$0xf]
                  %357 = vst [vmem:[%s305 + $0x64] sm:$0xf] %v356
                  %v358 = vld [vmem:[%s304 + $0xd0] sm:$0xf]
                  %359 = vst [vmem:[%s305 + $0x68] sm:$0xf] %v358
                  %v360 = vld [vmem:[%s304 + $0xd8] sm:$0xf]
                  %361 = vst [vmem:[%s305 + $0x6c] sm:$0xf] %v360
                  %v362 = vld [vmem:[%s304 + $0xe0] sm:$0xf]
                  %363 = vst [vmem:[%s305 + $0x70] sm:$0xf] %v362
                  %v364 = vld [vmem:[%s304 + $0xe8] sm:$0xf]
                  %365 = vst [vmem:[%s305 + $0x74] sm:$0xf] %v364
                  %v366 = vld [vmem:[%s304 + $0xf0] sm:$0xf]
                  %367 = vst [vmem:[%s305 + $0x78] sm:$0xf] %v366
                  %v368 = vld [vmem:[%s304 + $0xf8] sm:$0xf]
                  %369 = vst [vmem:[%s305 + $0x7c] sm:$0xf] %v368
                $region63: #{_lambda_.23} parent=50 // loop_footer
                  %s303 = sadd.s32 1, %s299
                $region64: #{_lambda_.23} parent=50 // loop_footer_branch
                  %298 = sbr.rel target = $region60
                $region65: #{_lambda_.23} parent=50 // loop_exit
                  _
              $region51: #{_lambda_.23} parent=35 // pred_fallthru
                _
            $region36: #{_lambda_.23} parent=31 // pred_fallthru
              _
            // Predicated region
            $region37: #{_lambda_.23} parent=31 // pred_check
              _
            $region38: #{_lambda_.23} parent=31 // pred_check_branch
              %213 = sbr.rel (0) target = $region40
            $region39: #{_lambda_.23} parent=31 // pred_region
              loop: start=0, step=1, limit=1
              $region41: #{_lambda_.23} parent=39 // loop_pre_header
                _
              $region42: #{_lambda_.23} parent=39 // loop_header
                %s216 = sphi 0, %s220
                %p217 = scmp.ge.s32.totalorder %s216, 1
                %s221 = sphi %s207, %s207
                %s222 = sphi %s202, %s202
              $region43: #{_lambda_.23} parent=39 // loop_header_branch
                %219 = sbr.rel (%p217) target = $region47
              $region44: #{_lambda_.23} parent=39 // loop_body
                %v223 = vld [vmem:[%s221] sm:$0xf]
                %224 = vst [vmem:[%s222] sm:$0xf] %v223
                %v225 = vld [vmem:[%s221 + $0x8] sm:$0xf]
                %226 = vst [vmem:[%s222 + $0x4] sm:$0xf] %v225
                %v227 = vld [vmem:[%s221 + $0x10] sm:$0xf]
                %228 = vst [vmem:[%s222 + $0x8] sm:$0xf] %v227
                %v229 = vld [vmem:[%s221 + $0x18] sm:$0xf]
                %230 = vst [vmem:[%s222 + $0xc] sm:$0xf] %v229
                %v231 = vld [vmem:[%s221 + $0x20] sm:$0xf]
                %232 = vst [vmem:[%s222 + $0x10] sm:$0xf] %v231
                %v233 = vld [vmem:[%s221 + $0x28] sm:$0xf]
                %234 = vst [vmem:[%s222 + $0x14] sm:$0xf] %v233
                %v235 = vld [vmem:[%s221 + $0x30] sm:$0xf]
                %236 = vst [vmem:[%s222 + $0x18] sm:$0xf] %v235
                %v237 = vld [vmem:[%s221 + $0x38] sm:$0xf]
                %238 = vst [vmem:[%s222 + $0x1c] sm:$0xf] %v237
                %v239 = vld [vmem:[%s221 + $0x40] sm:$0xf]
                %240 = vst [vmem:[%s222 + $0x20] sm:$0xf] %v239
                %v241 = vld [vmem:[%s221 + $0x48] sm:$0xf]
                %242 = vst [vmem:[%s222 + $0x24] sm:$0xf] %v241
                %v243 = vld [vmem:[%s221 + $0x50] sm:$0xf]
                %244 = vst [vmem:[%s222 + $0x28] sm:$0xf] %v243
                %v245 = vld [vmem:[%s221 + $0x58] sm:$0xf]
                %246 = vst [vmem:[%s222 + $0x2c] sm:$0xf] %v245
                %v247 = vld [vmem:[%s221 + $0x60] sm:$0xf]
                %248 = vst [vmem:[%s222 + $0x30] sm:$0xf] %v247
                %v249 = vld [vmem:[%s221 + $0x68] sm:$0xf]
                %250 = vst [vmem:[%s222 + $0x34] sm:$0xf] %v249
                %v251 = vld [vmem:[%s221 + $0x70] sm:$0xf]
                %252 = vst [vmem:[%s222 + $0x38] sm:$0xf] %v251
                %v253 = vld [vmem:[%s221 + $0x78] sm:$0xf]
                %254 = vst [vmem:[%s222 + $0x3c] sm:$0xf] %v253
                %v255 = vld [vmem:[%s221 + $0x80] sm:$0xf]
                %256 = vst [vmem:[%s222 + $0x40] sm:$0xf] %v255
                %v257 = vld [vmem:[%s221 + $0x88] sm:$0xf]
                %258 = vst [vmem:[%s222 + $0x44] sm:$0xf] %v257
                %v259 = vld [vmem:[%s221 + $0x90] sm:$0xf]
                %260 = vst [vmem:[%s222 + $0x48] sm:$0xf] %v259
                %v261 = vld [vmem:[%s221 + $0x98] sm:$0xf]
                %262 = vst [vmem:[%s222 + $0x4c] sm:$0xf] %v261
                %v263 = vld [vmem:[%s221 + $0xa0] sm:$0xf]
                %264 = vst [vmem:[%s222 + $0x50] sm:$0xf] %v263
                %v265 = vld [vmem:[%s221 + $0xa8] sm:$0xf]
                %266 = vst [vmem:[%s222 + $0x54] sm:$0xf] %v265
                %v267 = vld [vmem:[%s221 + $0xb0] sm:$0xf]
                %268 = vst [vmem:[%s222 + $0x58] sm:$0xf] %v267
                %v269 = vld [vmem:[%s221 + $0xb8] sm:$0xf]
                %270 = vst [vmem:[%s222 + $0x5c] sm:$0xf] %v269
                %v271 = vld [vmem:[%s221 + $0xc0] sm:$0xf]
                %272 = vst [vmem:[%s222 + $0x60] sm:$0xf] %v271
                %v273 = vld [vmem:[%s221 + $0xc8] sm:$0xf]
                %274 = vst [vmem:[%s222 + $0x64] sm:$0xf] %v273
                %v275 = vld [vmem:[%s221 + $0xd0] sm:$0xf]
                %276 = vst [vmem:[%s222 + $0x68] sm:$0xf] %v275
                %v277 = vld [vmem:[%s221 + $0xd8] sm:$0xf]
                %278 = vst [vmem:[%s222 + $0x6c] sm:$0xf] %v277
                %v279 = vld [vmem:[%s221 + $0xe0] sm:$0xf]
                %280 = vst [vmem:[%s222 + $0x70] sm:$0xf] %v279
                %v281 = vld [vmem:[%s221 + $0xe8] sm:$0xf]
                %282 = vst [vmem:[%s222 + $0x74] sm:$0xf] %v281
                %v283 = vld [vmem:[%s221 + $0xf0] sm:$0xf]
                %284 = vst [vmem:[%s222 + $0x78] sm:$0xf] %v283
                %v285 = vld [vmem:[%s221 + $0xf8] sm:$0xf]
                %286 = vst [vmem:[%s222 + $0x7c] sm:$0xf] %v285
              $region45: #{_lambda_.23} parent=39 // loop_footer
                %s220 = sadd.s32 1, %s216
              $region46: #{_lambda_.23} parent=39 // loop_footer_branch
                %215 = sbr.rel target = $region42
              $region47: #{_lambda_.23} parent=39 // loop_exit
                _
            $region40: #{_lambda_.23} parent=31 // pred_fallthru
              _
          $region32: #{_lambda_.23} parent=27 // pred_fallthru
            _
          %370 = vnop
        $region28: #{_lambda_.23} parent=23 // pred_fallthru
          _
        // Predicated region
        $region66: #{_lambda_.23} parent=23 // pred_check
          %p371 = pneg %p79
        $region67: #{_lambda_.23} parent=23 // pred_check_branch
          %373 = sbr.rel (%p371) target = $region69
        $region68: #{_lambda_.23} parent=23 // pred_region
          %s374 = smul.u32 16, %s19
          %p375 = scmp.lt.s32.totalorder %s374, 31
          %s376 = scalar_select %p375, %s374, 31
          %p377 = scmp.lt.s32.totalorder %s18, 0
          %s378 = scalar_select %p377, %s18, 0
          %s379 = sadd.s32 %s378, %s376
          %s380 = smul.addr %s379, 4
          %s381 = scalar_lea.vmem %s1, %s380
          %s382 = smul.u32 16, %s19
        $region69: #{_lambda_.23} parent=23 // pred_fallthru
          _
      $region24: #{_lambda_.23} parent=5 // pred_fallthru
        _
      %p383 = scmp.le.s32.totalorder 1, %s10
      %p384 = scmp.lt.s32.totalorder %s10, 5
      %p385 = pnand %p383, %p384
      %p386 = pneg %p385
      // Predicated region
      $region70: #{_lambda_.23} parent=5 // pred_check
        _
      $region71: #{_lambda_.23} parent=5 // pred_check_branch
        %388 = sbr.rel (%p385) target = $region73
      $region72: #{_lambda_.23} parent=5 // pred_region
        %s389 = ssub.s32 %s10, 1
        %s390 = sand.u32 %s44, 1
        %s391 = sand.u32 %s44, 1
        %s392 = smul.addr %s391, 128
        %s393 = scalar_lea.vmem [#allocation3], %s392
        // Predicated region
        $region74: #{_lambda_.23} parent=72 // pred_check
          %p394 = pneg %p57
        $region75: #{_lambda_.23} parent=72 // pred_check_branch
          %396 = sbr.rel (%p394) target = $region77
        $region76: #{_lambda_.23} parent=72 // pred_region
          _
        $region77: #{_lambda_.23} parent=72 // pred_fallthru
          _
        %s397 = sand.u32 %s44, 1
        %s398 = sand.u32 %s44, 1
        %s399 = smul.addr %s398, 128
        %s400 = scalar_lea.vmem [#allocation3], %s399
        %p401 = pneg %p57
        %p402 = pneg %p54
        %s403 = smul.u32 16, %s22
        %p404 = scmp.lt.s32.totalorder %s403, 31
        %s405 = scalar_select %p404, %s403, 31
        %p406 = scmp.lt.s32.totalorder %s21, 0
        %s407 = scalar_select %p406, %s21, 0
        %s408 = sadd.s32 %s407, %s405
        %s409 = smul.addr %s408, 4
        %s410 = scalar_lea.vmem %s1, %s409
        %p411 = pneg %p85
        %p412 = pneg %p82
        %p413 = scmp.lt.s32.totalorder %s21, 0
        %s414 = scalar_select %p413, %s21, 0
        %s415 = scalar_lea.vmem %s2, %s414
        %p416 = pneg %p111
        %p417 = pneg %p108
        %p418 = scmp.lt.s32.totalorder %s21, 0
        %s419 = scalar_select %p418, %s21, 0
        %s420 = scalar_lea.vmem %s3, %s419
        %p421 = pneg %p137
        %p422 = pneg %p134
        %p423 = pneg %p165
        %p424 = pneg %p162
        %s425 = smul.u32 32, %s20
        %p426 = scmp.lt.s32.totalorder %s425, 63
        %s427 = scalar_select %p426, %s425, 63
        %p428 = scmp.lt.s32.totalorder %s21, 0
        %s429 = scalar_select %p428, %s21, 0
        %s430 = sadd.s32 %s429, %s427
        %s431 = smul.addr %s430, 8
        %s432 = scalar_lea.vmem %s4, %s431
        %s433 = smul.u32 32, %s20
        %s434 = smul.u32 16, %s22
        %p435 = scmp.lt.s32.totalorder %s434, 31
        %s436 = scalar_select %p435, %s434, 31
        %p437 = scmp.lt.s32.totalorder %s21, 0
        %s438 = scalar_select %p437, %s21, 0
        %s439 = sadd.s32 %s438, %s436
        %s440 = smul.addr %s439, 4
        %s441 = scalar_lea.vmem %s1, %s440
        %s442 = smul.u32 16, %s22
        %p443 = scmp.lt.s32.totalorder %s21, 0
        %s444 = scalar_select %p443, %s21, 0
        %s445 = scalar_lea.vmem %s2, %s444
        %p446 = scmp.lt.s32.totalorder %s21, 0
        %s447 = scalar_select %p446, %s21, 0
        %s448 = scalar_lea.vmem %s3, %s447
        %s449 = smul.u32 32, %s20
        %p450 = scmp.lt.s32.totalorder %s449, 63
        %s451 = scalar_select %p450, %s449, 63
        %p452 = scmp.lt.s32.totalorder %s21, 0
        %s453 = scalar_select %p452, %s21, 0
        %s454 = sadd.s32 %s453, %s451
        %s455 = smul.addr %s454, 8
        %s456 = scalar_lea.vmem %s4, %s455
        %s457 = smul.u32 32, %s20
        %p459 = scmp.eq.s32.totalorder %s22, 0
        // Predicated region
        $region78: #{_lambda_.23} parent=72 // pred_check
          %p460 = pneg %p459
        $region79: #{_lambda_.23} parent=72 // pred_check_branch
          %462 = sbr.rel (%p460) target = $region81
        $region80: #{_lambda_.23} parent=72 // pred_region
          %463 = vst [vmem:[#allocation2] sm:$0xff] 0.0
          %464 = vst [vmem:[#allocation2 + $0x8] sm:$0xff] 0.0
          %465 = vst [vmem:[#allocation2 + $0x10] sm:$0xff] 0.0
          %466 = vst [vmem:[#allocation2 + $0x18] sm:$0xff] 0.0
          %467 = vst [vmem:[#allocation2 + $0x20] sm:$0xff] 0.0
          %468 = vst [vmem:[#allocation2 + $0x28] sm:$0xff] 0.0
          %469 = vst [vmem:[#allocation2 + $0x30] sm:$0xff] 0.0
          %470 = vst [vmem:[#allocation2 + $0x38] sm:$0xff] 0.0
          %471 = vst [vmem:[#allocation2 + $0x40] sm:$0xff] 0.0
          %472 = vst [vmem:[#allocation2 + $0x48] sm:$0xff] 0.0
          %473 = vst [vmem:[#allocation2 + $0x50] sm:$0xff] 0.0
          %474 = vst [vmem:[#allocation2 + $0x58] sm:$0xff] 0.0
          %475 = vst [vmem:[#allocation2 + $0x60] sm:$0xff] 0.0
          %476 = vst [vmem:[#allocation2 + $0x68] sm:$0xff] 0.0
          %477 = vst [vmem:[#allocation2 + $0x70] sm:$0xff] 0.0
          %478 = vst [vmem:[#allocation2 + $0x78] sm:$0xff] 0.0
          %479 = vst [vmem:[#allocation2 + $0x80] sm:$0xff] 0.0
          %480 = vst [vmem:[#allocation2 + $0x88] sm:$0xff] 0.0
          %481 = vst [vmem:[#allocation2 + $0x90] sm:$0xff] 0.0
          %482 = vst [vmem:[#allocation2 + $0x98] sm:$0xff] 0.0
          %483 = vst [vmem:[#allocation2 + $0xa0] sm:$0xff] 0.0
          %484 = vst [vmem:[#allocation2 + $0xa8] sm:$0xff] 0.0
          %485 = vst [vmem:[#allocation2 + $0xb0] sm:$0xff] 0.0
          %486 = vst [vmem:[#allocation2 + $0xb8] sm:$0xff] 0.0
          %487 = vst [vmem:[#allocation2 + $0xc0] sm:$0xff] 0.0
          %488 = vst [vmem:[#allocation2 + $0xc8] sm:$0xff] 0.0
          %489 = vst [vmem:[#allocation2 + $0xd0] sm:$0xff] 0.0
          %490 = vst [vmem:[#allocation2 + $0xd8] sm:$0xff] 0.0
          %491 = vst [vmem:[#allocation2 + $0xe0] sm:$0xff] 0.0
          %492 = vst [vmem:[#allocation2 + $0xe8] sm:$0xff] 0.0
          %493 = vst [vmem:[#allocation2 + $0xf0] sm:$0xff] 0.0
          %494 = vst [vmem:[#allocation2 + $0xf8] sm:$0xff] 0.0
        $region81: #{_lambda_.23} parent=72 // pred_fallthru
          _
        %v495 = vld [vmem:[#allocation2] sm:$0xff]
        %v496 = vld [vmem:[#allocation2 + $0x8] sm:$0xff]
        %v497 = vld [vmem:[#allocation2 + $0x10] sm:$0xff]
        %v498 = vld [vmem:[#allocation2 + $0x18] sm:$0xff]
        %v499 = vld [vmem:[#allocation2 + $0x20] sm:$0xff]
        %v500 = vld [vmem:[#allocation2 + $0x28] sm:$0xff]
        %v501 = vld [vmem:[#allocation2 + $0x30] sm:$0xff]
        %v502 = vld [vmem:[#allocation2 + $0x38] sm:$0xff]
        %v503 = vld [vmem:[#allocation2 + $0x40] sm:$0xff]
        %v504 = vld [vmem:[#allocation2 + $0x48] sm:$0xff]
        %v505 = vld [vmem:[#allocation2 + $0x50] sm:$0xff]
        %v506 = vld [vmem:[#allocation2 + $0x58] sm:$0xff]
        %v507 = vld [vmem:[#allocation2 + $0x60] sm:$0xff]
        %v508 = vld [vmem:[#allocation2 + $0x68] sm:$0xff]
        %v509 = vld [vmem:[#allocation2 + $0x70] sm:$0xff]
        %v510 = vld [vmem:[#allocation2 + $0x78] sm:$0xff]
        %v511 = vld [vmem:[#allocation2 + $0x80] sm:$0xff]
        %v512 = vld [vmem:[#allocation2 + $0x88] sm:$0xff]
        %v513 = vld [vmem:[#allocation2 + $0x90] sm:$0xff]
        %v514 = vld [vmem:[#allocation2 + $0x98] sm:$0xff]
        %v515 = vld [vmem:[#allocation2 + $0xa0] sm:$0xff]
        %v516 = vld [vmem:[#allocation2 + $0xa8] sm:$0xff]
        %v517 = vld [vmem:[#allocation2 + $0xb0] sm:$0xff]
        %v518 = vld [vmem:[#allocation2 + $0xb8] sm:$0xff]
        %v519 = vld [vmem:[#allocation2 + $0xc0] sm:$0xff]
        %v520 = vld [vmem:[#allocation2 + $0xc8] sm:$0xff]
        %v521 = vld [vmem:[#allocation2 + $0xd0] sm:$0xff]
        %v522 = vld [vmem:[#allocation2 + $0xd8] sm:$0xff]
        %v523 = vld [vmem:[#allocation2 + $0xe0] sm:$0xff]
        %v524 = vld [vmem:[#allocation2 + $0xe8] sm:$0xff]
        %v525 = vld [vmem:[#allocation2 + $0xf0] sm:$0xff]
        %v526 = vld [vmem:[#allocation2 + $0xf8] sm:$0xff]
        %v527 = vld [vmem:[%s393] sm:$0xf]
        %v528 = vld [vmem:[%s393 + $0x4] sm:$0xf]
        %v529 = vld [vmem:[%s393 + $0x8] sm:$0xf]
        %v530 = vld [vmem:[%s393 + $0xc] sm:$0xf]
        %v531 = vld [vmem:[%s393 + $0x10] sm:$0xf]
        %v532 = vld [vmem:[%s393 + $0x14] sm:$0xf]
        %v533 = vld [vmem:[%s393 + $0x18] sm:$0xf]
        %v534 = vld [vmem:[%s393 + $0x1c] sm:$0xf]
        %v535 = vld [vmem:[%s393 + $0x20] sm:$0xf]
        %v536 = vld [vmem:[%s393 + $0x24] sm:$0xf]
        %v537 = vld [vmem:[%s393 + $0x28] sm:$0xf]
        %v538 = vld [vmem:[%s393 + $0x2c] sm:$0xf]
        %v539 = vld [vmem:[%s393 + $0x30] sm:$0xf]
        %v540 = vld [vmem:[%s393 + $0x34] sm:$0xf]
        %v541 = vld [vmem:[%s393 + $0x38] sm:$0xf]
        %v542 = vld [vmem:[%s393 + $0x3c] sm:$0xf]
        %v543 = vld [vmem:[%s393 + $0x40] sm:$0xf]
        %v544 = vld [vmem:[%s393 + $0x44] sm:$0xf]
        %v545 = vld [vmem:[%s393 + $0x48] sm:$0xf]
        %v546 = vld [vmem:[%s393 + $0x4c] sm:$0xf]
        %v547 = vld [vmem:[%s393 + $0x50] sm:$0xf]
        %v548 = vld [vmem:[%s393 + $0x54] sm:$0xf]
        %v549 = vld [vmem:[%s393 + $0x58] sm:$0xf]
        %v550 = vld [vmem:[%s393 + $0x5c] sm:$0xf]
        %v551 = vld [vmem:[%s393 + $0x60] sm:$0xf]
        %v552 = vld [vmem:[%s393 + $0x64] sm:$0xf]
        %v553 = vld [vmem:[%s393 + $0x68] sm:$0xf]
        %v554 = vld [vmem:[%s393 + $0x6c] sm:$0xf]
        %v555 = vld [vmem:[%s393 + $0x70] sm:$0xf]
        %v556 = vld [vmem:[%s393 + $0x74] sm:$0xf]
        %v557 = vld [vmem:[%s393 + $0x78] sm:$0xf]
        %v558 = vld [vmem:[%s393 + $0x7c] sm:$0xf]
        %v559 = vld [vmem:[%s441] sm:$0xf]
        %v560 = vld [vmem:[%s441 + $0x4] sm:$0xf]
        %v561 = vld [vmem:[%s441 + $0x8] sm:$0xf]
        %v562 = vld [vmem:[%s441 + $0xc] sm:$0xf]
        %v563 = vld [vmem:[%s441 + $0x10] sm:$0xf]
        %v564 = vld [vmem:[%s441 + $0x14] sm:$0xf]
        %v565 = vld [vmem:[%s441 + $0x18] sm:$0xf]
        %v566 = vld [vmem:[%s441 + $0x1c] sm:$0xf]
        %v567 = vld [vmem:[%s441 + $0x20] sm:$0xf]
        %v568 = vld [vmem:[%s441 + $0x24] sm:$0xf]
        %v569 = vld [vmem:[%s441 + $0x28] sm:$0xf]
        %v570 = vld [vmem:[%s441 + $0x2c] sm:$0xf]
        %v571 = vld [vmem:[%s441 + $0x30] sm:$0xf]
        %v572 = vld [vmem:[%s441 + $0x34] sm:$0xf]
        %v573 = vld [vmem:[%s441 + $0x38] sm:$0xf]
        %v574 = vld [vmem:[%s441 + $0x3c] sm:$0xf]
        %v607 = vunpack.c.l.b16 %v527
        %v608 = vunpack.c.l.b16 %v528
        %v609 = vunpack.c.l.b16 %v529
        %v610 = vunpack.c.l.b16 %v530
        %v611 = vunpack.c.l.b16 %v531
        %v612 = vunpack.c.l.b16 %v532
        %v613 = vunpack.c.l.b16 %v533
        %v614 = vunpack.c.l.b16 %v534
        %v615 = vunpack.c.l.b16 %v535
        %v616 = vunpack.c.l.b16 %v536
        %v617 = vunpack.c.l.b16 %v537
        %v618 = vunpack.c.l.b16 %v538
        %v619 = vunpack.c.l.b16 %v539
        %v620 = vunpack.c.l.b16 %v540
        %v621 = vunpack.c.l.b16 %v541
        %v622 = vunpack.c.l.b16 %v542
        %v623 = vunpack.c.l.b16 %v543
        %v624 = vunpack.c.l.b16 %v544
        %v625 = vunpack.c.l.b16 %v545
        %v626 = vunpack.c.l.b16 %v546
        %v627 = vunpack.c.l.b16 %v547
        %v628 = vunpack.c.l.b16 %v548
        %v629 = vunpack.c.l.b16 %v549
        %v630 = vunpack.c.l.b16 %v550
        %v631 = vunpack.c.l.b16 %v551
        %v632 = vunpack.c.l.b16 %v552
        %v633 = vunpack.c.l.b16 %v553
        %v634 = vunpack.c.l.b16 %v554
        %v635 = vunpack.c.l.b16 %v555
        %v636 = vunpack.c.l.b16 %v556
        %v637 = vunpack.c.l.b16 %v557
        %v638 = vunpack.c.l.b16 %v558
        %v639 = vpack.c.b16 %v608, %v607
        %v640 = vpack.c.b16 %v610, %v609
        %v641 = vpack.c.b16 %v612, %v611
        %v642 = vpack.c.b16 %v614, %v613
        %v643 = vpack.c.b16 %v616, %v615
        %v644 = vpack.c.b16 %v618, %v617
        %v645 = vpack.c.b16 %v620, %v619
        %v646 = vpack.c.b16 %v622, %v621
        %v647 = vpack.c.b16 %v624, %v623
        %v648 = vpack.c.b16 %v626, %v625
        %v649 = vpack.c.b16 %v628, %v627
        %v650 = vpack.c.b16 %v630, %v629
        %v651 = vpack.c.b16 %v632, %v631
        %v652 = vpack.c.b16 %v634, %v633
        %v653 = vpack.c.b16 %v636, %v635
        %v654 = vpack.c.b16 %v638, %v637
        %v687 = vunpack.c.l.b16 %v559
        %v688 = vunpack.c.l.b16 %v560
        %v689 = vunpack.c.l.b16 %v561
        %v690 = vunpack.c.l.b16 %v562
        %v691 = vunpack.c.l.b16 %v563
        %v692 = vunpack.c.l.b16 %v564
        %v693 = vunpack.c.l.b16 %v565
        %v694 = vunpack.c.l.b16 %v566
        %v695 = vunpack.c.l.b16 %v567
        %v696 = vunpack.c.l.b16 %v568
        %v697 = vunpack.c.l.b16 %v569
        %v698 = vunpack.c.l.b16 %v570
        %v699 = vunpack.c.l.b16 %v571
        %v700 = vunpack.c.l.b16 %v572
        %v701 = vunpack.c.l.b16 %v573
        %v702 = vunpack.c.l.b16 %v574
        %v703 = vpack.c.b16 %v688, %v687
        %v704 = vpack.c.b16 %v690, %v689
        %v705 = vpack.c.b16 %v692, %v691
        %v706 = vpack.c.b16 %v694, %v693
        %v707 = vpack.c.b16 %v696, %v695
        %v708 = vpack.c.b16 %v698, %v697
        %v709 = vpack.c.b16 %v700, %v699
        %v710 = vpack.c.b16 %v702, %v701
        %719 = vmatprep.subr.bf16.mxu0 0
        %720 = vmatpush1.bf16.msra.mxu0 %v703
        %721 = vmatprep.subr.bf16.mxu0 0
        %722 = vmatpush1.bf16.msra.mxu0 %v704
        %723 = vmatprep.subr.bf16.mxu0 0
        %724 = vmatpush1.bf16.msra.mxu0 %v705
        %725 = vmatprep.subr.bf16.mxu0 0
        %726 = vmatpush1.bf16.msra.mxu0 %v706
        %727 = vmatprep.subr.bf16.mxu0 0
        %728 = vmatpush1.bf16.msra.mxu0 %v707
        %729 = vmatprep.subr.bf16.mxu0 0
        %730 = vmatpush1.bf16.msra.mxu0 %v708
        %731 = vmatprep.subr.bf16.mxu0 0
        %732 = vmatpush1.bf16.msra.mxu0 %v709
        %733 = vmatprep.subr.bf16.mxu0 0
        %734 = vmatpush1.bf16.msra.mxu0 %v710
        %735 = vmatprep.subr.bf16.mxu0 0
        %736 = vmatpush1.bf16.msra.mxu0 0
        %737 = vmatprep.subr.bf16.mxu0 0
        %738 = vmatpush1.bf16.msra.mxu0 0
        %739 = vmatprep.subr.bf16.mxu0 0
        %740 = vmatpush1.bf16.msra.mxu0 0
        %741 = vmatprep.subr.bf16.mxu0 0
        %742 = vmatpush1.bf16.msra.mxu0 0
        %743 = vmatprep.subr.bf16.mxu0 0
        %744 = vmatpush1.bf16.msra.mxu0 0
        %745 = vmatprep.subr.bf16.mxu0 0
        %746 = vmatpush1.bf16.msra.mxu0 0
        %747 = vmatprep.subr.bf16.mxu0 0
        %748 = vmatpush1.bf16.msra.mxu0 0
        %749 = vmatprep.subr.bf16.mxu0 0
        %750 = vmatpush1.bf16.msra.mxu0 0
        %751 = vmatprep.mubr.bf16.mxu0 0
        %752 = vmatmul.mubr.bf16.gmra.mrb[0].mxu0 %v639
        %v753 = vpop.f32.mrb[0].mxu0
        %v754 = vadd.f32 0.0, %v753
        %v755 = vpop.f32.mrb[0].mxu0
        %v756 = vpop.f32.mrb[0].mxu0
        %v757 = vadd.f32 0.0, %v756
        %v758 = vpop.f32.mrb[0].mxu0
        %759 = vmatprep.mubr.bf16.mxu0 0
        %760 = vmatmul.mubr.bf16.gmra.mrb[0].mxu0 %v640
        %v761 = vpop.f32.mrb[0].mxu0
        %v762 = vadd.f32 0.0, %v761
        %v763 = vpop.f32.mrb[0].mxu0
        %v764 = vpop.f32.mrb[0].mxu0
        %v765 = vadd.f32 0.0, %v764
        %v766 = vpop.f32.mrb[0].mxu0
        %767 = vmatprep.mubr.bf16.mxu0 0
        %768 = vmatmul.mubr.bf16.gmra.mrb[0].mxu0 %v641
        %v769 = vpop.f32.mrb[0].mxu0
        %v770 = vadd.f32 0.0, %v769
        %v771 = vpop.f32.mrb[0].mxu0
        %v772 = vpop.f32.mrb[0].mxu0
        %v773 = vadd.f32 0.0, %v772
        %v774 = vpop.f32.mrb[0].mxu0
        %775 = vmatprep.mubr.bf16.mxu0 0
        %776 = vmatmul.mubr.bf16.gmra.mrb[0].mxu0 %v642
        %v777 = vpop.f32.mrb[0].mxu0
        %v778 = vadd.f32 0.0, %v777
        %v779 = vpop.f32.mrb[0].mxu0
        %v780 = vpop.f32.mrb[0].mxu0
        %v781 = vadd.f32 0.0, %v780
        %v782 = vpop.f32.mrb[0].mxu0
        %783 = vmatprep.mubr.bf16.mxu0 0
        %784 = vmatmul.mubr.bf16.gmra.mrb[0].mxu0 %v643
        %v785 = vpop.f32.mrb[0].mxu0
        %v786 = vadd.f32 0.0, %v785
        %v787 = vpop.f32.mrb[0].mxu0
        %v788 = vpop.f32.mrb[0].mxu0
        %v789 = vadd.f32 0.0, %v788
        %v790 = vpop.f32.mrb[0].mxu0
        %791 = vmatprep.mubr.bf16.mxu0 0
        %792 = vmatmul.mubr.bf16.gmra.mrb[0].mxu0 %v644
        %v793 = vpop.f32.mrb[0].mxu0
        %v794 = vadd.f32 0.0, %v793
        %v795 = vpop.f32.mrb[0].mxu0
        %v796 = vpop.f32.mrb[0].mxu0
        %v797 = vadd.f32 0.0, %v796
        %v798 = vpop.f32.mrb[0].mxu0
        %799 = vmatprep.mubr.bf16.mxu0 0
        %800 = vmatmul.mubr.bf16.gmra.mrb[0].mxu0 %v645
        %v801 = vpop.f32.mrb[0].mxu0
        %v802 = vadd.f32 0.0, %v801
        %v803 = vpop.f32.mrb[0].mxu0
        %v804 = vpop.f32.mrb[0].mxu0
        %v805 = vadd.f32 0.0, %v804
        %v806 = vpop.f32.mrb[0].mxu0
        %807 = vmatprep.mubr.bf16.mxu0 0
        %808 = vmatmul.mubr.bf16.gmra.mrb[0].mxu0 %v646
        %v809 = vpop.f32.mrb[0].mxu0
        %v810 = vadd.f32 0.0, %v809
        %v811 = vpop.f32.mrb[0].mxu0
        %v812 = vpop.f32.mrb[0].mxu0
        %v813 = vadd.f32 0.0, %v812
        %v814 = vpop.f32.mrb[0].mxu0
        %815 = vmatprep.mubr.bf16.mxu0 0
        %816 = vmatmul.mubr.bf16.gmra.mrb[0].mxu0 %v647
        %v817 = vpop.f32.mrb[0].mxu0
        %v818 = vadd.f32 0.0, %v817
        %v819 = vpop.f32.mrb[0].mxu0
        %v820 = vpop.f32.mrb[0].mxu0
        %v821 = vadd.f32 0.0, %v820
        %v822 = vpop.f32.mrb[0].mxu0
        %823 = vmatprep.mubr.bf16.mxu0 0
        %824 = vmatmul.mubr.bf16.gmra.mrb[0].mxu0 %v648
        %v825 = vpop.f32.mrb[0].mxu0
        %v826 = vadd.f32 0.0, %v825
        %v827 = vpop.f32.mrb[0].mxu0
        %v828 = vpop.f32.mrb[0].mxu0
        %v829 = vadd.f32 0.0, %v828
        %v830 = vpop.f32.mrb[0].mxu0
        %831 = vmatprep.mubr.bf16.mxu0 0
        %832 = vmatmul.mubr.bf16.gmra.mrb[0].mxu0 %v649
        %v833 = vpop.f32.mrb[0].mxu0
        %v834 = vadd.f32 0.0, %v833
        %v835 = vpop.f32.mrb[0].mxu0
        %v836 = vpop.f32.mrb[0].mxu0
        %v837 = vadd.f32 0.0, %v836
        %v838 = vpop.f32.mrb[0].mxu0
        %839 = vmatprep.mubr.bf16.mxu0 0
        %840 = vmatmul.mubr.bf16.gmra.mrb[0].mxu0 %v650
        %v841 = vpop.f32.mrb[0].mxu0
        %v842 = vadd.f32 0.0, %v841
        %v843 = vpop.f32.mrb[0].mxu0
        %v844 = vpop.f32.mrb[0].mxu0
        %v845 = vadd.f32 0.0, %v844
        %v846 = vpop.f32.mrb[0].mxu0
        %847 = vmatprep.mubr.bf16.mxu0 0
        %848 = vmatmul.mubr.bf16.gmra.mrb[0].mxu0 %v651
        %v849 = vpop.f32.mrb[0].mxu0
        %v850 = vadd.f32 0.0, %v849
        %v851 = vpop.f32.mrb[0].mxu0
        %v852 = vpop.f32.mrb[0].mxu0
        %v853 = vadd.f32 0.0, %v852
        %v854 = vpop.f32.mrb[0].mxu0
        %855 = vmatprep.mubr.bf16.mxu0 0
        %856 = vmatmul.mubr.bf16.gmra.mrb[0].mxu0 %v652
        %v857 = vpop.f32.mrb[0].mxu0
        %v858 = vadd.f32 0.0, %v857
        %v859 = vpop.f32.mrb[0].mxu0
        %v860 = vpop.f32.mrb[0].mxu0
        %v861 = vadd.f32 0.0, %v860
        %v862 = vpop.f32.mrb[0].mxu0
        %863 = vmatprep.mubr.bf16.mxu0 0
        %864 = vmatmul.mubr.bf16.gmra.mrb[0].mxu0 %v653
        %v865 = vpop.f32.mrb[0].mxu0
        %v866 = vadd.f32 0.0, %v865
        %v867 = vpop.f32.mrb[0].mxu0
        %v868 = vpop.f32.mrb[0].mxu0
        %v869 = vadd.f32 0.0, %v868
        %v870 = vpop.f32.mrb[0].mxu0
        %871 = vmatprep.mubr.bf16.mxu0 0
        %872 = vmatmul.mubr.bf16.gmra.mrb[0].mxu0 %v654
        %v873 = vpop.f32.mrb[0].mxu0
        %v874 = vadd.f32 0.0, %v873
        %v875 = vpop.f32.mrb[0].mxu0
        %v876 = vpop.f32.mrb[0].mxu0
        %v877 = vadd.f32 0.0, %v876
        %v878 = vpop.f32.mrb[0].mxu0
        %879 = vdwg.mxu0
        %v880 = vadd.f32 %v495, %v754
        %v881 = vadd.f32 %v496, %v757
        %v882 = vadd.f32 %v497, %v762
        %v883 = vadd.f32 %v498, %v765
        %v884 = vadd.f32 %v499, %v770
        %v885 = vadd.f32 %v500, %v773
        %v886 = vadd.f32 %v501, %v778
        %v887 = vadd.f32 %v502, %v781
        %v888 = vadd.f32 %v503, %v786
        %v889 = vadd.f32 %v504, %v789
        %v890 = vadd.f32 %v505, %v794
        %v891 = vadd.f32 %v506, %v797
        %v892 = vadd.f32 %v507, %v802
        %v893 = vadd.f32 %v508, %v805
        %v894 = vadd.f32 %v509, %v810
        %v895 = vadd.f32 %v510, %v813
        %v896 = vadd.f32 %v511, %v818
        %v897 = vadd.f32 %v512, %v821
        %v898 = vadd.f32 %v513, %v826
        %v899 = vadd.f32 %v514, %v829
        %v900 = vadd.f32 %v515, %v834
        %v901 = vadd.f32 %v516, %v837
        %v902 = vadd.f32 %v517, %v842
        %v903 = vadd.f32 %v518, %v845
        %v904 = vadd.f32 %v519, %v850
        %v905 = vadd.f32 %v520, %v853
        %v906 = vadd.f32 %v521, %v858
        %v907 = vadd.f32 %v522, %v861
        %v908 = vadd.f32 %v523, %v866
        %v909 = vadd.f32 %v524, %v869
        %v910 = vadd.f32 %v525, %v874
        %v911 = vadd.f32 %v526, %v877
        %912 = vst [vmem:[#allocation2] sm:$0xff] %v880
        %913 = vst [vmem:[#allocation2 + $0x8] sm:$0xff] %v881
        %914 = vst [vmem:[#allocation2 + $0x10] sm:$0xff] %v882
        %915 = vst [vmem:[#allocation2 + $0x18] sm:$0xff] %v883
        %916 = vst [vmem:[#allocation2 + $0x20] sm:$0xff] %v884
        %917 = vst [vmem:[#allocation2 + $0x28] sm:$0xff] %v885
        %918 = vst [vmem:[#allocation2 + $0x30] sm:$0xff] %v886
        %919 = vst [vmem:[#allocation2 + $0x38] sm:$0xff] %v887
        %920 = vst [vmem:[#allocation2 + $0x40] sm:$0xff] %v888
        %921 = vst [vmem:[#allocation2 + $0x48] sm:$0xff] %v889
        %922 = vst [vmem:[#allocation2 + $0x50] sm:$0xff] %v890
        %923 = vst [vmem:[#allocation2 + $0x58] sm:$0xff] %v891
        %924 = vst [vmem:[#allocation2 + $0x60] sm:$0xff] %v892
        %925 = vst [vmem:[#allocation2 + $0x68] sm:$0xff] %v893
        %926 = vst [vmem:[#allocation2 + $0x70] sm:$0xff] %v894
        %927 = vst [vmem:[#allocation2 + $0x78] sm:$0xff] %v895
        %928 = vst [vmem:[#allocation2 + $0x80] sm:$0xff] %v896
        %929 = vst [vmem:[#allocation2 + $0x88] sm:$0xff] %v897
        %930 = vst [vmem:[#allocation2 + $0x90] sm:$0xff] %v898
        %931 = vst [vmem:[#allocation2 + $0x98] sm:$0xff] %v899
        %932 = vst [vmem:[#allocation2 + $0xa0] sm:$0xff] %v900
        %933 = vst [vmem:[#allocation2 + $0xa8] sm:$0xff] %v901
        %934 = vst [vmem:[#allocation2 + $0xb0] sm:$0xff] %v902
        %935 = vst [vmem:[#allocation2 + $0xb8] sm:$0xff] %v903
        %936 = vst [vmem:[#allocation2 + $0xc0] sm:$0xff] %v904
        %937 = vst [vmem:[#allocation2 + $0xc8] sm:$0xff] %v905
        %938 = vst [vmem:[#allocation2 + $0xd0] sm:$0xff] %v906
        %939 = vst [vmem:[#allocation2 + $0xd8] sm:$0xff] %v907
        %940 = vst [vmem:[#allocation2 + $0xe0] sm:$0xff] %v908
        %941 = vst [vmem:[#allocation2 + $0xe8] sm:$0xff] %v909
        %942 = vst [vmem:[#allocation2 + $0xf0] sm:$0xff] %v910
        %943 = vst [vmem:[#allocation2 + $0xf8] sm:$0xff] %v911
        %p944 = scmp.eq.s32.totalorder %s22, 1
        // Predicated region
        $region82: #{_lambda_.23} parent=72 // pred_check
          %p945 = pneg %p944
        $region83: #{_lambda_.23} parent=72 // pred_check_branch
          %947 = sbr.rel (%p945) target = $region85
        $region84: #{_lambda_.23} parent=72 // pred_region
          %v948 = vld [vmem:[#allocation2] sm:$0xff]
          %v949 = vld [vmem:[#allocation2 + $0x8] sm:$0xff]
          %v950 = vld [vmem:[#allocation2 + $0x10] sm:$0xff]
          %v951 = vld [vmem:[#allocation2 + $0x18] sm:$0xff]
          %v952 = vld [vmem:[#allocation2 + $0x20] sm:$0xff]
          %v953 = vld [vmem:[#allocation2 + $0x28] sm:$0xff]
          %v954 = vld [vmem:[#allocation2 + $0x30] sm:$0xff]
          %v955 = vld [vmem:[#allocation2 + $0x38] sm:$0xff]
          %v956 = vld [vmem:[#allocation2 + $0x40] sm:$0xff]
          %v957 = vld [vmem:[#allocation2 + $0x48] sm:$0xff]
          %v958 = vld [vmem:[#allocation2 + $0x50] sm:$0xff]
          %v959 = vld [vmem:[#allocation2 + $0x58] sm:$0xff]
          %v960 = vld [vmem:[#allocation2 + $0x60] sm:$0xff]
          %v961 = vld [vmem:[#allocation2 + $0x68] sm:$0xff]
          %v962 = vld [vmem:[#allocation2 + $0x70] sm:$0xff]
          %v963 = vld [vmem:[#allocation2 + $0x78] sm:$0xff]
          %v964 = vld [vmem:[#allocation2 + $0x80] sm:$0xff]
          %v965 = vld [vmem:[#allocation2 + $0x88] sm:$0xff]
          %v966 = vld [vmem:[#allocation2 + $0x90] sm:$0xff]
          %v967 = vld [vmem:[#allocation2 + $0x98] sm:$0xff]
          %v968 = vld [vmem:[#allocation2 + $0xa0] sm:$0xff]
          %v969 = vld [vmem:[#allocation2 + $0xa8] sm:$0xff]
          %v970 = vld [vmem:[#allocation2 + $0xb0] sm:$0xff]
          %v971 = vld [vmem:[#allocation2 + $0xb8] sm:$0xff]
          %v972 = vld [vmem:[#allocation2 + $0xc0] sm:$0xff]
          %v973 = vld [vmem:[#allocation2 + $0xc8] sm:$0xff]
          %v974 = vld [vmem:[#allocation2 + $0xd0] sm:$0xff]
          %v975 = vld [vmem:[#allocation2 + $0xd8] sm:$0xff]
          %v976 = vld [vmem:[#allocation2 + $0xe0] sm:$0xff]
          %v977 = vld [vmem:[#allocation2 + $0xe8] sm:$0xff]
          %v978 = vld [vmem:[#allocation2 + $0xf0] sm:$0xff]
          %v979 = vld [vmem:[#allocation2 + $0xf8] sm:$0xff]
          %v980 = vld [vmem:[%s445] sm:$0x1]
          %v981 = vld [vmem:[%s448] sm:$0x1]
          %v983 = vlaneseq
          %v984 = vshrl.u32 %v983, 7
          %v985 = vsub.s32 0, %v984
          %v986 = vrot.slane %v980, %v985
          %v988 = vmul.f32 %v948, %v986
          %v989 = vmul.f32 %v949, %v986
          %v990 = vmul.f32 %v950, %v986
          %v991 = vmul.f32 %v951, %v986
          %v992 = vmul.f32 %v952, %v986
          %v993 = vmul.f32 %v953, %v986
          %v994 = vmul.f32 %v954, %v986
          %v995 = vmul.f32 %v955, %v986
          %v996 = vmul.f32 %v956, %v986
          %v997 = vmul.f32 %v957, %v986
          %v998 = vmul.f32 %v958, %v986
          %v999 = vmul.f32 %v959, %v986
          %v1000 = vmul.f32 %v960, %v986
          %v1001 = vmul.f32 %v961, %v986
          %v1002 = vmul.f32 %v962, %v986
          %v1003 = vmul.f32 %v963, %v986
          %v1004 = vmul.f32 %v964, %v986
          %v1005 = vmul.f32 %v965, %v986
          %v1006 = vmul.f32 %v966, %v986
          %v1007 = vmul.f32 %v967, %v986
          %v1008 = vmul.f32 %v968, %v986
          %v1009 = vmul.f32 %v969, %v986
          %v1010 = vmul.f32 %v970, %v986
          %v1011 = vmul.f32 %v971, %v986
          %v1012 = vmul.f32 %v972, %v986
          %v1013 = vmul.f32 %v973, %v986
          %v1014 = vmul.f32 %v974, %v986
          %v1015 = vmul.f32 %v975, %v986
          %v1016 = vmul.f32 %v976, %v986
          %v1017 = vmul.f32 %v977, %v986
          %v1018 = vmul.f32 %v978, %v986
          %v1019 = vmul.f32 %v979, %v986
          %v1021 = vlaneseq
          %v1022 = vshrl.u32 %v1021, 7
          %v1023 = vsub.s32 0, %v1022
          %v1024 = vrot.slane %v981, %v1023
          %v1026 = vadd.f32 %v988, %v1024
          %v1027 = vadd.f32 %v989, %v1024
          %v1028 = vadd.f32 %v990, %v1024
          %v1029 = vadd.f32 %v991, %v1024
          %v1030 = vadd.f32 %v992, %v1024
          %v1031 = vadd.f32 %v993, %v1024
          %v1032 = vadd.f32 %v994, %v1024
          %v1033 = vadd.f32 %v995, %v1024
          %v1034 = vadd.f32 %v996, %v1024
          %v1035 = vadd.f32 %v997, %v1024
          %v1036 = vadd.f32 %v998, %v1024
          %v1037 = vadd.f32 %v999, %v1024
          %v1038 = vadd.f32 %v1000, %v1024
          %v1039 = vadd.f32 %v1001, %v1024
          %v1040 = vadd.f32 %v1002, %v1024
          %v1041 = vadd.f32 %v1003, %v1024
          %v1042 = vadd.f32 %v1004, %v1024
          %v1043 = vadd.f32 %v1005, %v1024
          %v1044 = vadd.f32 %v1006, %v1024
          %v1045 = vadd.f32 %v1007, %v1024
          %v1046 = vadd.f32 %v1008, %v1024
          %v1047 = vadd.f32 %v1009, %v1024
          %v1048 = vadd.f32 %v1010, %v1024
          %v1049 = vadd.f32 %v1011, %v1024
          %v1050 = vadd.f32 %v1012, %v1024
          %v1051 = vadd.f32 %v1013, %v1024
          %v1052 = vadd.f32 %v1014, %v1024
          %v1053 = vadd.f32 %v1015, %v1024
          %v1054 = vadd.f32 %v1016, %v1024
          %v1055 = vadd.f32 %v1017, %v1024
          %v1056 = vadd.f32 %v1018, %v1024
          %v1057 = vadd.f32 %v1019, %v1024
          %v1058 = vmax.f32 %v1026, 0.0
          %v1059 = vmax.f32 %v1027, 0.0
          %v1060 = vmax.f32 %v1028, 0.0
          %v1061 = vmax.f32 %v1029, 0.0
          %v1062 = vmax.f32 %v1030, 0.0
          %v1063 = vmax.f32 %v1031, 0.0
          %v1064 = vmax.f32 %v1032, 0.0
          %v1065 = vmax.f32 %v1033, 0.0
          %v1066 = vmax.f32 %v1034, 0.0
          %v1067 = vmax.f32 %v1035, 0.0
          %v1068 = vmax.f32 %v1036, 0.0
          %v1069 = vmax.f32 %v1037, 0.0
          %v1070 = vmax.f32 %v1038, 0.0
          %v1071 = vmax.f32 %v1039, 0.0
          %v1072 = vmax.f32 %v1040, 0.0
          %v1073 = vmax.f32 %v1041, 0.0
          %v1074 = vmax.f32 %v1042, 0.0
          %v1075 = vmax.f32 %v1043, 0.0
          %v1076 = vmax.f32 %v1044, 0.0
          %v1077 = vmax.f32 %v1045, 0.0
          %v1078 = vmax.f32 %v1046, 0.0
          %v1079 = vmax.f32 %v1047, 0.0
          %v1080 = vmax.f32 %v1048, 0.0
          %v1081 = vmax.f32 %v1049, 0.0
          %v1082 = vmax.f32 %v1050, 0.0
          %v1083 = vmax.f32 %v1051, 0.0
          %v1084 = vmax.f32 %v1052, 0.0
          %v1085 = vmax.f32 %v1053, 0.0
          %v1086 = vmax.f32 %v1054, 0.0
          %v1087 = vmax.f32 %v1055, 0.0
          %v1088 = vmax.f32 %v1056, 0.0
          %v1089 = vmax.f32 %v1057, 0.0
          %1090 = vst [vmem:[%s456] sm:$0xff] %v1058
          %1091 = vst [vmem:[%s456 + $0x8] sm:$0xff] %v1059
          %1092 = vst [vmem:[%s456 + $0x10] sm:$0xff] %v1060
          %1093 = vst [vmem:[%s456 + $0x18] sm:$0xff] %v1061
          %1094 = vst [vmem:[%s456 + $0x20] sm:$0xff] %v1062
          %1095 = vst [vmem:[%s456 + $0x28] sm:$0xff] %v1063
          %1096 = vst [vmem:[%s456 + $0x30] sm:$0xff] %v1064
          %1097 = vst [vmem:[%s456 + $0x38] sm:$0xff] %v1065
          %1098 = vst [vmem:[%s456 + $0x40] sm:$0xff] %v1066
          %1099 = vst [vmem:[%s456 + $0x48] sm:$0xff] %v1067
          %1100 = vst [vmem:[%s456 + $0x50] sm:$0xff] %v1068
          %1101 = vst [vmem:[%s456 + $0x58] sm:$0xff] %v1069
          %1102 = vst [vmem:[%s456 + $0x60] sm:$0xff] %v1070
          %1103 = vst [vmem:[%s456 + $0x68] sm:$0xff] %v1071
          %1104 = vst [vmem:[%s456 + $0x70] sm:$0xff] %v1072
          %1105 = vst [vmem:[%s456 + $0x78] sm:$0xff] %v1073
          %1106 = vst [vmem:[%s456 + $0x80] sm:$0xff] %v1074
          %1107 = vst [vmem:[%s456 + $0x88] sm:$0xff] %v1075
          %1108 = vst [vmem:[%s456 + $0x90] sm:$0xff] %v1076
          %1109 = vst [vmem:[%s456 + $0x98] sm:$0xff] %v1077
          %1110 = vst [vmem:[%s456 + $0xa0] sm:$0xff] %v1078
          %1111 = vst [vmem:[%s456 + $0xa8] sm:$0xff] %v1079
          %1112 = vst [vmem:[%s456 + $0xb0] sm:$0xff] %v1080
          %1113 = vst [vmem:[%s456 + $0xb8] sm:$0xff] %v1081
          %1114 = vst [vmem:[%s456 + $0xc0] sm:$0xff] %v1082
          %1115 = vst [vmem:[%s456 + $0xc8] sm:$0xff] %v1083
          %1116 = vst [vmem:[%s456 + $0xd0] sm:$0xff] %v1084
          %1117 = vst [vmem:[%s456 + $0xd8] sm:$0xff] %v1085
          %1118 = vst [vmem:[%s456 + $0xe0] sm:$0xff] %v1086
          %1119 = vst [vmem:[%s456 + $0xe8] sm:$0xff] %v1087
          %1120 = vst [vmem:[%s456 + $0xf0] sm:$0xff] %v1088
          %1121 = vst [vmem:[%s456 + $0xf8] sm:$0xff] %v1089
        $region85: #{_lambda_.23} parent=72 // pred_fallthru
          _
        %s1122 = smul.u32 32, %s20
        %p1123 = scmp.lt.s32.totalorder %s1122, 63
        %s1124 = scalar_select %p1123, %s1122, 63
        %p1125 = scmp.lt.s32.totalorder %s21, 0
        %s1126 = scalar_select %p1125, %s21, 0
        %s1127 = sadd.s32 %s1126, %s1124
        %s1128 = smul.addr %s1127, 8
        %s1129 = scalar_lea.vmem %s4, %s1128
        // Predicated region
        $region86: #{_lambda_.23} parent=72 // pred_check
          %p1130 = pneg %p162
        $region87: #{_lambda_.23} parent=72 // pred_check_branch
          %1132 = sbr.rel (%p1130) target = $region89
        $region88: #{_lambda_.23} parent=72 // pred_region
          %s1133 = smul.u32 32, %s20
        $region89: #{_lambda_.23} parent=72 // pred_fallthru
          _
      $region73: #{_lambda_.23} parent=5 // pred_fallthru
        _
      %p1134 = scmp.le.s32.totalorder 2, %s10
      // Predicated region
      $region90: #{_lambda_.23} parent=5 // pred_check
        %p1135 = pneg %p1134
      $region91: #{_lambda_.23} parent=5 // pred_check_branch
        %1137 = sbr.rel (%p1135) target = $region93
      $region92: #{_lambda_.23} parent=5 // pred_region
        %s1138 = ssub.s32 %s10, 2
        // Predicated region
        $region94: #{_lambda_.23} parent=92 // pred_check
          %p1139 = pneg %p168
        $region95: #{_lambda_.23} parent=92 // pred_check_branch
          %1141 = sbr.rel (%p1139) target = $region97
        $region96: #{_lambda_.23} parent=92 // pred_region
          %s1142 = smul.u32 32, %s23
          %p1143 = scmp.lt.s32.totalorder %s1142, 63
          %s1144 = scalar_select %p1143, %s1142, 63
          %p1145 = scmp.lt.s32.totalorder %s24, 0
          %s1146 = scalar_select %p1145, %s24, 0
          %s1147 = sadd.s32 %s1146, %s1144
          %s1148 = smul.addr %s1147, 8
          %s1149 = scalar_lea.vmem %s4, %s1148
        $region97: #{_lambda_.23} parent=92 // pred_fallthru
          _
      $region93: #{_lambda_.23} parent=5 // pred_fallthru
        _
    $region6: #{_lambda_.23} parent=1 // loop_footer
      %s14 = sadd.s32 1, %s10
    $region7: #{_lambda_.23} parent=1 // loop_footer_branch
      %9 = sbr.rel target = $region3
    $region8: #{_lambda_.23} parent=1 // loop_exit
      _

// kernel: _lambda_.24
$region0: #{_lambda_.24}
  #allocation0 [shape = 'u32[]', space=smem, size = 0x4, offset = 0x4, fixed_abs, tag = 'smem constant byte address 0x4 - core index']
  #allocation1 [shape = 'u32[144,128]{1,0:T(1,128)}', space=vmem, size = 0x12000, scoped, tag = 'internal scratch']
  %s0 = inlined_call_operand.vmem [shape: f32[9,128,8], index: 0, kind: input, shape index: {}]
  %s1 = inlined_call_operand.vmem [shape: f32[128,8], index: 1, kind: output, shape index: {}]
  %s2 = sld [smem:[#allocation0]]
  $region14: #{_lambda_.24} parent=0
    _
  %s4 = ssub.s32 1, %s2
  %s5 = scalar_select 0, %s4, %s2
  // Predicated region
  $region2: #{_lambda_.24} parent=0 // pred_check
    _
  $region3: #{_lambda_.24} parent=0 // pred_check_branch
    %7 = sbr.rel (0) target = $region5
  $region4: #{_lambda_.24} parent=0 // pred_region
    _
  $region5: #{_lambda_.24} parent=0 // pred_fallthru
    _
  %v8 = vld [vmem:[%s0] sm:$0xff]
  %v9 = vld [vmem:[%s0 + $0x8] sm:$0xff]
  %v10 = vld [vmem:[%s0 + $0x10] sm:$0xff]
  %v11 = vld [vmem:[%s0 + $0x18] sm:$0xff]
  %v12 = vld [vmem:[%s0 + $0x20] sm:$0xff]
  %v13 = vld [vmem:[%s0 + $0x28] sm:$0xff]
  %v14 = vld [vmem:[%s0 + $0x30] sm:$0xff]
  %v15 = vld [vmem:[%s0 + $0x38] sm:$0xff]
  %v16 = vld [vmem:[%s0 + $0x40] sm:$0xff]
  %v17 = vld [vmem:[%s0 + $0x48] sm:$0xff]
  %v18 = vld [vmem:[%s0 + $0x50] sm:$0xff]
  %v19 = vld [vmem:[%s0 + $0x58] sm:$0xff]
  %v20 = vld [vmem:[%s0 + $0x60] sm:$0xff]
  %v21 = vld [vmem:[%s0 + $0x68] sm:$0xff]
  %v22 = vld [vmem:[%s0 + $0x70] sm:$0xff]
  %v23 = vld [vmem:[%s0 + $0x78] sm:$0xff]
  %v24 = vld [vmem:[%s0 + $0x80] sm:$0xff]
  %v25 = vld [vmem:[%s0 + $0x88] sm:$0xff]
  %v26 = vld [vmem:[%s0 + $0x90] sm:$0xff]
  %v27 = vld [vmem:[%s0 + $0x98] sm:$0xff]
  %v28 = vld [vmem:[%s0 + $0xa0] sm:$0xff]
  %v29 = vld [vmem:[%s0 + $0xa8] sm:$0xff]
  %v30 = vld [vmem:[%s0 + $0xb0] sm:$0xff]
  %v31 = vld [vmem:[%s0 + $0xb8] sm:$0xff]
  %v32 = vld [vmem:[%s0 + $0xc0] sm:$0xff]
  %v33 = vld [vmem:[%s0 + $0xc8] sm:$0xff]
  %v34 = vld [vmem:[%s0 + $0xd0] sm:$0xff]
  %v35 = vld [vmem:[%s0 + $0xd8] sm:$0xff]
  %v36 = vld [vmem:[%s0 + $0xe0] sm:$0xff]
  %v37 = vld [vmem:[%s0 + $0xe8] sm:$0xff]
  %v38 = vld [vmem:[%s0 + $0xf0] sm:$0xff]
  %v39 = vld [vmem:[%s0 + $0xf8] sm:$0xff]
  %v40 = vld [vmem:[%s0 + $0x100] sm:$0xff]
  %v41 = vld [vmem:[%s0 + $0x108] sm:$0xff]
  %v42 = vld [vmem:[%s0 + $0x110] sm:$0xff]
  %v43 = vld [vmem:[%s0 + $0x118] sm:$0xff]
  %v44 = vld [vmem:[%s0 + $0x120] sm:$0xff]
  %v45 = vld [vmem:[%s0 + $0x128] sm:$0xff]
  %v46 = vld [vmem:[%s0 + $0x130] sm:$0xff]
  %v47 = vld [vmem:[%s0 + $0x138] sm:$0xff]
  %v48 = vld [vmem:[%s0 + $0x140] sm:$0xff]
  %v49 = vld [vmem:[%s0 + $0x148] sm:$0xff]
  %v50 = vld [vmem:[%s0 + $0x150] sm:$0xff]
  %v51 = vld [vmem:[%s0 + $0x158] sm:$0xff]
  %v52 = vld [vmem:[%s0 + $0x160] sm:$0xff]
  %v53 = vld [vmem:[%s0 + $0x168] sm:$0xff]
  %v54 = vld [vmem:[%s0 + $0x170] sm:$0xff]
  %v55 = vld [vmem:[%s0 + $0x178] sm:$0xff]
  %v56 = vld [vmem:[%s0 + $0x180] sm:$0xff]
  %v57 = vld [vmem:[%s0 + $0x188] sm:$0xff]
  %v58 = vld [vmem:[%s0 + $0x190] sm:$0xff]
  %v59 = vld [vmem:[%s0 + $0x198] sm:$0xff]
  %v60 = vld [vmem:[%s0 + $0x1a0] sm:$0xff]
  %v61 = vld [vmem:[%s0 + $0x1a8] sm:$0xff]
  %v62 = vld [vmem:[%s0 + $0x1b0] sm:$0xff]
  %v63 = vld [vmem:[%s0 + $0x1b8] sm:$0xff]
  %v64 = vld [vmem:[%s0 + $0x1c0] sm:$0xff]
  %v65 = vld [vmem:[%s0 + $0x1c8] sm:$0xff]
  %v66 = vld [vmem:[%s0 + $0x1d0] sm:$0xff]
  %v67 = vld [vmem:[%s0 + $0x1d8] sm:$0xff]
  %v68 = vld [vmem:[%s0 + $0x1e0] sm:$0xff]
  %v69 = vld [vmem:[%s0 + $0x1e8] sm:$0xff]
  %v70 = vld [vmem:[%s0 + $0x1f0] sm:$0xff]
  %v71 = vld [vmem:[%s0 + $0x1f8] sm:$0xff]
  %v72 = vld [vmem:[%s0 + $0x200] sm:$0xff]
  %v73 = vld [vmem:[%s0 + $0x208] sm:$0xff]
  %v74 = vld [vmem:[%s0 + $0x210] sm:$0xff]
  %v75 = vld [vmem:[%s0 + $0x218] sm:$0xff]
  %v76 = vld [vmem:[%s0 + $0x220] sm:$0xff]
  %v77 = vld [vmem:[%s0 + $0x228] sm:$0xff]
  %v78 = vld [vmem:[%s0 + $0x230] sm:$0xff]
  %v79 = vld [vmem:[%s0 + $0x238] sm:$0xff]
  %v80 = vld [vmem:[%s0 + $0x240] sm:$0xff]
  %v81 = vld [vmem:[%s0 + $0x248] sm:$0xff]
  %v82 = vld [vmem:[%s0 + $0x250] sm:$0xff]
  %v83 = vld [vmem:[%s0 + $0x258] sm:$0xff]
  %v84 = vld [vmem:[%s0 + $0x260] sm:$0xff]
  %v85 = vld [vmem:[%s0 + $0x268] sm:$0xff]
  %v86 = vld [vmem:[%s0 + $0x270] sm:$0xff]
  %v87 = vld [vmem:[%s0 + $0x278] sm:$0xff]
  %v88 = vld [vmem:[%s0 + $0x280] sm:$0xff]
  %v89 = vld [vmem:[%s0 + $0x288] sm:$0xff]
  %v90 = vld [vmem:[%s0 + $0x290] sm:$0xff]
  %v91 = vld [vmem:[%s0 + $0x298] sm:$0xff]
  %v92 = vld [vmem:[%s0 + $0x2a0] sm:$0xff]
  %v93 = vld [vmem:[%s0 + $0x2a8] sm:$0xff]
  %v94 = vld [vmem:[%s0 + $0x2b0] sm:$0xff]
  %v95 = vld [vmem:[%s0 + $0x2b8] sm:$0xff]
  %v96 = vld [vmem:[%s0 + $0x2c0] sm:$0xff]
  %v97 = vld [vmem:[%s0 + $0x2c8] sm:$0xff]
  %v98 = vld [vmem:[%s0 + $0x2d0] sm:$0xff]
  %v99 = vld [vmem:[%s0 + $0x2d8] sm:$0xff]
  %v100 = vld [vmem:[%s0 + $0x2e0] sm:$0xff]
  %v101 = vld [vmem:[%s0 + $0x2e8] sm:$0xff]
  %v102 = vld [vmem:[%s0 + $0x2f0] sm:$0xff]
  %v103 = vld [vmem:[%s0 + $0x2f8] sm:$0xff]
  %v104 = vld [vmem:[%s0 + $0x300] sm:$0xff]
  %v105 = vld [vmem:[%s0 + $0x308] sm:$0xff]
  %v106 = vld [vmem:[%s0 + $0x310] sm:$0xff]
  %v107 = vld [vmem:[%s0 + $0x318] sm:$0xff]
  %v108 = vld [vmem:[%s0 + $0x320] sm:$0xff]
  %v109 = vld [vmem:[%s0 + $0x328] sm:$0xff]
  %v110 = vld [vmem:[%s0 + $0x330] sm:$0xff]
  %v111 = vld [vmem:[%s0 + $0x338] sm:$0xff]
  %v112 = vld [vmem:[%s0 + $0x340] sm:$0xff]
  %v113 = vld [vmem:[%s0 + $0x348] sm:$0xff]
  %v114 = vld [vmem:[%s0 + $0x350] sm:$0xff]
  %v115 = vld [vmem:[%s0 + $0x358] sm:$0xff]
  %v116 = vld [vmem:[%s0 + $0x360] sm:$0xff]
  %v117 = vld [vmem:[%s0 + $0x368] sm:$0xff]
  %v118 = vld [vmem:[%s0 + $0x370] sm:$0xff]
  %v119 = vld [vmem:[%s0 + $0x378] sm:$0xff]
  %v120 = vld [vmem:[%s0 + $0x380] sm:$0xff]
  %v121 = vld [vmem:[%s0 + $0x388] sm:$0xff]
  %v122 = vld [vmem:[%s0 + $0x390] sm:$0xff]
  %v123 = vld [vmem:[%s0 + $0x398] sm:$0xff]
  %v124 = vld [vmem:[%s0 + $0x3a0] sm:$0xff]
  %v125 = vld [vmem:[%s0 + $0x3a8] sm:$0xff]
  %v126 = vld [vmem:[%s0 + $0x3b0] sm:$0xff]
  %v127 = vld [vmem:[%s0 + $0x3b8] sm:$0xff]
  %v128 = vld [vmem:[%s0 + $0x3c0] sm:$0xff]
  %v129 = vld [vmem:[%s0 + $0x3c8] sm:$0xff]
  %v130 = vld [vmem:[%s0 + $0x3d0] sm:$0xff]
  %v131 = vld [vmem:[%s0 + $0x3d8] sm:$0xff]
  %v132 = vld [vmem:[%s0 + $0x3e0] sm:$0xff]
  %v133 = vld [vmem:[%s0 + $0x3e8] sm:$0xff]
  %v134 = vld [vmem:[%s0 + $0x3f0] sm:$0xff]
  %v135 = vld [vmem:[%s0 + $0x3f8] sm:$0xff]
  %v136 = vld [vmem:[%s0 + $0x400] sm:$0xff]
  %v137 = vld [vmem:[%s0 + $0x408] sm:$0xff]
  %v138 = vld [vmem:[%s0 + $0x410] sm:$0xff]
  %v139 = vld [vmem:[%s0 + $0x418] sm:$0xff]
  %v140 = vld [vmem:[%s0 + $0x420] sm:$0xff]
  %v141 = vld [vmem:[%s0 + $0x428] sm:$0xff]
  %v142 = vld [vmem:[%s0 + $0x430] sm:$0xff]
  %v143 = vld [vmem:[%s0 + $0x438] sm:$0xff]
  %v144 = vld [vmem:[%s0 + $0x440] sm:$0xff]
  %v145 = vld [vmem:[%s0 + $0x448] sm:$0xff]
  %v146 = vld [vmem:[%s0 + $0x450] sm:$0xff]
  %v147 = vld [vmem:[%s0 + $0x458] sm:$0xff]
  %v148 = vld [vmem:[%s0 + $0x460] sm:$0xff]
  %v149 = vld [vmem:[%s0 + $0x468] sm:$0xff]
  %v150 = vld [vmem:[%s0 + $0x470] sm:$0xff]
  %v151 = vld [vmem:[%s0 + $0x478] sm:$0xff]
  %vm152 = vcmask 64512
  %v153 = vsel %vm152, %v8, -inf
  %v154 = vsel %vm152, %v24, -inf
  %v155 = vmax.f32 %v153, %v154
  %v156 = vsel %vm152, %v40, -inf
  %v157 = vmax.f32 %v155, %v156
  %v158 = vsel %vm152, %v56, -inf
  %v159 = vmax.f32 %v157, %v158
  %v160 = vsel %vm152, %v72, -inf
  %v161 = vmax.f32 %v159, %v160
  %v162 = vsel %vm152, %v88, -inf
  %v163 = vmax.f32 %v161, %v162
  %v164 = vsel %vm152, %v104, -inf
  %v165 = vmax.f32 %v163, %v164
  %v166 = vsel %vm152, %v120, -inf
  %v167 = vmax.f32 %v165, %v166
  %v168 = vsel %vm152, %v136, -inf
  %v169 = vmax.f32 %v167, %v168
  %v170 = vsel %vm152, %v9, -inf
  %v171 = vsel %vm152, %v25, -inf
  %v172 = vmax.f32 %v170, %v171
  %v173 = vsel %vm152, %v41, -inf
  %v174 = vmax.f32 %v172, %v173
  %v175 = vsel %vm152, %v57, -inf
  %v176 = vmax.f32 %v174, %v175
  %v177 = vsel %vm152, %v73, -inf
  %v178 = vmax.f32 %v176, %v177
  %v179 = vsel %vm152, %v89, -inf
  %v180 = vmax.f32 %v178, %v179
  %v181 = vsel %vm152, %v105, -inf
  %v182 = vmax.f32 %v180, %v181
  %v183 = vsel %vm152, %v121, -inf
  %v184 = vmax.f32 %v182, %v183
  %v185 = vsel %vm152, %v137, -inf
  %v186 = vmax.f32 %v184, %v185
  %v187 = vsel %vm152, %v10, -inf
  %v188 = vsel %vm152, %v26, -inf
  %v189 = vmax.f32 %v187, %v188
  %v190 = vsel %vm152, %v42, -inf
  %v191 = vmax.f32 %v189, %v190
  %v192 = vsel %vm152, %v58, -inf
  %v193 = vmax.f32 %v191, %v192
  %v194 = vsel %vm152, %v74, -inf
  %v195 = vmax.f32 %v193, %v194
  %v196 = vsel %vm152, %v90, -inf
  %v197 = vmax.f32 %v195, %v196
  %v198 = vsel %vm152, %v106, -inf
  %v199 = vmax.f32 %v197, %v198
  %v200 = vsel %vm152, %v122, -inf
  %v201 = vmax.f32 %v199, %v200
  %v202 = vsel %vm152, %v138, -inf
  %v203 = vmax.f32 %v201, %v202
  %v204 = vsel %vm152, %v11, -inf
  %v205 = vsel %vm152, %v27, -inf
  %v206 = vmax.f32 %v204, %v205
  %v207 = vsel %vm152, %v43, -inf
  %v208 = vmax.f32 %v206, %v207
  %v209 = vsel %vm152, %v59, -inf
  %v210 = vmax.f32 %v208, %v209
  %v211 = vsel %vm152, %v75, -inf
  %v212 = vmax.f32 %v210, %v211
  %v213 = vsel %vm152, %v91, -inf
  %v214 = vmax.f32 %v212, %v213
  %v215 = vsel %vm152, %v107, -inf
  %v216 = vmax.f32 %v214, %v215
  %v217 = vsel %vm152, %v123, -inf
  %v218 = vmax.f32 %v216, %v217
  %v219 = vsel %vm152, %v139, -inf
  %v220 = vmax.f32 %v218, %v219
  %v221 = vsel %vm152, %v12, -inf
  %v222 = vsel %vm152, %v28, -inf
  %v223 = vmax.f32 %v221, %v222
  %v224 = vsel %vm152, %v44, -inf
  %v225 = vmax.f32 %v223, %v224
  %v226 = vsel %vm152, %v60, -inf
  %v227 = vmax.f32 %v225, %v226
  %v228 = vsel %vm152, %v76, -inf
  %v229 = vmax.f32 %v227, %v228
  %v230 = vsel %vm152, %v92, -inf
  %v231 = vmax.f32 %v229, %v230
  %v232 = vsel %vm152, %v108, -inf
  %v233 = vmax.f32 %v231, %v232
  %v234 = vsel %vm152, %v124, -inf
  %v235 = vmax.f32 %v233, %v234
  %v236 = vsel %vm152, %v140, -inf
  %v237 = vmax.f32 %v235, %v236
  %v238 = vsel %vm152, %v13, -inf
  %v239 = vsel %vm152, %v29, -inf
  %v240 = vmax.f32 %v238, %v239
  %v241 = vsel %vm152, %v45, -inf
  %v242 = vmax.f32 %v240, %v241
  %v243 = vsel %vm152, %v61, -inf
  %v244 = vmax.f32 %v242, %v243
  %v245 = vsel %vm152, %v77, -inf
  %v246 = vmax.f32 %v244, %v245
  %v247 = vsel %vm152, %v93, -inf
  %v248 = vmax.f32 %v246, %v247
  %v249 = vsel %vm152, %v109, -inf
  %v250 = vmax.f32 %v248, %v249
  %v251 = vsel %vm152, %v125, -inf
  %v252 = vmax.f32 %v250, %v251
  %v253 = vsel %vm152, %v141, -inf
  %v254 = vmax.f32 %v252, %v253
  %v255 = vsel %vm152, %v14, -inf
  %v256 = vsel %vm152, %v30, -inf
  %v257 = vmax.f32 %v255, %v256
  %v258 = vsel %vm152, %v46, -inf
  %v259 = vmax.f32 %v257, %v258
  %v260 = vsel %vm152, %v62, -inf
  %v261 = vmax.f32 %v259, %v260
  %v262 = vsel %vm152, %v78, -inf
  %v263 = vmax.f32 %v261, %v262
  %v264 = vsel %vm152, %v94, -inf
  %v265 = vmax.f32 %v263, %v264
  %v266 = vsel %vm152, %v110, -inf
  %v267 = vmax.f32 %v265, %v266
  %v268 = vsel %vm152, %v126, -inf
  %v269 = vmax.f32 %v267, %v268
  %v270 = vsel %vm152, %v142, -inf
  %v271 = vmax.f32 %v269, %v270
  %v272 = vsel %vm152, %v15, -inf
  %v273 = vsel %vm152, %v31, -inf
  %v274 = vmax.f32 %v272, %v273
  %v275 = vsel %vm152, %v47, -inf
  %v276 = vmax.f32 %v274, %v275
  %v277 = vsel %vm152, %v63, -inf
  %v278 = vmax.f32 %v276, %v277
  %v279 = vsel %vm152, %v79, -inf
  %v280 = vmax.f32 %v278, %v279
  %v281 = vsel %vm152, %v95, -inf
  %v282 = vmax.f32 %v280, %v281
  %v283 = vsel %vm152, %v111, -inf
  %v284 = vmax.f32 %v282, %v283
  %v285 = vsel %vm152, %v127, -inf
  %v286 = vmax.f32 %v284, %v285
  %v287 = vsel %vm152, %v143, -inf
  %v288 = vmax.f32 %v286, %v287
  %v289 = vsel %vm152, %v16, -inf
  %v290 = vsel %vm152, %v32, -inf
  %v291 = vmax.f32 %v289, %v290
  %v292 = vsel %vm152, %v48, -inf
  %v293 = vmax.f32 %v291, %v292
  %v294 = vsel %vm152, %v64, -inf
  %v295 = vmax.f32 %v293, %v294
  %v296 = vsel %vm152, %v80, -inf
  %v297 = vmax.f32 %v295, %v296
  %v298 = vsel %vm152, %v96, -inf
  %v299 = vmax.f32 %v297, %v298
  %v300 = vsel %vm152, %v112, -inf
  %v301 = vmax.f32 %v299, %v300
  %v302 = vsel %vm152, %v128, -inf
  %v303 = vmax.f32 %v301, %v302
  %v304 = vsel %vm152, %v144, -inf
  %v305 = vmax.f32 %v303, %v304
  %v306 = vsel %vm152, %v17, -inf
  %v307 = vsel %vm152, %v33, -inf
  %v308 = vmax.f32 %v306, %v307
  %v309 = vsel %vm152, %v49, -inf
  %v310 = vmax.f32 %v308, %v309
  %v311 = vsel %vm152, %v65, -inf
  %v312 = vmax.f32 %v310, %v311
  %v313 = vsel %vm152, %v81, -inf
  %v314 = vmax.f32 %v312, %v313
  %v315 = vsel %vm152, %v97, -inf
  %v316 = vmax.f32 %v314, %v315
  %v317 = vsel %vm152, %v113, -inf
  %v318 = vmax.f32 %v316, %v317
  %v319 = vsel %vm152, %v129, -inf
  %v320 = vmax.f32 %v318, %v319
  %v321 = vsel %vm152, %v145, -inf
  %v322 = vmax.f32 %v320, %v321
  %v323 = vsel %vm152, %v18, -inf
  %v324 = vsel %vm152, %v34, -inf
  %v325 = vmax.f32 %v323, %v324
  %v326 = vsel %vm152, %v50, -inf
  %v327 = vmax.f32 %v325, %v326
  %v328 = vsel %vm152, %v66, -inf
  %v329 = vmax.f32 %v327, %v328
  %v330 = vsel %vm152, %v82, -inf
  %v331 = vmax.f32 %v329, %v330
  %v332 = vsel %vm152, %v98, -inf
  %v333 = vmax.f32 %v331, %v332
  %v334 = vsel %vm152, %v114, -inf
  %v335 = vmax.f32 %v333, %v334
  %v336 = vsel %vm152, %v130, -inf
  %v337 = vmax.f32 %v335, %v336
  %v338 = vsel %vm152, %v146, -inf
  %v339 = vmax.f32 %v337, %v338
  %v340 = vsel %vm152, %v19, -inf
  %v341 = vsel %vm152, %v35, -inf
  %v342 = vmax.f32 %v340, %v341
  %v343 = vsel %vm152, %v51, -inf
  %v344 = vmax.f32 %v342, %v343
  %v345 = vsel %vm152, %v67, -inf
  %v346 = vmax.f32 %v344, %v345
  %v347 = vsel %vm152, %v83, -inf
  %v348 = vmax.f32 %v346, %v347
  %v349 = vsel %vm152, %v99, -inf
  %v350 = vmax.f32 %v348, %v349
  %v351 = vsel %vm152, %v115, -inf
  %v352 = vmax.f32 %v350, %v351
  %v353 = vsel %vm152, %v131, -inf
  %v354 = vmax.f32 %v352, %v353
  %v355 = vsel %vm152, %v147, -inf
  %v356 = vmax.f32 %v354, %v355
  %v357 = vsel %vm152, %v20, -inf
  %v358 = vsel %vm152, %v36, -inf
  %v359 = vmax.f32 %v357, %v358
  %v360 = vsel %vm152, %v52, -inf
  %v361 = vmax.f32 %v359, %v360
  %v362 = vsel %vm152, %v68, -inf
  %v363 = vmax.f32 %v361, %v362
  %v364 = vsel %vm152, %v84, -inf
  %v365 = vmax.f32 %v363, %v364
  %v366 = vsel %vm152, %v100, -inf
  %v367 = vmax.f32 %v365, %v366
  %v368 = vsel %vm152, %v116, -inf
  %v369 = vmax.f32 %v367, %v368
  %v370 = vsel %vm152, %v132, -inf
  %v371 = vmax.f32 %v369, %v370
  %v372 = vsel %vm152, %v148, -inf
  %v373 = vmax.f32 %v371, %v372
  %v374 = vsel %vm152, %v21, -inf
  %v375 = vsel %vm152, %v37, -inf
  %v376 = vmax.f32 %v374, %v375
  %v377 = vsel %vm152, %v53, -inf
  %v378 = vmax.f32 %v376, %v377
  %v379 = vsel %vm152, %v69, -inf
  %v380 = vmax.f32 %v378, %v379
  %v381 = vsel %vm152, %v85, -inf
  %v382 = vmax.f32 %v380, %v381
  %v383 = vsel %vm152, %v101, -inf
  %v384 = vmax.f32 %v382, %v383
  %v385 = vsel %vm152, %v117, -inf
  %v386 = vmax.f32 %v384, %v385
  %v387 = vsel %vm152, %v133, -inf
  %v388 = vmax.f32 %v386, %v387
  %v389 = vsel %vm152, %v149, -inf
  %v390 = vmax.f32 %v388, %v389
  %v391 = vsel %vm152, %v22, -inf
  %v392 = vsel %vm152, %v38, -inf
  %v393 = vmax.f32 %v391, %v392
  %v394 = vsel %vm152, %v54, -inf
  %v395 = vmax.f32 %v393, %v394
  %v396 = vsel %vm152, %v70, -inf
  %v397 = vmax.f32 %v395, %v396
  %v398 = vsel %vm152, %v86, -inf
  %v399 = vmax.f32 %v397, %v398
  %v400 = vsel %vm152, %v102, -inf
  %v401 = vmax.f32 %v399, %v400
  %v402 = vsel %vm152, %v118, -inf
  %v403 = vmax.f32 %v401, %v402
  %v404 = vsel %vm152, %v134, -inf
  %v405 = vmax.f32 %v403, %v404
  %v406 = vsel %vm152, %v150, -inf
  %v407 = vmax.f32 %v405, %v406
  %v408 = vsel %vm152, %v23, -inf
  %v409 = vsel %vm152, %v39, -inf
  %v410 = vmax.f32 %v408, %v409
  %v411 = vsel %vm152, %v55, -inf
  %v412 = vmax.f32 %v410, %v411
  %v413 = vsel %vm152, %v71, -inf
  %v414 = vmax.f32 %v412, %v413
  %v415 = vsel %vm152, %v87, -inf
  %v416 = vmax.f32 %v414, %v415
  %v417 = vsel %vm152, %v103, -inf
  %v418 = vmax.f32 %v416, %v417
  %v419 = vsel %vm152, %v119, -inf
  %v420 = vmax.f32 %v418, %v419
  %v421 = vsel %vm152, %v135, -inf
  %v422 = vmax.f32 %v420, %v421
  %v423 = vsel %vm152, %v151, -inf
  %v424 = vmax.f32 %v422, %v423
  %425 = vst.msk [vmem:[%s1] sm:$0xff] %vm152, %v169
  %426 = vst.msk [vmem:[%s1 + $0x8] sm:$0xff] %vm152, %v186
  %427 = vst.msk [vmem:[%s1 + $0x10] sm:$0xff] %vm152, %v203
  %428 = vst.msk [vmem:[%s1 + $0x18] sm:$0xff] %vm152, %v220
  %429 = vst.msk [vmem:[%s1 + $0x20] sm:$0xff] %vm152, %v237
  %430 = vst.msk [vmem:[%s1 + $0x28] sm:$0xff] %vm152, %v254
  %431 = vst.msk [vmem:[%s1 + $0x30] sm:$0xff] %vm152, %v271
  %432 = vst.msk [vmem:[%s1 + $0x38] sm:$0xff] %vm152, %v288
  %433 = vst.msk [vmem:[%s1 + $0x40] sm:$0xff] %vm152, %v305
  %434 = vst.msk [vmem:[%s1 + $0x48] sm:$0xff] %vm152, %v322
  %435 = vst.msk [vmem:[%s1 + $0x50] sm:$0xff] %vm152, %v339
  %436 = vst.msk [vmem:[%s1 + $0x58] sm:$0xff] %vm152, %v356
  %437 = vst.msk [vmem:[%s1 + $0x60] sm:$0xff] %vm152, %v373
  %438 = vst.msk [vmem:[%s1 + $0x68] sm:$0xff] %vm152, %v390
  %439 = vst.msk [vmem:[%s1 + $0x70] sm:$0xff] %vm152, %v407
  %440 = vst.msk [vmem:[%s1 + $0x78] sm:$0xff] %vm152, %v424
  // Predicated region
  $region6: #{_lambda_.24} parent=0 // pred_check
    _
  $region7: #{_lambda_.24} parent=0 // pred_check_branch
    %442 = sbr.rel (0) target = $region9
  $region8: #{_lambda_.24} parent=0 // pred_region
    _
  $region9: #{_lambda_.24} parent=0 // pred_fallthru
    _
  // Predicated region
  $region10: #{_lambda_.24} parent=0 // pred_check
    _
  $region11: #{_lambda_.24} parent=0 // pred_check_branch
    %444 = sbr.rel (0) target = $region13
  $region12: #{_lambda_.24} parent=0 // pred_region
    _
  $region13: #{_lambda_.24} parent=0 // pred_fallthru
    _

// kernel: _lambda_.26
$region0: #{_lambda_.26}
  #allocation0 [shape = 'u32[]', space=smem, size = 0x4, offset = 0x4, fixed_abs, tag = 'smem constant byte address 0x4 - core index']
  #allocation1 [shape = 'u32[144,128]{1,0:T(1,128)}', space=vmem, size = 0x12000, scoped, tag = 'internal scratch']
  #allocation2 [shape = 'f32[128,128]{1,0:T(8,128)}', space=vmem, size = 0x10000, scoped, tag = 'scratch operand']
  %s0 = inlined_call_operand.vmem [shape: bf16[128,128], index: 0, kind: input, shape index: {}]
  %s1 = inlined_call_operand.vmem [shape: bf16[128,128], index: 1, kind: input, shape index: {}]
  %s2 = inlined_call_operand.vmem [shape: f32[1,128], index: 2, kind: input, shape index: {}]
  %s3 = inlined_call_operand.vmem [shape: f32[1,128], index: 3, kind: input, shape index: {}]
  %s4 = inlined_call_operand.vmem [shape: f32[128,128], index: 4, kind: output, shape index: {}]
  %s5 = sld [smem:[#allocation0]]
  $region34: #{_lambda_.26} parent=0
    _
  %s7 = ssub.s32 1, %s5
  %s8 = scalar_select 0, %s7, %s5
  // Predicated region
  $region2: #{_lambda_.26} parent=0 // pred_check
    _
  $region3: #{_lambda_.26} parent=0 // pred_check_branch
    %10 = sbr.rel (0) target = $region5
  $region4: #{_lambda_.26} parent=0 // pred_region
    _
  $region5: #{_lambda_.26} parent=0 // pred_fallthru
    _
  // Predicated region
  $region6: #{_lambda_.26} parent=0 // pred_check
    _
  $region7: #{_lambda_.26} parent=0 // pred_check_branch
    %12 = sbr.rel (0) target = $region9
  $region8: #{_lambda_.26} parent=0 // pred_region
    _
  $region9: #{_lambda_.26} parent=0 // pred_fallthru
    _
  // Predicated region
  $region10: #{_lambda_.26} parent=0 // pred_check
    _
  $region11: #{_lambda_.26} parent=0 // pred_check_branch
    %14 = sbr.rel (0) target = $region13
  $region12: #{_lambda_.26} parent=0 // pred_region
    _
  $region13: #{_lambda_.26} parent=0 // pred_fallthru
    _
  // Predicated region
  $region14: #{_lambda_.26} parent=0 // pred_check
    _
  $region15: #{_lambda_.26} parent=0 // pred_check_branch
    %16 = sbr.rel (0) target = $region17
  $region16: #{_lambda_.26} parent=0 // pred_region
    _
  $region17: #{_lambda_.26} parent=0 // pred_fallthru
    _
  %p18 = scmp.eq.s32.totalorder 0, 0
  // Predicated region
  $region18: #{_lambda_.26} parent=0 // pred_check
    %p19 = pneg %p18
  $region19: #{_lambda_.26} parent=0 // pred_check_branch
    %21 = sbr.rel (%p19) target = $region21
  $region20: #{_lambda_.26} parent=0 // pred_region
    %22 = vst [vmem:[#allocation2] sm:$0xff] 0.0
    %23 = vst [vmem:[#allocation2 + $0x8] sm:$0xff] 0.0
    %24 = vst [vmem:[#allocation2 + $0x10] sm:$0xff] 0.0
    %25 = vst [vmem:[#allocation2 + $0x18] sm:$0xff] 0.0
    %26 = vst [vmem:[#allocation2 + $0x20] sm:$0xff] 0.0
    %27 = vst [vmem:[#allocation2 + $0x28] sm:$0xff] 0.0
    %28 = vst [vmem:[#allocation2 + $0x30] sm:$0xff] 0.0
    %29 = vst [vmem:[#allocation2 + $0x38] sm:$0xff] 0.0
    %30 = vst [vmem:[#allocation2 + $0x40] sm:$0xff] 0.0
    %31 = vst [vmem:[#allocation2 + $0x48] sm:$0xff] 0.0
    %32 = vst [vmem:[#allocation2 + $0x50] sm:$0xff] 0.0
    %33 = vst [vmem:[#allocation2 + $0x58] sm:$0xff] 0.0
    %34 = vst [vmem:[#allocation2 + $0x60] sm:$0xff] 0.0
    %35 = vst [vmem:[#allocation2 + $0x68] sm:$0xff] 0.0
    %36 = vst [vmem:[#allocation2 + $0x70] sm:$0xff] 0.0
    %37 = vst [vmem:[#allocation2 + $0x78] sm:$0xff] 0.0
  $region21: #{_lambda_.26} parent=0 // pred_fallthru
    _
  %v38 = vld [vmem:[#allocation2] sm:$0xff]
  %v39 = vld [vmem:[#allocation2 + $0x8] sm:$0xff]
  %v40 = vld [vmem:[#allocation2 + $0x10] sm:$0xff]
  %v41 = vld [vmem:[#allocation2 + $0x18] sm:$0xff]
  %v42 = vld [vmem:[#allocation2 + $0x20] sm:$0xff]
  %v43 = vld [vmem:[#allocation2 + $0x28] sm:$0xff]
  %v44 = vld [vmem:[#allocation2 + $0x30] sm:$0xff]
  %v45 = vld [vmem:[#allocation2 + $0x38] sm:$0xff]
  %v46 = vld [vmem:[#allocation2 + $0x40] sm:$0xff]
  %v47 = vld [vmem:[#allocation2 + $0x48] sm:$0xff]
  %v48 = vld [vmem:[#allocation2 + $0x50] sm:$0xff]
  %v49 = vld [vmem:[#allocation2 + $0x58] sm:$0xff]
  %v50 = vld [vmem:[#allocation2 + $0x60] sm:$0xff]
  %v51 = vld [vmem:[#allocation2 + $0x68] sm:$0xff]
  %v52 = vld [vmem:[#allocation2 + $0x70] sm:$0xff]
  %v53 = vld [vmem:[#allocation2 + $0x78] sm:$0xff]
  %v54 = vld [vmem:[%s0] sm:$0xf]
  %v55 = vld [vmem:[%s0 + $0x4] sm:$0xf]
  %v56 = vld [vmem:[%s0 + $0x8] sm:$0xf]
  %v57 = vld [vmem:[%s0 + $0xc] sm:$0xf]
  %v58 = vld [vmem:[%s0 + $0x10] sm:$0xf]
  %v59 = vld [vmem:[%s0 + $0x14] sm:$0xf]
  %v60 = vld [vmem:[%s0 + $0x18] sm:$0xf]
  %v61 = vld [vmem:[%s0 + $0x1c] sm:$0xf]
  %v62 = vld [vmem:[%s0 + $0x20] sm:$0xf]
  %v63 = vld [vmem:[%s0 + $0x24] sm:$0xf]
  %v64 = vld [vmem:[%s0 + $0x28] sm:$0xf]
  %v65 = vld [vmem:[%s0 + $0x2c] sm:$0xf]
  %v66 = vld [vmem:[%s0 + $0x30] sm:$0xf]
  %v67 = vld [vmem:[%s0 + $0x34] sm:$0xf]
  %v68 = vld [vmem:[%s0 + $0x38] sm:$0xf]
  %v69 = vld [vmem:[%s0 + $0x3c] sm:$0xf]
  %v70 = vld [vmem:[%s1] sm:$0xf]
  %v71 = vld [vmem:[%s1 + $0x4] sm:$0xf]
  %v72 = vld [vmem:[%s1 + $0x8] sm:$0xf]
  %v73 = vld [vmem:[%s1 + $0xc] sm:$0xf]
  %v74 = vld [vmem:[%s1 + $0x10] sm:$0xf]
  %v75 = vld [vmem:[%s1 + $0x14] sm:$0xf]
  %v76 = vld [vmem:[%s1 + $0x18] sm:$0xf]
  %v77 = vld [vmem:[%s1 + $0x1c] sm:$0xf]
  %v78 = vld [vmem:[%s1 + $0x20] sm:$0xf]
  %v79 = vld [vmem:[%s1 + $0x24] sm:$0xf]
  %v80 = vld [vmem:[%s1 + $0x28] sm:$0xf]
  %v81 = vld [vmem:[%s1 + $0x2c] sm:$0xf]
  %v82 = vld [vmem:[%s1 + $0x30] sm:$0xf]
  %v83 = vld [vmem:[%s1 + $0x34] sm:$0xf]
  %v84 = vld [vmem:[%s1 + $0x38] sm:$0xf]
  %v85 = vld [vmem:[%s1 + $0x3c] sm:$0xf]
  %v102 = vunpack.c.l.b16 %v54
  %v103 = vunpack.c.l.b16 %v55
  %v104 = vunpack.c.l.b16 %v56
  %v105 = vunpack.c.l.b16 %v57
  %v106 = vunpack.c.l.b16 %v58
  %v107 = vunpack.c.l.b16 %v59
  %v108 = vunpack.c.l.b16 %v60
  %v109 = vunpack.c.l.b16 %v61
  %v110 = vunpack.c.l.b16 %v62
  %v111 = vunpack.c.l.b16 %v63
  %v112 = vunpack.c.l.b16 %v64
  %v113 = vunpack.c.l.b16 %v65
  %v114 = vunpack.c.l.b16 %v66
  %v115 = vunpack.c.l.b16 %v67
  %v116 = vunpack.c.l.b16 %v68
  %v117 = vunpack.c.l.b16 %v69
  %v118 = vpack.c.b16 %v103, %v102
  %v119 = vpack.c.b16 %v105, %v104
  %v120 = vpack.c.b16 %v107, %v106
  %v121 = vpack.c.b16 %v109, %v108
  %v122 = vpack.c.b16 %v111, %v110
  %v123 = vpack.c.b16 %v113, %v112
  %v124 = vpack.c.b16 %v115, %v114
  %v125 = vpack.c.b16 %v117, %v116
  %v150 = vunpack.c.l.b16 %v70
  %v151 = vunpack.c.l.b16 %v71
  %v152 = vunpack.c.l.b16 %v72
  %v153 = vunpack.c.l.b16 %v73
  %v154 = vunpack.c.l.b16 %v74
  %v155 = vunpack.c.l.b16 %v75
  %v156 = vunpack.c.l.b16 %v76
  %v157 = vunpack.c.l.b16 %v77
  %v158 = vunpack.c.l.b16 %v78
  %v159 = vunpack.c.l.b16 %v79
  %v160 = vunpack.c.l.b16 %v80
  %v161 = vunpack.c.l.b16 %v81
  %v162 = vunpack.c.l.b16 %v82
  %v163 = vunpack.c.l.b16 %v83
  %v164 = vunpack.c.l.b16 %v84
  %v165 = vunpack.c.l.b16 %v85
  %v166 = vpack.c.b16 %v151, %v150
  %v167 = vpack.c.b16 %v153, %v152
  %v168 = vpack.c.b16 %v155, %v154
  %v169 = vpack.c.b16 %v157, %v156
  %v170 = vpack.c.b16 %v159, %v158
  %v171 = vpack.c.b16 %v161, %v160
  %v172 = vpack.c.b16 %v163, %v162
  %v173 = vpack.c.b16 %v165, %v164
  %182 = vmatprep.subr.bf16.mxu0 0
  %183 = vmatpush1.bf16.msra.mxu0 %v166
  %184 = vmatprep.subr.bf16.mxu0 0
  %185 = vmatpush1.bf16.msra.mxu0 %v167
  %186 = vmatprep.subr.bf16.mxu0 0
  %187 = vmatpush1.bf16.msra.mxu0 %v168
  %188 = vmatprep.subr.bf16.mxu0 0
  %189 = vmatpush1.bf16.msra.mxu0 %v169
  %190 = vmatprep.subr.bf16.mxu0 0
  %191 = vmatpush1.bf16.msra.mxu0 %v170
  %192 = vmatprep.subr.bf16.mxu0 0
  %193 = vmatpush1.bf16.msra.mxu0 %v171
  %194 = vmatprep.subr.bf16.mxu0 0
  %195 = vmatpush1.bf16.msra.mxu0 %v172
  %196 = vmatprep.subr.bf16.mxu0 0
  %197 = vmatpush1.bf16.msra.mxu0 %v173
  %198 = vmatprep.subr.bf16.mxu0 0
  %199 = vmatpush1.bf16.msra.mxu0 0
  %200 = vmatprep.subr.bf16.mxu0 0
  %201 = vmatpush1.bf16.msra.mxu0 0
  %202 = vmatprep.subr.bf16.mxu0 0
  %203 = vmatpush1.bf16.msra.mxu0 0
  %204 = vmatprep.subr.bf16.mxu0 0
  %205 = vmatpush1.bf16.msra.mxu0 0
  %206 = vmatprep.subr.bf16.mxu0 0
  %207 = vmatpush1.bf16.msra.mxu0 0
  %208 = vmatprep.subr.bf16.mxu0 0
  %209 = vmatpush1.bf16.msra.mxu0 0
  %210 = vmatprep.subr.bf16.mxu0 0
  %211 = vmatpush1.bf16.msra.mxu0 0
  %212 = vmatprep.subr.bf16.mxu0 0
  %213 = vmatpush1.bf16.msra.mxu0 0
  %214 = vmatprep.mubr.bf16.mxu0 0
  %215 = vmatmul.mubr.bf16.gmra.mrb[0].mxu0 %v118
  %v216 = vpop.f32.mrb[0].mxu0
  %v217 = vadd.f32 0.0, %v216
  %v218 = vpop.f32.mrb[0].mxu0
  %v219 = vpop.f32.mrb[0].mxu0
  %v220 = vadd.f32 0.0, %v219
  %v221 = vpop.f32.mrb[0].mxu0
  %222 = vmatprep.mubr.bf16.mxu0 0
  %223 = vmatmul.mubr.bf16.gmra.mrb[0].mxu0 %v119
  %v224 = vpop.f32.mrb[0].mxu0
  %v225 = vadd.f32 0.0, %v224
  %v226 = vpop.f32.mrb[0].mxu0
  %v227 = vpop.f32.mrb[0].mxu0
  %v228 = vadd.f32 0.0, %v227
  %v229 = vpop.f32.mrb[0].mxu0
  %230 = vmatprep.mubr.bf16.mxu0 0
  %231 = vmatmul.mubr.bf16.gmra.mrb[0].mxu0 %v120
  %v232 = vpop.f32.mrb[0].mxu0
  %v233 = vadd.f32 0.0, %v232
  %v234 = vpop.f32.mrb[0].mxu0
  %v235 = vpop.f32.mrb[0].mxu0
  %v236 = vadd.f32 0.0, %v235
  %v237 = vpop.f32.mrb[0].mxu0
  %238 = vmatprep.mubr.bf16.mxu0 0
  %239 = vmatmul.mubr.bf16.gmra.mrb[0].mxu0 %v121
  %v240 = vpop.f32.mrb[0].mxu0
  %v241 = vadd.f32 0.0, %v240
  %v242 = vpop.f32.mrb[0].mxu0
  %v243 = vpop.f32.mrb[0].mxu0
  %v244 = vadd.f32 0.0, %v243
  %v245 = vpop.f32.mrb[0].mxu0
  %246 = vmatprep.mubr.bf16.mxu0 0
  %247 = vmatmul.mubr.bf16.gmra.mrb[0].mxu0 %v122
  %v248 = vpop.f32.mrb[0].mxu0
  %v249 = vadd.f32 0.0, %v248
  %v250 = vpop.f32.mrb[0].mxu0
  %v251 = vpop.f32.mrb[0].mxu0
  %v252 = vadd.f32 0.0, %v251
  %v253 = vpop.f32.mrb[0].mxu0
  %254 = vmatprep.mubr.bf16.mxu0 0
  %255 = vmatmul.mubr.bf16.gmra.mrb[0].mxu0 %v123
  %v256 = vpop.f32.mrb[0].mxu0
  %v257 = vadd.f32 0.0, %v256
  %v258 = vpop.f32.mrb[0].mxu0
  %v259 = vpop.f32.mrb[0].mxu0
  %v260 = vadd.f32 0.0, %v259
  %v261 = vpop.f32.mrb[0].mxu0
  %262 = vmatprep.mubr.bf16.mxu0 0
  %263 = vmatmul.mubr.bf16.gmra.mrb[0].mxu0 %v124
  %v264 = vpop.f32.mrb[0].mxu0
  %v265 = vadd.f32 0.0, %v264
  %v266 = vpop.f32.mrb[0].mxu0
  %v267 = vpop.f32.mrb[0].mxu0
  %v268 = vadd.f32 0.0, %v267
  %v269 = vpop.f32.mrb[0].mxu0
  %270 = vmatprep.mubr.bf16.mxu0 0
  %271 = vmatmul.mubr.bf16.gmra.mrb[0].mxu0 %v125
  %v272 = vpop.f32.mrb[0].mxu0
  %v273 = vadd.f32 0.0, %v272
  %v274 = vpop.f32.mrb[0].mxu0
  %v275 = vpop.f32.mrb[0].mxu0
  %v276 = vadd.f32 0.0, %v275
  %v277 = vpop.f32.mrb[0].mxu0
  %278 = vdwg.mxu0
  %v279 = vadd.f32 %v38, %v217
  %v280 = vadd.f32 %v39, %v220
  %v281 = vadd.f32 %v40, %v225
  %v282 = vadd.f32 %v41, %v228
  %v283 = vadd.f32 %v42, %v233
  %v284 = vadd.f32 %v43, %v236
  %v285 = vadd.f32 %v44, %v241
  %v286 = vadd.f32 %v45, %v244
  %v287 = vadd.f32 %v46, %v249
  %v288 = vadd.f32 %v47, %v252
  %v289 = vadd.f32 %v48, %v257
  %v290 = vadd.f32 %v49, %v260
  %v291 = vadd.f32 %v50, %v265
  %v292 = vadd.f32 %v51, %v268
  %v293 = vadd.f32 %v52, %v273
  %v294 = vadd.f32 %v53, %v276
  %295 = vst [vmem:[#allocation2] sm:$0xff] %v279
  %296 = vst [vmem:[#allocation2 + $0x8] sm:$0xff] %v280
  %297 = vst [vmem:[#allocation2 + $0x10] sm:$0xff] %v281
  %298 = vst [vmem:[#allocation2 + $0x18] sm:$0xff] %v282
  %299 = vst [vmem:[#allocation2 + $0x20] sm:$0xff] %v283
  %300 = vst [vmem:[#allocation2 + $0x28] sm:$0xff] %v284
  %301 = vst [vmem:[#allocation2 + $0x30] sm:$0xff] %v285
  %302 = vst [vmem:[#allocation2 + $0x38] sm:$0xff] %v286
  %303 = vst [vmem:[#allocation2 + $0x40] sm:$0xff] %v287
  %304 = vst [vmem:[#allocation2 + $0x48] sm:$0xff] %v288
  %305 = vst [vmem:[#allocation2 + $0x50] sm:$0xff] %v289
  %306 = vst [vmem:[#allocation2 + $0x58] sm:$0xff] %v290
  %307 = vst [vmem:[#allocation2 + $0x60] sm:$0xff] %v291
  %308 = vst [vmem:[#allocation2 + $0x68] sm:$0xff] %v292
  %309 = vst [vmem:[#allocation2 + $0x70] sm:$0xff] %v293
  %310 = vst [vmem:[#allocation2 + $0x78] sm:$0xff] %v294
  // Predicated region
  $region22: #{_lambda_.26} parent=0 // pred_check
    %p311 = pneg %p18
  $region23: #{_lambda_.26} parent=0 // pred_check_branch
    %313 = sbr.rel (%p311) target = $region25
  $region24: #{_lambda_.26} parent=0 // pred_region
    %v314 = vld [vmem:[#allocation2] sm:$0xff]
    %v315 = vld [vmem:[#allocation2 + $0x8] sm:$0xff]
    %v316 = vld [vmem:[#allocation2 + $0x10] sm:$0xff]
    %v317 = vld [vmem:[#allocation2 + $0x18] sm:$0xff]
    %v318 = vld [vmem:[#allocation2 + $0x20] sm:$0xff]
    %v319 = vld [vmem:[#allocation2 + $0x28] sm:$0xff]
    %v320 = vld [vmem:[#allocation2 + $0x30] sm:$0xff]
    %v321 = vld [vmem:[#allocation2 + $0x38] sm:$0xff]
    %v322 = vld [vmem:[#allocation2 + $0x40] sm:$0xff]
    %v323 = vld [vmem:[#allocation2 + $0x48] sm:$0xff]
    %v324 = vld [vmem:[#allocation2 + $0x50] sm:$0xff]
    %v325 = vld [vmem:[#allocation2 + $0x58] sm:$0xff]
    %v326 = vld [vmem:[#allocation2 + $0x60] sm:$0xff]
    %v327 = vld [vmem:[#allocation2 + $0x68] sm:$0xff]
    %v328 = vld [vmem:[#allocation2 + $0x70] sm:$0xff]
    %v329 = vld [vmem:[#allocation2 + $0x78] sm:$0xff]
    %v330 = vld [vmem:[%s2] sm:$0x1]
    %v331 = vld [vmem:[%s3] sm:$0x1]
    %v333 = vlaneseq
    %v334 = vshrl.u32 %v333, 7
    %v335 = vsub.s32 0, %v334
    %v336 = vrot.slane %v330, %v335
    %v338 = vmul.f32 %v314, %v336
    %v339 = vmul.f32 %v315, %v336
    %v340 = vmul.f32 %v316, %v336
    %v341 = vmul.f32 %v317, %v336
    %v342 = vmul.f32 %v318, %v336
    %v343 = vmul.f32 %v319, %v336
    %v344 = vmul.f32 %v320, %v336
    %v345 = vmul.f32 %v321, %v336
    %v346 = vmul.f32 %v322, %v336
    %v347 = vmul.f32 %v323, %v336
    %v348 = vmul.f32 %v324, %v336
    %v349 = vmul.f32 %v325, %v336
    %v350 = vmul.f32 %v326, %v336
    %v351 = vmul.f32 %v327, %v336
    %v352 = vmul.f32 %v328, %v336
    %v353 = vmul.f32 %v329, %v336
    %v355 = vlaneseq
    %v356 = vshrl.u32 %v355, 7
    %v357 = vsub.s32 0, %v356
    %v358 = vrot.slane %v331, %v357
    %v360 = vadd.f32 %v338, %v358
    %v361 = vadd.f32 %v339, %v358
    %v362 = vadd.f32 %v340, %v358
    %v363 = vadd.f32 %v341, %v358
    %v364 = vadd.f32 %v342, %v358
    %v365 = vadd.f32 %v343, %v358
    %v366 = vadd.f32 %v344, %v358
    %v367 = vadd.f32 %v345, %v358
    %v368 = vadd.f32 %v346, %v358
    %v369 = vadd.f32 %v347, %v358
    %v370 = vadd.f32 %v348, %v358
    %v371 = vadd.f32 %v349, %v358
    %v372 = vadd.f32 %v350, %v358
    %v373 = vadd.f32 %v351, %v358
    %v374 = vadd.f32 %v352, %v358
    %v375 = vadd.f32 %v353, %v358
    %v376 = vmax.f32 %v360, 0.0
    %v377 = vmax.f32 %v361, 0.0
    %v378 = vmax.f32 %v362, 0.0
    %v379 = vmax.f32 %v363, 0.0
    %v380 = vmax.f32 %v364, 0.0
    %v381 = vmax.f32 %v365, 0.0
    %v382 = vmax.f32 %v366, 0.0
    %v383 = vmax.f32 %v367, 0.0
    %v384 = vmax.f32 %v368, 0.0
    %v385 = vmax.f32 %v369, 0.0
    %v386 = vmax.f32 %v370, 0.0
    %v387 = vmax.f32 %v371, 0.0
    %v388 = vmax.f32 %v372, 0.0
    %v389 = vmax.f32 %v373, 0.0
    %v390 = vmax.f32 %v374, 0.0
    %v391 = vmax.f32 %v375, 0.0
    %392 = vst [vmem:[%s4] sm:$0xff] %v376
    %393 = vst [vmem:[%s4 + $0x8] sm:$0xff] %v377
    %394 = vst [vmem:[%s4 + $0x10] sm:$0xff] %v378
    %395 = vst [vmem:[%s4 + $0x18] sm:$0xff] %v379
    %396 = vst [vmem:[%s4 + $0x20] sm:$0xff] %v380
    %397 = vst [vmem:[%s4 + $0x28] sm:$0xff] %v381
    %398 = vst [vmem:[%s4 + $0x30] sm:$0xff] %v382
    %399 = vst [vmem:[%s4 + $0x38] sm:$0xff] %v383
    %400 = vst [vmem:[%s4 + $0x40] sm:$0xff] %v384
    %401 = vst [vmem:[%s4 + $0x48] sm:$0xff] %v385
    %402 = vst [vmem:[%s4 + $0x50] sm:$0xff] %v386
    %403 = vst [vmem:[%s4 + $0x58] sm:$0xff] %v387
    %404 = vst [vmem:[%s4 + $0x60] sm:$0xff] %v388
    %405 = vst [vmem:[%s4 + $0x68] sm:$0xff] %v389
    %406 = vst [vmem:[%s4 + $0x70] sm:$0xff] %v390
    %407 = vst [vmem:[%s4 + $0x78] sm:$0xff] %v391
  $region25: #{_lambda_.26} parent=0 // pred_fallthru
    _
  // Predicated region
  $region26: #{_lambda_.26} parent=0 // pred_check
    _
  $region27: #{_lambda_.26} parent=0 // pred_check_branch
    %409 = sbr.rel (0) target = $region29
  $region28: #{_lambda_.26} parent=0 // pred_region
    _
  $region29: #{_lambda_.26} parent=0 // pred_fallthru
    _
  // Predicated region
  $region30: #{_lambda_.26} parent=0 // pred_check
    _
  $region31: #{_lambda_.26} parent=0 // pred_check_branch
    %411 = sbr.rel (0) target = $region33
  $region32: #{_lambda_.26} parent=0 // pred_region
    _
  $region33: #{_lambda_.26} parent=0 // pred_fallthru
    _

// kernel: _lambda_.25
$region0: #{_lambda_.25}
  #allocation0 [shape = 'u32[]', space=smem, size = 0x4, offset = 0x4, fixed_abs, tag = 'smem constant byte address 0x4 - core index']
  #allocation1 [shape = 'u32[144,128]{1,0:T(1,128)}', space=vmem, size = 0x12000, scoped, tag = 'internal scratch']
  #allocation2 [shape = 'f32[128,128]{1,0:T(8,128)}', space=vmem, size = 0x10000, scoped, tag = 'scratch operand']
  %s0 = inlined_call_operand.vmem [shape: bf16[128,128], index: 0, kind: input, shape index: {}]
  %s1 = inlined_call_operand.vmem [shape: bf16[128,128], index: 1, kind: input, shape index: {}]
  %s2 = inlined_call_operand.vmem [shape: f32[1,128], index: 2, kind: input, shape index: {}]
  %s3 = inlined_call_operand.vmem [shape: f32[1,128], index: 3, kind: input, shape index: {}]
  %s4 = inlined_call_operand.vmem [shape: f32[128,128], index: 4, kind: output, shape index: {}]
  %s5 = sld [smem:[#allocation0]]
  $region34: #{_lambda_.25} parent=0
    _
  %s7 = ssub.s32 1, %s5
  %s8 = scalar_select 0, %s7, %s5
  // Predicated region
  $region2: #{_lambda_.25} parent=0 // pred_check
    _
  $region3: #{_lambda_.25} parent=0 // pred_check_branch
    %10 = sbr.rel (0) target = $region5
  $region4: #{_lambda_.25} parent=0 // pred_region
    _
  $region5: #{_lambda_.25} parent=0 // pred_fallthru
    _
  // Predicated region
  $region6: #{_lambda_.25} parent=0 // pred_check
    _
  $region7: #{_lambda_.25} parent=0 // pred_check_branch
    %12 = sbr.rel (0) target = $region9
  $region8: #{_lambda_.25} parent=0 // pred_region
    _
  $region9: #{_lambda_.25} parent=0 // pred_fallthru
    _
  // Predicated region
  $region10: #{_lambda_.25} parent=0 // pred_check
    _
  $region11: #{_lambda_.25} parent=0 // pred_check_branch
    %14 = sbr.rel (0) target = $region13
  $region12: #{_lambda_.25} parent=0 // pred_region
    _
  $region13: #{_lambda_.25} parent=0 // pred_fallthru
    _
  // Predicated region
  $region14: #{_lambda_.25} parent=0 // pred_check
    _
  $region15: #{_lambda_.25} parent=0 // pred_check_branch
    %16 = sbr.rel (0) target = $region17
  $region16: #{_lambda_.25} parent=0 // pred_region
    _
  $region17: #{_lambda_.25} parent=0 // pred_fallthru
    _
  %p18 = scmp.eq.s32.totalorder 0, 0
  // Predicated region
  $region18: #{_lambda_.25} parent=0 // pred_check
    %p19 = pneg %p18
  $region19: #{_lambda_.25} parent=0 // pred_check_branch
    %21 = sbr.rel (%p19) target = $region21
  $region20: #{_lambda_.25} parent=0 // pred_region
    %22 = vst [vmem:[#allocation2] sm:$0xff] 0.0
    %23 = vst [vmem:[#allocation2 + $0x8] sm:$0xff] 0.0
    %24 = vst [vmem:[#allocation2 + $0x10] sm:$0xff] 0.0
    %25 = vst [vmem:[#allocation2 + $0x18] sm:$0xff] 0.0
    %26 = vst [vmem:[#allocation2 + $0x20] sm:$0xff] 0.0
    %27 = vst [vmem:[#allocation2 + $0x28] sm:$0xff] 0.0
    %28 = vst [vmem:[#allocation2 + $0x30] sm:$0xff] 0.0
    %29 = vst [vmem:[#allocation2 + $0x38] sm:$0xff] 0.0
    %30 = vst [vmem:[#allocation2 + $0x40] sm:$0xff] 0.0
    %31 = vst [vmem:[#allocation2 + $0x48] sm:$0xff] 0.0
    %32 = vst [vmem:[#allocation2 + $0x50] sm:$0xff] 0.0
    %33 = vst [vmem:[#allocation2 + $0x58] sm:$0xff] 0.0
    %34 = vst [vmem:[#allocation2 + $0x60] sm:$0xff] 0.0
    %35 = vst [vmem:[#allocation2 + $0x68] sm:$0xff] 0.0
    %36 = vst [vmem:[#allocation2 + $0x70] sm:$0xff] 0.0
    %37 = vst [vmem:[#allocation2 + $0x78] sm:$0xff] 0.0
  $region21: #{_lambda_.25} parent=0 // pred_fallthru
    _
  %v38 = vld [vmem:[#allocation2] sm:$0xff]
  %v39 = vld [vmem:[#allocation2 + $0x8] sm:$0xff]
  %v40 = vld [vmem:[#allocation2 + $0x10] sm:$0xff]
  %v41 = vld [vmem:[#allocation2 + $0x18] sm:$0xff]
  %v42 = vld [vmem:[#allocation2 + $0x20] sm:$0xff]
  %v43 = vld [vmem:[#allocation2 + $0x28] sm:$0xff]
  %v44 = vld [vmem:[#allocation2 + $0x30] sm:$0xff]
  %v45 = vld [vmem:[#allocation2 + $0x38] sm:$0xff]
  %v46 = vld [vmem:[#allocation2 + $0x40] sm:$0xff]
  %v47 = vld [vmem:[#allocation2 + $0x48] sm:$0xff]
  %v48 = vld [vmem:[#allocation2 + $0x50] sm:$0xff]
  %v49 = vld [vmem:[#allocation2 + $0x58] sm:$0xff]
  %v50 = vld [vmem:[#allocation2 + $0x60] sm:$0xff]
  %v51 = vld [vmem:[#allocation2 + $0x68] sm:$0xff]
  %v52 = vld [vmem:[#allocation2 + $0x70] sm:$0xff]
  %v53 = vld [vmem:[#allocation2 + $0x78] sm:$0xff]
  %v54 = vld [vmem:[%s0] sm:$0xf]
  %v55 = vld [vmem:[%s0 + $0x4] sm:$0xf]
  %v56 = vld [vmem:[%s0 + $0x8] sm:$0xf]
  %v57 = vld [vmem:[%s0 + $0xc] sm:$0xf]
  %v58 = vld [vmem:[%s0 + $0x10] sm:$0xf]
  %v59 = vld [vmem:[%s0 + $0x14] sm:$0xf]
  %v60 = vld [vmem:[%s0 + $0x18] sm:$0xf]
  %v61 = vld [vmem:[%s0 + $0x1c] sm:$0xf]
  %v62 = vld [vmem:[%s0 + $0x20] sm:$0xf]
  %v63 = vld [vmem:[%s0 + $0x24] sm:$0xf]
  %v64 = vld [vmem:[%s0 + $0x28] sm:$0xf]
  %v65 = vld [vmem:[%s0 + $0x2c] sm:$0xf]
  %v66 = vld [vmem:[%s0 + $0x30] sm:$0xf]
  %v67 = vld [vmem:[%s0 + $0x34] sm:$0xf]
  %v68 = vld [vmem:[%s0 + $0x38] sm:$0xf]
  %v69 = vld [vmem:[%s0 + $0x3c] sm:$0xf]
  %v70 = vld [vmem:[%s1] sm:$0xf]
  %v71 = vld [vmem:[%s1 + $0x4] sm:$0xf]
  %v72 = vld [vmem:[%s1 + $0x8] sm:$0xf]
  %v73 = vld [vmem:[%s1 + $0xc] sm:$0xf]
  %v74 = vld [vmem:[%s1 + $0x10] sm:$0xf]
  %v75 = vld [vmem:[%s1 + $0x14] sm:$0xf]
  %v76 = vld [vmem:[%s1 + $0x18] sm:$0xf]
  %v77 = vld [vmem:[%s1 + $0x1c] sm:$0xf]
  %v78 = vld [vmem:[%s1 + $0x20] sm:$0xf]
  %v79 = vld [vmem:[%s1 + $0x24] sm:$0xf]
  %v80 = vld [vmem:[%s1 + $0x28] sm:$0xf]
  %v81 = vld [vmem:[%s1 + $0x2c] sm:$0xf]
  %v82 = vld [vmem:[%s1 + $0x30] sm:$0xf]
  %v83 = vld [vmem:[%s1 + $0x34] sm:$0xf]
  %v84 = vld [vmem:[%s1 + $0x38] sm:$0xf]
  %v85 = vld [vmem:[%s1 + $0x3c] sm:$0xf]
  %v102 = vunpack.c.l.b16 %v54
  %v103 = vunpack.c.l.b16 %v55
  %v104 = vunpack.c.l.b16 %v56
  %v105 = vunpack.c.l.b16 %v57
  %v106 = vunpack.c.l.b16 %v58
  %v107 = vunpack.c.l.b16 %v59
  %v108 = vunpack.c.l.b16 %v60
  %v109 = vunpack.c.l.b16 %v61
  %v110 = vunpack.c.l.b16 %v62
  %v111 = vunpack.c.l.b16 %v63
  %v112 = vunpack.c.l.b16 %v64
  %v113 = vunpack.c.l.b16 %v65
  %v114 = vunpack.c.l.b16 %v66
  %v115 = vunpack.c.l.b16 %v67
  %v116 = vunpack.c.l.b16 %v68
  %v117 = vunpack.c.l.b16 %v69
  %v118 = vpack.c.b16 %v103, %v102
  %v119 = vpack.c.b16 %v105, %v104
  %v120 = vpack.c.b16 %v107, %v106
  %v121 = vpack.c.b16 %v109, %v108
  %v122 = vpack.c.b16 %v111, %v110
  %v123 = vpack.c.b16 %v113, %v112
  %v124 = vpack.c.b16 %v115, %v114
  %v125 = vpack.c.b16 %v117, %v116
  %v150 = vunpack.c.l.b16 %v70
  %v151 = vunpack.c.l.b16 %v71
  %v152 = vunpack.c.l.b16 %v72
  %v153 = vunpack.c.l.b16 %v73
  %v154 = vunpack.c.l.b16 %v74
  %v155 = vunpack.c.l.b16 %v75
  %v156 = vunpack.c.l.b16 %v76
  %v157 = vunpack.c.l.b16 %v77
  %v158 = vunpack.c.l.b16 %v78
  %v159 = vunpack.c.l.b16 %v79
  %v160 = vunpack.c.l.b16 %v80
  %v161 = vunpack.c.l.b16 %v81
  %v162 = vunpack.c.l.b16 %v82
  %v163 = vunpack.c.l.b16 %v83
  %v164 = vunpack.c.l.b16 %v84
  %v165 = vunpack.c.l.b16 %v85
  %v166 = vpack.c.b16 %v151, %v150
  %v167 = vpack.c.b16 %v153, %v152
  %v168 = vpack.c.b16 %v155, %v154
  %v169 = vpack.c.b16 %v157, %v156
  %v170 = vpack.c.b16 %v159, %v158
  %v171 = vpack.c.b16 %v161, %v160
  %v172 = vpack.c.b16 %v163, %v162
  %v173 = vpack.c.b16 %v165, %v164
  %182 = vmatprep.subr.bf16.mxu0 0
  %183 = vmatpush1.bf16.msra.mxu0 %v166
  %184 = vmatprep.subr.bf16.mxu0 0
  %185 = vmatpush1.bf16.msra.mxu0 %v167
  %186 = vmatprep.subr.bf16.mxu0 0
  %187 = vmatpush1.bf16.msra.mxu0 %v168
  %188 = vmatprep.subr.bf16.mxu0 0
  %189 = vmatpush1.bf16.msra.mxu0 %v169
  %190 = vmatprep.subr.bf16.mxu0 0
  %191 = vmatpush1.bf16.msra.mxu0 %v170
  %192 = vmatprep.subr.bf16.mxu0 0
  %193 = vmatpush1.bf16.msra.mxu0 %v171
  %194 = vmatprep.subr.bf16.mxu0 0
  %195 = vmatpush1.bf16.msra.mxu0 %v172
  %196 = vmatprep.subr.bf16.mxu0 0
  %197 = vmatpush1.bf16.msra.mxu0 %v173
  %198 = vmatprep.subr.bf16.mxu0 0
  %199 = vmatpush1.bf16.msra.mxu0 0
  %200 = vmatprep.subr.bf16.mxu0 0
  %201 = vmatpush1.bf16.msra.mxu0 0
  %202 = vmatprep.subr.bf16.mxu0 0
  %203 = vmatpush1.bf16.msra.mxu0 0
  %204 = vmatprep.subr.bf16.mxu0 0
  %205 = vmatpush1.bf16.msra.mxu0 0
  %206 = vmatprep.subr.bf16.mxu0 0
  %207 = vmatpush1.bf16.msra.mxu0 0
  %208 = vmatprep.subr.bf16.mxu0 0
  %209 = vmatpush1.bf16.msra.mxu0 0
  %210 = vmatprep.subr.bf16.mxu0 0
  %211 = vmatpush1.bf16.msra.mxu0 0
  %212 = vmatprep.subr.bf16.mxu0 0
  %213 = vmatpush1.bf16.msra.mxu0 0
  %214 = vmatprep.mubr.bf16.mxu0 0
  %215 = vmatmul.mubr.bf16.gmra.mrb[0].mxu0 %v118
  %v216 = vpop.f32.mrb[0].mxu0
  %v217 = vadd.f32 0.0, %v216
  %v218 = vpop.f32.mrb[0].mxu0
  %v219 = vpop.f32.mrb[0].mxu0
  %v220 = vadd.f32 0.0, %v219
  %v221 = vpop.f32.mrb[0].mxu0
  %222 = vmatprep.mubr.bf16.mxu0 0
  %223 = vmatmul.mubr.bf16.gmra.mrb[0].mxu0 %v119
  %v224 = vpop.f32.mrb[0].mxu0
  %v225 = vadd.f32 0.0, %v224
  %v226 = vpop.f32.mrb[0].mxu0
  %v227 = vpop.f32.mrb[0].mxu0
  %v228 = vadd.f32 0.0, %v227
  %v229 = vpop.f32.mrb[0].mxu0
  %230 = vmatprep.mubr.bf16.mxu0 0
  %231 = vmatmul.mubr.bf16.gmra.mrb[0].mxu0 %v120
  %v232 = vpop.f32.mrb[0].mxu0
  %v233 = vadd.f32 0.0, %v232
  %v234 = vpop.f32.mrb[0].mxu0
  %v235 = vpop.f32.mrb[0].mxu0
  %v236 = vadd.f32 0.0, %v235
  %v237 = vpop.f32.mrb[0].mxu0
  %238 = vmatprep.mubr.bf16.mxu0 0
  %239 = vmatmul.mubr.bf16.gmra.mrb[0].mxu0 %v121
  %v240 = vpop.f32.mrb[0].mxu0
  %v241 = vadd.f32 0.0, %v240
  %v242 = vpop.f32.mrb[0].mxu0
  %v243 = vpop.f32.mrb[0].mxu0
  %v244 = vadd.f32 0.0, %v243
  %v245 = vpop.f32.mrb[0].mxu0
  %246 = vmatprep.mubr.bf16.mxu0 0
  %247 = vmatmul.mubr.bf16.gmra.mrb[0].mxu0 %v122
  %v248 = vpop.f32.mrb[0].mxu0
  %v249 = vadd.f32 0.0, %v248
  %v250 = vpop.f32.mrb[0].mxu0
  %v251 = vpop.f32.mrb[0].mxu0
  %v252 = vadd.f32 0.0, %v251
  %v253 = vpop.f32.mrb[0].mxu0
  %254 = vmatprep.mubr.bf16.mxu0 0
  %255 = vmatmul.mubr.bf16.gmra.mrb[0].mxu0 %v123
  %v256 = vpop.f32.mrb[0].mxu0
  %v257 = vadd.f32 0.0, %v256
  %v258 = vpop.f32.mrb[0].mxu0
  %v259 = vpop.f32.mrb[0].mxu0
  %v260 = vadd.f32 0.0, %v259
  %v261 = vpop.f32.mrb[0].mxu0
  %262 = vmatprep.mubr.bf16.mxu0 0
  %263 = vmatmul.mubr.bf16.gmra.mrb[0].mxu0 %v124
  %v264 = vpop.f32.mrb[0].mxu0
  %v265 = vadd.f32 0.0, %v264
  %v266 = vpop.f32.mrb[0].mxu0
  %v267 = vpop.f32.mrb[0].mxu0
  %v268 = vadd.f32 0.0, %v267
  %v269 = vpop.f32.mrb[0].mxu0
  %270 = vmatprep.mubr.bf16.mxu0 0
  %271 = vmatmul.mubr.bf16.gmra.mrb[0].mxu0 %v125
  %v272 = vpop.f32.mrb[0].mxu0
  %v273 = vadd.f32 0.0, %v272
  %v274 = vpop.f32.mrb[0].mxu0
  %v275 = vpop.f32.mrb[0].mxu0
  %v276 = vadd.f32 0.0, %v275
  %v277 = vpop.f32.mrb[0].mxu0
  %278 = vdwg.mxu0
  %v279 = vadd.f32 %v38, %v217
  %v280 = vadd.f32 %v39, %v220
  %v281 = vadd.f32 %v40, %v225
  %v282 = vadd.f32 %v41, %v228
  %v283 = vadd.f32 %v42, %v233
  %v284 = vadd.f32 %v43, %v236
  %v285 = vadd.f32 %v44, %v241
  %v286 = vadd.f32 %v45, %v244
  %v287 = vadd.f32 %v46, %v249
  %v288 = vadd.f32 %v47, %v252
  %v289 = vadd.f32 %v48, %v257
  %v290 = vadd.f32 %v49, %v260
  %v291 = vadd.f32 %v50, %v265
  %v292 = vadd.f32 %v51, %v268
  %v293 = vadd.f32 %v52, %v273
  %v294 = vadd.f32 %v53, %v276
  %295 = vst [vmem:[#allocation2] sm:$0xff] %v279
  %296 = vst [vmem:[#allocation2 + $0x8] sm:$0xff] %v280
  %297 = vst [vmem:[#allocation2 + $0x10] sm:$0xff] %v281
  %298 = vst [vmem:[#allocation2 + $0x18] sm:$0xff] %v282
  %299 = vst [vmem:[#allocation2 + $0x20] sm:$0xff] %v283
  %300 = vst [vmem:[#allocation2 + $0x28] sm:$0xff] %v284
  %301 = vst [vmem:[#allocation2 + $0x30] sm:$0xff] %v285
  %302 = vst [vmem:[#allocation2 + $0x38] sm:$0xff] %v286
  %303 = vst [vmem:[#allocation2 + $0x40] sm:$0xff] %v287
  %304 = vst [vmem:[#allocation2 + $0x48] sm:$0xff] %v288
  %305 = vst [vmem:[#allocation2 + $0x50] sm:$0xff] %v289
  %306 = vst [vmem:[#allocation2 + $0x58] sm:$0xff] %v290
  %307 = vst [vmem:[#allocation2 + $0x60] sm:$0xff] %v291
  %308 = vst [vmem:[#allocation2 + $0x68] sm:$0xff] %v292
  %309 = vst [vmem:[#allocation2 + $0x70] sm:$0xff] %v293
  %310 = vst [vmem:[#allocation2 + $0x78] sm:$0xff] %v294
  // Predicated region
  $region22: #{_lambda_.25} parent=0 // pred_check
    %p311 = pneg %p18
  $region23: #{_lambda_.25} parent=0 // pred_check_branch
    %313 = sbr.rel (%p311) target = $region25
  $region24: #{_lambda_.25} parent=0 // pred_region
    %v314 = vld [vmem:[#allocation2] sm:$0xff]
    %v315 = vld [vmem:[#allocation2 + $0x8] sm:$0xff]
    %v316 = vld [vmem:[#allocation2 + $0x10] sm:$0xff]
    %v317 = vld [vmem:[#allocation2 + $0x18] sm:$0xff]
    %v318 = vld [vmem:[#allocation2 + $0x20] sm:$0xff]
    %v319 = vld [vmem:[#allocation2 + $0x28] sm:$0xff]
    %v320 = vld [vmem:[#allocation2 + $0x30] sm:$0xff]
    %v321 = vld [vmem:[#allocation2 + $0x38] sm:$0xff]
    %v322 = vld [vmem:[#allocation2 + $0x40] sm:$0xff]
    %v323 = vld [vmem:[#allocation2 + $0x48] sm:$0xff]
    %v324 = vld [vmem:[#allocation2 + $0x50] sm:$0xff]
    %v325 = vld [vmem:[#allocation2 + $0x58] sm:$0xff]
    %v326 = vld [vmem:[#allocation2 + $0x60] sm:$0xff]
    %v327 = vld [vmem:[#allocation2 + $0x68] sm:$0xff]
    %v328 = vld [vmem:[#allocation2 + $0x70] sm:$0xff]
    %v329 = vld [vmem:[#allocation2 + $0x78] sm:$0xff]
    %v330 = vld [vmem:[%s2] sm:$0x1]
    %v331 = vld [vmem:[%s3] sm:$0x1]
    %v333 = vlaneseq
    %v334 = vshrl.u32 %v333, 7
    %v335 = vsub.s32 0, %v334
    %v336 = vrot.slane %v330, %v335
    %v338 = vmul.f32 %v314, %v336
    %v339 = vmul.f32 %v315, %v336
    %v340 = vmul.f32 %v316, %v336
    %v341 = vmul.f32 %v317, %v336
    %v342 = vmul.f32 %v318, %v336
    %v343 = vmul.f32 %v319, %v336
    %v344 = vmul.f32 %v320, %v336
    %v345 = vmul.f32 %v321, %v336
    %v346 = vmul.f32 %v322, %v336
    %v347 = vmul.f32 %v323, %v336
    %v348 = vmul.f32 %v324, %v336
    %v349 = vmul.f32 %v325, %v336
    %v350 = vmul.f32 %v326, %v336
    %v351 = vmul.f32 %v327, %v336
    %v352 = vmul.f32 %v328, %v336
    %v353 = vmul.f32 %v329, %v336
    %v355 = vlaneseq
    %v356 = vshrl.u32 %v355, 7
    %v357 = vsub.s32 0, %v356
    %v358 = vrot.slane %v331, %v357
    %v360 = vadd.f32 %v338, %v358
    %v361 = vadd.f32 %v339, %v358
    %v362 = vadd.f32 %v340, %v358
    %v363 = vadd.f32 %v341, %v358
    %v364 = vadd.f32 %v342, %v358
    %v365 = vadd.f32 %v343, %v358
    %v366 = vadd.f32 %v344, %v358
    %v367 = vadd.f32 %v345, %v358
    %v368 = vadd.f32 %v346, %v358
    %v369 = vadd.f32 %v347, %v358
    %v370 = vadd.f32 %v348, %v358
    %v371 = vadd.f32 %v349, %v358
    %v372 = vadd.f32 %v350, %v358
    %v373 = vadd.f32 %v351, %v358
    %v374 = vadd.f32 %v352, %v358
    %v375 = vadd.f32 %v353, %v358
    %376 = vst [vmem:[%s4] sm:$0xff] %v360
    %377 = vst [vmem:[%s4 + $0x8] sm:$0xff] %v361
    %378 = vst [vmem:[%s4 + $0x10] sm:$0xff] %v362
    %379 = vst [vmem:[%s4 + $0x18] sm:$0xff] %v363
    %380 = vst [vmem:[%s4 + $0x20] sm:$0xff] %v364
    %381 = vst [vmem:[%s4 + $0x28] sm:$0xff] %v365
    %382 = vst [vmem:[%s4 + $0x30] sm:$0xff] %v366
    %383 = vst [vmem:[%s4 + $0x38] sm:$0xff] %v367
    %384 = vst [vmem:[%s4 + $0x40] sm:$0xff] %v368
    %385 = vst [vmem:[%s4 + $0x48] sm:$0xff] %v369
    %386 = vst [vmem:[%s4 + $0x50] sm:$0xff] %v370
    %387 = vst [vmem:[%s4 + $0x58] sm:$0xff] %v371
    %388 = vst [vmem:[%s4 + $0x60] sm:$0xff] %v372
    %389 = vst [vmem:[%s4 + $0x68] sm:$0xff] %v373
    %390 = vst [vmem:[%s4 + $0x70] sm:$0xff] %v374
    %391 = vst [vmem:[%s4 + $0x78] sm:$0xff] %v375
  $region25: #{_lambda_.25} parent=0 // pred_fallthru
    _
  // Predicated region
  $region26: #{_lambda_.25} parent=0 // pred_check
    _
  $region27: #{_lambda_.25} parent=0 // pred_check_branch
    %393 = sbr.rel (0) target = $region29
  $region28: #{_lambda_.25} parent=0 // pred_region
    _
  $region29: #{_lambda_.25} parent=0 // pred_fallthru
    _
  // Predicated region
  $region30: #{_lambda_.25} parent=0 // pred_check
    _
  $region31: #{_lambda_.25} parent=0 // pred_check_branch
    %395 = sbr.rel (0) target = $region33
  $region32: #{_lambda_.25} parent=0 // pred_region
    _
  $region33: #{_lambda_.25} parent=0 // pred_fallthru
    _

// kernel: _lambda_.28
$region0: #{_lambda_.28}
  #allocation0 [shape = 'u32[]', space=smem, size = 0x4, offset = 0x4, fixed_abs, tag = 'smem constant byte address 0x4 - core index']
  #allocation1 [shape = 'u32[144,128]{1,0:T(1,128)}', space=vmem, size = 0x12000, scoped, tag = 'internal scratch']
  #allocation2 [shape = 'f32[128,128]{1,0:T(8,128)}', space=vmem, size = 0x10000, scoped, tag = 'scratch operand']
  %s0 = inlined_call_operand.vmem [shape: bf16[128,128], index: 0, kind: input, shape index: {}]
  %s1 = inlined_call_operand.vmem [shape: bf16[128,128], index: 1, kind: input, shape index: {}]
  %s2 = inlined_call_operand.vmem [shape: f32[1,128], index: 2, kind: input, shape index: {}]
  %s3 = inlined_call_operand.vmem [shape: f32[1,128], index: 3, kind: input, shape index: {}]
  %s4 = inlined_call_operand.vmem [shape: f32[128,128], index: 4, kind: input, shape index: {}]
  %s5 = inlined_call_operand.vmem [shape: f32[128,128], index: 5, kind: output, shape index: {}]
  %s6 = sld [smem:[#allocation0]]
  $region38: #{_lambda_.28} parent=0
    _
  %s8 = ssub.s32 1, %s6
  %s9 = scalar_select 0, %s8, %s6
  // Predicated region
  $region2: #{_lambda_.28} parent=0 // pred_check
    _
  $region3: #{_lambda_.28} parent=0 // pred_check_branch
    %11 = sbr.rel (0) target = $region5
  $region4: #{_lambda_.28} parent=0 // pred_region
    _
  $region5: #{_lambda_.28} parent=0 // pred_fallthru
    _
  // Predicated region
  $region6: #{_lambda_.28} parent=0 // pred_check
    _
  $region7: #{_lambda_.28} parent=0 // pred_check_branch
    %13 = sbr.rel (0) target = $region9
  $region8: #{_lambda_.28} parent=0 // pred_region
    _
  $region9: #{_lambda_.28} parent=0 // pred_fallthru
    _
  // Predicated region
  $region10: #{_lambda_.28} parent=0 // pred_check
    _
  $region11: #{_lambda_.28} parent=0 // pred_check_branch
    %15 = sbr.rel (0) target = $region13
  $region12: #{_lambda_.28} parent=0 // pred_region
    _
  $region13: #{_lambda_.28} parent=0 // pred_fallthru
    _
  // Predicated region
  $region14: #{_lambda_.28} parent=0 // pred_check
    _
  $region15: #{_lambda_.28} parent=0 // pred_check_branch
    %17 = sbr.rel (0) target = $region17
  $region16: #{_lambda_.28} parent=0 // pred_region
    _
  $region17: #{_lambda_.28} parent=0 // pred_fallthru
    _
  // Predicated region
  $region18: #{_lambda_.28} parent=0 // pred_check
    _
  $region19: #{_lambda_.28} parent=0 // pred_check_branch
    %19 = sbr.rel (0) target = $region21
  $region20: #{_lambda_.28} parent=0 // pred_region
    _
  $region21: #{_lambda_.28} parent=0 // pred_fallthru
    _
  %p21 = scmp.eq.s32.totalorder 0, 0
  // Predicated region
  $region22: #{_lambda_.28} parent=0 // pred_check
    %p22 = pneg %p21
  $region23: #{_lambda_.28} parent=0 // pred_check_branch
    %24 = sbr.rel (%p22) target = $region25
  $region24: #{_lambda_.28} parent=0 // pred_region
    %25 = vst [vmem:[#allocation2] sm:$0xff] 0.0
    %26 = vst [vmem:[#allocation2 + $0x8] sm:$0xff] 0.0
    %27 = vst [vmem:[#allocation2 + $0x10] sm:$0xff] 0.0
    %28 = vst [vmem:[#allocation2 + $0x18] sm:$0xff] 0.0
    %29 = vst [vmem:[#allocation2 + $0x20] sm:$0xff] 0.0
    %30 = vst [vmem:[#allocation2 + $0x28] sm:$0xff] 0.0
    %31 = vst [vmem:[#allocation2 + $0x30] sm:$0xff] 0.0
    %32 = vst [vmem:[#allocation2 + $0x38] sm:$0xff] 0.0
    %33 = vst [vmem:[#allocation2 + $0x40] sm:$0xff] 0.0
    %34 = vst [vmem:[#allocation2 + $0x48] sm:$0xff] 0.0
    %35 = vst [vmem:[#allocation2 + $0x50] sm:$0xff] 0.0
    %36 = vst [vmem:[#allocation2 + $0x58] sm:$0xff] 0.0
    %37 = vst [vmem:[#allocation2 + $0x60] sm:$0xff] 0.0
    %38 = vst [vmem:[#allocation2 + $0x68] sm:$0xff] 0.0
    %39 = vst [vmem:[#allocation2 + $0x70] sm:$0xff] 0.0
    %40 = vst [vmem:[#allocation2 + $0x78] sm:$0xff] 0.0
  $region25: #{_lambda_.28} parent=0 // pred_fallthru
    _
  %v41 = vld [vmem:[#allocation2] sm:$0xff]
  %v42 = vld [vmem:[#allocation2 + $0x8] sm:$0xff]
  %v43 = vld [vmem:[#allocation2 + $0x10] sm:$0xff]
  %v44 = vld [vmem:[#allocation2 + $0x18] sm:$0xff]
  %v45 = vld [vmem:[#allocation2 + $0x20] sm:$0xff]
  %v46 = vld [vmem:[#allocation2 + $0x28] sm:$0xff]
  %v47 = vld [vmem:[#allocation2 + $0x30] sm:$0xff]
  %v48 = vld [vmem:[#allocation2 + $0x38] sm:$0xff]
  %v49 = vld [vmem:[#allocation2 + $0x40] sm:$0xff]
  %v50 = vld [vmem:[#allocation2 + $0x48] sm:$0xff]
  %v51 = vld [vmem:[#allocation2 + $0x50] sm:$0xff]
  %v52 = vld [vmem:[#allocation2 + $0x58] sm:$0xff]
  %v53 = vld [vmem:[#allocation2 + $0x60] sm:$0xff]
  %v54 = vld [vmem:[#allocation2 + $0x68] sm:$0xff]
  %v55 = vld [vmem:[#allocation2 + $0x70] sm:$0xff]
  %v56 = vld [vmem:[#allocation2 + $0x78] sm:$0xff]
  %v57 = vld [vmem:[%s0] sm:$0xf]
  %v58 = vld [vmem:[%s0 + $0x4] sm:$0xf]
  %v59 = vld [vmem:[%s0 + $0x8] sm:$0xf]
  %v60 = vld [vmem:[%s0 + $0xc] sm:$0xf]
  %v61 = vld [vmem:[%s0 + $0x10] sm:$0xf]
  %v62 = vld [vmem:[%s0 + $0x14] sm:$0xf]
  %v63 = vld [vmem:[%s0 + $0x18] sm:$0xf]
  %v64 = vld [vmem:[%s0 + $0x1c] sm:$0xf]
  %v65 = vld [vmem:[%s0 + $0x20] sm:$0xf]
  %v66 = vld [vmem:[%s0 + $0x24] sm:$0xf]
  %v67 = vld [vmem:[%s0 + $0x28] sm:$0xf]
  %v68 = vld [vmem:[%s0 + $0x2c] sm:$0xf]
  %v69 = vld [vmem:[%s0 + $0x30] sm:$0xf]
  %v70 = vld [vmem:[%s0 + $0x34] sm:$0xf]
  %v71 = vld [vmem:[%s0 + $0x38] sm:$0xf]
  %v72 = vld [vmem:[%s0 + $0x3c] sm:$0xf]
  %v73 = vld [vmem:[%s1] sm:$0xf]
  %v74 = vld [vmem:[%s1 + $0x4] sm:$0xf]
  %v75 = vld [vmem:[%s1 + $0x8] sm:$0xf]
  %v76 = vld [vmem:[%s1 + $0xc] sm:$0xf]
  %v77 = vld [vmem:[%s1 + $0x10] sm:$0xf]
  %v78 = vld [vmem:[%s1 + $0x14] sm:$0xf]
  %v79 = vld [vmem:[%s1 + $0x18] sm:$0xf]
  %v80 = vld [vmem:[%s1 + $0x1c] sm:$0xf]
  %v81 = vld [vmem:[%s1 + $0x20] sm:$0xf]
  %v82 = vld [vmem:[%s1 + $0x24] sm:$0xf]
  %v83 = vld [vmem:[%s1 + $0x28] sm:$0xf]
  %v84 = vld [vmem:[%s1 + $0x2c] sm:$0xf]
  %v85 = vld [vmem:[%s1 + $0x30] sm:$0xf]
  %v86 = vld [vmem:[%s1 + $0x34] sm:$0xf]
  %v87 = vld [vmem:[%s1 + $0x38] sm:$0xf]
  %v88 = vld [vmem:[%s1 + $0x3c] sm:$0xf]
  %v105 = vunpack.c.l.b16 %v57
  %v106 = vunpack.c.l.b16 %v58
  %v107 = vunpack.c.l.b16 %v59
  %v108 = vunpack.c.l.b16 %v60
  %v109 = vunpack.c.l.b16 %v61
  %v110 = vunpack.c.l.b16 %v62
  %v111 = vunpack.c.l.b16 %v63
  %v112 = vunpack.c.l.b16 %v64
  %v113 = vunpack.c.l.b16 %v65
  %v114 = vunpack.c.l.b16 %v66
  %v115 = vunpack.c.l.b16 %v67
  %v116 = vunpack.c.l.b16 %v68
  %v117 = vunpack.c.l.b16 %v69
  %v118 = vunpack.c.l.b16 %v70
  %v119 = vunpack.c.l.b16 %v71
  %v120 = vunpack.c.l.b16 %v72
  %v121 = vpack.c.b16 %v106, %v105
  %v122 = vpack.c.b16 %v108, %v107
  %v123 = vpack.c.b16 %v110, %v109
  %v124 = vpack.c.b16 %v112, %v111
  %v125 = vpack.c.b16 %v114, %v113
  %v126 = vpack.c.b16 %v116, %v115
  %v127 = vpack.c.b16 %v118, %v117
  %v128 = vpack.c.b16 %v120, %v119
  %v153 = vunpack.c.l.b16 %v73
  %v154 = vunpack.c.l.b16 %v74
  %v155 = vunpack.c.l.b16 %v75
  %v156 = vunpack.c.l.b16 %v76
  %v157 = vunpack.c.l.b16 %v77
  %v158 = vunpack.c.l.b16 %v78
  %v159 = vunpack.c.l.b16 %v79
  %v160 = vunpack.c.l.b16 %v80
  %v161 = vunpack.c.l.b16 %v81
  %v162 = vunpack.c.l.b16 %v82
  %v163 = vunpack.c.l.b16 %v83
  %v164 = vunpack.c.l.b16 %v84
  %v165 = vunpack.c.l.b16 %v85
  %v166 = vunpack.c.l.b16 %v86
  %v167 = vunpack.c.l.b16 %v87
  %v168 = vunpack.c.l.b16 %v88
  %v169 = vpack.c.b16 %v154, %v153
  %v170 = vpack.c.b16 %v156, %v155
  %v171 = vpack.c.b16 %v158, %v157
  %v172 = vpack.c.b16 %v160, %v159
  %v173 = vpack.c.b16 %v162, %v161
  %v174 = vpack.c.b16 %v164, %v163
  %v175 = vpack.c.b16 %v166, %v165
  %v176 = vpack.c.b16 %v168, %v167
  %185 = vmatprep.subr.bf16.mxu0 0
  %186 = vmatpush1.bf16.msra.mxu0 %v169
  %187 = vmatprep.subr.bf16.mxu0 0
  %188 = vmatpush1.bf16.msra.mxu0 %v170
  %189 = vmatprep.subr.bf16.mxu0 0
  %190 = vmatpush1.bf16.msra.mxu0 %v171
  %191 = vmatprep.subr.bf16.mxu0 0
  %192 = vmatpush1.bf16.msra.mxu0 %v172
  %193 = vmatprep.subr.bf16.mxu0 0
  %194 = vmatpush1.bf16.msra.mxu0 %v173
  %195 = vmatprep.subr.bf16.mxu0 0
  %196 = vmatpush1.bf16.msra.mxu0 %v174
  %197 = vmatprep.subr.bf16.mxu0 0
  %198 = vmatpush1.bf16.msra.mxu0 %v175
  %199 = vmatprep.subr.bf16.mxu0 0
  %200 = vmatpush1.bf16.msra.mxu0 %v176
  %201 = vmatprep.subr.bf16.mxu0 0
  %202 = vmatpush1.bf16.msra.mxu0 0
  %203 = vmatprep.subr.bf16.mxu0 0
  %204 = vmatpush1.bf16.msra.mxu0 0
  %205 = vmatprep.subr.bf16.mxu0 0
  %206 = vmatpush1.bf16.msra.mxu0 0
  %207 = vmatprep.subr.bf16.mxu0 0
  %208 = vmatpush1.bf16.msra.mxu0 0
  %209 = vmatprep.subr.bf16.mxu0 0
  %210 = vmatpush1.bf16.msra.mxu0 0
  %211 = vmatprep.subr.bf16.mxu0 0
  %212 = vmatpush1.bf16.msra.mxu0 0
  %213 = vmatprep.subr.bf16.mxu0 0
  %214 = vmatpush1.bf16.msra.mxu0 0
  %215 = vmatprep.subr.bf16.mxu0 0
  %216 = vmatpush1.bf16.msra.mxu0 0
  %217 = vmatprep.mubr.bf16.mxu0 0
  %218 = vmatmul.mubr.bf16.gmra.mrb[0].mxu0 %v121
  %v219 = vpop.f32.mrb[0].mxu0
  %v220 = vadd.f32 0.0, %v219
  %v221 = vpop.f32.mrb[0].mxu0
  %v222 = vpop.f32.mrb[0].mxu0
  %v223 = vadd.f32 0.0, %v222
  %v224 = vpop.f32.mrb[0].mxu0
  %225 = vmatprep.mubr.bf16.mxu0 0
  %226 = vmatmul.mubr.bf16.gmra.mrb[0].mxu0 %v122
  %v227 = vpop.f32.mrb[0].mxu0
  %v228 = vadd.f32 0.0, %v227
  %v229 = vpop.f32.mrb[0].mxu0
  %v230 = vpop.f32.mrb[0].mxu0
  %v231 = vadd.f32 0.0, %v230
  %v232 = vpop.f32.mrb[0].mxu0
  %233 = vmatprep.mubr.bf16.mxu0 0
  %234 = vmatmul.mubr.bf16.gmra.mrb[0].mxu0 %v123
  %v235 = vpop.f32.mrb[0].mxu0
  %v236 = vadd.f32 0.0, %v235
  %v237 = vpop.f32.mrb[0].mxu0
  %v238 = vpop.f32.mrb[0].mxu0
  %v239 = vadd.f32 0.0, %v238
  %v240 = vpop.f32.mrb[0].mxu0
  %241 = vmatprep.mubr.bf16.mxu0 0
  %242 = vmatmul.mubr.bf16.gmra.mrb[0].mxu0 %v124
  %v243 = vpop.f32.mrb[0].mxu0
  %v244 = vadd.f32 0.0, %v243
  %v245 = vpop.f32.mrb[0].mxu0
  %v246 = vpop.f32.mrb[0].mxu0
  %v247 = vadd.f32 0.0, %v246
  %v248 = vpop.f32.mrb[0].mxu0
  %249 = vmatprep.mubr.bf16.mxu0 0
  %250 = vmatmul.mubr.bf16.gmra.mrb[0].mxu0 %v125
  %v251 = vpop.f32.mrb[0].mxu0
  %v252 = vadd.f32 0.0, %v251
  %v253 = vpop.f32.mrb[0].mxu0
  %v254 = vpop.f32.mrb[0].mxu0
  %v255 = vadd.f32 0.0, %v254
  %v256 = vpop.f32.mrb[0].mxu0
  %257 = vmatprep.mubr.bf16.mxu0 0
  %258 = vmatmul.mubr.bf16.gmra.mrb[0].mxu0 %v126
  %v259 = vpop.f32.mrb[0].mxu0
  %v260 = vadd.f32 0.0, %v259
  %v261 = vpop.f32.mrb[0].mxu0
  %v262 = vpop.f32.mrb[0].mxu0
  %v263 = vadd.f32 0.0, %v262
  %v264 = vpop.f32.mrb[0].mxu0
  %265 = vmatprep.mubr.bf16.mxu0 0
  %266 = vmatmul.mubr.bf16.gmra.mrb[0].mxu0 %v127
  %v267 = vpop.f32.mrb[0].mxu0
  %v268 = vadd.f32 0.0, %v267
  %v269 = vpop.f32.mrb[0].mxu0
  %v270 = vpop.f32.mrb[0].mxu0
  %v271 = vadd.f32 0.0, %v270
  %v272 = vpop.f32.mrb[0].mxu0
  %273 = vmatprep.mubr.bf16.mxu0 0
  %274 = vmatmul.mubr.bf16.gmra.mrb[0].mxu0 %v128
  %v275 = vpop.f32.mrb[0].mxu0
  %v276 = vadd.f32 0.0, %v275
  %v277 = vpop.f32.mrb[0].mxu0
  %v278 = vpop.f32.mrb[0].mxu0
  %v279 = vadd.f32 0.0, %v278
  %v280 = vpop.f32.mrb[0].mxu0
  %281 = vdwg.mxu0
  %v282 = vadd.f32 %v41, %v220
  %v283 = vadd.f32 %v42, %v223
  %v284 = vadd.f32 %v43, %v228
  %v285 = vadd.f32 %v44, %v231
  %v286 = vadd.f32 %v45, %v236
  %v287 = vadd.f32 %v46, %v239
  %v288 = vadd.f32 %v47, %v244
  %v289 = vadd.f32 %v48, %v247
  %v290 = vadd.f32 %v49, %v252
  %v291 = vadd.f32 %v50, %v255
  %v292 = vadd.f32 %v51, %v260
  %v293 = vadd.f32 %v52, %v263
  %v294 = vadd.f32 %v53, %v268
  %v295 = vadd.f32 %v54, %v271
  %v296 = vadd.f32 %v55, %v276
  %v297 = vadd.f32 %v56, %v279
  %298 = vst [vmem:[#allocation2] sm:$0xff] %v282
  %299 = vst [vmem:[#allocation2 + $0x8] sm:$0xff] %v283
  %300 = vst [vmem:[#allocation2 + $0x10] sm:$0xff] %v284
  %301 = vst [vmem:[#allocation2 + $0x18] sm:$0xff] %v285
  %302 = vst [vmem:[#allocation2 + $0x20] sm:$0xff] %v286
  %303 = vst [vmem:[#allocation2 + $0x28] sm:$0xff] %v287
  %304 = vst [vmem:[#allocation2 + $0x30] sm:$0xff] %v288
  %305 = vst [vmem:[#allocation2 + $0x38] sm:$0xff] %v289
  %306 = vst [vmem:[#allocation2 + $0x40] sm:$0xff] %v290
  %307 = vst [vmem:[#allocation2 + $0x48] sm:$0xff] %v291
  %308 = vst [vmem:[#allocation2 + $0x50] sm:$0xff] %v292
  %309 = vst [vmem:[#allocation2 + $0x58] sm:$0xff] %v293
  %310 = vst [vmem:[#allocation2 + $0x60] sm:$0xff] %v294
  %311 = vst [vmem:[#allocation2 + $0x68] sm:$0xff] %v295
  %312 = vst [vmem:[#allocation2 + $0x70] sm:$0xff] %v296
  %313 = vst [vmem:[#allocation2 + $0x78] sm:$0xff] %v297
  // Predicated region
  $region26: #{_lambda_.28} parent=0 // pred_check
    %p314 = pneg %p21
  $region27: #{_lambda_.28} parent=0 // pred_check_branch
    %316 = sbr.rel (%p314) target = $region29
  $region28: #{_lambda_.28} parent=0 // pred_region
    %v317 = vld [vmem:[#allocation2] sm:$0xff]
    %v318 = vld [vmem:[#allocation2 + $0x8] sm:$0xff]
    %v319 = vld [vmem:[#allocation2 + $0x10] sm:$0xff]
    %v320 = vld [vmem:[#allocation2 + $0x18] sm:$0xff]
    %v321 = vld [vmem:[#allocation2 + $0x20] sm:$0xff]
    %v322 = vld [vmem:[#allocation2 + $0x28] sm:$0xff]
    %v323 = vld [vmem:[#allocation2 + $0x30] sm:$0xff]
    %v324 = vld [vmem:[#allocation2 + $0x38] sm:$0xff]
    %v325 = vld [vmem:[#allocation2 + $0x40] sm:$0xff]
    %v326 = vld [vmem:[#allocation2 + $0x48] sm:$0xff]
    %v327 = vld [vmem:[#allocation2 + $0x50] sm:$0xff]
    %v328 = vld [vmem:[#allocation2 + $0x58] sm:$0xff]
    %v329 = vld [vmem:[#allocation2 + $0x60] sm:$0xff]
    %v330 = vld [vmem:[#allocation2 + $0x68] sm:$0xff]
    %v331 = vld [vmem:[#allocation2 + $0x70] sm:$0xff]
    %v332 = vld [vmem:[#allocation2 + $0x78] sm:$0xff]
    %v333 = vld [vmem:[%s2] sm:$0x1]
    %v334 = vld [vmem:[%s3] sm:$0x1]
    %v335 = vld [vmem:[%s4] sm:$0xff]
    %v336 = vld [vmem:[%s4 + $0x8] sm:$0xff]
    %v337 = vld [vmem:[%s4 + $0x10] sm:$0xff]
    %v338 = vld [vmem:[%s4 + $0x18] sm:$0xff]
    %v339 = vld [vmem:[%s4 + $0x20] sm:$0xff]
    %v340 = vld [vmem:[%s4 + $0x28] sm:$0xff]
    %v341 = vld [vmem:[%s4 + $0x30] sm:$0xff]
    %v342 = vld [vmem:[%s4 + $0x38] sm:$0xff]
    %v343 = vld [vmem:[%s4 + $0x40] sm:$0xff]
    %v344 = vld [vmem:[%s4 + $0x48] sm:$0xff]
    %v345 = vld [vmem:[%s4 + $0x50] sm:$0xff]
    %v346 = vld [vmem:[%s4 + $0x58] sm:$0xff]
    %v347 = vld [vmem:[%s4 + $0x60] sm:$0xff]
    %v348 = vld [vmem:[%s4 + $0x68] sm:$0xff]
    %v349 = vld [vmem:[%s4 + $0x70] sm:$0xff]
    %v350 = vld [vmem:[%s4 + $0x78] sm:$0xff]
    %v352 = vlaneseq
    %v353 = vshrl.u32 %v352, 7
    %v354 = vsub.s32 0, %v353
    %v355 = vrot.slane %v333, %v354
    %v357 = vmul.f32 %v317, %v355
    %v358 = vmul.f32 %v318, %v355
    %v359 = vmul.f32 %v319, %v355
    %v360 = vmul.f32 %v320, %v355
    %v361 = vmul.f32 %v321, %v355
    %v362 = vmul.f32 %v322, %v355
    %v363 = vmul.f32 %v323, %v355
    %v364 = vmul.f32 %v324, %v355
    %v365 = vmul.f32 %v325, %v355
    %v366 = vmul.f32 %v326, %v355
    %v367 = vmul.f32 %v327, %v355
    %v368 = vmul.f32 %v328, %v355
    %v369 = vmul.f32 %v329, %v355
    %v370 = vmul.f32 %v330, %v355
    %v371 = vmul.f32 %v331, %v355
    %v372 = vmul.f32 %v332, %v355
    %v374 = vlaneseq
    %v375 = vshrl.u32 %v374, 7
    %v376 = vsub.s32 0, %v375
    %v377 = vrot.slane %v334, %v376
    %v379 = vadd.f32 %v357, %v377
    %v380 = vadd.f32 %v358, %v377
    %v381 = vadd.f32 %v359, %v377
    %v382 = vadd.f32 %v360, %v377
    %v383 = vadd.f32 %v361, %v377
    %v384 = vadd.f32 %v362, %v377
    %v385 = vadd.f32 %v363, %v377
    %v386 = vadd.f32 %v364, %v377
    %v387 = vadd.f32 %v365, %v377
    %v388 = vadd.f32 %v366, %v377
    %v389 = vadd.f32 %v367, %v377
    %v390 = vadd.f32 %v368, %v377
    %v391 = vadd.f32 %v369, %v377
    %v392 = vadd.f32 %v370, %v377
    %v393 = vadd.f32 %v371, %v377
    %v394 = vadd.f32 %v372, %v377
    %v395 = vadd.f32 %v379, %v335
    %v396 = vadd.f32 %v380, %v336
    %v397 = vadd.f32 %v381, %v337
    %v398 = vadd.f32 %v382, %v338
    %v399 = vadd.f32 %v383, %v339
    %v400 = vadd.f32 %v384, %v340
    %v401 = vadd.f32 %v385, %v341
    %v402 = vadd.f32 %v386, %v342
    %v403 = vadd.f32 %v387, %v343
    %v404 = vadd.f32 %v388, %v344
    %v405 = vadd.f32 %v389, %v345
    %v406 = vadd.f32 %v390, %v346
    %v407 = vadd.f32 %v391, %v347
    %v408 = vadd.f32 %v392, %v348
    %v409 = vadd.f32 %v393, %v349
    %v410 = vadd.f32 %v394, %v350
    %v411 = vmax.f32 %v395, 0.0
    %v412 = vmax.f32 %v396, 0.0
    %v413 = vmax.f32 %v397, 0.0
    %v414 = vmax.f32 %v398, 0.0
    %v415 = vmax.f32 %v399, 0.0
    %v416 = vmax.f32 %v400, 0.0
    %v417 = vmax.f32 %v401, 0.0
    %v418 = vmax.f32 %v402, 0.0
    %v419 = vmax.f32 %v403, 0.0
    %v420 = vmax.f32 %v404, 0.0
    %v421 = vmax.f32 %v405, 0.0
    %v422 = vmax.f32 %v406, 0.0
    %v423 = vmax.f32 %v407, 0.0
    %v424 = vmax.f32 %v408, 0.0
    %v425 = vmax.f32 %v409, 0.0
    %v426 = vmax.f32 %v410, 0.0
    %427 = vst [vmem:[%s5] sm:$0xff] %v411
    %428 = vst [vmem:[%s5 + $0x8] sm:$0xff] %v412
    %429 = vst [vmem:[%s5 + $0x10] sm:$0xff] %v413
    %430 = vst [vmem:[%s5 + $0x18] sm:$0xff] %v414
    %431 = vst [vmem:[%s5 + $0x20] sm:$0xff] %v415
    %432 = vst [vmem:[%s5 + $0x28] sm:$0xff] %v416
    %433 = vst [vmem:[%s5 + $0x30] sm:$0xff] %v417
    %434 = vst [vmem:[%s5 + $0x38] sm:$0xff] %v418
    %435 = vst [vmem:[%s5 + $0x40] sm:$0xff] %v419
    %436 = vst [vmem:[%s5 + $0x48] sm:$0xff] %v420
    %437 = vst [vmem:[%s5 + $0x50] sm:$0xff] %v421
    %438 = vst [vmem:[%s5 + $0x58] sm:$0xff] %v422
    %439 = vst [vmem:[%s5 + $0x60] sm:$0xff] %v423
    %440 = vst [vmem:[%s5 + $0x68] sm:$0xff] %v424
    %441 = vst [vmem:[%s5 + $0x70] sm:$0xff] %v425
    %442 = vst [vmem:[%s5 + $0x78] sm:$0xff] %v426
  $region29: #{_lambda_.28} parent=0 // pred_fallthru
    _
  // Predicated region
  $region30: #{_lambda_.28} parent=0 // pred_check
    _
  $region31: #{_lambda_.28} parent=0 // pred_check_branch
    %444 = sbr.rel (0) target = $region33
  $region32: #{_lambda_.28} parent=0 // pred_region
    _
  $region33: #{_lambda_.28} parent=0 // pred_fallthru
    _
  // Predicated region
  $region34: #{_lambda_.28} parent=0 // pred_check
    _
  $region35: #{_lambda_.28} parent=0 // pred_check_branch
    %446 = sbr.rel (0) target = $region37
  $region36: #{_lambda_.28} parent=0 // pred_region
    _
  $region37: #{_lambda_.28} parent=0 // pred_fallthru
    _

// kernel: _lambda_.31
$region0: #{_lambda_.31}
  #allocation0 [shape = 'u32[]', space=smem, size = 0x4, offset = 0x4, fixed_abs, tag = 'smem constant byte address 0x4 - core index']
  #allocation1 [shape = 'u32[144,128]{1,0:T(1,128)}', space=vmem, size = 0x12000, scoped, tag = 'internal scratch']
  #allocation2 [shape = 'f32[128,128]{1,0:T(8,128)}', space=vmem, size = 0x10000, scoped, tag = 'scratch operand']
  %s0 = inlined_call_operand.vmem [shape: bf16[128,256], index: 0, kind: input, shape index: {}]
  %s1 = inlined_call_operand.vmem [shape: bf16[256,128], index: 1, kind: input, shape index: {}]
  %s2 = inlined_call_operand.vmem [shape: f32[1,128], index: 2, kind: input, shape index: {}]
  %s3 = inlined_call_operand.vmem [shape: f32[1,128], index: 3, kind: input, shape index: {}]
  %s4 = inlined_call_operand.vmem [shape: f32[128,128], index: 4, kind: output, shape index: {}]
  %s5 = sld [smem:[#allocation0]]
  $region98: #{_lambda_.31} parent=0
    _
  %s7 = ssub.s32 1, %s5
  %s8 = scalar_select 0, %s7, %s5
  $region1: #{_lambda_.31} parent=0
    #allocation3 [shape = 'u8[65536]{0}', space=vmem, size = 0x10000, scoped, tag = 'input window, operand 0']
    loop: start=0, step=1, limit=4
    $region2: #{_lambda_.31} parent=1 // loop_pre_header
      _
    $region3: #{_lambda_.31} parent=1 // loop_header
      %s10 = sphi 0, %s14
      %p11 = scmp.ge.s32.totalorder %s10, 4
      %s17 = sphi 0, %s36
      %s18 = sphi 0, %s32
      %s19 = sphi 0, %s28
      %s20 = sphi 0, %s17
      %s21 = sphi 0, %s18
      %s22 = sphi 0, %s19
      %s23 = sphi 0, %s20
      %s24 = sphi 0, %s21
      %s25 = sphi 0, %s22
      %s41 = sphi 0, %s43
      %s44 = sphi 0, %s41
      %s45 = sphi 0, %s44
      %s61 = sphi 0, %s45
      %s69 = sphi 0, %s71
      %s72 = sphi 0, %s69
      %s73 = sphi 0, %s72
      %s89 = sphi 0, %s73
      %s95 = sphi 0, %s97
      %s98 = sphi 0, %s95
      %s99 = sphi 0, %s98
      %s115 = sphi 0, %s99
      %s121 = sphi 0, %s123
      %s124 = sphi 0, %s121
      %s125 = sphi 0, %s124
      %s141 = sphi 0, %s125
      %s149 = sphi 0, %s151
      %s152 = sphi 0, %s149
      %s153 = sphi 0, %s152
      %s169 = sphi 0, %s153
    $region4: #{_lambda_.31} parent=1 // loop_header_branch
      %13 = sbr.rel (%p11) target = $region8
    $region5: #{_lambda_.31} parent=1 // loop_body
      %s15 = ssub.s32 %s10, 1
      %s16 = ssub.s32 %s10, 2
      %s26 = sadd.s32 1, %s19
      %p27 = scmp.ge.s32.totalorder %s26, 2
      %s28 = scalar_select %p27, 0, %s26
      %s29 = sadd.s32 1, %s18
      %s30 = scalar_select %p27, %s29, %s18
      %p31 = scmp.ge.s32.totalorder %s30, 1
      %s32 = scalar_select %p31, 0, %s30
      %s33 = sadd.s32 1, %s17
      %s34 = scalar_select %p31, %s33, %s17
      %p35 = scmp.ge.s32.totalorder %s34, 1
      %s36 = scalar_select %p35, 0, %s34
      %s37 = ssub.s32 %s17, %s36
      %s38 = ssub.s32 %s19, %s28
      %s39 = sor.u32 %s37, %s38
      %p40 = scmp.eq.s32.totalorder %s39, 0
      %s42 = sadd.s32 %s41, 1
      %s43 = scalar_select %p40, %s41, %s42
      %p46 = pneg %p40
      %p47 = scmp.eq.s32.totalorder %s10, 1
      %p48 = por %p46, %p47
      %p49 = scmp.ne.s32.totalorder %s41, %s44
      %p50 = scmp.eq.s32.totalorder %s10, 0
      %p51 = por %p49, %p50
      %p52 = scmp.ne.s32.totalorder %s41, %s44
      %p53 = scmp.eq.s32.totalorder %s15, 1
      %p54 = por %p52, %p53
      %p55 = scmp.ne.s32.totalorder %s44, %s45
      %p56 = scmp.eq.s32.totalorder %s15, 0
      %p57 = por %p55, %p56
      %p58 = scmp.ne.s32.totalorder %s44, %s45
      %p59 = scmp.eq.s32.totalorder %s16, 1
      %p60 = por %p58, %p59
      %p62 = scmp.ne.s32.totalorder %s45, %s61
      %p63 = scmp.eq.s32.totalorder %s16, 0
      %p64 = por %p62, %p63
      %s65 = ssub.s32 %s19, %s28
      %s66 = ssub.s32 %s18, %s32
      %s67 = sor.u32 %s65, %s66
      %p68 = scmp.eq.s32.totalorder %s67, 0
      %s70 = sadd.s32 %s69, 1
      %s71 = scalar_select %p68, %s69, %s70
      %p74 = pneg %p68
      %p75 = scmp.eq.s32.totalorder %s10, 1
      %p76 = por %p74, %p75
      %p77 = scmp.ne.s32.totalorder %s69, %s72
      %p78 = scmp.eq.s32.totalorder %s10, 0
      %p79 = por %p77, %p78
      %p80 = scmp.ne.s32.totalorder %s69, %s72
      %p81 = scmp.eq.s32.totalorder %s15, 1
      %p82 = por %p80, %p81
      %p83 = scmp.ne.s32.totalorder %s72, %s73
      %p84 = scmp.eq.s32.totalorder %s15, 0
      %p85 = por %p83, %p84
      %p86 = scmp.ne.s32.totalorder %s72, %s73
      %p87 = scmp.eq.s32.totalorder %s16, 1
      %p88 = por %p86, %p87
      %p90 = scmp.ne.s32.totalorder %s73, %s89
      %p91 = scmp.eq.s32.totalorder %s16, 0
      %p92 = por %p90, %p91
      %s93 = ssub.s32 %s18, %s32
      %p94 = scmp.eq.s32.totalorder %s93, 0
      %s96 = sadd.s32 %s95, 1
      %s97 = scalar_select %p94, %s95, %s96
      %p100 = pneg %p94
      %p101 = scmp.eq.s32.totalorder %s10, 1
      %p102 = por %p100, %p101
      %p103 = scmp.ne.s32.totalorder %s95, %s98
      %p104 = scmp.eq.s32.totalorder %s10, 0
      %p105 = por %p103, %p104
      %p106 = scmp.ne.s32.totalorder %s95, %s98
      %p107 = scmp.eq.s32.totalorder %s15, 1
      %p108 = por %p106, %p107
      %p109 = scmp.ne.s32.totalorder %s98, %s99
      %p110 = scmp.eq.s32.totalorder %s15, 0
      %p111 = por %p109, %p110
      %p112 = scmp.ne.s32.totalorder %s98, %s99
      %p113 = scmp.eq.s32.totalorder %s16, 1
      %p114 = por %p112, %p113
      %p116 = scmp.ne.s32.totalorder %s99, %s115
      %p117 = scmp.eq.s32.totalorder %s16, 0
      %p118 = por %p116, %p117
      %s119 = ssub.s32 %s18, %s32
      %p120 = scmp.eq.s32.totalorder %s119, 0
      %s122 = sadd.s32 %s121, 1
      %s123 = scalar_select %p120, %s121, %s122
      %p126 = pneg %p120
      %p127 = scmp.eq.s32.totalorder %s10, 1
      %p128 = por %p126, %p127
      %p129 = scmp.ne.s32.totalorder %s121, %s124
      %p130 = scmp.eq.s32.totalorder %s10, 0
      %p131 = por %p129, %p130
      %p132 = scmp.ne.s32.totalorder %s121, %s124
      %p133 = scmp.eq.s32.totalorder %s15, 1
      %p134 = por %p132, %p133
      %p135 = scmp.ne.s32.totalorder %s124, %s125
      %p136 = scmp.eq.s32.totalorder %s15, 0
      %p137 = por %p135, %p136
      %p138 = scmp.ne.s32.totalorder %s124, %s125
      %p139 = scmp.eq.s32.totalorder %s16, 1
      %p140 = por %p138, %p139
      %p142 = scmp.ne.s32.totalorder %s125, %s141
      %p143 = scmp.eq.s32.totalorder %s16, 0
      %p144 = por %p142, %p143
      %s145 = ssub.s32 %s17, %s36
      %s146 = ssub.s32 %s18, %s32
      %s147 = sor.u32 %s145, %s146
      %p148 = scmp.eq.s32.totalorder %s147, 0
      %s150 = sadd.s32 %s149, 1
      %s151 = scalar_select %p148, %s149, %s150
      %p154 = pneg %p148
      %p155 = scmp.eq.s32.totalorder %s10, 1
      %p156 = por %p154, %p155
      %p157 = scmp.ne.s32.totalorder %s149, %s152
      %p158 = scmp.eq.s32.totalorder %s10, 0
      %p159 = por %p157, %p158
      %p160 = scmp.ne.s32.totalorder %s149, %s152
      %p161 = scmp.eq.s32.totalorder %s15, 1
      %p162 = por %p160, %p161
      %p163 = scmp.ne.s32.totalorder %s152, %s153
      %p164 = scmp.eq.s32.totalorder %s15, 0
      %p165 = por %p163, %p164
      %p166 = scmp.ne.s32.totalorder %s152, %s153
      %p167 = scmp.eq.s32.totalorder %s16, 1
      %p168 = por %p166, %p167
      %p170 = scmp.ne.s32.totalorder %s153, %s169
      %p171 = scmp.eq.s32.totalorder %s16, 0
      %p172 = por %p170, %p171
      %p173 = scmp.le.s32.totalorder 1, %s10
      %p174 = scmp.lt.s32.totalorder %s10, 3
      %p175 = pnand %p173, %p174
      %p176 = pneg %p175
      // Predicated region
      $region9: #{_lambda_.31} parent=5 // pred_check
        _
      $region10: #{_lambda_.31} parent=5 // pred_check_branch
        %178 = sbr.rel (%p175) target = $region12
      $region11: #{_lambda_.31} parent=5 // pred_region
        %s179 = ssub.s32 %s10, 1
        // Predicated region
        $region13: #{_lambda_.31} parent=11 // pred_check
          %p180 = pneg %p111
        $region14: #{_lambda_.31} parent=11 // pred_check_branch
          %182 = sbr.rel (%p180) target = $region16
        $region15: #{_lambda_.31} parent=11 // pred_region
          %p183 = scmp.lt.s32.totalorder %s21, 0
          %s184 = scalar_select %p183, %s21, 0
          %s185 = scalar_lea.vmem %s2, %s184
        $region16: #{_lambda_.31} parent=11 // pred_fallthru
          _
        // Predicated region
        $region17: #{_lambda_.31} parent=11 // pred_check
          %p186 = pneg %p137
        $region18: #{_lambda_.31} parent=11 // pred_check_branch
          %188 = sbr.rel (%p186) target = $region20
        $region19: #{_lambda_.31} parent=11 // pred_region
          %p189 = scmp.lt.s32.totalorder %s21, 0
          %s190 = scalar_select %p189, %s21, 0
          %s191 = scalar_lea.vmem %s3, %s190
        $region20: #{_lambda_.31} parent=11 // pred_fallthru
          _
      $region12: #{_lambda_.31} parent=5 // pred_fallthru
        _
      %p192 = scmp.lt.s32.totalorder %s10, 2
      // Predicated region
      $region21: #{_lambda_.31} parent=5 // pred_check
        %p193 = pneg %p192
      $region22: #{_lambda_.31} parent=5 // pred_check_branch
        %195 = sbr.rel (%p193) target = $region24
      $region23: #{_lambda_.31} parent=5 // pred_region
        // Predicated region
        $region25: #{_lambda_.31} parent=23 // pred_check
          %p196 = pneg %p51
        $region26: #{_lambda_.31} parent=23 // pred_check_branch
          %198 = sbr.rel (%p196) target = $region28
        $region27: #{_lambda_.31} parent=23 // pred_region
          %s199 = sand.u32 %s41, 1
          %s200 = sand.u32 %s41, 1
          %s201 = smul.addr %s200, 64
          %s202 = scalar_lea.vmem [#allocation3], %s201
          %s203 = smul.u32 16, %s17
          %s204 = smul.addr %s203, 2
          %s205 = sadd.s32 %s19, %s204
          %s206 = smul.addr %s205, 4
          %s207 = scalar_lea.vmem %s0, %s206
          // Predicated region
          $region29: #{_lambda_.31} parent=27 // pred_check
            _
          $region30: #{_lambda_.31} parent=27 // pred_check_branch
            %209 = sbr.rel (0) target = $region32
          $region31: #{_lambda_.31} parent=27 // pred_region
            // Predicated region
            $region33: #{_lambda_.31} parent=31 // pred_check
              _
            $region34: #{_lambda_.31} parent=31 // pred_check_branch
              %211 = sbr.rel target = $region36
            $region35: #{_lambda_.31} parent=31 // pred_region
              // Predicated region
              $region48: #{_lambda_.31} parent=35 // pred_check
                _
              $region49: #{_lambda_.31} parent=35 // pred_check_branch
                %256 = sbr.rel (0) target = $region51
              $region50: #{_lambda_.31} parent=35 // pred_region
                loop: start=0, step=1, limit=1
                $region52: #{_lambda_.31} parent=50 // loop_pre_header
                  _
                $region53: #{_lambda_.31} parent=50 // loop_header
                  %s258 = sphi 0, %s262
                  %p259 = scmp.ge.s32.totalorder %s258, 1
                  %s263 = sphi %s207, %s207
                  %s264 = sphi %s202, %s202
                $region54: #{_lambda_.31} parent=50 // loop_header_branch
                  %261 = sbr.rel (%p259) target = $region58
                $region55: #{_lambda_.31} parent=50 // loop_body
                  _
                $region56: #{_lambda_.31} parent=50 // loop_footer
                  %s262 = sadd.s32 1, %s258
                $region57: #{_lambda_.31} parent=50 // loop_footer_branch
                  %257 = sbr.rel target = $region53
                $region58: #{_lambda_.31} parent=50 // loop_exit
                  _
                loop: start=0, step=1, limit=1
                $region59: #{_lambda_.31} parent=50 // loop_pre_header
                  _
                $region60: #{_lambda_.31} parent=50 // loop_header
                  %s267 = sphi 0, %s271
                  %p268 = scmp.ge.s32.totalorder %s267, 1
                  %s272 = sphi %s207, %s207
                  %s273 = sphi %s202, %s202
                $region61: #{_lambda_.31} parent=50 // loop_header_branch
                  %270 = sbr.rel (%p268) target = $region65
                $region62: #{_lambda_.31} parent=50 // loop_body
                  %v274 = vld [vmem:[%s272] sm:$0xf]
                  %275 = vst [vmem:[%s273] sm:$0xf] %v274
                  %v276 = vld [vmem:[%s272 + $0x8] sm:$0xf]
                  %277 = vst [vmem:[%s273 + $0x4] sm:$0xf] %v276
                  %v278 = vld [vmem:[%s272 + $0x10] sm:$0xf]
                  %279 = vst [vmem:[%s273 + $0x8] sm:$0xf] %v278
                  %v280 = vld [vmem:[%s272 + $0x18] sm:$0xf]
                  %281 = vst [vmem:[%s273 + $0xc] sm:$0xf] %v280
                  %v282 = vld [vmem:[%s272 + $0x20] sm:$0xf]
                  %283 = vst [vmem:[%s273 + $0x10] sm:$0xf] %v282
                  %v284 = vld [vmem:[%s272 + $0x28] sm:$0xf]
                  %285 = vst [vmem:[%s273 + $0x14] sm:$0xf] %v284
                  %v286 = vld [vmem:[%s272 + $0x30] sm:$0xf]
                  %287 = vst [vmem:[%s273 + $0x18] sm:$0xf] %v286
                  %v288 = vld [vmem:[%s272 + $0x38] sm:$0xf]
                  %289 = vst [vmem:[%s273 + $0x1c] sm:$0xf] %v288
                  %v290 = vld [vmem:[%s272 + $0x40] sm:$0xf]
                  %291 = vst [vmem:[%s273 + $0x20] sm:$0xf] %v290
                  %v292 = vld [vmem:[%s272 + $0x48] sm:$0xf]
                  %293 = vst [vmem:[%s273 + $0x24] sm:$0xf] %v292
                  %v294 = vld [vmem:[%s272 + $0x50] sm:$0xf]
                  %295 = vst [vmem:[%s273 + $0x28] sm:$0xf] %v294
                  %v296 = vld [vmem:[%s272 + $0x58] sm:$0xf]
                  %297 = vst [vmem:[%s273 + $0x2c] sm:$0xf] %v296
                  %v298 = vld [vmem:[%s272 + $0x60] sm:$0xf]
                  %299 = vst [vmem:[%s273 + $0x30] sm:$0xf] %v298
                  %v300 = vld [vmem:[%s272 + $0x68] sm:$0xf]
                  %301 = vst [vmem:[%s273 + $0x34] sm:$0xf] %v300
                  %v302 = vld [vmem:[%s272 + $0x70] sm:$0xf]
                  %303 = vst [vmem:[%s273 + $0x38] sm:$0xf] %v302
                  %v304 = vld [vmem:[%s272 + $0x78] sm:$0xf]
                  %305 = vst [vmem:[%s273 + $0x3c] sm:$0xf] %v304
                $region63: #{_lambda_.31} parent=50 // loop_footer
                  %s271 = sadd.s32 1, %s267
                $region64: #{_lambda_.31} parent=50 // loop_footer_branch
                  %266 = sbr.rel target = $region60
                $region65: #{_lambda_.31} parent=50 // loop_exit
                  _
              $region51: #{_lambda_.31} parent=35 // pred_fallthru
                _
            $region36: #{_lambda_.31} parent=31 // pred_fallthru
              _
            // Predicated region
            $region37: #{_lambda_.31} parent=31 // pred_check
              _
            $region38: #{_lambda_.31} parent=31 // pred_check_branch
              %213 = sbr.rel (0) target = $region40
            $region39: #{_lambda_.31} parent=31 // pred_region
              loop: start=0, step=1, limit=1
              $region41: #{_lambda_.31} parent=39 // loop_pre_header
                _
              $region42: #{_lambda_.31} parent=39 // loop_header
                %s216 = sphi 0, %s220
                %p217 = scmp.ge.s32.totalorder %s216, 1
                %s221 = sphi %s207, %s207
                %s222 = sphi %s202, %s202
              $region43: #{_lambda_.31} parent=39 // loop_header_branch
                %219 = sbr.rel (%p217) target = $region47
              $region44: #{_lambda_.31} parent=39 // loop_body
                %v223 = vld [vmem:[%s221] sm:$0xf]
                %224 = vst [vmem:[%s222] sm:$0xf] %v223
                %v225 = vld [vmem:[%s221 + $0x8] sm:$0xf]
                %226 = vst [vmem:[%s222 + $0x4] sm:$0xf] %v225
                %v227 = vld [vmem:[%s221 + $0x10] sm:$0xf]
                %228 = vst [vmem:[%s222 + $0x8] sm:$0xf] %v227
                %v229 = vld [vmem:[%s221 + $0x18] sm:$0xf]
                %230 = vst [vmem:[%s222 + $0xc] sm:$0xf] %v229
                %v231 = vld [vmem:[%s221 + $0x20] sm:$0xf]
                %232 = vst [vmem:[%s222 + $0x10] sm:$0xf] %v231
                %v233 = vld [vmem:[%s221 + $0x28] sm:$0xf]
                %234 = vst [vmem:[%s222 + $0x14] sm:$0xf] %v233
                %v235 = vld [vmem:[%s221 + $0x30] sm:$0xf]
                %236 = vst [vmem:[%s222 + $0x18] sm:$0xf] %v235
                %v237 = vld [vmem:[%s221 + $0x38] sm:$0xf]
                %238 = vst [vmem:[%s222 + $0x1c] sm:$0xf] %v237
                %v239 = vld [vmem:[%s221 + $0x40] sm:$0xf]
                %240 = vst [vmem:[%s222 + $0x20] sm:$0xf] %v239
                %v241 = vld [vmem:[%s221 + $0x48] sm:$0xf]
                %242 = vst [vmem:[%s222 + $0x24] sm:$0xf] %v241
                %v243 = vld [vmem:[%s221 + $0x50] sm:$0xf]
                %244 = vst [vmem:[%s222 + $0x28] sm:$0xf] %v243
                %v245 = vld [vmem:[%s221 + $0x58] sm:$0xf]
                %246 = vst [vmem:[%s222 + $0x2c] sm:$0xf] %v245
                %v247 = vld [vmem:[%s221 + $0x60] sm:$0xf]
                %248 = vst [vmem:[%s222 + $0x30] sm:$0xf] %v247
                %v249 = vld [vmem:[%s221 + $0x68] sm:$0xf]
                %250 = vst [vmem:[%s222 + $0x34] sm:$0xf] %v249
                %v251 = vld [vmem:[%s221 + $0x70] sm:$0xf]
                %252 = vst [vmem:[%s222 + $0x38] sm:$0xf] %v251
                %v253 = vld [vmem:[%s221 + $0x78] sm:$0xf]
                %254 = vst [vmem:[%s222 + $0x3c] sm:$0xf] %v253
              $region45: #{_lambda_.31} parent=39 // loop_footer
                %s220 = sadd.s32 1, %s216
              $region46: #{_lambda_.31} parent=39 // loop_footer_branch
                %215 = sbr.rel target = $region42
              $region47: #{_lambda_.31} parent=39 // loop_exit
                _
            $region40: #{_lambda_.31} parent=31 // pred_fallthru
              _
          $region32: #{_lambda_.31} parent=27 // pred_fallthru
            _
          %306 = vnop
        $region28: #{_lambda_.31} parent=23 // pred_fallthru
          _
        // Predicated region
        $region66: #{_lambda_.31} parent=23 // pred_check
          %p307 = pneg %p79
        $region67: #{_lambda_.31} parent=23 // pred_check_branch
          %309 = sbr.rel (%p307) target = $region69
        $region68: #{_lambda_.31} parent=23 // pred_region
          %s310 = smul.u32 16, %s19
          %p311 = scmp.lt.s32.totalorder %s310, 31
          %s312 = scalar_select %p311, %s310, 31
          %p313 = scmp.lt.s32.totalorder %s18, 0
          %s314 = scalar_select %p313, %s18, 0
          %s315 = sadd.s32 %s314, %s312
          %s316 = smul.addr %s315, 4
          %s317 = scalar_lea.vmem %s1, %s316
          %s318 = smul.u32 16, %s19
        $region69: #{_lambda_.31} parent=23 // pred_fallthru
          _
      $region24: #{_lambda_.31} parent=5 // pred_fallthru
        _
      %p319 = scmp.le.s32.totalorder 1, %s10
      %p320 = scmp.lt.s32.totalorder %s10, 3
      %p321 = pnand %p319, %p320
      %p322 = pneg %p321
      // Predicated region
      $region70: #{_lambda_.31} parent=5 // pred_check
        _
      $region71: #{_lambda_.31} parent=5 // pred_check_branch
        %324 = sbr.rel (%p321) target = $region73
      $region72: #{_lambda_.31} parent=5 // pred_region
        %s325 = ssub.s32 %s10, 1
        %s326 = sand.u32 %s44, 1
        %s327 = sand.u32 %s44, 1
        %s328 = smul.addr %s327, 64
        %s329 = scalar_lea.vmem [#allocation3], %s328
        // Predicated region
        $region74: #{_lambda_.31} parent=72 // pred_check
          %p330 = pneg %p57
        $region75: #{_lambda_.31} parent=72 // pred_check_branch
          %332 = sbr.rel (%p330) target = $region77
        $region76: #{_lambda_.31} parent=72 // pred_region
          _
        $region77: #{_lambda_.31} parent=72 // pred_fallthru
          _
        %s333 = sand.u32 %s44, 1
        %s334 = sand.u32 %s44, 1
        %s335 = smul.addr %s334, 64
        %s336 = scalar_lea.vmem [#allocation3], %s335
        %p337 = pneg %p57
        %p338 = pneg %p54
        %s339 = smul.u32 16, %s22
        %p340 = scmp.lt.s32.totalorder %s339, 31
        %s341 = scalar_select %p340, %s339, 31
        %p342 = scmp.lt.s32.totalorder %s21, 0
        %s343 = scalar_select %p342, %s21, 0
        %s344 = sadd.s32 %s343, %s341
        %s345 = smul.addr %s344, 4
        %s346 = scalar_lea.vmem %s1, %s345
        %p347 = pneg %p85
        %p348 = pneg %p82
        %p349 = scmp.lt.s32.totalorder %s21, 0
        %s350 = scalar_select %p349, %s21, 0
        %s351 = scalar_lea.vmem %s2, %s350
        %p352 = pneg %p111
        %p353 = pneg %p108
        %p354 = scmp.lt.s32.totalorder %s21, 0
        %s355 = scalar_select %p354, %s21, 0
        %s356 = scalar_lea.vmem %s3, %s355
        %p357 = pneg %p137
        %p358 = pneg %p134
        %p359 = pneg %p165
        %p360 = pneg %p162
        %s361 = smul.u32 16, %s20
        %p362 = scmp.lt.s32.totalorder %s361, 15
        %s363 = scalar_select %p362, %s361, 15
        %p364 = scmp.lt.s32.totalorder %s21, 0
        %s365 = scalar_select %p364, %s21, 0
        %s366 = sadd.s32 %s365, %s363
        %s367 = smul.addr %s366, 8
        %s368 = scalar_lea.vmem %s4, %s367
        %s369 = smul.u32 16, %s20
        %s370 = smul.u32 16, %s22
        %p371 = scmp.lt.s32.totalorder %s370, 31
        %s372 = scalar_select %p371, %s370, 31
        %p373 = scmp.lt.s32.totalorder %s21, 0
        %s374 = scalar_select %p373, %s21, 0
        %s375 = sadd.s32 %s374, %s372
        %s376 = smul.addr %s375, 4
        %s377 = scalar_lea.vmem %s1, %s376
        %s378 = smul.u32 16, %s22
        %p379 = scmp.lt.s32.totalorder %s21, 0
        %s380 = scalar_select %p379, %s21, 0
        %s381 = scalar_lea.vmem %s2, %s380
        %p382 = scmp.lt.s32.totalorder %s21, 0
        %s383 = scalar_select %p382, %s21, 0
        %s384 = scalar_lea.vmem %s3, %s383
        %s385 = smul.u32 16, %s20
        %p386 = scmp.lt.s32.totalorder %s385, 15
        %s387 = scalar_select %p386, %s385, 15
        %p388 = scmp.lt.s32.totalorder %s21, 0
        %s389 = scalar_select %p388, %s21, 0
        %s390 = sadd.s32 %s389, %s387
        %s391 = smul.addr %s390, 8
        %s392 = scalar_lea.vmem %s4, %s391
        %s393 = smul.u32 16, %s20
        %p395 = scmp.eq.s32.totalorder %s22, 0
        // Predicated region
        $region78: #{_lambda_.31} parent=72 // pred_check
          %p396 = pneg %p395
        $region79: #{_lambda_.31} parent=72 // pred_check_branch
          %398 = sbr.rel (%p396) target = $region81
        $region80: #{_lambda_.31} parent=72 // pred_region
          %399 = vst [vmem:[#allocation2] sm:$0xff] 0.0
          %400 = vst [vmem:[#allocation2 + $0x8] sm:$0xff] 0.0
          %401 = vst [vmem:[#allocation2 + $0x10] sm:$0xff] 0.0
          %402 = vst [vmem:[#allocation2 + $0x18] sm:$0xff] 0.0
          %403 = vst [vmem:[#allocation2 + $0x20] sm:$0xff] 0.0
          %404 = vst [vmem:[#allocation2 + $0x28] sm:$0xff] 0.0
          %405 = vst [vmem:[#allocation2 + $0x30] sm:$0xff] 0.0
          %406 = vst [vmem:[#allocation2 + $0x38] sm:$0xff] 0.0
          %407 = vst [vmem:[#allocation2 + $0x40] sm:$0xff] 0.0
          %408 = vst [vmem:[#allocation2 + $0x48] sm:$0xff] 0.0
          %409 = vst [vmem:[#allocation2 + $0x50] sm:$0xff] 0.0
          %410 = vst [vmem:[#allocation2 + $0x58] sm:$0xff] 0.0
          %411 = vst [vmem:[#allocation2 + $0x60] sm:$0xff] 0.0
          %412 = vst [vmem:[#allocation2 + $0x68] sm:$0xff] 0.0
          %413 = vst [vmem:[#allocation2 + $0x70] sm:$0xff] 0.0
          %414 = vst [vmem:[#allocation2 + $0x78] sm:$0xff] 0.0
        $region81: #{_lambda_.31} parent=72 // pred_fallthru
          _
        %v415 = vld [vmem:[#allocation2] sm:$0xff]
        %v416 = vld [vmem:[#allocation2 + $0x8] sm:$0xff]
        %v417 = vld [vmem:[#allocation2 + $0x10] sm:$0xff]
        %v418 = vld [vmem:[#allocation2 + $0x18] sm:$0xff]
        %v419 = vld [vmem:[#allocation2 + $0x20] sm:$0xff]
        %v420 = vld [vmem:[#allocation2 + $0x28] sm:$0xff]
        %v421 = vld [vmem:[#allocation2 + $0x30] sm:$0xff]
        %v422 = vld [vmem:[#allocation2 + $0x38] sm:$0xff]
        %v423 = vld [vmem:[#allocation2 + $0x40] sm:$0xff]
        %v424 = vld [vmem:[#allocation2 + $0x48] sm:$0xff]
        %v425 = vld [vmem:[#allocation2 + $0x50] sm:$0xff]
        %v426 = vld [vmem:[#allocation2 + $0x58] sm:$0xff]
        %v427 = vld [vmem:[#allocation2 + $0x60] sm:$0xff]
        %v428 = vld [vmem:[#allocation2 + $0x68] sm:$0xff]
        %v429 = vld [vmem:[#allocation2 + $0x70] sm:$0xff]
        %v430 = vld [vmem:[#allocation2 + $0x78] sm:$0xff]
        %v431 = vld [vmem:[%s329] sm:$0xf]
        %v432 = vld [vmem:[%s329 + $0x4] sm:$0xf]
        %v433 = vld [vmem:[%s329 + $0x8] sm:$0xf]
        %v434 = vld [vmem:[%s329 + $0xc] sm:$0xf]
        %v435 = vld [vmem:[%s329 + $0x10] sm:$0xf]
        %v436 = vld [vmem:[%s329 + $0x14] sm:$0xf]
        %v437 = vld [vmem:[%s329 + $0x18] sm:$0xf]
        %v438 = vld [vmem:[%s329 + $0x1c] sm:$0xf]
        %v439 = vld [vmem:[%s329 + $0x20] sm:$0xf]
        %v440 = vld [vmem:[%s329 + $0x24] sm:$0xf]
        %v441 = vld [vmem:[%s329 + $0x28] sm:$0xf]
        %v442 = vld [vmem:[%s329 + $0x2c] sm:$0xf]
        %v443 = vld [vmem:[%s329 + $0x30] sm:$0xf]
        %v444 = vld [vmem:[%s329 + $0x34] sm:$0xf]
        %v445 = vld [vmem:[%s329 + $0x38] sm:$0xf]
        %v446 = vld [vmem:[%s329 + $0x3c] sm:$0xf]
        %v447 = vld [vmem:[%s377] sm:$0xf]
        %v448 = vld [vmem:[%s377 + $0x4] sm:$0xf]
        %v449 = vld [vmem:[%s377 + $0x8] sm:$0xf]
        %v450 = vld [vmem:[%s377 + $0xc] sm:$0xf]
        %v451 = vld [vmem:[%s377 + $0x10] sm:$0xf]
        %v452 = vld [vmem:[%s377 + $0x14] sm:$0xf]
        %v453 = vld [vmem:[%s377 + $0x18] sm:$0xf]
        %v454 = vld [vmem:[%s377 + $0x1c] sm:$0xf]
        %v455 = vld [vmem:[%s377 + $0x20] sm:$0xf]
        %v456 = vld [vmem:[%s377 + $0x24] sm:$0xf]
        %v457 = vld [vmem:[%s377 + $0x28] sm:$0xf]
        %v458 = vld [vmem:[%s377 + $0x2c] sm:$0xf]
        %v459 = vld [vmem:[%s377 + $0x30] sm:$0xf]
        %v460 = vld [vmem:[%s377 + $0x34] sm:$0xf]
        %v461 = vld [vmem:[%s377 + $0x38] sm:$0xf]
        %v462 = vld [vmem:[%s377 + $0x3c] sm:$0xf]
        %v479 = vunpack.c.l.b16 %v431
        %v480 = vunpack.c.l.b16 %v432
        %v481 = vunpack.c.l.b16 %v433
        %v482 = vunpack.c.l.b16 %v434
        %v483 = vunpack.c.l.b16 %v435
        %v484 = vunpack.c.l.b16 %v436
        %v485 = vunpack.c.l.b16 %v437
        %v486 = vunpack.c.l.b16 %v438
        %v487 = vunpack.c.l.b16 %v439
        %v488 = vunpack.c.l.b16 %v440
        %v489 = vunpack.c.l.b16 %v441
        %v490 = vunpack.c.l.b16 %v442
        %v491 = vunpack.c.l.b16 %v443
        %v492 = vunpack.c.l.b16 %v444
        %v493 = vunpack.c.l.b16 %v445
        %v494 = vunpack.c.l.b16 %v446
        %v495 = vpack.c.b16 %v480, %v479
        %v496 = vpack.c.b16 %v482, %v481
        %v497 = vpack.c.b16 %v484, %v483
        %v498 = vpack.c.b16 %v486, %v485
        %v499 = vpack.c.b16 %v488, %v487
        %v500 = vpack.c.b16 %v490, %v489
        %v501 = vpack.c.b16 %v492, %v491
        %v502 = vpack.c.b16 %v494, %v493
        %v527 = vunpack.c.l.b16 %v447
        %v528 = vunpack.c.l.b16 %v448
        %v529 = vunpack.c.l.b16 %v449
        %v530 = vunpack.c.l.b16 %v450
        %v531 = vunpack.c.l.b16 %v451
        %v532 = vunpack.c.l.b16 %v452
        %v533 = vunpack.c.l.b16 %v453
        %v534 = vunpack.c.l.b16 %v454
        %v535 = vunpack.c.l.b16 %v455
        %v536 = vunpack.c.l.b16 %v456
        %v537 = vunpack.c.l.b16 %v457
        %v538 = vunpack.c.l.b16 %v458
        %v539 = vunpack.c.l.b16 %v459
        %v540 = vunpack.c.l.b16 %v460
        %v541 = vunpack.c.l.b16 %v461
        %v542 = vunpack.c.l.b16 %v462
        %v543 = vpack.c.b16 %v528, %v527
        %v544 = vpack.c.b16 %v530, %v529
        %v545 = vpack.c.b16 %v532, %v531
        %v546 = vpack.c.b16 %v534, %v533
        %v547 = vpack.c.b16 %v536, %v535
        %v548 = vpack.c.b16 %v538, %v537
        %v549 = vpack.c.b16 %v540, %v539
        %v550 = vpack.c.b16 %v542, %v541
        %559 = vmatprep.subr.bf16.mxu0 0
        %560 = vmatpush1.bf16.msra.mxu0 %v543
        %561 = vmatprep.subr.bf16.mxu0 0
        %562 = vmatpush1.bf16.msra.mxu0 %v544
        %563 = vmatprep.subr.bf16.mxu0 0
        %564 = vmatpush1.bf16.msra.mxu0 %v545
        %565 = vmatprep.subr.bf16.mxu0 0
        %566 = vmatpush1.bf16.msra.mxu0 %v546
        %567 = vmatprep.subr.bf16.mxu0 0
        %568 = vmatpush1.bf16.msra.mxu0 %v547
        %569 = vmatprep.subr.bf16.mxu0 0
        %570 = vmatpush1.bf16.msra.mxu0 %v548
        %571 = vmatprep.subr.bf16.mxu0 0
        %572 = vmatpush1.bf16.msra.mxu0 %v549
        %573 = vmatprep.subr.bf16.mxu0 0
        %574 = vmatpush1.bf16.msra.mxu0 %v550
        %575 = vmatprep.subr.bf16.mxu0 0
        %576 = vmatpush1.bf16.msra.mxu0 0
        %577 = vmatprep.subr.bf16.mxu0 0
        %578 = vmatpush1.bf16.msra.mxu0 0
        %579 = vmatprep.subr.bf16.mxu0 0
        %580 = vmatpush1.bf16.msra.mxu0 0
        %581 = vmatprep.subr.bf16.mxu0 0
        %582 = vmatpush1.bf16.msra.mxu0 0
        %583 = vmatprep.subr.bf16.mxu0 0
        %584 = vmatpush1.bf16.msra.mxu0 0
        %585 = vmatprep.subr.bf16.mxu0 0
        %586 = vmatpush1.bf16.msra.mxu0 0
        %587 = vmatprep.subr.bf16.mxu0 0
        %588 = vmatpush1.bf16.msra.mxu0 0
        %589 = vmatprep.subr.bf16.mxu0 0
        %590 = vmatpush1.bf16.msra.mxu0 0
        %591 = vmatprep.mubr.bf16.mxu0 0
        %592 = vmatmul.mubr.bf16.gmra.mrb[0].mxu0 %v495
        %v593 = vpop.f32.mrb[0].mxu0
        %v594 = vadd.f32 0.0, %v593
        %v595 = vpop.f32.mrb[0].mxu0
        %v596 = vpop.f32.mrb[0].mxu0
        %v597 = vadd.f32 0.0, %v596
        %v598 = vpop.f32.mrb[0].mxu0
        %599 = vmatprep.mubr.bf16.mxu0 0
        %600 = vmatmul.mubr.bf16.gmra.mrb[0].mxu0 %v496
        %v601 = vpop.f32.mrb[0].mxu0
        %v602 = vadd.f32 0.0, %v601
        %v603 = vpop.f32.mrb[0].mxu0
        %v604 = vpop.f32.mrb[0].mxu0
        %v605 = vadd.f32 0.0, %v604
        %v606 = vpop.f32.mrb[0].mxu0
        %607 = vmatprep.mubr.bf16.mxu0 0
        %608 = vmatmul.mubr.bf16.gmra.mrb[0].mxu0 %v497
        %v609 = vpop.f32.mrb[0].mxu0
        %v610 = vadd.f32 0.0, %v609
        %v611 = vpop.f32.mrb[0].mxu0
        %v612 = vpop.f32.mrb[0].mxu0
        %v613 = vadd.f32 0.0, %v612
        %v614 = vpop.f32.mrb[0].mxu0
        %615 = vmatprep.mubr.bf16.mxu0 0
        %616 = vmatmul.mubr.bf16.gmra.mrb[0].mxu0 %v498
        %v617 = vpop.f32.mrb[0].mxu0
        %v618 = vadd.f32 0.0, %v617
        %v619 = vpop.f32.mrb[0].mxu0
        %v620 = vpop.f32.mrb[0].mxu0
        %v621 = vadd.f32 0.0, %v620
        %v622 = vpop.f32.mrb[0].mxu0
        %623 = vmatprep.mubr.bf16.mxu0 0
        %624 = vmatmul.mubr.bf16.gmra.mrb[0].mxu0 %v499
        %v625 = vpop.f32.mrb[0].mxu0
        %v626 = vadd.f32 0.0, %v625
        %v627 = vpop.f32.mrb[0].mxu0
        %v628 = vpop.f32.mrb[0].mxu0
        %v629 = vadd.f32 0.0, %v628
        %v630 = vpop.f32.mrb[0].mxu0
        %631 = vmatprep.mubr.bf16.mxu0 0
        %632 = vmatmul.mubr.bf16.gmra.mrb[0].mxu0 %v500
        %v633 = vpop.f32.mrb[0].mxu0
        %v634 = vadd.f32 0.0, %v633
        %v635 = vpop.f32.mrb[0].mxu0
        %v636 = vpop.f32.mrb[0].mxu0
        %v637 = vadd.f32 0.0, %v636
        %v638 = vpop.f32.mrb[0].mxu0
        %639 = vmatprep.mubr.bf16.mxu0 0
        %640 = vmatmul.mubr.bf16.gmra.mrb[0].mxu0 %v501
        %v641 = vpop.f32.mrb[0].mxu0
        %v642 = vadd.f32 0.0, %v641
        %v643 = vpop.f32.mrb[0].mxu0
        %v644 = vpop.f32.mrb[0].mxu0
        %v645 = vadd.f32 0.0, %v644
        %v646 = vpop.f32.mrb[0].mxu0
        %647 = vmatprep.mubr.bf16.mxu0 0
        %648 = vmatmul.mubr.bf16.gmra.mrb[0].mxu0 %v502
        %v649 = vpop.f32.mrb[0].mxu0
        %v650 = vadd.f32 0.0, %v649
        %v651 = vpop.f32.mrb[0].mxu0
        %v652 = vpop.f32.mrb[0].mxu0
        %v653 = vadd.f32 0.0, %v652
        %v654 = vpop.f32.mrb[0].mxu0
        %655 = vdwg.mxu0
        %v656 = vadd.f32 %v415, %v594
        %v657 = vadd.f32 %v416, %v597
        %v658 = vadd.f32 %v417, %v602
        %v659 = vadd.f32 %v418, %v605
        %v660 = vadd.f32 %v419, %v610
        %v661 = vadd.f32 %v420, %v613
        %v662 = vadd.f32 %v421, %v618
        %v663 = vadd.f32 %v422, %v621
        %v664 = vadd.f32 %v423, %v626
        %v665 = vadd.f32 %v424, %v629
        %v666 = vadd.f32 %v425, %v634
        %v667 = vadd.f32 %v426, %v637
        %v668 = vadd.f32 %v427, %v642
        %v669 = vadd.f32 %v428, %v645
        %v670 = vadd.f32 %v429, %v650
        %v671 = vadd.f32 %v430, %v653
        %672 = vst [vmem:[#allocation2] sm:$0xff] %v656
        %673 = vst [vmem:[#allocation2 + $0x8] sm:$0xff] %v657
        %674 = vst [vmem:[#allocation2 + $0x10] sm:$0xff] %v658
        %675 = vst [vmem:[#allocation2 + $0x18] sm:$0xff] %v659
        %676 = vst [vmem:[#allocation2 + $0x20] sm:$0xff] %v660
        %677 = vst [vmem:[#allocation2 + $0x28] sm:$0xff] %v661
        %678 = vst [vmem:[#allocation2 + $0x30] sm:$0xff] %v662
        %679 = vst [vmem:[#allocation2 + $0x38] sm:$0xff] %v663
        %680 = vst [vmem:[#allocation2 + $0x40] sm:$0xff] %v664
        %681 = vst [vmem:[#allocation2 + $0x48] sm:$0xff] %v665
        %682 = vst [vmem:[#allocation2 + $0x50] sm:$0xff] %v666
        %683 = vst [vmem:[#allocation2 + $0x58] sm:$0xff] %v667
        %684 = vst [vmem:[#allocation2 + $0x60] sm:$0xff] %v668
        %685 = vst [vmem:[#allocation2 + $0x68] sm:$0xff] %v669
        %686 = vst [vmem:[#allocation2 + $0x70] sm:$0xff] %v670
        %687 = vst [vmem:[#allocation2 + $0x78] sm:$0xff] %v671
        %p688 = scmp.eq.s32.totalorder %s22, 1
        // Predicated region
        $region82: #{_lambda_.31} parent=72 // pred_check
          %p689 = pneg %p688
        $region83: #{_lambda_.31} parent=72 // pred_check_branch
          %691 = sbr.rel (%p689) target = $region85
        $region84: #{_lambda_.31} parent=72 // pred_region
          %v692 = vld [vmem:[#allocation2] sm:$0xff]
          %v693 = vld [vmem:[#allocation2 + $0x8] sm:$0xff]
          %v694 = vld [vmem:[#allocation2 + $0x10] sm:$0xff]
          %v695 = vld [vmem:[#allocation2 + $0x18] sm:$0xff]
          %v696 = vld [vmem:[#allocation2 + $0x20] sm:$0xff]
          %v697 = vld [vmem:[#allocation2 + $0x28] sm:$0xff]
          %v698 = vld [vmem:[#allocation2 + $0x30] sm:$0xff]
          %v699 = vld [vmem:[#allocation2 + $0x38] sm:$0xff]
          %v700 = vld [vmem:[#allocation2 + $0x40] sm:$0xff]
          %v701 = vld [vmem:[#allocation2 + $0x48] sm:$0xff]
          %v702 = vld [vmem:[#allocation2 + $0x50] sm:$0xff]
          %v703 = vld [vmem:[#allocation2 + $0x58] sm:$0xff]
          %v704 = vld [vmem:[#allocation2 + $0x60] sm:$0xff]
          %v705 = vld [vmem:[#allocation2 + $0x68] sm:$0xff]
          %v706 = vld [vmem:[#allocation2 + $0x70] sm:$0xff]
          %v707 = vld [vmem:[#allocation2 + $0x78] sm:$0xff]
          %v708 = vld [vmem:[%s381] sm:$0x1]
          %v709 = vld [vmem:[%s384] sm:$0x1]
          %v711 = vlaneseq
          %v712 = vshrl.u32 %v711, 7
          %v713 = vsub.s32 0, %v712
          %v714 = vrot.slane %v708, %v713
          %v716 = vmul.f32 %v692, %v714
          %v717 = vmul.f32 %v693, %v714
          %v718 = vmul.f32 %v694, %v714
          %v719 = vmul.f32 %v695, %v714
          %v720 = vmul.f32 %v696, %v714
          %v721 = vmul.f32 %v697, %v714
          %v722 = vmul.f32 %v698, %v714
          %v723 = vmul.f32 %v699, %v714
          %v724 = vmul.f32 %v700, %v714
          %v725 = vmul.f32 %v701, %v714
          %v726 = vmul.f32 %v702, %v714
          %v727 = vmul.f32 %v703, %v714
          %v728 = vmul.f32 %v704, %v714
          %v729 = vmul.f32 %v705, %v714
          %v730 = vmul.f32 %v706, %v714
          %v731 = vmul.f32 %v707, %v714
          %v733 = vlaneseq
          %v734 = vshrl.u32 %v733, 7
          %v735 = vsub.s32 0, %v734
          %v736 = vrot.slane %v709, %v735
          %v738 = vadd.f32 %v716, %v736
          %v739 = vadd.f32 %v717, %v736
          %v740 = vadd.f32 %v718, %v736
          %v741 = vadd.f32 %v719, %v736
          %v742 = vadd.f32 %v720, %v736
          %v743 = vadd.f32 %v721, %v736
          %v744 = vadd.f32 %v722, %v736
          %v745 = vadd.f32 %v723, %v736
          %v746 = vadd.f32 %v724, %v736
          %v747 = vadd.f32 %v725, %v736
          %v748 = vadd.f32 %v726, %v736
          %v749 = vadd.f32 %v727, %v736
          %v750 = vadd.f32 %v728, %v736
          %v751 = vadd.f32 %v729, %v736
          %v752 = vadd.f32 %v730, %v736
          %v753 = vadd.f32 %v731, %v736
          %v754 = vmax.f32 %v738, 0.0
          %v755 = vmax.f32 %v739, 0.0
          %v756 = vmax.f32 %v740, 0.0
          %v757 = vmax.f32 %v741, 0.0
          %v758 = vmax.f32 %v742, 0.0
          %v759 = vmax.f32 %v743, 0.0
          %v760 = vmax.f32 %v744, 0.0
          %v761 = vmax.f32 %v745, 0.0
          %v762 = vmax.f32 %v746, 0.0
          %v763 = vmax.f32 %v747, 0.0
          %v764 = vmax.f32 %v748, 0.0
          %v765 = vmax.f32 %v749, 0.0
          %v766 = vmax.f32 %v750, 0.0
          %v767 = vmax.f32 %v751, 0.0
          %v768 = vmax.f32 %v752, 0.0
          %v769 = vmax.f32 %v753, 0.0
          %770 = vst [vmem:[%s392] sm:$0xff] %v754
          %771 = vst [vmem:[%s392 + $0x8] sm:$0xff] %v755
          %772 = vst [vmem:[%s392 + $0x10] sm:$0xff] %v756
          %773 = vst [vmem:[%s392 + $0x18] sm:$0xff] %v757
          %774 = vst [vmem:[%s392 + $0x20] sm:$0xff] %v758
          %775 = vst [vmem:[%s392 + $0x28] sm:$0xff] %v759
          %776 = vst [vmem:[%s392 + $0x30] sm:$0xff] %v760
          %777 = vst [vmem:[%s392 + $0x38] sm:$0xff] %v761
          %778 = vst [vmem:[%s392 + $0x40] sm:$0xff] %v762
          %779 = vst [vmem:[%s392 + $0x48] sm:$0xff] %v763
          %780 = vst [vmem:[%s392 + $0x50] sm:$0xff] %v764
          %781 = vst [vmem:[%s392 + $0x58] sm:$0xff] %v765
          %782 = vst [vmem:[%s392 + $0x60] sm:$0xff] %v766
          %783 = vst [vmem:[%s392 + $0x68] sm:$0xff] %v767
          %784 = vst [vmem:[%s392 + $0x70] sm:$0xff] %v768
          %785 = vst [vmem:[%s392 + $0x78] sm:$0xff] %v769
        $region85: #{_lambda_.31} parent=72 // pred_fallthru
          _
        %s786 = smul.u32 16, %s20
        %p787 = scmp.lt.s32.totalorder %s786, 15
        %s788 = scalar_select %p787, %s786, 15
        %p789 = scmp.lt.s32.totalorder %s21, 0
        %s790 = scalar_select %p789, %s21, 0
        %s791 = sadd.s32 %s790, %s788
        %s792 = smul.addr %s791, 8
        %s793 = scalar_lea.vmem %s4, %s792
        // Predicated region
        $region86: #{_lambda_.31} parent=72 // pred_check
          %p794 = pneg %p162
        $region87: #{_lambda_.31} parent=72 // pred_check_branch
          %796 = sbr.rel (%p794) target = $region89
        $region88: #{_lambda_.31} parent=72 // pred_region
          %s797 = smul.u32 16, %s20
        $region89: #{_lambda_.31} parent=72 // pred_fallthru
          _
        // Predicated region
        $region90: #{_lambda_.31} parent=72 // pred_check
          %p798 = pneg %p162
        $region91: #{_lambda_.31} parent=72 // pred_check_branch
          %800 = sbr.rel (%p798) target = $region93
        $region92: #{_lambda_.31} parent=72 // pred_region
          %s801 = smul.u32 16, %s20
          %p802 = scmp.lt.s32.totalorder %s801, 15
          %s803 = scalar_select %p802, %s801, 15
          %p804 = scmp.lt.s32.totalorder %s21, 0
          %s805 = scalar_select %p804, %s21, 0
          %s806 = sadd.s32 %s805, %s803
          %s807 = smul.addr %s806, 8
          %s808 = scalar_lea.vmem %s4, %s807
        $region93: #{_lambda_.31} parent=72 // pred_fallthru
          _
      $region73: #{_lambda_.31} parent=5 // pred_fallthru
        _
      %p809 = scmp.le.s32.totalorder 2, %s10
      // Predicated region
      $region94: #{_lambda_.31} parent=5 // pred_check
        %p810 = pneg %p809
      $region95: #{_lambda_.31} parent=5 // pred_check_branch
        %812 = sbr.rel (%p810) target = $region97
      $region96: #{_lambda_.31} parent=5 // pred_region
        %s813 = ssub.s32 %s10, 2
      $region97: #{_lambda_.31} parent=5 // pred_fallthru
        _
    $region6: #{_lambda_.31} parent=1 // loop_footer
      %s14 = sadd.s32 1, %s10
    $region7: #{_lambda_.31} parent=1 // loop_footer_branch
      %9 = sbr.rel target = $region3
    $region8: #{_lambda_.31} parent=1 // loop_exit
      _

// kernel: _lambda_.35
$region0: #{_lambda_.35}
  #allocation0 [shape = 'u32[]', space=smem, size = 0x4, offset = 0x4, fixed_abs, tag = 'smem constant byte address 0x4 - core index']
  #allocation1 [shape = 'u32[144,128]{1,0:T(1,128)}', space=vmem, size = 0x12000, scoped, tag = 'internal scratch']
  #allocation2 [shape = 'f32[128,128]{1,0:T(8,128)}', space=vmem, size = 0x10000, scoped, tag = 'scratch operand']
  %s0 = inlined_call_operand.vmem [shape: bf16[128,512], index: 0, kind: input, shape index: {}]
  %s1 = inlined_call_operand.vmem [shape: bf16[512,128], index: 1, kind: input, shape index: {}]
  %s2 = inlined_call_operand.vmem [shape: f32[1,128], index: 2, kind: input, shape index: {}]
  %s3 = inlined_call_operand.vmem [shape: f32[1,128], index: 3, kind: input, shape index: {}]
  %s4 = inlined_call_operand.vmem [shape: f32[128,128], index: 4, kind: output, shape index: {}]
  %s5 = sld [smem:[#allocation0]]
  $region95: #{_lambda_.35} parent=0
    _
  %s7 = ssub.s32 1, %s5
  %s8 = scalar_select 0, %s7, %s5
  $region1: #{_lambda_.35} parent=0
    #allocation3 [shape = 'u8[131072]{0}', space=vmem, size = 0x20000, scoped, tag = 'input window, operand 0']
    loop: start=0, step=1, limit=4
    $region2: #{_lambda_.35} parent=1 // loop_pre_header
      _
    $region3: #{_lambda_.35} parent=1 // loop_header
      %s10 = sphi 0, %s14
      %p11 = scmp.ge.s32.totalorder %s10, 4
      %s17 = sphi 0, %s36
      %s18 = sphi 0, %s32
      %s19 = sphi 0, %s28
      %s20 = sphi 0, %s17
      %s21 = sphi 0, %s18
      %s22 = sphi 0, %s19
      %s23 = sphi 0, %s20
      %s24 = sphi 0, %s21
      %s25 = sphi 0, %s22
      %s41 = sphi 0, %s43
      %s44 = sphi 0, %s41
      %s45 = sphi 0, %s44
      %s61 = sphi 0, %s45
      %s69 = sphi 0, %s71
      %s72 = sphi 0, %s69
      %s73 = sphi 0, %s72
      %s89 = sphi 0, %s73
      %s95 = sphi 0, %s97
      %s98 = sphi 0, %s95
      %s99 = sphi 0, %s98
      %s115 = sphi 0, %s99
      %s121 = sphi 0, %s123
      %s124 = sphi 0, %s121
      %s125 = sphi 0, %s124
      %s141 = sphi 0, %s125
      %s149 = sphi 0, %s151
      %s152 = sphi 0, %s149
      %s153 = sphi 0, %s152
      %s169 = sphi 0, %s153
    $region4: #{_lambda_.35} parent=1 // loop_header_branch
      %13 = sbr.rel (%p11) target = $region8
    $region5: #{_lambda_.35} parent=1 // loop_body
      %s15 = ssub.s32 %s10, 1
      %s16 = ssub.s32 %s10, 2
      %s26 = sadd.s32 1, %s19
      %p27 = scmp.ge.s32.totalorder %s26, 2
      %s28 = scalar_select %p27, 0, %s26
      %s29 = sadd.s32 1, %s18
      %s30 = scalar_select %p27, %s29, %s18
      %p31 = scmp.ge.s32.totalorder %s30, 1
      %s32 = scalar_select %p31, 0, %s30
      %s33 = sadd.s32 1, %s17
      %s34 = scalar_select %p31, %s33, %s17
      %p35 = scmp.ge.s32.totalorder %s34, 1
      %s36 = scalar_select %p35, 0, %s34
      %s37 = ssub.s32 %s17, %s36
      %s38 = ssub.s32 %s19, %s28
      %s39 = sor.u32 %s37, %s38
      %p40 = scmp.eq.s32.totalorder %s39, 0
      %s42 = sadd.s32 %s41, 1
      %s43 = scalar_select %p40, %s41, %s42
      %p46 = pneg %p40
      %p47 = scmp.eq.s32.totalorder %s10, 1
      %p48 = por %p46, %p47
      %p49 = scmp.ne.s32.totalorder %s41, %s44
      %p50 = scmp.eq.s32.totalorder %s10, 0
      %p51 = por %p49, %p50
      %p52 = scmp.ne.s32.totalorder %s41, %s44
      %p53 = scmp.eq.s32.totalorder %s15, 1
      %p54 = por %p52, %p53
      %p55 = scmp.ne.s32.totalorder %s44, %s45
      %p56 = scmp.eq.s32.totalorder %s15, 0
      %p57 = por %p55, %p56
      %p58 = scmp.ne.s32.totalorder %s44, %s45
      %p59 = scmp.eq.s32.totalorder %s16, 1
      %p60 = por %p58, %p59
      %p62 = scmp.ne.s32.totalorder %s45, %s61
      %p63 = scmp.eq.s32.totalorder %s16, 0
      %p64 = por %p62, %p63
      %s65 = ssub.s32 %s19, %s28
      %s66 = ssub.s32 %s18, %s32
      %s67 = sor.u32 %s65, %s66
      %p68 = scmp.eq.s32.totalorder %s67, 0
      %s70 = sadd.s32 %s69, 1
      %s71 = scalar_select %p68, %s69, %s70
      %p74 = pneg %p68
      %p75 = scmp.eq.s32.totalorder %s10, 1
      %p76 = por %p74, %p75
      %p77 = scmp.ne.s32.totalorder %s69, %s72
      %p78 = scmp.eq.s32.totalorder %s10, 0
      %p79 = por %p77, %p78
      %p80 = scmp.ne.s32.totalorder %s69, %s72
      %p81 = scmp.eq.s32.totalorder %s15, 1
      %p82 = por %p80, %p81
      %p83 = scmp.ne.s32.totalorder %s72, %s73
      %p84 = scmp.eq.s32.totalorder %s15, 0
      %p85 = por %p83, %p84
      %p86 = scmp.ne.s32.totalorder %s72, %s73
      %p87 = scmp.eq.s32.totalorder %s16, 1
      %p88 = por %p86, %p87
      %p90 = scmp.ne.s32.totalorder %s73, %s89
      %p91 = scmp.eq.s32.totalorder %s16, 0
      %p92 = por %p90, %p91
      %s93 = ssub.s32 %s18, %s32
      %p94 = scmp.eq.s32.totalorder %s93, 0
      %s96 = sadd.s32 %s95, 1
      %s97 = scalar_select %p94, %s95, %s96
      %p100 = pneg %p94
      %p101 = scmp.eq.s32.totalorder %s10, 1
      %p102 = por %p100, %p101
      %p103 = scmp.ne.s32.totalorder %s95, %s98
      %p104 = scmp.eq.s32.totalorder %s10, 0
      %p105 = por %p103, %p104
      %p106 = scmp.ne.s32.totalorder %s95, %s98
      %p107 = scmp.eq.s32.totalorder %s15, 1
      %p108 = por %p106, %p107
      %p109 = scmp.ne.s32.totalorder %s98, %s99
      %p110 = scmp.eq.s32.totalorder %s15, 0
      %p111 = por %p109, %p110
      %p112 = scmp.ne.s32.totalorder %s98, %s99
      %p113 = scmp.eq.s32.totalorder %s16, 1
      %p114 = por %p112, %p113
      %p116 = scmp.ne.s32.totalorder %s99, %s115
      %p117 = scmp.eq.s32.totalorder %s16, 0
      %p118 = por %p116, %p117
      %s119 = ssub.s32 %s18, %s32
      %p120 = scmp.eq.s32.totalorder %s119, 0
      %s122 = sadd.s32 %s121, 1
      %s123 = scalar_select %p120, %s121, %s122
      %p126 = pneg %p120
      %p127 = scmp.eq.s32.totalorder %s10, 1
      %p128 = por %p126, %p127
      %p129 = scmp.ne.s32.totalorder %s121, %s124
      %p130 = scmp.eq.s32.totalorder %s10, 0
      %p131 = por %p129, %p130
      %p132 = scmp.ne.s32.totalorder %s121, %s124
      %p133 = scmp.eq.s32.totalorder %s15, 1
      %p134 = por %p132, %p133
      %p135 = scmp.ne.s32.totalorder %s124, %s125
      %p136 = scmp.eq.s32.totalorder %s15, 0
      %p137 = por %p135, %p136
      %p138 = scmp.ne.s32.totalorder %s124, %s125
      %p139 = scmp.eq.s32.totalorder %s16, 1
      %p140 = por %p138, %p139
      %p142 = scmp.ne.s32.totalorder %s125, %s141
      %p143 = scmp.eq.s32.totalorder %s16, 0
      %p144 = por %p142, %p143
      %s145 = ssub.s32 %s17, %s36
      %s146 = ssub.s32 %s18, %s32
      %s147 = sor.u32 %s145, %s146
      %p148 = scmp.eq.s32.totalorder %s147, 0
      %s150 = sadd.s32 %s149, 1
      %s151 = scalar_select %p148, %s149, %s150
      %p154 = pneg %p148
      %p155 = scmp.eq.s32.totalorder %s10, 1
      %p156 = por %p154, %p155
      %p157 = scmp.ne.s32.totalorder %s149, %s152
      %p158 = scmp.eq.s32.totalorder %s10, 0
      %p159 = por %p157, %p158
      %p160 = scmp.ne.s32.totalorder %s149, %s152
      %p161 = scmp.eq.s32.totalorder %s15, 1
      %p162 = por %p160, %p161
      %p163 = scmp.ne.s32.totalorder %s152, %s153
      %p164 = scmp.eq.s32.totalorder %s15, 0
      %p165 = por %p163, %p164
      %p166 = scmp.ne.s32.totalorder %s152, %s153
      %p167 = scmp.eq.s32.totalorder %s16, 1
      %p168 = por %p166, %p167
      %p170 = scmp.ne.s32.totalorder %s153, %s169
      %p171 = scmp.eq.s32.totalorder %s16, 0
      %p172 = por %p170, %p171
      %p173 = scmp.le.s32.totalorder 1, %s10
      %p174 = scmp.lt.s32.totalorder %s10, 3
      %p175 = pnand %p173, %p174
      %p176 = pneg %p175
      // Predicated region
      $region9: #{_lambda_.35} parent=5 // pred_check
        _
      $region10: #{_lambda_.35} parent=5 // pred_check_branch
        %178 = sbr.rel (%p175) target = $region12
      $region11: #{_lambda_.35} parent=5 // pred_region
        %s179 = ssub.s32 %s10, 1
        // Predicated region
        $region13: #{_lambda_.35} parent=11 // pred_check
          %p180 = pneg %p111
        $region14: #{_lambda_.35} parent=11 // pred_check_branch
          %182 = sbr.rel (%p180) target = $region16
        $region15: #{_lambda_.35} parent=11 // pred_region
          %p183 = scmp.lt.s32.totalorder %s21, 0
          %s184 = scalar_select %p183, %s21, 0
          %s185 = scalar_lea.vmem %s2, %s184
        $region16: #{_lambda_.35} parent=11 // pred_fallthru
          _
        // Predicated region
        $region17: #{_lambda_.35} parent=11 // pred_check
          %p186 = pneg %p137
        $region18: #{_lambda_.35} parent=11 // pred_check_branch
          %188 = sbr.rel (%p186) target = $region20
        $region19: #{_lambda_.35} parent=11 // pred_region
          %p189 = scmp.lt.s32.totalorder %s21, 0
          %s190 = scalar_select %p189, %s21, 0
          %s191 = scalar_lea.vmem %s3, %s190
        $region20: #{_lambda_.35} parent=11 // pred_fallthru
          _
      $region12: #{_lambda_.35} parent=5 // pred_fallthru
        _
      %p192 = scmp.lt.s32.totalorder %s10, 2
      // Predicated region
      $region21: #{_lambda_.35} parent=5 // pred_check
        %p193 = pneg %p192
      $region22: #{_lambda_.35} parent=5 // pred_check_branch
        %195 = sbr.rel (%p193) target = $region24
      $region23: #{_lambda_.35} parent=5 // pred_region
        // Predicated region
        $region25: #{_lambda_.35} parent=23 // pred_check
          %p196 = pneg %p51
        $region26: #{_lambda_.35} parent=23 // pred_check_branch
          %198 = sbr.rel (%p196) target = $region28
        $region27: #{_lambda_.35} parent=23 // pred_region
          %s199 = sand.u32 %s41, 1
          %s200 = sand.u32 %s41, 1
          %s201 = smul.addr %s200, 128
          %s202 = scalar_lea.vmem [#allocation3], %s201
          %s203 = smul.u32 16, %s17
          %s204 = smul.u32 2, %s19
          %s205 = smul.addr %s203, 4
          %s206 = sadd.s32 %s204, %s205
          %s207 = smul.addr %s206, 4
          %s208 = scalar_lea.vmem %s0, %s207
          // Predicated region
          $region29: #{_lambda_.35} parent=27 // pred_check
            _
          $region30: #{_lambda_.35} parent=27 // pred_check_branch
            %210 = sbr.rel (0) target = $region32
          $region31: #{_lambda_.35} parent=27 // pred_region
            // Predicated region
            $region33: #{_lambda_.35} parent=31 // pred_check
              _
            $region34: #{_lambda_.35} parent=31 // pred_check_branch
              %212 = sbr.rel (0) target = $region36
            $region35: #{_lambda_.35} parent=31 // pred_region
              // Predicated region
              $region48: #{_lambda_.35} parent=35 // pred_check
                _
              $region49: #{_lambda_.35} parent=35 // pred_check_branch
                %257 = sbr.rel (0) target = $region51
              $region50: #{_lambda_.35} parent=35 // pred_region
                loop: start=0, step=1, limit=1
                $region52: #{_lambda_.35} parent=50 // loop_pre_header
                  _
                $region53: #{_lambda_.35} parent=50 // loop_header
                  %s259 = sphi 0, %s263
                  %p260 = scmp.ge.s32.totalorder %s259, 1
                  %s264 = sphi %s208, %s208
                  %s265 = sphi %s202, %s202
                $region54: #{_lambda_.35} parent=50 // loop_header_branch
                  %262 = sbr.rel (%p260) target = $region58
                $region55: #{_lambda_.35} parent=50 // loop_body
                  %v266 = vld [vmem:[%s264] sm:$0xff]
                  %267 = vst [vmem:[%s265] sm:$0xff] %v266
                  %v268 = vld [vmem:[%s264 + $0x10] sm:$0xff]
                  %269 = vst [vmem:[%s265 + $0x8] sm:$0xff] %v268
                  %v270 = vld [vmem:[%s264 + $0x20] sm:$0xff]
                  %271 = vst [vmem:[%s265 + $0x10] sm:$0xff] %v270
                  %v272 = vld [vmem:[%s264 + $0x30] sm:$0xff]
                  %273 = vst [vmem:[%s265 + $0x18] sm:$0xff] %v272
                  %v274 = vld [vmem:[%s264 + $0x40] sm:$0xff]
                  %275 = vst [vmem:[%s265 + $0x20] sm:$0xff] %v274
                  %v276 = vld [vmem:[%s264 + $0x50] sm:$0xff]
                  %277 = vst [vmem:[%s265 + $0x28] sm:$0xff] %v276
                  %v278 = vld [vmem:[%s264 + $0x60] sm:$0xff]
                  %279 = vst [vmem:[%s265 + $0x30] sm:$0xff] %v278
                  %v280 = vld [vmem:[%s264 + $0x70] sm:$0xff]
                  %281 = vst [vmem:[%s265 + $0x38] sm:$0xff] %v280
                  %v282 = vld [vmem:[%s264 + $0x80] sm:$0xff]
                  %283 = vst [vmem:[%s265 + $0x40] sm:$0xff] %v282
                  %v284 = vld [vmem:[%s264 + $0x90] sm:$0xff]
                  %285 = vst [vmem:[%s265 + $0x48] sm:$0xff] %v284
                  %v286 = vld [vmem:[%s264 + $0xa0] sm:$0xff]
                  %287 = vst [vmem:[%s265 + $0x50] sm:$0xff] %v286
                  %v288 = vld [vmem:[%s264 + $0xb0] sm:$0xff]
                  %289 = vst [vmem:[%s265 + $0x58] sm:$0xff] %v288
                  %v290 = vld [vmem:[%s264 + $0xc0] sm:$0xff]
                  %291 = vst [vmem:[%s265 + $0x60] sm:$0xff] %v290
                  %v292 = vld [vmem:[%s264 + $0xd0] sm:$0xff]
                  %293 = vst [vmem:[%s265 + $0x68] sm:$0xff] %v292
                  %v294 = vld [vmem:[%s264 + $0xe0] sm:$0xff]
                  %295 = vst [vmem:[%s265 + $0x70] sm:$0xff] %v294
                  %v296 = vld [vmem:[%s264 + $0xf0] sm:$0xff]
                  %297 = vst [vmem:[%s265 + $0x78] sm:$0xff] %v296
                $region56: #{_lambda_.35} parent=50 // loop_footer
                  %s263 = sadd.s32 1, %s259
                $region57: #{_lambda_.35} parent=50 // loop_footer_branch
                  %258 = sbr.rel target = $region53
                $region58: #{_lambda_.35} parent=50 // loop_exit
                  _
              $region51: #{_lambda_.35} parent=35 // pred_fallthru
                _
              // Predicated region
              $region59: #{_lambda_.35} parent=35 // pred_check
                _
              $region60: #{_lambda_.35} parent=35 // pred_check_branch
                %299 = sbr.rel target = $region62
              $region61: #{_lambda_.35} parent=35 // pred_region
                _
              $region62: #{_lambda_.35} parent=35 // pred_fallthru
                _
            $region36: #{_lambda_.35} parent=31 // pred_fallthru
              _
            // Predicated region
            $region37: #{_lambda_.35} parent=31 // pred_check
              _
            $region38: #{_lambda_.35} parent=31 // pred_check_branch
              %214 = sbr.rel target = $region40
            $region39: #{_lambda_.35} parent=31 // pred_region
              loop: start=0, step=1, limit=1
              $region41: #{_lambda_.35} parent=39 // loop_pre_header
                _
              $region42: #{_lambda_.35} parent=39 // loop_header
                %s217 = sphi 0, %s221
                %p218 = scmp.ge.s32.totalorder %s217, 1
                %s222 = sphi %s208, %s208
                %s223 = sphi %s202, %s202
              $region43: #{_lambda_.35} parent=39 // loop_header_branch
                %220 = sbr.rel (%p218) target = $region47
              $region44: #{_lambda_.35} parent=39 // loop_body
                %v224 = vld [vmem:[%s222] sm:$0xff]
                %225 = vst [vmem:[%s223] sm:$0xff] %v224
                %v226 = vld [vmem:[%s222 + $0x10] sm:$0xff]
                %227 = vst [vmem:[%s223 + $0x8] sm:$0xff] %v226
                %v228 = vld [vmem:[%s222 + $0x20] sm:$0xff]
                %229 = vst [vmem:[%s223 + $0x10] sm:$0xff] %v228
                %v230 = vld [vmem:[%s222 + $0x30] sm:$0xff]
                %231 = vst [vmem:[%s223 + $0x18] sm:$0xff] %v230
                %v232 = vld [vmem:[%s222 + $0x40] sm:$0xff]
                %233 = vst [vmem:[%s223 + $0x20] sm:$0xff] %v232
                %v234 = vld [vmem:[%s222 + $0x50] sm:$0xff]
                %235 = vst [vmem:[%s223 + $0x28] sm:$0xff] %v234
                %v236 = vld [vmem:[%s222 + $0x60] sm:$0xff]
                %237 = vst [vmem:[%s223 + $0x30] sm:$0xff] %v236
                %v238 = vld [vmem:[%s222 + $0x70] sm:$0xff]
                %239 = vst [vmem:[%s223 + $0x38] sm:$0xff] %v238
                %v240 = vld [vmem:[%s222 + $0x80] sm:$0xff]
                %241 = vst [vmem:[%s223 + $0x40] sm:$0xff] %v240
                %v242 = vld [vmem:[%s222 + $0x90] sm:$0xff]
                %243 = vst [vmem:[%s223 + $0x48] sm:$0xff] %v242
                %v244 = vld [vmem:[%s222 + $0xa0] sm:$0xff]
                %245 = vst [vmem:[%s223 + $0x50] sm:$0xff] %v244
                %v246 = vld [vmem:[%s222 + $0xb0] sm:$0xff]
                %247 = vst [vmem:[%s223 + $0x58] sm:$0xff] %v246
                %v248 = vld [vmem:[%s222 + $0xc0] sm:$0xff]
                %249 = vst [vmem:[%s223 + $0x60] sm:$0xff] %v248
                %v250 = vld [vmem:[%s222 + $0xd0] sm:$0xff]
                %251 = vst [vmem:[%s223 + $0x68] sm:$0xff] %v250
                %v252 = vld [vmem:[%s222 + $0xe0] sm:$0xff]
                %253 = vst [vmem:[%s223 + $0x70] sm:$0xff] %v252
                %v254 = vld [vmem:[%s222 + $0xf0] sm:$0xff]
                %255 = vst [vmem:[%s223 + $0x78] sm:$0xff] %v254
              $region45: #{_lambda_.35} parent=39 // loop_footer
                %s221 = sadd.s32 1, %s217
              $region46: #{_lambda_.35} parent=39 // loop_footer_branch
                %216 = sbr.rel target = $region42
              $region47: #{_lambda_.35} parent=39 // loop_exit
                _
            $region40: #{_lambda_.35} parent=31 // pred_fallthru
              _
          $region32: #{_lambda_.35} parent=27 // pred_fallthru
            _
          %300 = vnop
        $region28: #{_lambda_.35} parent=23 // pred_fallthru
          _
        // Predicated region
        $region63: #{_lambda_.35} parent=23 // pred_check
          %p301 = pneg %p79
        $region64: #{_lambda_.35} parent=23 // pred_check_branch
          %303 = sbr.rel (%p301) target = $region66
        $region65: #{_lambda_.35} parent=23 // pred_region
          %s304 = smul.u32 32, %s19
          %p305 = scmp.lt.s32.totalorder %s304, 63
          %s306 = scalar_select %p305, %s304, 63
          %p307 = scmp.lt.s32.totalorder %s18, 0
          %s308 = scalar_select %p307, %s18, 0
          %s309 = sadd.s32 %s308, %s306
          %s310 = smul.addr %s309, 4
          %s311 = scalar_lea.vmem %s1, %s310
          %s312 = smul.u32 32, %s19
        $region66: #{_lambda_.35} parent=23 // pred_fallthru
          _
      $region24: #{_lambda_.35} parent=5 // pred_fallthru
        _
      %p313 = scmp.le.s32.totalorder 1, %s10
      %p314 = scmp.lt.s32.totalorder %s10, 3
      %p315 = pnand %p313, %p314
      %p316 = pneg %p315
      // Predicated region
      $region67: #{_lambda_.35} parent=5 // pred_check
        _
      $region68: #{_lambda_.35} parent=5 // pred_check_branch
        %318 = sbr.rel (%p315) target = $region70
      $region69: #{_lambda_.35} parent=5 // pred_region
        %s319 = ssub.s32 %s10, 1
        %s320 = sand.u32 %s44, 1
        %s321 = sand.u32 %s44, 1
        %s322 = smul.addr %s321, 128
        %s323 = scalar_lea.vmem [#allocation3], %s322
        // Predicated region
        $region71: #{_lambda_.35} parent=69 // pred_check
          %p324 = pneg %p57
        $region72: #{_lambda_.35} parent=69 // pred_check_branch
          %326 = sbr.rel (%p324) target = $region74
        $region73: #{_lambda_.35} parent=69 // pred_region
          _
        $region74: #{_lambda_.35} parent=69 // pred_fallthru
          _
        %s327 = sand.u32 %s44, 1
        %s328 = sand.u32 %s44, 1
        %s329 = smul.addr %s328, 128
        %s330 = scalar_lea.vmem [#allocation3], %s329
        %p331 = pneg %p57
        %p332 = pneg %p54
        %s333 = smul.u32 32, %s22
        %p334 = scmp.lt.s32.totalorder %s333, 63
        %s335 = scalar_select %p334, %s333, 63
        %p336 = scmp.lt.s32.totalorder %s21, 0
        %s337 = scalar_select %p336, %s21, 0
        %s338 = sadd.s32 %s337, %s335
        %s339 = smul.addr %s338, 4
        %s340 = scalar_lea.vmem %s1, %s339
        %p341 = pneg %p85
        %p342 = pneg %p82
        %p343 = scmp.lt.s32.totalorder %s21, 0
        %s344 = scalar_select %p343, %s21, 0
        %s345 = scalar_lea.vmem %s2, %s344
        %p346 = pneg %p111
        %p347 = pneg %p108
        %p348 = scmp.lt.s32.totalorder %s21, 0
        %s349 = scalar_select %p348, %s21, 0
        %s350 = scalar_lea.vmem %s3, %s349
        %p351 = pneg %p137
        %p352 = pneg %p134
        %p353 = pneg %p165
        %p354 = pneg %p162
        %s355 = smul.u32 16, %s20
        %p356 = scmp.lt.s32.totalorder %s355, 15
        %s357 = scalar_select %p356, %s355, 15
        %p358 = scmp.lt.s32.totalorder %s21, 0
        %s359 = scalar_select %p358, %s21, 0
        %s360 = sadd.s32 %s359, %s357
        %s361 = smul.addr %s360, 8
        %s362 = scalar_lea.vmem %s4, %s361
        %s363 = smul.u32 16, %s20
        %s364 = smul.u32 2, %s22
        %s365 = smul.u32 32, %s22
        %p366 = scmp.lt.s32.totalorder %s365, 63
        %s367 = scalar_select %p366, %s365, 63
        %p368 = scmp.lt.s32.totalorder %s21, 0
        %s369 = scalar_select %p368, %s21, 0
        %s370 = sadd.s32 %s369, %s367
        %s371 = smul.addr %s370, 4
        %s372 = scalar_lea.vmem %s1, %s371
        %s373 = smul.u32 32, %s22
        %p374 = scmp.lt.s32.totalorder %s21, 0
        %s375 = scalar_select %p374, %s21, 0
        %s376 = scalar_lea.vmem %s2, %s375
        %p377 = scmp.lt.s32.totalorder %s21, 0
        %s378 = scalar_select %p377, %s21, 0
        %s379 = scalar_lea.vmem %s3, %s378
        %s380 = smul.u32 16, %s20
        %p381 = scmp.lt.s32.totalorder %s380, 15
        %s382 = scalar_select %p381, %s380, 15
        %p383 = scmp.lt.s32.totalorder %s21, 0
        %s384 = scalar_select %p383, %s21, 0
        %s385 = sadd.s32 %s384, %s382
        %s386 = smul.addr %s385, 8
        %s387 = scalar_lea.vmem %s4, %s386
        %s388 = smul.u32 16, %s20
        %p390 = scmp.eq.s32.totalorder %s22, 0
        // Predicated region
        $region75: #{_lambda_.35} parent=69 // pred_check
          %p391 = pneg %p390
        $region76: #{_lambda_.35} parent=69 // pred_check_branch
          %393 = sbr.rel (%p391) target = $region78
        $region77: #{_lambda_.35} parent=69 // pred_region
          %394 = vst [vmem:[#allocation2] sm:$0xff] 0.0
          %395 = vst [vmem:[#allocation2 + $0x8] sm:$0xff] 0.0
          %396 = vst [vmem:[#allocation2 + $0x10] sm:$0xff] 0.0
          %397 = vst [vmem:[#allocation2 + $0x18] sm:$0xff] 0.0
          %398 = vst [vmem:[#allocation2 + $0x20] sm:$0xff] 0.0
          %399 = vst [vmem:[#allocation2 + $0x28] sm:$0xff] 0.0
          %400 = vst [vmem:[#allocation2 + $0x30] sm:$0xff] 0.0
          %401 = vst [vmem:[#allocation2 + $0x38] sm:$0xff] 0.0
          %402 = vst [vmem:[#allocation2 + $0x40] sm:$0xff] 0.0
          %403 = vst [vmem:[#allocation2 + $0x48] sm:$0xff] 0.0
          %404 = vst [vmem:[#allocation2 + $0x50] sm:$0xff] 0.0
          %405 = vst [vmem:[#allocation2 + $0x58] sm:$0xff] 0.0
          %406 = vst [vmem:[#allocation2 + $0x60] sm:$0xff] 0.0
          %407 = vst [vmem:[#allocation2 + $0x68] sm:$0xff] 0.0
          %408 = vst [vmem:[#allocation2 + $0x70] sm:$0xff] 0.0
          %409 = vst [vmem:[#allocation2 + $0x78] sm:$0xff] 0.0
        $region78: #{_lambda_.35} parent=69 // pred_fallthru
          _
        %v410 = vld [vmem:[#allocation2] sm:$0xff]
        %v411 = vld [vmem:[#allocation2 + $0x8] sm:$0xff]
        %v412 = vld [vmem:[#allocation2 + $0x10] sm:$0xff]
        %v413 = vld [vmem:[#allocation2 + $0x18] sm:$0xff]
        %v414 = vld [vmem:[#allocation2 + $0x20] sm:$0xff]
        %v415 = vld [vmem:[#allocation2 + $0x28] sm:$0xff]
        %v416 = vld [vmem:[#allocation2 + $0x30] sm:$0xff]
        %v417 = vld [vmem:[#allocation2 + $0x38] sm:$0xff]
        %v418 = vld [vmem:[#allocation2 + $0x40] sm:$0xff]
        %v419 = vld [vmem:[#allocation2 + $0x48] sm:$0xff]
        %v420 = vld [vmem:[#allocation2 + $0x50] sm:$0xff]
        %v421 = vld [vmem:[#allocation2 + $0x58] sm:$0xff]
        %v422 = vld [vmem:[#allocation2 + $0x60] sm:$0xff]
        %v423 = vld [vmem:[#allocation2 + $0x68] sm:$0xff]
        %v424 = vld [vmem:[#allocation2 + $0x70] sm:$0xff]
        %v425 = vld [vmem:[#allocation2 + $0x78] sm:$0xff]
        %v426 = vld [vmem:[%s323] sm:$0xff]
        %v427 = vld [vmem:[%s323 + $0x8] sm:$0xff]
        %v428 = vld [vmem:[%s323 + $0x10] sm:$0xff]
        %v429 = vld [vmem:[%s323 + $0x18] sm:$0xff]
        %v430 = vld [vmem:[%s323 + $0x20] sm:$0xff]
        %v431 = vld [vmem:[%s323 + $0x28] sm:$0xff]
        %v432 = vld [vmem:[%s323 + $0x30] sm:$0xff]
        %v433 = vld [vmem:[%s323 + $0x38] sm:$0xff]
        %v434 = vld [vmem:[%s323 + $0x40] sm:$0xff]
        %v435 = vld [vmem:[%s323 + $0x48] sm:$0xff]
        %v436 = vld [vmem:[%s323 + $0x50] sm:$0xff]
        %v437 = vld [vmem:[%s323 + $0x58] sm:$0xff]
        %v438 = vld [vmem:[%s323 + $0x60] sm:$0xff]
        %v439 = vld [vmem:[%s323 + $0x68] sm:$0xff]
        %v440 = vld [vmem:[%s323 + $0x70] sm:$0xff]
        %v441 = vld [vmem:[%s323 + $0x78] sm:$0xff]
        %v442 = vld [vmem:[%s372] sm:$0xf]
        %v443 = vld [vmem:[%s372 + $0x4] sm:$0xf]
        %v444 = vld [vmem:[%s372 + $0x8] sm:$0xf]
        %v445 = vld [vmem:[%s372 + $0xc] sm:$0xf]
        %v446 = vld [vmem:[%s372 + $0x10] sm:$0xf]
        %v447 = vld [vmem:[%s372 + $0x14] sm:$0xf]
        %v448 = vld [vmem:[%s372 + $0x18] sm:$0xf]
        %v449 = vld [vmem:[%s372 + $0x1c] sm:$0xf]
        %v450 = vld [vmem:[%s372 + $0x20] sm:$0xf]
        %v451 = vld [vmem:[%s372 + $0x24] sm:$0xf]
        %v452 = vld [vmem:[%s372 + $0x28] sm:$0xf]
        %v453 = vld [vmem:[%s372 + $0x2c] sm:$0xf]
        %v454 = vld [vmem:[%s372 + $0x30] sm:$0xf]
        %v455 = vld [vmem:[%s372 + $0x34] sm:$0xf]
        %v456 = vld [vmem:[%s372 + $0x38] sm:$0xf]
        %v457 = vld [vmem:[%s372 + $0x3c] sm:$0xf]
        %v458 = vld [vmem:[%s372 + $0x40] sm:$0xf]
        %v459 = vld [vmem:[%s372 + $0x44] sm:$0xf]
        %v460 = vld [vmem:[%s372 + $0x48] sm:$0xf]
        %v461 = vld [vmem:[%s372 + $0x4c] sm:$0xf]
        %v462 = vld [vmem:[%s372 + $0x50] sm:$0xf]
        %v463 = vld [vmem:[%s372 + $0x54] sm:$0xf]
        %v464 = vld [vmem:[%s372 + $0x58] sm:$0xf]
        %v465 = vld [vmem:[%s372 + $0x5c] sm:$0xf]
        %v466 = vld [vmem:[%s372 + $0x60] sm:$0xf]
        %v467 = vld [vmem:[%s372 + $0x64] sm:$0xf]
        %v468 = vld [vmem:[%s372 + $0x68] sm:$0xf]
        %v469 = vld [vmem:[%s372 + $0x6c] sm:$0xf]
        %v470 = vld [vmem:[%s372 + $0x70] sm:$0xf]
        %v471 = vld [vmem:[%s372 + $0x74] sm:$0xf]
        %v472 = vld [vmem:[%s372 + $0x78] sm:$0xf]
        %v473 = vld [vmem:[%s372 + $0x7c] sm:$0xf]
        %v490 = vunpack.c.l.b16 %v426
        %v491 = vunpack.c.h.b16 %v426
        %v492 = vunpack.c.l.b16 %v427
        %v493 = vunpack.c.h.b16 %v427
        %v494 = vunpack.c.l.b16 %v428
        %v495 = vunpack.c.h.b16 %v428
        %v496 = vunpack.c.l.b16 %v429
        %v497 = vunpack.c.h.b16 %v429
        %v498 = vunpack.c.l.b16 %v430
        %v499 = vunpack.c.h.b16 %v430
        %v500 = vunpack.c.l.b16 %v431
        %v501 = vunpack.c.h.b16 %v431
        %v502 = vunpack.c.l.b16 %v432
        %v503 = vunpack.c.h.b16 %v432
        %v504 = vunpack.c.l.b16 %v433
        %v505 = vunpack.c.h.b16 %v433
        %v506 = vunpack.c.l.b16 %v434
        %v507 = vunpack.c.h.b16 %v434
        %v508 = vunpack.c.l.b16 %v435
        %v509 = vunpack.c.h.b16 %v435
        %v510 = vunpack.c.l.b16 %v436
        %v511 = vunpack.c.h.b16 %v436
        %v512 = vunpack.c.l.b16 %v437
        %v513 = vunpack.c.h.b16 %v437
        %v514 = vunpack.c.l.b16 %v438
        %v515 = vunpack.c.h.b16 %v438
        %v516 = vunpack.c.l.b16 %v439
        %v517 = vunpack.c.h.b16 %v439
        %v518 = vunpack.c.l.b16 %v440
        %v519 = vunpack.c.h.b16 %v440
        %v520 = vunpack.c.l.b16 %v441
        %v521 = vunpack.c.h.b16 %v441
        %v522 = vpack.c.b16 %v492, %v490
        %v523 = vpack.c.b16 %v493, %v491
        %v524 = vpack.c.b16 %v496, %v494
        %v525 = vpack.c.b16 %v497, %v495
        %v526 = vpack.c.b16 %v500, %v498
        %v527 = vpack.c.b16 %v501, %v499
        %v528 = vpack.c.b16 %v504, %v502
        %v529 = vpack.c.b16 %v505, %v503
        %v530 = vpack.c.b16 %v508, %v506
        %v531 = vpack.c.b16 %v509, %v507
        %v532 = vpack.c.b16 %v512, %v510
        %v533 = vpack.c.b16 %v513, %v511
        %v534 = vpack.c.b16 %v516, %v514
        %v535 = vpack.c.b16 %v517, %v515
        %v536 = vpack.c.b16 %v520, %v518
        %v537 = vpack.c.b16 %v521, %v519
        %v586 = vunpack.c.l.b16 %v442
        %v587 = vunpack.c.l.b16 %v443
        %v588 = vunpack.c.l.b16 %v444
        %v589 = vunpack.c.l.b16 %v445
        %v590 = vunpack.c.l.b16 %v446
        %v591 = vunpack.c.l.b16 %v447
        %v592 = vunpack.c.l.b16 %v448
        %v593 = vunpack.c.l.b16 %v449
        %v594 = vunpack.c.l.b16 %v450
        %v595 = vunpack.c.l.b16 %v451
        %v596 = vunpack.c.l.b16 %v452
        %v597 = vunpack.c.l.b16 %v453
        %v598 = vunpack.c.l.b16 %v454
        %v599 = vunpack.c.l.b16 %v455
        %v600 = vunpack.c.l.b16 %v456
        %v601 = vunpack.c.l.b16 %v457
        %v602 = vunpack.c.l.b16 %v458
        %v603 = vunpack.c.l.b16 %v459
        %v604 = vunpack.c.l.b16 %v460
        %v605 = vunpack.c.l.b16 %v461
        %v606 = vunpack.c.l.b16 %v462
        %v607 = vunpack.c.l.b16 %v463
        %v608 = vunpack.c.l.b16 %v464
        %v609 = vunpack.c.l.b16 %v465
        %v610 = vunpack.c.l.b16 %v466
        %v611 = vunpack.c.l.b16 %v467
        %v612 = vunpack.c.l.b16 %v468
        %v613 = vunpack.c.l.b16 %v469
        %v614 = vunpack.c.l.b16 %v470
        %v615 = vunpack.c.l.b16 %v471
        %v616 = vunpack.c.l.b16 %v472
        %v617 = vunpack.c.l.b16 %v473
        %v618 = vpack.c.b16 %v587, %v586
        %v619 = vpack.c.b16 %v589, %v588
        %v620 = vpack.c.b16 %v591, %v590
        %v621 = vpack.c.b16 %v593, %v592
        %v622 = vpack.c.b16 %v595, %v594
        %v623 = vpack.c.b16 %v597, %v596
        %v624 = vpack.c.b16 %v599, %v598
        %v625 = vpack.c.b16 %v601, %v600
        %v626 = vpack.c.b16 %v603, %v602
        %v627 = vpack.c.b16 %v605, %v604
        %v628 = vpack.c.b16 %v607, %v606
        %v629 = vpack.c.b16 %v609, %v608
        %v630 = vpack.c.b16 %v611, %v610
        %v631 = vpack.c.b16 %v613, %v612
        %v632 = vpack.c.b16 %v615, %v614
        %v633 = vpack.c.b16 %v617, %v616
        %650 = vmatprep.subr.bf16.mxu0 0
        %651 = vmatpush1.bf16.msra.mxu0 %v618
        %652 = vmatprep.subr.bf16.mxu0 0
        %653 = vmatpush1.bf16.msra.mxu0 %v619
        %654 = vmatprep.subr.bf16.mxu0 0
        %655 = vmatpush1.bf16.msra.mxu0 %v620
        %656 = vmatprep.subr.bf16.mxu0 0
        %657 = vmatpush1.bf16.msra.mxu0 %v621
        %658 = vmatprep.subr.bf16.mxu0 0
        %659 = vmatpush1.bf16.msra.mxu0 %v622
        %660 = vmatprep.subr.bf16.mxu0 0
        %661 = vmatpush1.bf16.msra.mxu0 %v623
        %662 = vmatprep.subr.bf16.mxu0 0
        %663 = vmatpush1.bf16.msra.mxu0 %v624
        %664 = vmatprep.subr.bf16.mxu0 0
        %665 = vmatpush1.bf16.msra.mxu0 %v625
        %666 = vmatprep.subr.bf16.mxu0 0
        %667 = vmatpush1.bf16.msra.mxu0 %v626
        %668 = vmatprep.subr.bf16.mxu0 0
        %669 = vmatpush1.bf16.msra.mxu0 %v627
        %670 = vmatprep.subr.bf16.mxu0 0
        %671 = vmatpush1.bf16.msra.mxu0 %v628
        %672 = vmatprep.subr.bf16.mxu0 0
        %673 = vmatpush1.bf16.msra.mxu0 %v629
        %674 = vmatprep.subr.bf16.mxu0 0
        %675 = vmatpush1.bf16.msra.mxu0 %v630
        %676 = vmatprep.subr.bf16.mxu0 0
        %677 = vmatpush1.bf16.msra.mxu0 %v631
        %678 = vmatprep.subr.bf16.mxu0 0
        %679 = vmatpush1.bf16.msra.mxu0 %v632
        %680 = vmatprep.subr.bf16.mxu0 0
        %681 = vmatpush1.bf16.msra.mxu0 %v633
        %682 = vmatprep.mubr.bf16.mxu0 %v523
        %683 = vmatmul.mubr.bf16.gmra.mrb[0].mxu0 %v522
        %v684 = vpop.f32.mrb[0].mxu0
        %v685 = vadd.f32 0.0, %v684
        %v686 = vpop.f32.mrb[0].mxu0
        %v687 = vpop.f32.mrb[0].mxu0
        %v688 = vadd.f32 0.0, %v687
        %v689 = vpop.f32.mrb[0].mxu0
        %690 = vmatprep.mubr.bf16.mxu0 %v525
        %691 = vmatmul.mubr.bf16.gmra.mrb[0].mxu0 %v524
        %v692 = vpop.f32.mrb[0].mxu0
        %v693 = vadd.f32 0.0, %v692
        %v694 = vpop.f32.mrb[0].mxu0
        %v695 = vpop.f32.mrb[0].mxu0
        %v696 = vadd.f32 0.0, %v695
        %v697 = vpop.f32.mrb[0].mxu0
        %698 = vmatprep.mubr.bf16.mxu0 %v527
        %699 = vmatmul.mubr.bf16.gmra.mrb[0].mxu0 %v526
        %v700 = vpop.f32.mrb[0].mxu0
        %v701 = vadd.f32 0.0, %v700
        %v702 = vpop.f32.mrb[0].mxu0
        %v703 = vpop.f32.mrb[0].mxu0
        %v704 = vadd.f32 0.0, %v703
        %v705 = vpop.f32.mrb[0].mxu0
        %706 = vmatprep.mubr.bf16.mxu0 %v529
        %707 = vmatmul.mubr.bf16.gmra.mrb[0].mxu0 %v528
        %v708 = vpop.f32.mrb[0].mxu0
        %v709 = vadd.f32 0.0, %v708
        %v710 = vpop.f32.mrb[0].mxu0
        %v711 = vpop.f32.mrb[0].mxu0
        %v712 = vadd.f32 0.0, %v711
        %v713 = vpop.f32.mrb[0].mxu0
        %714 = vmatprep.mubr.bf16.mxu0 %v531
        %715 = vmatmul.mubr.bf16.gmra.mrb[0].mxu0 %v530
        %v716 = vpop.f32.mrb[0].mxu0
        %v717 = vadd.f32 0.0, %v716
        %v718 = vpop.f32.mrb[0].mxu0
        %v719 = vpop.f32.mrb[0].mxu0
        %v720 = vadd.f32 0.0, %v719
        %v721 = vpop.f32.mrb[0].mxu0
        %722 = vmatprep.mubr.bf16.mxu0 %v533
        %723 = vmatmul.mubr.bf16.gmra.mrb[0].mxu0 %v532
        %v724 = vpop.f32.mrb[0].mxu0
        %v725 = vadd.f32 0.0, %v724
        %v726 = vpop.f32.mrb[0].mxu0
        %v727 = vpop.f32.mrb[0].mxu0
        %v728 = vadd.f32 0.0, %v727
        %v729 = vpop.f32.mrb[0].mxu0
        %730 = vmatprep.mubr.bf16.mxu0 %v535
        %731 = vmatmul.mubr.bf16.gmra.mrb[0].mxu0 %v534
        %v732 = vpop.f32.mrb[0].mxu0
        %v733 = vadd.f32 0.0, %v732
        %v734 = vpop.f32.mrb[0].mxu0
        %v735 = vpop.f32.mrb[0].mxu0
        %v736 = vadd.f32 0.0, %v735
        %v737 = vpop.f32.mrb[0].mxu0
        %738 = vmatprep.mubr.bf16.mxu0 %v537
        %739 = vmatmul.mubr.bf16.gmra.mrb[0].mxu0 %v536
        %v740 = vpop.f32.mrb[0].mxu0
        %v741 = vadd.f32 0.0, %v740
        %v742 = vpop.f32.mrb[0].mxu0
        %v743 = vpop.f32.mrb[0].mxu0
        %v744 = vadd.f32 0.0, %v743
        %v745 = vpop.f32.mrb[0].mxu0
        %746 = vdwg.mxu0
        %v747 = vadd.f32 %v410, %v685
        %v748 = vadd.f32 %v411, %v688
        %v749 = vadd.f32 %v412, %v693
        %v750 = vadd.f32 %v413, %v696
        %v751 = vadd.f32 %v414, %v701
        %v752 = vadd.f32 %v415, %v704
        %v753 = vadd.f32 %v416, %v709
        %v754 = vadd.f32 %v417, %v712
        %v755 = vadd.f32 %v418, %v717
        %v756 = vadd.f32 %v419, %v720
        %v757 = vadd.f32 %v420, %v725
        %v758 = vadd.f32 %v421, %v728
        %v759 = vadd.f32 %v422, %v733
        %v760 = vadd.f32 %v423, %v736
        %v761 = vadd.f32 %v424, %v741
        %v762 = vadd.f32 %v425, %v744
        %763 = vst [vmem:[#allocation2] sm:$0xff] %v747
        %764 = vst [vmem:[#allocation2 + $0x8] sm:$0xff] %v748
        %765 = vst [vmem:[#allocation2 + $0x10] sm:$0xff] %v749
        %766 = vst [vmem:[#allocation2 + $0x18] sm:$0xff] %v750
        %767 = vst [vmem:[#allocation2 + $0x20] sm:$0xff] %v751
        %768 = vst [vmem:[#allocation2 + $0x28] sm:$0xff] %v752
        %769 = vst [vmem:[#allocation2 + $0x30] sm:$0xff] %v753
        %770 = vst [vmem:[#allocation2 + $0x38] sm:$0xff] %v754
        %771 = vst [vmem:[#allocation2 + $0x40] sm:$0xff] %v755
        %772 = vst [vmem:[#allocation2 + $0x48] sm:$0xff] %v756
        %773 = vst [vmem:[#allocation2 + $0x50] sm:$0xff] %v757
        %774 = vst [vmem:[#allocation2 + $0x58] sm:$0xff] %v758
        %775 = vst [vmem:[#allocation2 + $0x60] sm:$0xff] %v759
        %776 = vst [vmem:[#allocation2 + $0x68] sm:$0xff] %v760
        %777 = vst [vmem:[#allocation2 + $0x70] sm:$0xff] %v761
        %778 = vst [vmem:[#allocation2 + $0x78] sm:$0xff] %v762
        %p779 = scmp.eq.s32.totalorder %s22, 1
        // Predicated region
        $region79: #{_lambda_.35} parent=69 // pred_check
          %p780 = pneg %p779
        $region80: #{_lambda_.35} parent=69 // pred_check_branch
          %782 = sbr.rel (%p780) target = $region82
        $region81: #{_lambda_.35} parent=69 // pred_region
          %v783 = vld [vmem:[#allocation2] sm:$0xff]
          %v784 = vld [vmem:[#allocation2 + $0x8] sm:$0xff]
          %v785 = vld [vmem:[#allocation2 + $0x10] sm:$0xff]
          %v786 = vld [vmem:[#allocation2 + $0x18] sm:$0xff]
          %v787 = vld [vmem:[#allocation2 + $0x20] sm:$0xff]
          %v788 = vld [vmem:[#allocation2 + $0x28] sm:$0xff]
          %v789 = vld [vmem:[#allocation2 + $0x30] sm:$0xff]
          %v790 = vld [vmem:[#allocation2 + $0x38] sm:$0xff]
          %v791 = vld [vmem:[#allocation2 + $0x40] sm:$0xff]
          %v792 = vld [vmem:[#allocation2 + $0x48] sm:$0xff]
          %v793 = vld [vmem:[#allocation2 + $0x50] sm:$0xff]
          %v794 = vld [vmem:[#allocation2 + $0x58] sm:$0xff]
          %v795 = vld [vmem:[#allocation2 + $0x60] sm:$0xff]
          %v796 = vld [vmem:[#allocation2 + $0x68] sm:$0xff]
          %v797 = vld [vmem:[#allocation2 + $0x70] sm:$0xff]
          %v798 = vld [vmem:[#allocation2 + $0x78] sm:$0xff]
          %v799 = vld [vmem:[%s376] sm:$0x1]
          %v800 = vld [vmem:[%s379] sm:$0x1]
          %v802 = vlaneseq
          %v803 = vshrl.u32 %v802, 7
          %v804 = vsub.s32 0, %v803
          %v805 = vrot.slane %v799, %v804
          %v807 = vmul.f32 %v783, %v805
          %v808 = vmul.f32 %v784, %v805
          %v809 = vmul.f32 %v785, %v805
          %v810 = vmul.f32 %v786, %v805
          %v811 = vmul.f32 %v787, %v805
          %v812 = vmul.f32 %v788, %v805
          %v813 = vmul.f32 %v789, %v805
          %v814 = vmul.f32 %v790, %v805
          %v815 = vmul.f32 %v791, %v805
          %v816 = vmul.f32 %v792, %v805
          %v817 = vmul.f32 %v793, %v805
          %v818 = vmul.f32 %v794, %v805
          %v819 = vmul.f32 %v795, %v805
          %v820 = vmul.f32 %v796, %v805
          %v821 = vmul.f32 %v797, %v805
          %v822 = vmul.f32 %v798, %v805
          %v824 = vlaneseq
          %v825 = vshrl.u32 %v824, 7
          %v826 = vsub.s32 0, %v825
          %v827 = vrot.slane %v800, %v826
          %v829 = vadd.f32 %v807, %v827
          %v830 = vadd.f32 %v808, %v827
          %v831 = vadd.f32 %v809, %v827
          %v832 = vadd.f32 %v810, %v827
          %v833 = vadd.f32 %v811, %v827
          %v834 = vadd.f32 %v812, %v827
          %v835 = vadd.f32 %v813, %v827
          %v836 = vadd.f32 %v814, %v827
          %v837 = vadd.f32 %v815, %v827
          %v838 = vadd.f32 %v816, %v827
          %v839 = vadd.f32 %v817, %v827
          %v840 = vadd.f32 %v818, %v827
          %v841 = vadd.f32 %v819, %v827
          %v842 = vadd.f32 %v820, %v827
          %v843 = vadd.f32 %v821, %v827
          %v844 = vadd.f32 %v822, %v827
          %v845 = vmax.f32 %v829, 0.0
          %v846 = vmax.f32 %v830, 0.0
          %v847 = vmax.f32 %v831, 0.0
          %v848 = vmax.f32 %v832, 0.0
          %v849 = vmax.f32 %v833, 0.0
          %v850 = vmax.f32 %v834, 0.0
          %v851 = vmax.f32 %v835, 0.0
          %v852 = vmax.f32 %v836, 0.0
          %v853 = vmax.f32 %v837, 0.0
          %v854 = vmax.f32 %v838, 0.0
          %v855 = vmax.f32 %v839, 0.0
          %v856 = vmax.f32 %v840, 0.0
          %v857 = vmax.f32 %v841, 0.0
          %v858 = vmax.f32 %v842, 0.0
          %v859 = vmax.f32 %v843, 0.0
          %v860 = vmax.f32 %v844, 0.0
          %861 = vst [vmem:[%s387] sm:$0xff] %v845
          %862 = vst [vmem:[%s387 + $0x8] sm:$0xff] %v846
          %863 = vst [vmem:[%s387 + $0x10] sm:$0xff] %v847
          %864 = vst [vmem:[%s387 + $0x18] sm:$0xff] %v848
          %865 = vst [vmem:[%s387 + $0x20] sm:$0xff] %v849
          %866 = vst [vmem:[%s387 + $0x28] sm:$0xff] %v850
          %867 = vst [vmem:[%s387 + $0x30] sm:$0xff] %v851
          %868 = vst [vmem:[%s387 + $0x38] sm:$0xff] %v852
          %869 = vst [vmem:[%s387 + $0x40] sm:$0xff] %v853
          %870 = vst [vmem:[%s387 + $0x48] sm:$0xff] %v854
          %871 = vst [vmem:[%s387 + $0x50] sm:$0xff] %v855
          %872 = vst [vmem:[%s387 + $0x58] sm:$0xff] %v856
          %873 = vst [vmem:[%s387 + $0x60] sm:$0xff] %v857
          %874 = vst [vmem:[%s387 + $0x68] sm:$0xff] %v858
          %875 = vst [vmem:[%s387 + $0x70] sm:$0xff] %v859
          %876 = vst [vmem:[%s387 + $0x78] sm:$0xff] %v860
        $region82: #{_lambda_.35} parent=69 // pred_fallthru
          _
        %s877 = smul.u32 16, %s20
        %p878 = scmp.lt.s32.totalorder %s877, 15
        %s879 = scalar_select %p878, %s877, 15
        %p880 = scmp.lt.s32.totalorder %s21, 0
        %s881 = scalar_select %p880, %s21, 0
        %s882 = sadd.s32 %s881, %s879
        %s883 = smul.addr %s882, 8
        %s884 = scalar_lea.vmem %s4, %s883
        // Predicated region
        $region83: #{_lambda_.35} parent=69 // pred_check
          %p885 = pneg %p162
        $region84: #{_lambda_.35} parent=69 // pred_check_branch
          %887 = sbr.rel (%p885) target = $region86
        $region85: #{_lambda_.35} parent=69 // pred_region
          %s888 = smul.u32 16, %s20
        $region86: #{_lambda_.35} parent=69 // pred_fallthru
          _
        // Predicated region
        $region87: #{_lambda_.35} parent=69 // pred_check
          %p889 = pneg %p162
        $region88: #{_lambda_.35} parent=69 // pred_check_branch
          %891 = sbr.rel (%p889) target = $region90
        $region89: #{_lambda_.35} parent=69 // pred_region
          %s892 = smul.u32 16, %s20
          %p893 = scmp.lt.s32.totalorder %s892, 15
          %s894 = scalar_select %p893, %s892, 15
          %p895 = scmp.lt.s32.totalorder %s21, 0
          %s896 = scalar_select %p895, %s21, 0
          %s897 = sadd.s32 %s896, %s894
          %s898 = smul.addr %s897, 8
          %s899 = scalar_lea.vmem %s4, %s898
        $region90: #{_lambda_.35} parent=69 // pred_fallthru
          _
      $region70: #{_lambda_.35} parent=5 // pred_fallthru
        _
      %p900 = scmp.le.s32.totalorder 2, %s10
      // Predicated region
      $region91: #{_lambda_.35} parent=5 // pred_check
        %p901 = pneg %p900
      $region92: #{_lambda_.35} parent=5 // pred_check_branch
        %903 = sbr.rel (%p901) target = $region94
      $region93: #{_lambda_.35} parent=5 // pred_region
        %s904 = ssub.s32 %s10, 2
      $region94: #{_lambda_.35} parent=5 // pred_fallthru
        _
    $region6: #{_lambda_.35} parent=1 // loop_footer
      %s14 = sadd.s32 1, %s10
    $region7: #{_lambda_.35} parent=1 // loop_footer_branch
      %9 = sbr.rel target = $region3
    $region8: #{_lambda_.35} parent=1 // loop_exit
      _

// kernel: _lambda_.39
$region0: #{_lambda_.39}
  #allocation0 [shape = 'u32[]', space=smem, size = 0x4, offset = 0x4, fixed_abs, tag = 'smem constant byte address 0x4 - core index']
  #allocation1 [shape = 'u32[144,128]{1,0:T(1,128)}', space=vmem, size = 0x12000, scoped, tag = 'internal scratch']
  #allocation2 [shape = 'f32[128,128]{1,0:T(8,128)}', space=vmem, size = 0x10000, scoped, tag = 'scratch operand']
  %s0 = inlined_call_operand.vmem [shape: bf16[128,768], index: 0, kind: input, shape index: {}]
  %s1 = inlined_call_operand.vmem [shape: bf16[768,128], index: 1, kind: input, shape index: {}]
  %s2 = inlined_call_operand.vmem [shape: f32[1,128], index: 2, kind: input, shape index: {}]
  %s3 = inlined_call_operand.vmem [shape: f32[1,128], index: 3, kind: input, shape index: {}]
  %s4 = inlined_call_operand.vmem [shape: f32[128,128], index: 4, kind: output, shape index: {}]
  %s5 = sld [smem:[#allocation0]]
  $region95: #{_lambda_.39} parent=0
    _
  %s7 = ssub.s32 1, %s5
  %s8 = scalar_select 0, %s7, %s5
  $region1: #{_lambda_.39} parent=0
    #allocation3 [shape = 'u8[131072]{0}', space=vmem, size = 0x20000, scoped, tag = 'input window, operand 0']
    loop: start=0, step=1, limit=5
    $region2: #{_lambda_.39} parent=1 // loop_pre_header
      _
    $region3: #{_lambda_.39} parent=1 // loop_header
      %s10 = sphi 0, %s14
      %p11 = scmp.ge.s32.totalorder %s10, 5
      %s17 = sphi 0, %s36
      %s18 = sphi 0, %s32
      %s19 = sphi 0, %s28
      %s20 = sphi 0, %s17
      %s21 = sphi 0, %s18
      %s22 = sphi 0, %s19
      %s23 = sphi 0, %s20
      %s24 = sphi 0, %s21
      %s25 = sphi 0, %s22
      %s41 = sphi 0, %s43
      %s44 = sphi 0, %s41
      %s45 = sphi 0, %s44
      %s61 = sphi 0, %s45
      %s69 = sphi 0, %s71
      %s72 = sphi 0, %s69
      %s73 = sphi 0, %s72
      %s89 = sphi 0, %s73
      %s95 = sphi 0, %s97
      %s98 = sphi 0, %s95
      %s99 = sphi 0, %s98
      %s115 = sphi 0, %s99
      %s121 = sphi 0, %s123
      %s124 = sphi 0, %s121
      %s125 = sphi 0, %s124
      %s141 = sphi 0, %s125
      %s149 = sphi 0, %s151
      %s152 = sphi 0, %s149
      %s153 = sphi 0, %s152
      %s169 = sphi 0, %s153
    $region4: #{_lambda_.39} parent=1 // loop_header_branch
      %13 = sbr.rel (%p11) target = $region8
    $region5: #{_lambda_.39} parent=1 // loop_body
      %s15 = ssub.s32 %s10, 1
      %s16 = ssub.s32 %s10, 2
      %s26 = sadd.s32 1, %s19
      %p27 = scmp.ge.s32.totalorder %s26, 3
      %s28 = scalar_select %p27, 0, %s26
      %s29 = sadd.s32 1, %s18
      %s30 = scalar_select %p27, %s29, %s18
      %p31 = scmp.ge.s32.totalorder %s30, 1
      %s32 = scalar_select %p31, 0, %s30
      %s33 = sadd.s32 1, %s17
      %s34 = scalar_select %p31, %s33, %s17
      %p35 = scmp.ge.s32.totalorder %s34, 1
      %s36 = scalar_select %p35, 0, %s34
      %s37 = ssub.s32 %s17, %s36
      %s38 = ssub.s32 %s19, %s28
      %s39 = sor.u32 %s37, %s38
      %p40 = scmp.eq.s32.totalorder %s39, 0
      %s42 = sadd.s32 %s41, 1
      %s43 = scalar_select %p40, %s41, %s42
      %p46 = pneg %p40
      %p47 = scmp.eq.s32.totalorder %s10, 2
      %p48 = por %p46, %p47
      %p49 = scmp.ne.s32.totalorder %s41, %s44
      %p50 = scmp.eq.s32.totalorder %s10, 0
      %p51 = por %p49, %p50
      %p52 = scmp.ne.s32.totalorder %s41, %s44
      %p53 = scmp.eq.s32.totalorder %s15, 2
      %p54 = por %p52, %p53
      %p55 = scmp.ne.s32.totalorder %s44, %s45
      %p56 = scmp.eq.s32.totalorder %s15, 0
      %p57 = por %p55, %p56
      %p58 = scmp.ne.s32.totalorder %s44, %s45
      %p59 = scmp.eq.s32.totalorder %s16, 2
      %p60 = por %p58, %p59
      %p62 = scmp.ne.s32.totalorder %s45, %s61
      %p63 = scmp.eq.s32.totalorder %s16, 0
      %p64 = por %p62, %p63
      %s65 = ssub.s32 %s19, %s28
      %s66 = ssub.s32 %s18, %s32
      %s67 = sor.u32 %s65, %s66
      %p68 = scmp.eq.s32.totalorder %s67, 0
      %s70 = sadd.s32 %s69, 1
      %s71 = scalar_select %p68, %s69, %s70
      %p74 = pneg %p68
      %p75 = scmp.eq.s32.totalorder %s10, 2
      %p76 = por %p74, %p75
      %p77 = scmp.ne.s32.totalorder %s69, %s72
      %p78 = scmp.eq.s32.totalorder %s10, 0
      %p79 = por %p77, %p78
      %p80 = scmp.ne.s32.totalorder %s69, %s72
      %p81 = scmp.eq.s32.totalorder %s15, 2
      %p82 = por %p80, %p81
      %p83 = scmp.ne.s32.totalorder %s72, %s73
      %p84 = scmp.eq.s32.totalorder %s15, 0
      %p85 = por %p83, %p84
      %p86 = scmp.ne.s32.totalorder %s72, %s73
      %p87 = scmp.eq.s32.totalorder %s16, 2
      %p88 = por %p86, %p87
      %p90 = scmp.ne.s32.totalorder %s73, %s89
      %p91 = scmp.eq.s32.totalorder %s16, 0
      %p92 = por %p90, %p91
      %s93 = ssub.s32 %s18, %s32
      %p94 = scmp.eq.s32.totalorder %s93, 0
      %s96 = sadd.s32 %s95, 1
      %s97 = scalar_select %p94, %s95, %s96
      %p100 = pneg %p94
      %p101 = scmp.eq.s32.totalorder %s10, 2
      %p102 = por %p100, %p101
      %p103 = scmp.ne.s32.totalorder %s95, %s98
      %p104 = scmp.eq.s32.totalorder %s10, 0
      %p105 = por %p103, %p104
      %p106 = scmp.ne.s32.totalorder %s95, %s98
      %p107 = scmp.eq.s32.totalorder %s15, 2
      %p108 = por %p106, %p107
      %p109 = scmp.ne.s32.totalorder %s98, %s99
      %p110 = scmp.eq.s32.totalorder %s15, 0
      %p111 = por %p109, %p110
      %p112 = scmp.ne.s32.totalorder %s98, %s99
      %p113 = scmp.eq.s32.totalorder %s16, 2
      %p114 = por %p112, %p113
      %p116 = scmp.ne.s32.totalorder %s99, %s115
      %p117 = scmp.eq.s32.totalorder %s16, 0
      %p118 = por %p116, %p117
      %s119 = ssub.s32 %s18, %s32
      %p120 = scmp.eq.s32.totalorder %s119, 0
      %s122 = sadd.s32 %s121, 1
      %s123 = scalar_select %p120, %s121, %s122
      %p126 = pneg %p120
      %p127 = scmp.eq.s32.totalorder %s10, 2
      %p128 = por %p126, %p127
      %p129 = scmp.ne.s32.totalorder %s121, %s124
      %p130 = scmp.eq.s32.totalorder %s10, 0
      %p131 = por %p129, %p130
      %p132 = scmp.ne.s32.totalorder %s121, %s124
      %p133 = scmp.eq.s32.totalorder %s15, 2
      %p134 = por %p132, %p133
      %p135 = scmp.ne.s32.totalorder %s124, %s125
      %p136 = scmp.eq.s32.totalorder %s15, 0
      %p137 = por %p135, %p136
      %p138 = scmp.ne.s32.totalorder %s124, %s125
      %p139 = scmp.eq.s32.totalorder %s16, 2
      %p140 = por %p138, %p139
      %p142 = scmp.ne.s32.totalorder %s125, %s141
      %p143 = scmp.eq.s32.totalorder %s16, 0
      %p144 = por %p142, %p143
      %s145 = ssub.s32 %s17, %s36
      %s146 = ssub.s32 %s18, %s32
      %s147 = sor.u32 %s145, %s146
      %p148 = scmp.eq.s32.totalorder %s147, 0
      %s150 = sadd.s32 %s149, 1
      %s151 = scalar_select %p148, %s149, %s150
      %p154 = pneg %p148
      %p155 = scmp.eq.s32.totalorder %s10, 2
      %p156 = por %p154, %p155
      %p157 = scmp.ne.s32.totalorder %s149, %s152
      %p158 = scmp.eq.s32.totalorder %s10, 0
      %p159 = por %p157, %p158
      %p160 = scmp.ne.s32.totalorder %s149, %s152
      %p161 = scmp.eq.s32.totalorder %s15, 2
      %p162 = por %p160, %p161
      %p163 = scmp.ne.s32.totalorder %s152, %s153
      %p164 = scmp.eq.s32.totalorder %s15, 0
      %p165 = por %p163, %p164
      %p166 = scmp.ne.s32.totalorder %s152, %s153
      %p167 = scmp.eq.s32.totalorder %s16, 2
      %p168 = por %p166, %p167
      %p170 = scmp.ne.s32.totalorder %s153, %s169
      %p171 = scmp.eq.s32.totalorder %s16, 0
      %p172 = por %p170, %p171
      %p173 = scmp.le.s32.totalorder 1, %s10
      %p174 = scmp.lt.s32.totalorder %s10, 4
      %p175 = pnand %p173, %p174
      %p176 = pneg %p175
      // Predicated region
      $region9: #{_lambda_.39} parent=5 // pred_check
        _
      $region10: #{_lambda_.39} parent=5 // pred_check_branch
        %178 = sbr.rel (%p175) target = $region12
      $region11: #{_lambda_.39} parent=5 // pred_region
        %s179 = ssub.s32 %s10, 1
        // Predicated region
        $region13: #{_lambda_.39} parent=11 // pred_check
          %p180 = pneg %p111
        $region14: #{_lambda_.39} parent=11 // pred_check_branch
          %182 = sbr.rel (%p180) target = $region16
        $region15: #{_lambda_.39} parent=11 // pred_region
          %p183 = scmp.lt.s32.totalorder %s21, 0
          %s184 = scalar_select %p183, %s21, 0
          %s185 = scalar_lea.vmem %s2, %s184
        $region16: #{_lambda_.39} parent=11 // pred_fallthru
          _
        // Predicated region
        $region17: #{_lambda_.39} parent=11 // pred_check
          %p186 = pneg %p137
        $region18: #{_lambda_.39} parent=11 // pred_check_branch
          %188 = sbr.rel (%p186) target = $region20
        $region19: #{_lambda_.39} parent=11 // pred_region
          %p189 = scmp.lt.s32.totalorder %s21, 0
          %s190 = scalar_select %p189, %s21, 0
          %s191 = scalar_lea.vmem %s3, %s190
        $region20: #{_lambda_.39} parent=11 // pred_fallthru
          _
      $region12: #{_lambda_.39} parent=5 // pred_fallthru
        _
      %p192 = scmp.lt.s32.totalorder %s10, 3
      // Predicated region
      $region21: #{_lambda_.39} parent=5 // pred_check
        %p193 = pneg %p192
      $region22: #{_lambda_.39} parent=5 // pred_check_branch
        %195 = sbr.rel (%p193) target = $region24
      $region23: #{_lambda_.39} parent=5 // pred_region
        // Predicated region
        $region25: #{_lambda_.39} parent=23 // pred_check
          %p196 = pneg %p51
        $region26: #{_lambda_.39} parent=23 // pred_check_branch
          %198 = sbr.rel (%p196) target = $region28
        $region27: #{_lambda_.39} parent=23 // pred_region
          %s199 = sand.u32 %s41, 1
          %s200 = sand.u32 %s41, 1
          %s201 = smul.addr %s200, 128
          %s202 = scalar_lea.vmem [#allocation3], %s201
          %s203 = smul.u32 16, %s17
          %s204 = smul.u32 2, %s19
          %s205 = smul.addr %s203, 6
          %s206 = sadd.s32 %s204, %s205
          %s207 = smul.addr %s206, 4
          %s208 = scalar_lea.vmem %s0, %s207
          // Predicated region
          $region29: #{_lambda_.39} parent=27 // pred_check
            _
          $region30: #{_lambda_.39} parent=27 // pred_check_branch
            %210 = sbr.rel (0) target = $region32
          $region31: #{_lambda_.39} parent=27 // pred_region
            // Predicated region
            $region33: #{_lambda_.39} parent=31 // pred_check
              _
            $region34: #{_lambda_.39} parent=31 // pred_check_branch
              %212 = sbr.rel (0) target = $region36
            $region35: #{_lambda_.39} parent=31 // pred_region
              // Predicated region
              $region48: #{_lambda_.39} parent=35 // pred_check
                _
              $region49: #{_lambda_.39} parent=35 // pred_check_branch
                %257 = sbr.rel (0) target = $region51
              $region50: #{_lambda_.39} parent=35 // pred_region
                loop: start=0, step=1, limit=1
                $region52: #{_lambda_.39} parent=50 // loop_pre_header
                  _
                $region53: #{_lambda_.39} parent=50 // loop_header
                  %s259 = sphi 0, %s263
                  %p260 = scmp.ge.s32.totalorder %s259, 1
                  %s264 = sphi %s208, %s208
                  %s265 = sphi %s202, %s202
                $region54: #{_lambda_.39} parent=50 // loop_header_branch
                  %262 = sbr.rel (%p260) target = $region58
                $region55: #{_lambda_.39} parent=50 // loop_body
                  %v266 = vld [vmem:[%s264] sm:$0xff]
                  %267 = vst [vmem:[%s265] sm:$0xff] %v266
                  %v268 = vld [vmem:[%s264 + $0x18] sm:$0xff]
                  %269 = vst [vmem:[%s265 + $0x8] sm:$0xff] %v268
                  %v270 = vld [vmem:[%s264 + $0x30] sm:$0xff]
                  %271 = vst [vmem:[%s265 + $0x10] sm:$0xff] %v270
                  %v272 = vld [vmem:[%s264 + $0x48] sm:$0xff]
                  %273 = vst [vmem:[%s265 + $0x18] sm:$0xff] %v272
                  %v274 = vld [vmem:[%s264 + $0x60] sm:$0xff]
                  %275 = vst [vmem:[%s265 + $0x20] sm:$0xff] %v274
                  %v276 = vld [vmem:[%s264 + $0x78] sm:$0xff]
                  %277 = vst [vmem:[%s265 + $0x28] sm:$0xff] %v276
                  %v278 = vld [vmem:[%s264 + $0x90] sm:$0xff]
                  %279 = vst [vmem:[%s265 + $0x30] sm:$0xff] %v278
                  %v280 = vld [vmem:[%s264 + $0xa8] sm:$0xff]
                  %281 = vst [vmem:[%s265 + $0x38] sm:$0xff] %v280
                  %v282 = vld [vmem:[%s264 + $0xc0] sm:$0xff]
                  %283 = vst [vmem:[%s265 + $0x40] sm:$0xff] %v282
                  %v284 = vld [vmem:[%s264 + $0xd8] sm:$0xff]
                  %285 = vst [vmem:[%s265 + $0x48] sm:$0xff] %v284
                  %v286 = vld [vmem:[%s264 + $0xf0] sm:$0xff]
                  %287 = vst [vmem:[%s265 + $0x50] sm:$0xff] %v286
                  %v288 = vld [vmem:[%s264 + $0x108] sm:$0xff]
                  %289 = vst [vmem:[%s265 + $0x58] sm:$0xff] %v288
                  %v290 = vld [vmem:[%s264 + $0x120] sm:$0xff]
                  %291 = vst [vmem:[%s265 + $0x60] sm:$0xff] %v290
                  %v292 = vld [vmem:[%s264 + $0x138] sm:$0xff]
                  %293 = vst [vmem:[%s265 + $0x68] sm:$0xff] %v292
                  %v294 = vld [vmem:[%s264 + $0x150] sm:$0xff]
                  %295 = vst [vmem:[%s265 + $0x70] sm:$0xff] %v294
                  %v296 = vld [vmem:[%s264 + $0x168] sm:$0xff]
                  %297 = vst [vmem:[%s265 + $0x78] sm:$0xff] %v296
                $region56: #{_lambda_.39} parent=50 // loop_footer
                  %s263 = sadd.s32 1, %s259
                $region57: #{_lambda_.39} parent=50 // loop_footer_branch
                  %258 = sbr.rel target = $region53
                $region58: #{_lambda_.39} parent=50 // loop_exit
                  _
              $region51: #{_lambda_.39} parent=35 // pred_fallthru
                _
              // Predicated region
              $region59: #{_lambda_.39} parent=35 // pred_check
                _
              $region60: #{_lambda_.39} parent=35 // pred_check_branch
                %299 = sbr.rel target = $region62
              $region61: #{_lambda_.39} parent=35 // pred_region
                _
              $region62: #{_lambda_.39} parent=35 // pred_fallthru
                _
            $region36: #{_lambda_.39} parent=31 // pred_fallthru
              _
            // Predicated region
            $region37: #{_lambda_.39} parent=31 // pred_check
              _
            $region38: #{_lambda_.39} parent=31 // pred_check_branch
              %214 = sbr.rel target = $region40
            $region39: #{_lambda_.39} parent=31 // pred_region
              loop: start=0, step=1, limit=1
              $region41: #{_lambda_.39} parent=39 // loop_pre_header
                _
              $region42: #{_lambda_.39} parent=39 // loop_header
                %s217 = sphi 0, %s221
                %p218 = scmp.ge.s32.totalorder %s217, 1
                %s222 = sphi %s208, %s208
                %s223 = sphi %s202, %s202
              $region43: #{_lambda_.39} parent=39 // loop_header_branch
                %220 = sbr.rel (%p218) target = $region47
              $region44: #{_lambda_.39} parent=39 // loop_body
                %v224 = vld [vmem:[%s222] sm:$0xff]
                %225 = vst [vmem:[%s223] sm:$0xff] %v224
                %v226 = vld [vmem:[%s222 + $0x18] sm:$0xff]
                %227 = vst [vmem:[%s223 + $0x8] sm:$0xff] %v226
                %v228 = vld [vmem:[%s222 + $0x30] sm:$0xff]
                %229 = vst [vmem:[%s223 + $0x10] sm:$0xff] %v228
                %v230 = vld [vmem:[%s222 + $0x48] sm:$0xff]
                %231 = vst [vmem:[%s223 + $0x18] sm:$0xff] %v230
                %v232 = vld [vmem:[%s222 + $0x60] sm:$0xff]
                %233 = vst [vmem:[%s223 + $0x20] sm:$0xff] %v232
                %v234 = vld [vmem:[%s222 + $0x78] sm:$0xff]
                %235 = vst [vmem:[%s223 + $0x28] sm:$0xff] %v234
                %v236 = vld [vmem:[%s222 + $0x90] sm:$0xff]
                %237 = vst [vmem:[%s223 + $0x30] sm:$0xff] %v236
                %v238 = vld [vmem:[%s222 + $0xa8] sm:$0xff]
                %239 = vst [vmem:[%s223 + $0x38] sm:$0xff] %v238
                %v240 = vld [vmem:[%s222 + $0xc0] sm:$0xff]
                %241 = vst [vmem:[%s223 + $0x40] sm:$0xff] %v240
                %v242 = vld [vmem:[%s222 + $0xd8] sm:$0xff]
                %243 = vst [vmem:[%s223 + $0x48] sm:$0xff] %v242
                %v244 = vld [vmem:[%s222 + $0xf0] sm:$0xff]
                %245 = vst [vmem:[%s223 + $0x50] sm:$0xff] %v244
                %v246 = vld [vmem:[%s222 + $0x108] sm:$0xff]
                %247 = vst [vmem:[%s223 + $0x58] sm:$0xff] %v246
                %v248 = vld [vmem:[%s222 + $0x120] sm:$0xff]
                %249 = vst [vmem:[%s223 + $0x60] sm:$0xff] %v248
                %v250 = vld [vmem:[%s222 + $0x138] sm:$0xff]
                %251 = vst [vmem:[%s223 + $0x68] sm:$0xff] %v250
                %v252 = vld [vmem:[%s222 + $0x150] sm:$0xff]
                %253 = vst [vmem:[%s223 + $0x70] sm:$0xff] %v252
                %v254 = vld [vmem:[%s222 + $0x168] sm:$0xff]
                %255 = vst [vmem:[%s223 + $0x78] sm:$0xff] %v254
              $region45: #{_lambda_.39} parent=39 // loop_footer
                %s221 = sadd.s32 1, %s217
              $region46: #{_lambda_.39} parent=39 // loop_footer_branch
                %216 = sbr.rel target = $region42
              $region47: #{_lambda_.39} parent=39 // loop_exit
                _
            $region40: #{_lambda_.39} parent=31 // pred_fallthru
              _
          $region32: #{_lambda_.39} parent=27 // pred_fallthru
            _
          %300 = vnop
        $region28: #{_lambda_.39} parent=23 // pred_fallthru
          _
        // Predicated region
        $region63: #{_lambda_.39} parent=23 // pred_check
          %p301 = pneg %p79
        $region64: #{_lambda_.39} parent=23 // pred_check_branch
          %303 = sbr.rel (%p301) target = $region66
        $region65: #{_lambda_.39} parent=23 // pred_region
          %s304 = smul.u32 32, %s19
          %p305 = scmp.lt.s32.totalorder %s304, 95
          %s306 = scalar_select %p305, %s304, 95
          %p307 = scmp.lt.s32.totalorder %s18, 0
          %s308 = scalar_select %p307, %s18, 0
          %s309 = sadd.s32 %s308, %s306
          %s310 = smul.addr %s309, 4
          %s311 = scalar_lea.vmem %s1, %s310
          %s312 = smul.u32 32, %s19
        $region66: #{_lambda_.39} parent=23 // pred_fallthru
          _
      $region24: #{_lambda_.39} parent=5 // pred_fallthru
        _
      %p313 = scmp.le.s32.totalorder 1, %s10
      %p314 = scmp.lt.s32.totalorder %s10, 4
      %p315 = pnand %p313, %p314
      %p316 = pneg %p315
      // Predicated region
      $region67: #{_lambda_.39} parent=5 // pred_check
        _
      $region68: #{_lambda_.39} parent=5 // pred_check_branch
        %318 = sbr.rel (%p315) target = $region70
      $region69: #{_lambda_.39} parent=5 // pred_region
        %s319 = ssub.s32 %s10, 1
        %s320 = sand.u32 %s44, 1
        %s321 = sand.u32 %s44, 1
        %s322 = smul.addr %s321, 128
        %s323 = scalar_lea.vmem [#allocation3], %s322
        // Predicated region
        $region71: #{_lambda_.39} parent=69 // pred_check
          %p324 = pneg %p57
        $region72: #{_lambda_.39} parent=69 // pred_check_branch
          %326 = sbr.rel (%p324) target = $region74
        $region73: #{_lambda_.39} parent=69 // pred_region
          _
        $region74: #{_lambda_.39} parent=69 // pred_fallthru
          _
        %s327 = sand.u32 %s44, 1
        %s328 = sand.u32 %s44, 1
        %s329 = smul.addr %s328, 128
        %s330 = scalar_lea.vmem [#allocation3], %s329
        %p331 = pneg %p57
        %p332 = pneg %p54
        %s333 = smul.u32 32, %s22
        %p334 = scmp.lt.s32.totalorder %s333, 95
        %s335 = scalar_select %p334, %s333, 95
        %p336 = scmp.lt.s32.totalorder %s21, 0
        %s337 = scalar_select %p336, %s21, 0
        %s338 = sadd.s32 %s337, %s335
        %s339 = smul.addr %s338, 4
        %s340 = scalar_lea.vmem %s1, %s339
        %p341 = pneg %p85
        %p342 = pneg %p82
        %p343 = scmp.lt.s32.totalorder %s21, 0
        %s344 = scalar_select %p343, %s21, 0
        %s345 = scalar_lea.vmem %s2, %s344
        %p346 = pneg %p111
        %p347 = pneg %p108
        %p348 = scmp.lt.s32.totalorder %s21, 0
        %s349 = scalar_select %p348, %s21, 0
        %s350 = scalar_lea.vmem %s3, %s349
        %p351 = pneg %p137
        %p352 = pneg %p134
        %p353 = pneg %p165
        %p354 = pneg %p162
        %s355 = smul.u32 16, %s20
        %p356 = scmp.lt.s32.totalorder %s355, 15
        %s357 = scalar_select %p356, %s355, 15
        %p358 = scmp.lt.s32.totalorder %s21, 0
        %s359 = scalar_select %p358, %s21, 0
        %s360 = sadd.s32 %s359, %s357
        %s361 = smul.addr %s360, 8
        %s362 = scalar_lea.vmem %s4, %s361
        %s363 = smul.u32 16, %s20
        %s364 = smul.u32 2, %s22
        %s365 = smul.u32 32, %s22
        %p366 = scmp.lt.s32.totalorder %s365, 95
        %s367 = scalar_select %p366, %s365, 95
        %p368 = scmp.lt.s32.totalorder %s21, 0
        %s369 = scalar_select %p368, %s21, 0
        %s370 = sadd.s32 %s369, %s367
        %s371 = smul.addr %s370, 4
        %s372 = scalar_lea.vmem %s1, %s371
        %s373 = smul.u32 32, %s22
        %p374 = scmp.lt.s32.totalorder %s21, 0
        %s375 = scalar_select %p374, %s21, 0
        %s376 = scalar_lea.vmem %s2, %s375
        %p377 = scmp.lt.s32.totalorder %s21, 0
        %s378 = scalar_select %p377, %s21, 0
        %s379 = scalar_lea.vmem %s3, %s378
        %s380 = smul.u32 16, %s20
        %p381 = scmp.lt.s32.totalorder %s380, 15
        %s382 = scalar_select %p381, %s380, 15
        %p383 = scmp.lt.s32.totalorder %s21, 0
        %s384 = scalar_select %p383, %s21, 0
        %s385 = sadd.s32 %s384, %s382
        %s386 = smul.addr %s385, 8
        %s387 = scalar_lea.vmem %s4, %s386
        %s388 = smul.u32 16, %s20
        %p390 = scmp.eq.s32.totalorder %s22, 0
        // Predicated region
        $region75: #{_lambda_.39} parent=69 // pred_check
          %p391 = pneg %p390
        $region76: #{_lambda_.39} parent=69 // pred_check_branch
          %393 = sbr.rel (%p391) target = $region78
        $region77: #{_lambda_.39} parent=69 // pred_region
          %394 = vst [vmem:[#allocation2] sm:$0xff] 0.0
          %395 = vst [vmem:[#allocation2 + $0x8] sm:$0xff] 0.0
          %396 = vst [vmem:[#allocation2 + $0x10] sm:$0xff] 0.0
          %397 = vst [vmem:[#allocation2 + $0x18] sm:$0xff] 0.0
          %398 = vst [vmem:[#allocation2 + $0x20] sm:$0xff] 0.0
          %399 = vst [vmem:[#allocation2 + $0x28] sm:$0xff] 0.0
          %400 = vst [vmem:[#allocation2 + $0x30] sm:$0xff] 0.0
          %401 = vst [vmem:[#allocation2 + $0x38] sm:$0xff] 0.0
          %402 = vst [vmem:[#allocation2 + $0x40] sm:$0xff] 0.0
          %403 = vst [vmem:[#allocation2 + $0x48] sm:$0xff] 0.0
          %404 = vst [vmem:[#allocation2 + $0x50] sm:$0xff] 0.0
          %405 = vst [vmem:[#allocation2 + $0x58] sm:$0xff] 0.0
          %406 = vst [vmem:[#allocation2 + $0x60] sm:$0xff] 0.0
          %407 = vst [vmem:[#allocation2 + $0x68] sm:$0xff] 0.0
          %408 = vst [vmem:[#allocation2 + $0x70] sm:$0xff] 0.0
          %409 = vst [vmem:[#allocation2 + $0x78] sm:$0xff] 0.0
        $region78: #{_lambda_.39} parent=69 // pred_fallthru
          _
        %v410 = vld [vmem:[#allocation2] sm:$0xff]
        %v411 = vld [vmem:[#allocation2 + $0x8] sm:$0xff]
        %v412 = vld [vmem:[#allocation2 + $0x10] sm:$0xff]
        %v413 = vld [vmem:[#allocation2 + $0x18] sm:$0xff]
        %v414 = vld [vmem:[#allocation2 + $0x20] sm:$0xff]
        %v415 = vld [vmem:[#allocation2 + $0x28] sm:$0xff]
        %v416 = vld [vmem:[#allocation2 + $0x30] sm:$0xff]
        %v417 = vld [vmem:[#allocation2 + $0x38] sm:$0xff]
        %v418 = vld [vmem:[#allocation2 + $0x40] sm:$0xff]
        %v419 = vld [vmem:[#allocation2 + $0x48] sm:$0xff]
        %v420 = vld [vmem:[#allocation2 + $0x50] sm:$0xff]
        %v421 = vld [vmem:[#allocation2 + $0x58] sm:$0xff]
        %v422 = vld [vmem:[#allocation2 + $0x60] sm:$0xff]
        %v423 = vld [vmem:[#allocation2 + $0x68] sm:$0xff]
        %v424 = vld [vmem:[#allocation2 + $0x70] sm:$0xff]
        %v425 = vld [vmem:[#allocation2 + $0x78] sm:$0xff]
        %v426 = vld [vmem:[%s323] sm:$0xff]
        %v427 = vld [vmem:[%s323 + $0x8] sm:$0xff]
        %v428 = vld [vmem:[%s323 + $0x10] sm:$0xff]
        %v429 = vld [vmem:[%s323 + $0x18] sm:$0xff]
        %v430 = vld [vmem:[%s323 + $0x20] sm:$0xff]
        %v431 = vld [vmem:[%s323 + $0x28] sm:$0xff]
        %v432 = vld [vmem:[%s323 + $0x30] sm:$0xff]
        %v433 = vld [vmem:[%s323 + $0x38] sm:$0xff]
        %v434 = vld [vmem:[%s323 + $0x40] sm:$0xff]
        %v435 = vld [vmem:[%s323 + $0x48] sm:$0xff]
        %v436 = vld [vmem:[%s323 + $0x50] sm:$0xff]
        %v437 = vld [vmem:[%s323 + $0x58] sm:$0xff]
        %v438 = vld [vmem:[%s323 + $0x60] sm:$0xff]
        %v439 = vld [vmem:[%s323 + $0x68] sm:$0xff]
        %v440 = vld [vmem:[%s323 + $0x70] sm:$0xff]
        %v441 = vld [vmem:[%s323 + $0x78] sm:$0xff]
        %v442 = vld [vmem:[%s372] sm:$0xf]
        %v443 = vld [vmem:[%s372 + $0x4] sm:$0xf]
        %v444 = vld [vmem:[%s372 + $0x8] sm:$0xf]
        %v445 = vld [vmem:[%s372 + $0xc] sm:$0xf]
        %v446 = vld [vmem:[%s372 + $0x10] sm:$0xf]
        %v447 = vld [vmem:[%s372 + $0x14] sm:$0xf]
        %v448 = vld [vmem:[%s372 + $0x18] sm:$0xf]
        %v449 = vld [vmem:[%s372 + $0x1c] sm:$0xf]
        %v450 = vld [vmem:[%s372 + $0x20] sm:$0xf]
        %v451 = vld [vmem:[%s372 + $0x24] sm:$0xf]
        %v452 = vld [vmem:[%s372 + $0x28] sm:$0xf]
        %v453 = vld [vmem:[%s372 + $0x2c] sm:$0xf]
        %v454 = vld [vmem:[%s372 + $0x30] sm:$0xf]
        %v455 = vld [vmem:[%s372 + $0x34] sm:$0xf]
        %v456 = vld [vmem:[%s372 + $0x38] sm:$0xf]
        %v457 = vld [vmem:[%s372 + $0x3c] sm:$0xf]
        %v458 = vld [vmem:[%s372 + $0x40] sm:$0xf]
        %v459 = vld [vmem:[%s372 + $0x44] sm:$0xf]
        %v460 = vld [vmem:[%s372 + $0x48] sm:$0xf]
        %v461 = vld [vmem:[%s372 + $0x4c] sm:$0xf]
        %v462 = vld [vmem:[%s372 + $0x50] sm:$0xf]
        %v463 = vld [vmem:[%s372 + $0x54] sm:$0xf]
        %v464 = vld [vmem:[%s372 + $0x58] sm:$0xf]
        %v465 = vld [vmem:[%s372 + $0x5c] sm:$0xf]
        %v466 = vld [vmem:[%s372 + $0x60] sm:$0xf]
        %v467 = vld [vmem:[%s372 + $0x64] sm:$0xf]
        %v468 = vld [vmem:[%s372 + $0x68] sm:$0xf]
        %v469 = vld [vmem:[%s372 + $0x6c] sm:$0xf]
        %v470 = vld [vmem:[%s372 + $0x70] sm:$0xf]
        %v471 = vld [vmem:[%s372 + $0x74] sm:$0xf]
        %v472 = vld [vmem:[%s372 + $0x78] sm:$0xf]
        %v473 = vld [vmem:[%s372 + $0x7c] sm:$0xf]
        %v490 = vunpack.c.l.b16 %v426
        %v491 = vunpack.c.h.b16 %v426
        %v492 = vunpack.c.l.b16 %v427
        %v493 = vunpack.c.h.b16 %v427
        %v494 = vunpack.c.l.b16 %v428
        %v495 = vunpack.c.h.b16 %v428
        %v496 = vunpack.c.l.b16 %v429
        %v497 = vunpack.c.h.b16 %v429
        %v498 = vunpack.c.l.b16 %v430
        %v499 = vunpack.c.h.b16 %v430
        %v500 = vunpack.c.l.b16 %v431
        %v501 = vunpack.c.h.b16 %v431
        %v502 = vunpack.c.l.b16 %v432
        %v503 = vunpack.c.h.b16 %v432
        %v504 = vunpack.c.l.b16 %v433
        %v505 = vunpack.c.h.b16 %v433
        %v506 = vunpack.c.l.b16 %v434
        %v507 = vunpack.c.h.b16 %v434
        %v508 = vunpack.c.l.b16 %v435
        %v509 = vunpack.c.h.b16 %v435
        %v510 = vunpack.c.l.b16 %v436
        %v511 = vunpack.c.h.b16 %v436
        %v512 = vunpack.c.l.b16 %v437
        %v513 = vunpack.c.h.b16 %v437
        %v514 = vunpack.c.l.b16 %v438
        %v515 = vunpack.c.h.b16 %v438
        %v516 = vunpack.c.l.b16 %v439
        %v517 = vunpack.c.h.b16 %v439
        %v518 = vunpack.c.l.b16 %v440
        %v519 = vunpack.c.h.b16 %v440
        %v520 = vunpack.c.l.b16 %v441
        %v521 = vunpack.c.h.b16 %v441
        %v522 = vpack.c.b16 %v492, %v490
        %v523 = vpack.c.b16 %v493, %v491
        %v524 = vpack.c.b16 %v496, %v494
        %v525 = vpack.c.b16 %v497, %v495
        %v526 = vpack.c.b16 %v500, %v498
        %v527 = vpack.c.b16 %v501, %v499
        %v528 = vpack.c.b16 %v504, %v502
        %v529 = vpack.c.b16 %v505, %v503
        %v530 = vpack.c.b16 %v508, %v506
        %v531 = vpack.c.b16 %v509, %v507
        %v532 = vpack.c.b16 %v512, %v510
        %v533 = vpack.c.b16 %v513, %v511
        %v534 = vpack.c.b16 %v516, %v514
        %v535 = vpack.c.b16 %v517, %v515
        %v536 = vpack.c.b16 %v520, %v518
        %v537 = vpack.c.b16 %v521, %v519
        %v586 = vunpack.c.l.b16 %v442
        %v587 = vunpack.c.l.b16 %v443
        %v588 = vunpack.c.l.b16 %v444
        %v589 = vunpack.c.l.b16 %v445
        %v590 = vunpack.c.l.b16 %v446
        %v591 = vunpack.c.l.b16 %v447
        %v592 = vunpack.c.l.b16 %v448
        %v593 = vunpack.c.l.b16 %v449
        %v594 = vunpack.c.l.b16 %v450
        %v595 = vunpack.c.l.b16 %v451
        %v596 = vunpack.c.l.b16 %v452
        %v597 = vunpack.c.l.b16 %v453
        %v598 = vunpack.c.l.b16 %v454
        %v599 = vunpack.c.l.b16 %v455
        %v600 = vunpack.c.l.b16 %v456
        %v601 = vunpack.c.l.b16 %v457
        %v602 = vunpack.c.l.b16 %v458
        %v603 = vunpack.c.l.b16 %v459
        %v604 = vunpack.c.l.b16 %v460
        %v605 = vunpack.c.l.b16 %v461
        %v606 = vunpack.c.l.b16 %v462
        %v607 = vunpack.c.l.b16 %v463
        %v608 = vunpack.c.l.b16 %v464
        %v609 = vunpack.c.l.b16 %v465
        %v610 = vunpack.c.l.b16 %v466
        %v611 = vunpack.c.l.b16 %v467
        %v612 = vunpack.c.l.b16 %v468
        %v613 = vunpack.c.l.b16 %v469
        %v614 = vunpack.c.l.b16 %v470
        %v615 = vunpack.c.l.b16 %v471
        %v616 = vunpack.c.l.b16 %v472
        %v617 = vunpack.c.l.b16 %v473
        %v618 = vpack.c.b16 %v587, %v586
        %v619 = vpack.c.b16 %v589, %v588
        %v620 = vpack.c.b16 %v591, %v590
        %v621 = vpack.c.b16 %v593, %v592
        %v622 = vpack.c.b16 %v595, %v594
        %v623 = vpack.c.b16 %v597, %v596
        %v624 = vpack.c.b16 %v599, %v598
        %v625 = vpack.c.b16 %v601, %v600
        %v626 = vpack.c.b16 %v603, %v602
        %v627 = vpack.c.b16 %v605, %v604
        %v628 = vpack.c.b16 %v607, %v606
        %v629 = vpack.c.b16 %v609, %v608
        %v630 = vpack.c.b16 %v611, %v610
        %v631 = vpack.c.b16 %v613, %v612
        %v632 = vpack.c.b16 %v615, %v614
        %v633 = vpack.c.b16 %v617, %v616
        %650 = vmatprep.subr.bf16.mxu0 0
        %651 = vmatpush1.bf16.msra.mxu0 %v618
        %652 = vmatprep.subr.bf16.mxu0 0
        %653 = vmatpush1.bf16.msra.mxu0 %v619
        %654 = vmatprep.subr.bf16.mxu0 0
        %655 = vmatpush1.bf16.msra.mxu0 %v620
        %656 = vmatprep.subr.bf16.mxu0 0
        %657 = vmatpush1.bf16.msra.mxu0 %v621
        %658 = vmatprep.subr.bf16.mxu0 0
        %659 = vmatpush1.bf16.msra.mxu0 %v622
        %660 = vmatprep.subr.bf16.mxu0 0
        %661 = vmatpush1.bf16.msra.mxu0 %v623
        %662 = vmatprep.subr.bf16.mxu0 0
        %663 = vmatpush1.bf16.msra.mxu0 %v624
        %664 = vmatprep.subr.bf16.mxu0 0
        %665 = vmatpush1.bf16.msra.mxu0 %v625
        %666 = vmatprep.subr.bf16.mxu0 0
        %667 = vmatpush1.bf16.msra.mxu0 %v626
        %668 = vmatprep.subr.bf16.mxu0 0
        %669 = vmatpush1.bf16.msra.mxu0 %v627
        %670 = vmatprep.subr.bf16.mxu0 0
        %671 = vmatpush1.bf16.msra.mxu0 %v628
        %672 = vmatprep.subr.bf16.mxu0 0
        %673 = vmatpush1.bf16.msra.mxu0 %v629
        %674 = vmatprep.subr.bf16.mxu0 0
        %675 = vmatpush1.bf16.msra.mxu0 %v630
        %676 = vmatprep.subr.bf16.mxu0 0
        %677 = vmatpush1.bf16.msra.mxu0 %v631
        %678 = vmatprep.subr.bf16.mxu0 0
        %679 = vmatpush1.bf16.msra.mxu0 %v632
        %680 = vmatprep.subr.bf16.mxu0 0
        %681 = vmatpush1.bf16.msra.mxu0 %v633
        %682 = vmatprep.mubr.bf16.mxu0 %v523
        %683 = vmatmul.mubr.bf16.gmra.mrb[0].mxu0 %v522
        %v684 = vpop.f32.mrb[0].mxu0
        %v685 = vadd.f32 0.0, %v684
        %v686 = vpop.f32.mrb[0].mxu0
        %v687 = vpop.f32.mrb[0].mxu0
        %v688 = vadd.f32 0.0, %v687
        %v689 = vpop.f32.mrb[0].mxu0
        %690 = vmatprep.mubr.bf16.mxu0 %v525
        %691 = vmatmul.mubr.bf16.gmra.mrb[0].mxu0 %v524
        %v692 = vpop.f32.mrb[0].mxu0
        %v693 = vadd.f32 0.0, %v692
        %v694 = vpop.f32.mrb[0].mxu0
        %v695 = vpop.f32.mrb[0].mxu0
        %v696 = vadd.f32 0.0, %v695
        %v697 = vpop.f32.mrb[0].mxu0
        %698 = vmatprep.mubr.bf16.mxu0 %v527
        %699 = vmatmul.mubr.bf16.gmra.mrb[0].mxu0 %v526
        %v700 = vpop.f32.mrb[0].mxu0
        %v701 = vadd.f32 0.0, %v700
        %v702 = vpop.f32.mrb[0].mxu0
        %v703 = vpop.f32.mrb[0].mxu0
        %v704 = vadd.f32 0.0, %v703
        %v705 = vpop.f32.mrb[0].mxu0
        %706 = vmatprep.mubr.bf16.mxu0 %v529
        %707 = vmatmul.mubr.bf16.gmra.mrb[0].mxu0 %v528
        %v708 = vpop.f32.mrb[0].mxu0
        %v709 = vadd.f32 0.0, %v708
        %v710 = vpop.f32.mrb[0].mxu0
        %v711 = vpop.f32.mrb[0].mxu0
        %v712 = vadd.f32 0.0, %v711
        %v713 = vpop.f32.mrb[0].mxu0
        %714 = vmatprep.mubr.bf16.mxu0 %v531
        %715 = vmatmul.mubr.bf16.gmra.mrb[0].mxu0 %v530
        %v716 = vpop.f32.mrb[0].mxu0
        %v717 = vadd.f32 0.0, %v716
        %v718 = vpop.f32.mrb[0].mxu0
        %v719 = vpop.f32.mrb[0].mxu0
        %v720 = vadd.f32 0.0, %v719
        %v721 = vpop.f32.mrb[0].mxu0
        %722 = vmatprep.mubr.bf16.mxu0 %v533
        %723 = vmatmul.mubr.bf16.gmra.mrb[0].mxu0 %v532
        %v724 = vpop.f32.mrb[0].mxu0
        %v725 = vadd.f32 0.0, %v724
        %v726 = vpop.f32.mrb[0].mxu0
        %v727 = vpop.f32.mrb[0].mxu0
        %v728 = vadd.f32 0.0, %v727
        %v729 = vpop.f32.mrb[0].mxu0
        %730 = vmatprep.mubr.bf16.mxu0 %v535
        %731 = vmatmul.mubr.bf16.gmra.mrb[0].mxu0 %v534
        %v732 = vpop.f32.mrb[0].mxu0
        %v733 = vadd.f32 0.0, %v732
        %v734 = vpop.f32.mrb[0].mxu0
        %v735 = vpop.f32.mrb[0].mxu0
        %v736 = vadd.f32 0.0, %v735
        %v737 = vpop.f32.mrb[0].mxu0
        %738 = vmatprep.mubr.bf16.mxu0 %v537
        %739 = vmatmul.mubr.bf16.gmra.mrb[0].mxu0 %v536
        %v740 = vpop.f32.mrb[0].mxu0
        %v741 = vadd.f32 0.0, %v740
        %v742 = vpop.f32.mrb[0].mxu0
        %v743 = vpop.f32.mrb[0].mxu0
        %v744 = vadd.f32 0.0, %v743
        %v745 = vpop.f32.mrb[0].mxu0
        %746 = vdwg.mxu0
        %v747 = vadd.f32 %v410, %v685
        %v748 = vadd.f32 %v411, %v688
        %v749 = vadd.f32 %v412, %v693
        %v750 = vadd.f32 %v413, %v696
        %v751 = vadd.f32 %v414, %v701
        %v752 = vadd.f32 %v415, %v704
        %v753 = vadd.f32 %v416, %v709
        %v754 = vadd.f32 %v417, %v712
        %v755 = vadd.f32 %v418, %v717
        %v756 = vadd.f32 %v419, %v720
        %v757 = vadd.f32 %v420, %v725
        %v758 = vadd.f32 %v421, %v728
        %v759 = vadd.f32 %v422, %v733
        %v760 = vadd.f32 %v423, %v736
        %v761 = vadd.f32 %v424, %v741
        %v762 = vadd.f32 %v425, %v744
        %763 = vst [vmem:[#allocation2] sm:$0xff] %v747
        %764 = vst [vmem:[#allocation2 + $0x8] sm:$0xff] %v748
        %765 = vst [vmem:[#allocation2 + $0x10] sm:$0xff] %v749
        %766 = vst [vmem:[#allocation2 + $0x18] sm:$0xff] %v750
        %767 = vst [vmem:[#allocation2 + $0x20] sm:$0xff] %v751
        %768 = vst [vmem:[#allocation2 + $0x28] sm:$0xff] %v752
        %769 = vst [vmem:[#allocation2 + $0x30] sm:$0xff] %v753
        %770 = vst [vmem:[#allocation2 + $0x38] sm:$0xff] %v754
        %771 = vst [vmem:[#allocation2 + $0x40] sm:$0xff] %v755
        %772 = vst [vmem:[#allocation2 + $0x48] sm:$0xff] %v756
        %773 = vst [vmem:[#allocation2 + $0x50] sm:$0xff] %v757
        %774 = vst [vmem:[#allocation2 + $0x58] sm:$0xff] %v758
        %775 = vst [vmem:[#allocation2 + $0x60] sm:$0xff] %v759
        %776 = vst [vmem:[#allocation2 + $0x68] sm:$0xff] %v760
        %777 = vst [vmem:[#allocation2 + $0x70] sm:$0xff] %v761
        %778 = vst [vmem:[#allocation2 + $0x78] sm:$0xff] %v762
        %p779 = scmp.eq.s32.totalorder %s22, 2
        // Predicated region
        $region79: #{_lambda_.39} parent=69 // pred_check
          %p780 = pneg %p779
        $region80: #{_lambda_.39} parent=69 // pred_check_branch
          %782 = sbr.rel (%p780) target = $region82
        $region81: #{_lambda_.39} parent=69 // pred_region
          %v783 = vld [vmem:[#allocation2] sm:$0xff]
          %v784 = vld [vmem:[#allocation2 + $0x8] sm:$0xff]
          %v785 = vld [vmem:[#allocation2 + $0x10] sm:$0xff]
          %v786 = vld [vmem:[#allocation2 + $0x18] sm:$0xff]
          %v787 = vld [vmem:[#allocation2 + $0x20] sm:$0xff]
          %v788 = vld [vmem:[#allocation2 + $0x28] sm:$0xff]
          %v789 = vld [vmem:[#allocation2 + $0x30] sm:$0xff]
          %v790 = vld [vmem:[#allocation2 + $0x38] sm:$0xff]
          %v791 = vld [vmem:[#allocation2 + $0x40] sm:$0xff]
          %v792 = vld [vmem:[#allocation2 + $0x48] sm:$0xff]
          %v793 = vld [vmem:[#allocation2 + $0x50] sm:$0xff]
          %v794 = vld [vmem:[#allocation2 + $0x58] sm:$0xff]
          %v795 = vld [vmem:[#allocation2 + $0x60] sm:$0xff]
          %v796 = vld [vmem:[#allocation2 + $0x68] sm:$0xff]
          %v797 = vld [vmem:[#allocation2 + $0x70] sm:$0xff]
          %v798 = vld [vmem:[#allocation2 + $0x78] sm:$0xff]
          %v799 = vld [vmem:[%s376] sm:$0x1]
          %v800 = vld [vmem:[%s379] sm:$0x1]
          %v802 = vlaneseq
          %v803 = vshrl.u32 %v802, 7
          %v804 = vsub.s32 0, %v803
          %v805 = vrot.slane %v799, %v804
          %v807 = vmul.f32 %v783, %v805
          %v808 = vmul.f32 %v784, %v805
          %v809 = vmul.f32 %v785, %v805
          %v810 = vmul.f32 %v786, %v805
          %v811 = vmul.f32 %v787, %v805
          %v812 = vmul.f32 %v788, %v805
          %v813 = vmul.f32 %v789, %v805
          %v814 = vmul.f32 %v790, %v805
          %v815 = vmul.f32 %v791, %v805
          %v816 = vmul.f32 %v792, %v805
          %v817 = vmul.f32 %v793, %v805
          %v818 = vmul.f32 %v794, %v805
          %v819 = vmul.f32 %v795, %v805
          %v820 = vmul.f32 %v796, %v805
          %v821 = vmul.f32 %v797, %v805
          %v822 = vmul.f32 %v798, %v805
          %v824 = vlaneseq
          %v825 = vshrl.u32 %v824, 7
          %v826 = vsub.s32 0, %v825
          %v827 = vrot.slane %v800, %v826
          %v829 = vadd.f32 %v807, %v827
          %v830 = vadd.f32 %v808, %v827
          %v831 = vadd.f32 %v809, %v827
          %v832 = vadd.f32 %v810, %v827
          %v833 = vadd.f32 %v811, %v827
          %v834 = vadd.f32 %v812, %v827
          %v835 = vadd.f32 %v813, %v827
          %v836 = vadd.f32 %v814, %v827
          %v837 = vadd.f32 %v815, %v827
          %v838 = vadd.f32 %v816, %v827
          %v839 = vadd.f32 %v817, %v827
          %v840 = vadd.f32 %v818, %v827
          %v841 = vadd.f32 %v819, %v827
          %v842 = vadd.f32 %v820, %v827
          %v843 = vadd.f32 %v821, %v827
          %v844 = vadd.f32 %v822, %v827
          %v845 = vmax.f32 %v829, 0.0
          %v846 = vmax.f32 %v830, 0.0
          %v847 = vmax.f32 %v831, 0.0
          %v848 = vmax.f32 %v832, 0.0
          %v849 = vmax.f32 %v833, 0.0
          %v850 = vmax.f32 %v834, 0.0
          %v851 = vmax.f32 %v835, 0.0
          %v852 = vmax.f32 %v836, 0.0
          %v853 = vmax.f32 %v837, 0.0
          %v854 = vmax.f32 %v838, 0.0
          %v855 = vmax.f32 %v839, 0.0
          %v856 = vmax.f32 %v840, 0.0
          %v857 = vmax.f32 %v841, 0.0
          %v858 = vmax.f32 %v842, 0.0
          %v859 = vmax.f32 %v843, 0.0
          %v860 = vmax.f32 %v844, 0.0
          %861 = vst [vmem:[%s387] sm:$0xff] %v845
          %862 = vst [vmem:[%s387 + $0x8] sm:$0xff] %v846
          %863 = vst [vmem:[%s387 + $0x10] sm:$0xff] %v847
          %864 = vst [vmem:[%s387 + $0x18] sm:$0xff] %v848
          %865 = vst [vmem:[%s387 + $0x20] sm:$0xff] %v849
          %866 = vst [vmem:[%s387 + $0x28] sm:$0xff] %v850
          %867 = vst [vmem:[%s387 + $0x30] sm:$0xff] %v851
          %868 = vst [vmem:[%s387 + $0x38] sm:$0xff] %v852
          %869 = vst [vmem:[%s387 + $0x40] sm:$0xff] %v853
          %870 = vst [vmem:[%s387 + $0x48] sm:$0xff] %v854
          %871 = vst [vmem:[%s387 + $0x50] sm:$0xff] %v855
          %872 = vst [vmem:[%s387 + $0x58] sm:$0xff] %v856
          %873 = vst [vmem:[%s387 + $0x60] sm:$0xff] %v857
          %874 = vst [vmem:[%s387 + $0x68] sm:$0xff] %v858
          %875 = vst [vmem:[%s387 + $0x70] sm:$0xff] %v859
          %876 = vst [vmem:[%s387 + $0x78] sm:$0xff] %v860
        $region82: #{_lambda_.39} parent=69 // pred_fallthru
          _
        %s877 = smul.u32 16, %s20
        %p878 = scmp.lt.s32.totalorder %s877, 15
        %s879 = scalar_select %p878, %s877, 15
        %p880 = scmp.lt.s32.totalorder %s21, 0
        %s881 = scalar_select %p880, %s21, 0
        %s882 = sadd.s32 %s881, %s879
        %s883 = smul.addr %s882, 8
        %s884 = scalar_lea.vmem %s4, %s883
        // Predicated region
        $region83: #{_lambda_.39} parent=69 // pred_check
          %p885 = pneg %p162
        $region84: #{_lambda_.39} parent=69 // pred_check_branch
          %887 = sbr.rel (%p885) target = $region86
        $region85: #{_lambda_.39} parent=69 // pred_region
          %s888 = smul.u32 16, %s20
        $region86: #{_lambda_.39} parent=69 // pred_fallthru
          _
        // Predicated region
        $region87: #{_lambda_.39} parent=69 // pred_check
          %p889 = pneg %p162
        $region88: #{_lambda_.39} parent=69 // pred_check_branch
          %891 = sbr.rel (%p889) target = $region90
        $region89: #{_lambda_.39} parent=69 // pred_region
          %s892 = smul.u32 16, %s20
          %p893 = scmp.lt.s32.totalorder %s892, 15
          %s894 = scalar_select %p893, %s892, 15
          %p895 = scmp.lt.s32.totalorder %s21, 0
          %s896 = scalar_select %p895, %s21, 0
          %s897 = sadd.s32 %s896, %s894
          %s898 = smul.addr %s897, 8
          %s899 = scalar_lea.vmem %s4, %s898
        $region90: #{_lambda_.39} parent=69 // pred_fallthru
          _
      $region70: #{_lambda_.39} parent=5 // pred_fallthru
        _
      %p900 = scmp.le.s32.totalorder 2, %s10
      // Predicated region
      $region91: #{_lambda_.39} parent=5 // pred_check
        %p901 = pneg %p900
      $region92: #{_lambda_.39} parent=5 // pred_check_branch
        %903 = sbr.rel (%p901) target = $region94
      $region93: #{_lambda_.39} parent=5 // pred_region
        %s904 = ssub.s32 %s10, 2
      $region94: #{_lambda_.39} parent=5 // pred_fallthru
        _
    $region6: #{_lambda_.39} parent=1 // loop_footer
      %s14 = sadd.s32 1, %s10
    $region7: #{_lambda_.39} parent=1 // loop_footer_branch
      %9 = sbr.rel target = $region3
    $region8: #{_lambda_.39} parent=1 // loop_exit
      _

// kernel: _lambda_.37
$region0: #{_lambda_.37}
  #allocation0 [shape = 'u32[]', space=smem, size = 0x4, offset = 0x4, fixed_abs, tag = 'smem constant byte address 0x4 - core index']
  #allocation1 [shape = 'u32[144,128]{1,0:T(1,128)}', space=vmem, size = 0x12000, scoped, tag = 'internal scratch']
  #allocation2 [shape = 'f32[128,256]{1,0:T(8,128)}', space=vmem, size = 0x20000, scoped, tag = 'scratch operand']
  %s0 = inlined_call_operand.vmem [shape: bf16[128,128], index: 0, kind: input, shape index: {}]
  %s1 = inlined_call_operand.vmem [shape: bf16[128,256], index: 1, kind: input, shape index: {}]
  %s2 = inlined_call_operand.vmem [shape: f32[1,256], index: 2, kind: input, shape index: {}]
  %s3 = inlined_call_operand.vmem [shape: f32[1,256], index: 3, kind: input, shape index: {}]
  %s4 = inlined_call_operand.vmem [shape: f32[128,256], index: 4, kind: output, shape index: {}]
  %s5 = sld [smem:[#allocation0]]
  $region34: #{_lambda_.37} parent=0
    _
  %s7 = ssub.s32 1, %s5
  %s8 = scalar_select 0, %s7, %s5
  // Predicated region
  $region2: #{_lambda_.37} parent=0 // pred_check
    _
  $region3: #{_lambda_.37} parent=0 // pred_check_branch
    %10 = sbr.rel (0) target = $region5
  $region4: #{_lambda_.37} parent=0 // pred_region
    _
  $region5: #{_lambda_.37} parent=0 // pred_fallthru
    _
  // Predicated region
  $region6: #{_lambda_.37} parent=0 // pred_check
    _
  $region7: #{_lambda_.37} parent=0 // pred_check_branch
    %12 = sbr.rel (0) target = $region9
  $region8: #{_lambda_.37} parent=0 // pred_region
    _
  $region9: #{_lambda_.37} parent=0 // pred_fallthru
    _
  // Predicated region
  $region10: #{_lambda_.37} parent=0 // pred_check
    _
  $region11: #{_lambda_.37} parent=0 // pred_check_branch
    %14 = sbr.rel (0) target = $region13
  $region12: #{_lambda_.37} parent=0 // pred_region
    _
  $region13: #{_lambda_.37} parent=0 // pred_fallthru
    _
  // Predicated region
  $region14: #{_lambda_.37} parent=0 // pred_check
    _
  $region15: #{_lambda_.37} parent=0 // pred_check_branch
    %16 = sbr.rel (0) target = $region17
  $region16: #{_lambda_.37} parent=0 // pred_region
    _
  $region17: #{_lambda_.37} parent=0 // pred_fallthru
    _
  %p18 = scmp.eq.s32.totalorder 0, 0
  // Predicated region
  $region18: #{_lambda_.37} parent=0 // pred_check
    %p19 = pneg %p18
  $region19: #{_lambda_.37} parent=0 // pred_check_branch
    %21 = sbr.rel (%p19) target = $region21
  $region20: #{_lambda_.37} parent=0 // pred_region
    %22 = vst [vmem:[#allocation2] sm:$0xff] 0.0
    %23 = vst [vmem:[#allocation2 + $0x8] sm:$0xff] 0.0
    %24 = vst [vmem:[#allocation2 + $0x10] sm:$0xff] 0.0
    %25 = vst [vmem:[#allocation2 + $0x18] sm:$0xff] 0.0
    %26 = vst [vmem:[#allocation2 + $0x20] sm:$0xff] 0.0
    %27 = vst [vmem:[#allocation2 + $0x28] sm:$0xff] 0.0
    %28 = vst [vmem:[#allocation2 + $0x30] sm:$0xff] 0.0
    %29 = vst [vmem:[#allocation2 + $0x38] sm:$0xff] 0.0
    %30 = vst [vmem:[#allocation2 + $0x40] sm:$0xff] 0.0
    %31 = vst [vmem:[#allocation2 + $0x48] sm:$0xff] 0.0
    %32 = vst [vmem:[#allocation2 + $0x50] sm:$0xff] 0.0
    %33 = vst [vmem:[#allocation2 + $0x58] sm:$0xff] 0.0
    %34 = vst [vmem:[#allocation2 + $0x60] sm:$0xff] 0.0
    %35 = vst [vmem:[#allocation2 + $0x68] sm:$0xff] 0.0
    %36 = vst [vmem:[#allocation2 + $0x70] sm:$0xff] 0.0
    %37 = vst [vmem:[#allocation2 + $0x78] sm:$0xff] 0.0
    %38 = vst [vmem:[#allocation2 + $0x80] sm:$0xff] 0.0
    %39 = vst [vmem:[#allocation2 + $0x88] sm:$0xff] 0.0
    %40 = vst [vmem:[#allocation2 + $0x90] sm:$0xff] 0.0
    %41 = vst [vmem:[#allocation2 + $0x98] sm:$0xff] 0.0
    %42 = vst [vmem:[#allocation2 + $0xa0] sm:$0xff] 0.0
    %43 = vst [vmem:[#allocation2 + $0xa8] sm:$0xff] 0.0
    %44 = vst [vmem:[#allocation2 + $0xb0] sm:$0xff] 0.0
    %45 = vst [vmem:[#allocation2 + $0xb8] sm:$0xff] 0.0
    %46 = vst [vmem:[#allocation2 + $0xc0] sm:$0xff] 0.0
    %47 = vst [vmem:[#allocation2 + $0xc8] sm:$0xff] 0.0
    %48 = vst [vmem:[#allocation2 + $0xd0] sm:$0xff] 0.0
    %49 = vst [vmem:[#allocation2 + $0xd8] sm:$0xff] 0.0
    %50 = vst [vmem:[#allocation2 + $0xe0] sm:$0xff] 0.0
    %51 = vst [vmem:[#allocation2 + $0xe8] sm:$0xff] 0.0
    %52 = vst [vmem:[#allocation2 + $0xf0] sm:$0xff] 0.0
    %53 = vst [vmem:[#allocation2 + $0xf8] sm:$0xff] 0.0
  $region21: #{_lambda_.37} parent=0 // pred_fallthru
    _
  %v54 = vld [vmem:[#allocation2] sm:$0xff]
  %v55 = vld [vmem:[#allocation2 + $0x8] sm:$0xff]
  %v56 = vld [vmem:[#allocation2 + $0x10] sm:$0xff]
  %v57 = vld [vmem:[#allocation2 + $0x18] sm:$0xff]
  %v58 = vld [vmem:[#allocation2 + $0x20] sm:$0xff]
  %v59 = vld [vmem:[#allocation2 + $0x28] sm:$0xff]
  %v60 = vld [vmem:[#allocation2 + $0x30] sm:$0xff]
  %v61 = vld [vmem:[#allocation2 + $0x38] sm:$0xff]
  %v62 = vld [vmem:[#allocation2 + $0x40] sm:$0xff]
  %v63 = vld [vmem:[#allocation2 + $0x48] sm:$0xff]
  %v64 = vld [vmem:[#allocation2 + $0x50] sm:$0xff]
  %v65 = vld [vmem:[#allocation2 + $0x58] sm:$0xff]
  %v66 = vld [vmem:[#allocation2 + $0x60] sm:$0xff]
  %v67 = vld [vmem:[#allocation2 + $0x68] sm:$0xff]
  %v68 = vld [vmem:[#allocation2 + $0x70] sm:$0xff]
  %v69 = vld [vmem:[#allocation2 + $0x78] sm:$0xff]
  %v70 = vld [vmem:[#allocation2 + $0x80] sm:$0xff]
  %v71 = vld [vmem:[#allocation2 + $0x88] sm:$0xff]
  %v72 = vld [vmem:[#allocation2 + $0x90] sm:$0xff]
  %v73 = vld [vmem:[#allocation2 + $0x98] sm:$0xff]
  %v74 = vld [vmem:[#allocation2 + $0xa0] sm:$0xff]
  %v75 = vld [vmem:[#allocation2 + $0xa8] sm:$0xff]
  %v76 = vld [vmem:[#allocation2 + $0xb0] sm:$0xff]
  %v77 = vld [vmem:[#allocation2 + $0xb8] sm:$0xff]
  %v78 = vld [vmem:[#allocation2 + $0xc0] sm:$0xff]
  %v79 = vld [vmem:[#allocation2 + $0xc8] sm:$0xff]
  %v80 = vld [vmem:[#allocation2 + $0xd0] sm:$0xff]
  %v81 = vld [vmem:[#allocation2 + $0xd8] sm:$0xff]
  %v82 = vld [vmem:[#allocation2 + $0xe0] sm:$0xff]
  %v83 = vld [vmem:[#allocation2 + $0xe8] sm:$0xff]
  %v84 = vld [vmem:[#allocation2 + $0xf0] sm:$0xff]
  %v85 = vld [vmem:[#allocation2 + $0xf8] sm:$0xff]
  %v86 = vld [vmem:[%s0] sm:$0xf]
  %v87 = vld [vmem:[%s0 + $0x4] sm:$0xf]
  %v88 = vld [vmem:[%s0 + $0x8] sm:$0xf]
  %v89 = vld [vmem:[%s0 + $0xc] sm:$0xf]
  %v90 = vld [vmem:[%s0 + $0x10] sm:$0xf]
  %v91 = vld [vmem:[%s0 + $0x14] sm:$0xf]
  %v92 = vld [vmem:[%s0 + $0x18] sm:$0xf]
  %v93 = vld [vmem:[%s0 + $0x1c] sm:$0xf]
  %v94 = vld [vmem:[%s0 + $0x20] sm:$0xf]
  %v95 = vld [vmem:[%s0 + $0x24] sm:$0xf]
  %v96 = vld [vmem:[%s0 + $0x28] sm:$0xf]
  %v97 = vld [vmem:[%s0 + $0x2c] sm:$0xf]
  %v98 = vld [vmem:[%s0 + $0x30] sm:$0xf]
  %v99 = vld [vmem:[%s0 + $0x34] sm:$0xf]
  %v100 = vld [vmem:[%s0 + $0x38] sm:$0xf]
  %v101 = vld [vmem:[%s0 + $0x3c] sm:$0xf]
  %v102 = vld [vmem:[%s1] sm:$0xff]
  %v103 = vld [vmem:[%s1 + $0x8] sm:$0xff]
  %v104 = vld [vmem:[%s1 + $0x10] sm:$0xff]
  %v105 = vld [vmem:[%s1 + $0x18] sm:$0xff]
  %v106 = vld [vmem:[%s1 + $0x20] sm:$0xff]
  %v107 = vld [vmem:[%s1 + $0x28] sm:$0xff]
  %v108 = vld [vmem:[%s1 + $0x30] sm:$0xff]
  %v109 = vld [vmem:[%s1 + $0x38] sm:$0xff]
  %v110 = vld [vmem:[%s1 + $0x40] sm:$0xff]
  %v111 = vld [vmem:[%s1 + $0x48] sm:$0xff]
  %v112 = vld [vmem:[%s1 + $0x50] sm:$0xff]
  %v113 = vld [vmem:[%s1 + $0x58] sm:$0xff]
  %v114 = vld [vmem:[%s1 + $0x60] sm:$0xff]
  %v115 = vld [vmem:[%s1 + $0x68] sm:$0xff]
  %v116 = vld [vmem:[%s1 + $0x70] sm:$0xff]
  %v117 = vld [vmem:[%s1 + $0x78] sm:$0xff]
  %v134 = vunpack.c.l.b16 %v86
  %v135 = vunpack.c.l.b16 %v87
  %v136 = vunpack.c.l.b16 %v88
  %v137 = vunpack.c.l.b16 %v89
  %v138 = vunpack.c.l.b16 %v90
  %v139 = vunpack.c.l.b16 %v91
  %v140 = vunpack.c.l.b16 %v92
  %v141 = vunpack.c.l.b16 %v93
  %v142 = vunpack.c.l.b16 %v94
  %v143 = vunpack.c.l.b16 %v95
  %v144 = vunpack.c.l.b16 %v96
  %v145 = vunpack.c.l.b16 %v97
  %v146 = vunpack.c.l.b16 %v98
  %v147 = vunpack.c.l.b16 %v99
  %v148 = vunpack.c.l.b16 %v100
  %v149 = vunpack.c.l.b16 %v101
  %v150 = vpack.c.b16 %v135, %v134
  %v151 = vpack.c.b16 %v137, %v136
  %v152 = vpack.c.b16 %v139, %v138
  %v153 = vpack.c.b16 %v141, %v140
  %v154 = vpack.c.b16 %v143, %v142
  %v155 = vpack.c.b16 %v145, %v144
  %v156 = vpack.c.b16 %v147, %v146
  %v157 = vpack.c.b16 %v149, %v148
  %v182 = vunpack.c.l.b16 %v102
  %v183 = vunpack.c.h.b16 %v102
  %v184 = vunpack.c.l.b16 %v103
  %v185 = vunpack.c.h.b16 %v103
  %v186 = vunpack.c.l.b16 %v104
  %v187 = vunpack.c.h.b16 %v104
  %v188 = vunpack.c.l.b16 %v105
  %v189 = vunpack.c.h.b16 %v105
  %v190 = vunpack.c.l.b16 %v106
  %v191 = vunpack.c.h.b16 %v106
  %v192 = vunpack.c.l.b16 %v107
  %v193 = vunpack.c.h.b16 %v107
  %v194 = vunpack.c.l.b16 %v108
  %v195 = vunpack.c.h.b16 %v108
  %v196 = vunpack.c.l.b16 %v109
  %v197 = vunpack.c.h.b16 %v109
  %v198 = vunpack.c.l.b16 %v110
  %v199 = vunpack.c.h.b16 %v110
  %v200 = vunpack.c.l.b16 %v111
  %v201 = vunpack.c.h.b16 %v111
  %v202 = vunpack.c.l.b16 %v112
  %v203 = vunpack.c.h.b16 %v112
  %v204 = vunpack.c.l.b16 %v113
  %v205 = vunpack.c.h.b16 %v113
  %v206 = vunpack.c.l.b16 %v114
  %v207 = vunpack.c.h.b16 %v114
  %v208 = vunpack.c.l.b16 %v115
  %v209 = vunpack.c.h.b16 %v115
  %v210 = vunpack.c.l.b16 %v116
  %v211 = vunpack.c.h.b16 %v116
  %v212 = vunpack.c.l.b16 %v117
  %v213 = vunpack.c.h.b16 %v117
  %v214 = vpack.c.b16 %v184, %v182
  %v215 = vpack.c.b16 %v185, %v183
  %v216 = vpack.c.b16 %v188, %v186
  %v217 = vpack.c.b16 %v189, %v187
  %v218 = vpack.c.b16 %v192, %v190
  %v219 = vpack.c.b16 %v193, %v191
  %v220 = vpack.c.b16 %v196, %v194
  %v221 = vpack.c.b16 %v197, %v195
  %v222 = vpack.c.b16 %v200, %v198
  %v223 = vpack.c.b16 %v201, %v199
  %v224 = vpack.c.b16 %v204, %v202
  %v225 = vpack.c.b16 %v205, %v203
  %v226 = vpack.c.b16 %v208, %v206
  %v227 = vpack.c.b16 %v209, %v207
  %v228 = vpack.c.b16 %v212, %v210
  %v229 = vpack.c.b16 %v213, %v211
  %246 = vmatprep.subr.bf16.mxu0 %v215
  %247 = vmatpush1.bf16.msra.mxu0 %v214
  %248 = vmatprep.subr.bf16.mxu0 %v217
  %249 = vmatpush1.bf16.msra.mxu0 %v216
  %250 = vmatprep.subr.bf16.mxu0 %v219
  %251 = vmatpush1.bf16.msra.mxu0 %v218
  %252 = vmatprep.subr.bf16.mxu0 %v221
  %253 = vmatpush1.bf16.msra.mxu0 %v220
  %254 = vmatprep.subr.bf16.mxu0 %v223
  %255 = vmatpush1.bf16.msra.mxu0 %v222
  %256 = vmatprep.subr.bf16.mxu0 %v225
  %257 = vmatpush1.bf16.msra.mxu0 %v224
  %258 = vmatprep.subr.bf16.mxu0 %v227
  %259 = vmatpush1.bf16.msra.mxu0 %v226
  %260 = vmatprep.subr.bf16.mxu0 %v229
  %261 = vmatpush1.bf16.msra.mxu0 %v228
  %262 = vmatprep.subr.bf16.mxu0 0
  %263 = vmatpush1.bf16.msra.mxu0 0
  %264 = vmatprep.subr.bf16.mxu0 0
  %265 = vmatpush1.bf16.msra.mxu0 0
  %266 = vmatprep.subr.bf16.mxu0 0
  %267 = vmatpush1.bf16.msra.mxu0 0
  %268 = vmatprep.subr.bf16.mxu0 0
  %269 = vmatpush1.bf16.msra.mxu0 0
  %270 = vmatprep.subr.bf16.mxu0 0
  %271 = vmatpush1.bf16.msra.mxu0 0
  %272 = vmatprep.subr.bf16.mxu0 0
  %273 = vmatpush1.bf16.msra.mxu0 0
  %274 = vmatprep.subr.bf16.mxu0 0
  %275 = vmatpush1.bf16.msra.mxu0 0
  %276 = vmatprep.subr.bf16.mxu0 0
  %277 = vmatpush1.bf16.msra.mxu0 0
  %278 = vmatprep.mubr.bf16.mxu0 0
  %279 = vmatmul.mubr.bf16.gmra.mrb[0].mxu0 %v150
  %v280 = vpop.f32.mrb[0].mxu0
  %v281 = vadd.f32 0.0, %v280
  %v282 = vpop.f32.mrb[0].mxu0
  %v283 = vadd.f32 0.0, %v282
  %v284 = vpop.f32.mrb[0].mxu0
  %v285 = vadd.f32 0.0, %v284
  %v286 = vpop.f32.mrb[0].mxu0
  %v287 = vadd.f32 0.0, %v286
  %288 = vmatprep.mubr.bf16.mxu0 0
  %289 = vmatmul.mubr.bf16.gmra.mrb[0].mxu0 %v151
  %v290 = vpop.f32.mrb[0].mxu0
  %v291 = vadd.f32 0.0, %v290
  %v292 = vpop.f32.mrb[0].mxu0
  %v293 = vadd.f32 0.0, %v292
  %v294 = vpop.f32.mrb[0].mxu0
  %v295 = vadd.f32 0.0, %v294
  %v296 = vpop.f32.mrb[0].mxu0
  %v297 = vadd.f32 0.0, %v296
  %298 = vmatprep.mubr.bf16.mxu0 0
  %299 = vmatmul.mubr.bf16.gmra.mrb[0].mxu0 %v152
  %v300 = vpop.f32.mrb[0].mxu0
  %v301 = vadd.f32 0.0, %v300
  %v302 = vpop.f32.mrb[0].mxu0
  %v303 = vadd.f32 0.0, %v302
  %v304 = vpop.f32.mrb[0].mxu0
  %v305 = vadd.f32 0.0, %v304
  %v306 = vpop.f32.mrb[0].mxu0
  %v307 = vadd.f32 0.0, %v306
  %308 = vmatprep.mubr.bf16.mxu0 0
  %309 = vmatmul.mubr.bf16.gmra.mrb[0].mxu0 %v153
  %v310 = vpop.f32.mrb[0].mxu0
  %v311 = vadd.f32 0.0, %v310
  %v312 = vpop.f32.mrb[0].mxu0
  %v313 = vadd.f32 0.0, %v312
  %v314 = vpop.f32.mrb[0].mxu0
  %v315 = vadd.f32 0.0, %v314
  %v316 = vpop.f32.mrb[0].mxu0
  %v317 = vadd.f32 0.0, %v316
  %318 = vmatprep.mubr.bf16.mxu0 0
  %319 = vmatmul.mubr.bf16.gmra.mrb[0].mxu0 %v154
  %v320 = vpop.f32.mrb[0].mxu0
  %v321 = vadd.f32 0.0, %v320
  %v322 = vpop.f32.mrb[0].mxu0
  %v323 = vadd.f32 0.0, %v322
  %v324 = vpop.f32.mrb[0].mxu0
  %v325 = vadd.f32 0.0, %v324
  %v326 = vpop.f32.mrb[0].mxu0
  %v327 = vadd.f32 0.0, %v326
  %328 = vmatprep.mubr.bf16.mxu0 0
  %329 = vmatmul.mubr.bf16.gmra.mrb[0].mxu0 %v155
  %v330 = vpop.f32.mrb[0].mxu0
  %v331 = vadd.f32 0.0, %v330
  %v332 = vpop.f32.mrb[0].mxu0
  %v333 = vadd.f32 0.0, %v332
  %v334 = vpop.f32.mrb[0].mxu0
  %v335 = vadd.f32 0.0, %v334
  %v336 = vpop.f32.mrb[0].mxu0
  %v337 = vadd.f32 0.0, %v336
  %338 = vmatprep.mubr.bf16.mxu0 0
  %339 = vmatmul.mubr.bf16.gmra.mrb[0].mxu0 %v156
  %v340 = vpop.f32.mrb[0].mxu0
  %v341 = vadd.f32 0.0, %v340
  %v342 = vpop.f32.mrb[0].mxu0
  %v343 = vadd.f32 0.0, %v342
  %v344 = vpop.f32.mrb[0].mxu0
  %v345 = vadd.f32 0.0, %v344
  %v346 = vpop.f32.mrb[0].mxu0
  %v347 = vadd.f32 0.0, %v346
  %348 = vmatprep.mubr.bf16.mxu0 0
  %349 = vmatmul.mubr.bf16.gmra.mrb[0].mxu0 %v157
  %v350 = vpop.f32.mrb[0].mxu0
  %v351 = vadd.f32 0.0, %v350
  %v352 = vpop.f32.mrb[0].mxu0
  %v353 = vadd.f32 0.0, %v352
  %v354 = vpop.f32.mrb[0].mxu0
  %v355 = vadd.f32 0.0, %v354
  %v356 = vpop.f32.mrb[0].mxu0
  %v357 = vadd.f32 0.0, %v356
  %358 = vdwg.mxu0
  %v359 = vadd.f32 %v54, %v281
  %v360 = vadd.f32 %v55, %v283
  %v361 = vadd.f32 %v56, %v285
  %v362 = vadd.f32 %v57, %v287
  %v363 = vadd.f32 %v58, %v291
  %v364 = vadd.f32 %v59, %v293
  %v365 = vadd.f32 %v60, %v295
  %v366 = vadd.f32 %v61, %v297
  %v367 = vadd.f32 %v62, %v301
  %v368 = vadd.f32 %v63, %v303
  %v369 = vadd.f32 %v64, %v305
  %v370 = vadd.f32 %v65, %v307
  %v371 = vadd.f32 %v66, %v311
  %v372 = vadd.f32 %v67, %v313
  %v373 = vadd.f32 %v68, %v315
  %v374 = vadd.f32 %v69, %v317
  %v375 = vadd.f32 %v70, %v321
  %v376 = vadd.f32 %v71, %v323
  %v377 = vadd.f32 %v72, %v325
  %v378 = vadd.f32 %v73, %v327
  %v379 = vadd.f32 %v74, %v331
  %v380 = vadd.f32 %v75, %v333
  %v381 = vadd.f32 %v76, %v335
  %v382 = vadd.f32 %v77, %v337
  %v383 = vadd.f32 %v78, %v341
  %v384 = vadd.f32 %v79, %v343
  %v385 = vadd.f32 %v80, %v345
  %v386 = vadd.f32 %v81, %v347
  %v387 = vadd.f32 %v82, %v351
  %v388 = vadd.f32 %v83, %v353
  %v389 = vadd.f32 %v84, %v355
  %v390 = vadd.f32 %v85, %v357
  %391 = vst [vmem:[#allocation2] sm:$0xff] %v359
  %392 = vst [vmem:[#allocation2 + $0x8] sm:$0xff] %v360
  %393 = vst [vmem:[#allocation2 + $0x10] sm:$0xff] %v361
  %394 = vst [vmem:[#allocation2 + $0x18] sm:$0xff] %v362
  %395 = vst [vmem:[#allocation2 + $0x20] sm:$0xff] %v363
  %396 = vst [vmem:[#allocation2 + $0x28] sm:$0xff] %v364
  %397 = vst [vmem:[#allocation2 + $0x30] sm:$0xff] %v365
  %398 = vst [vmem:[#allocation2 + $0x38] sm:$0xff] %v366
  %399 = vst [vmem:[#allocation2 + $0x40] sm:$0xff] %v367
  %400 = vst [vmem:[#allocation2 + $0x48] sm:$0xff] %v368
  %401 = vst [vmem:[#allocation2 + $0x50] sm:$0xff] %v369
  %402 = vst [vmem:[#allocation2 + $0x58] sm:$0xff] %v370
  %403 = vst [vmem:[#allocation2 + $0x60] sm:$0xff] %v371
  %404 = vst [vmem:[#allocation2 + $0x68] sm:$0xff] %v372
  %405 = vst [vmem:[#allocation2 + $0x70] sm:$0xff] %v373
  %406 = vst [vmem:[#allocation2 + $0x78] sm:$0xff] %v374
  %407 = vst [vmem:[#allocation2 + $0x80] sm:$0xff] %v375
  %408 = vst [vmem:[#allocation2 + $0x88] sm:$0xff] %v376
  %409 = vst [vmem:[#allocation2 + $0x90] sm:$0xff] %v377
  %410 = vst [vmem:[#allocation2 + $0x98] sm:$0xff] %v378
  %411 = vst [vmem:[#allocation2 + $0xa0] sm:$0xff] %v379
  %412 = vst [vmem:[#allocation2 + $0xa8] sm:$0xff] %v380
  %413 = vst [vmem:[#allocation2 + $0xb0] sm:$0xff] %v381
  %414 = vst [vmem:[#allocation2 + $0xb8] sm:$0xff] %v382
  %415 = vst [vmem:[#allocation2 + $0xc0] sm:$0xff] %v383
  %416 = vst [vmem:[#allocation2 + $0xc8] sm:$0xff] %v384
  %417 = vst [vmem:[#allocation2 + $0xd0] sm:$0xff] %v385
  %418 = vst [vmem:[#allocation2 + $0xd8] sm:$0xff] %v386
  %419 = vst [vmem:[#allocation2 + $0xe0] sm:$0xff] %v387
  %420 = vst [vmem:[#allocation2 + $0xe8] sm:$0xff] %v388
  %421 = vst [vmem:[#allocation2 + $0xf0] sm:$0xff] %v389
  %422 = vst [vmem:[#allocation2 + $0xf8] sm:$0xff] %v390
  // Predicated region
  $region22: #{_lambda_.37} parent=0 // pred_check
    %p423 = pneg %p18
  $region23: #{_lambda_.37} parent=0 // pred_check_branch
    %425 = sbr.rel (%p423) target = $region25
  $region24: #{_lambda_.37} parent=0 // pred_region
    %v426 = vld [vmem:[#allocation2] sm:$0xff]
    %v427 = vld [vmem:[#allocation2 + $0x8] sm:$0xff]
    %v428 = vld [vmem:[#allocation2 + $0x10] sm:$0xff]
    %v429 = vld [vmem:[#allocation2 + $0x18] sm:$0xff]
    %v430 = vld [vmem:[#allocation2 + $0x20] sm:$0xff]
    %v431 = vld [vmem:[#allocation2 + $0x28] sm:$0xff]
    %v432 = vld [vmem:[#allocation2 + $0x30] sm:$0xff]
    %v433 = vld [vmem:[#allocation2 + $0x38] sm:$0xff]
    %v434 = vld [vmem:[#allocation2 + $0x40] sm:$0xff]
    %v435 = vld [vmem:[#allocation2 + $0x48] sm:$0xff]
    %v436 = vld [vmem:[#allocation2 + $0x50] sm:$0xff]
    %v437 = vld [vmem:[#allocation2 + $0x58] sm:$0xff]
    %v438 = vld [vmem:[#allocation2 + $0x60] sm:$0xff]
    %v439 = vld [vmem:[#allocation2 + $0x68] sm:$0xff]
    %v440 = vld [vmem:[#allocation2 + $0x70] sm:$0xff]
    %v441 = vld [vmem:[#allocation2 + $0x78] sm:$0xff]
    %v442 = vld [vmem:[#allocation2 + $0x80] sm:$0xff]
    %v443 = vld [vmem:[#allocation2 + $0x88] sm:$0xff]
    %v444 = vld [vmem:[#allocation2 + $0x90] sm:$0xff]
    %v445 = vld [vmem:[#allocation2 + $0x98] sm:$0xff]
    %v446 = vld [vmem:[#allocation2 + $0xa0] sm:$0xff]
    %v447 = vld [vmem:[#allocation2 + $0xa8] sm:$0xff]
    %v448 = vld [vmem:[#allocation2 + $0xb0] sm:$0xff]
    %v449 = vld [vmem:[#allocation2 + $0xb8] sm:$0xff]
    %v450 = vld [vmem:[#allocation2 + $0xc0] sm:$0xff]
    %v451 = vld [vmem:[#allocation2 + $0xc8] sm:$0xff]
    %v452 = vld [vmem:[#allocation2 + $0xd0] sm:$0xff]
    %v453 = vld [vmem:[#allocation2 + $0xd8] sm:$0xff]
    %v454 = vld [vmem:[#allocation2 + $0xe0] sm:$0xff]
    %v455 = vld [vmem:[#allocation2 + $0xe8] sm:$0xff]
    %v456 = vld [vmem:[#allocation2 + $0xf0] sm:$0xff]
    %v457 = vld [vmem:[#allocation2 + $0xf8] sm:$0xff]
    %v458 = vld [vmem:[%s2] sm:$0x3]
    %v459 = vld [vmem:[%s3] sm:$0x3]
    %v461 = vlaneseq
    %v462 = vshrl.u32 %v461, 7
    %v463 = vsub.s32 0, %v462
    %v464 = vrot.slane %v458, %v463
    %v465 = vlaneseq
    %v466 = vshrl.u32 %v465, 7
    %v467 = vsub.s32 1, %v466
    %v468 = vrot.slane %v458, %v467
    %v471 = vmul.f32 %v426, %v464
    %v472 = vmul.f32 %v427, %v468
    %v473 = vmul.f32 %v428, %v464
    %v474 = vmul.f32 %v429, %v468
    %v475 = vmul.f32 %v430, %v464
    %v476 = vmul.f32 %v431, %v468
    %v477 = vmul.f32 %v432, %v464
    %v478 = vmul.f32 %v433, %v468
    %v479 = vmul.f32 %v434, %v464
    %v480 = vmul.f32 %v435, %v468
    %v481 = vmul.f32 %v436, %v464
    %v482 = vmul.f32 %v437, %v468
    %v483 = vmul.f32 %v438, %v464
    %v484 = vmul.f32 %v439, %v468
    %v485 = vmul.f32 %v440, %v464
    %v486 = vmul.f32 %v441, %v468
    %v487 = vmul.f32 %v442, %v464
    %v488 = vmul.f32 %v443, %v468
    %v489 = vmul.f32 %v444, %v464
    %v490 = vmul.f32 %v445, %v468
    %v491 = vmul.f32 %v446, %v464
    %v492 = vmul.f32 %v447, %v468
    %v493 = vmul.f32 %v448, %v464
    %v494 = vmul.f32 %v449, %v468
    %v495 = vmul.f32 %v450, %v464
    %v496 = vmul.f32 %v451, %v468
    %v497 = vmul.f32 %v452, %v464
    %v498 = vmul.f32 %v453, %v468
    %v499 = vmul.f32 %v454, %v464
    %v500 = vmul.f32 %v455, %v468
    %v501 = vmul.f32 %v456, %v464
    %v502 = vmul.f32 %v457, %v468
    %v504 = vlaneseq
    %v505 = vshrl.u32 %v504, 7
    %v506 = vsub.s32 0, %v505
    %v507 = vrot.slane %v459, %v506
    %v508 = vlaneseq
    %v509 = vshrl.u32 %v508, 7
    %v510 = vsub.s32 1, %v509
    %v511 = vrot.slane %v459, %v510
    %v514 = vadd.f32 %v471, %v507
    %v515 = vadd.f32 %v472, %v511
    %v516 = vadd.f32 %v473, %v507
    %v517 = vadd.f32 %v474, %v511
    %v518 = vadd.f32 %v475, %v507
    %v519 = vadd.f32 %v476, %v511
    %v520 = vadd.f32 %v477, %v507
    %v521 = vadd.f32 %v478, %v511
    %v522 = vadd.f32 %v479, %v507
    %v523 = vadd.f32 %v480, %v511
    %v524 = vadd.f32 %v481, %v507
    %v525 = vadd.f32 %v482, %v511
    %v526 = vadd.f32 %v483, %v507
    %v527 = vadd.f32 %v484, %v511
    %v528 = vadd.f32 %v485, %v507
    %v529 = vadd.f32 %v486, %v511
    %v530 = vadd.f32 %v487, %v507
    %v531 = vadd.f32 %v488, %v511
    %v532 = vadd.f32 %v489, %v507
    %v533 = vadd.f32 %v490, %v511
    %v534 = vadd.f32 %v491, %v507
    %v535 = vadd.f32 %v492, %v511
    %v536 = vadd.f32 %v493, %v507
    %v537 = vadd.f32 %v494, %v511
    %v538 = vadd.f32 %v495, %v507
    %v539 = vadd.f32 %v496, %v511
    %v540 = vadd.f32 %v497, %v507
    %v541 = vadd.f32 %v498, %v511
    %v542 = vadd.f32 %v499, %v507
    %v543 = vadd.f32 %v500, %v511
    %v544 = vadd.f32 %v501, %v507
    %v545 = vadd.f32 %v502, %v511
    %546 = vst [vmem:[%s4] sm:$0xff] %v514
    %547 = vst [vmem:[%s4 + $0x8] sm:$0xff] %v515
    %548 = vst [vmem:[%s4 + $0x10] sm:$0xff] %v516
    %549 = vst [vmem:[%s4 + $0x18] sm:$0xff] %v517
    %550 = vst [vmem:[%s4 + $0x20] sm:$0xff] %v518
    %551 = vst [vmem:[%s4 + $0x28] sm:$0xff] %v519
    %552 = vst [vmem:[%s4 + $0x30] sm:$0xff] %v520
    %553 = vst [vmem:[%s4 + $0x38] sm:$0xff] %v521
    %554 = vst [vmem:[%s4 + $0x40] sm:$0xff] %v522
    %555 = vst [vmem:[%s4 + $0x48] sm:$0xff] %v523
    %556 = vst [vmem:[%s4 + $0x50] sm:$0xff] %v524
    %557 = vst [vmem:[%s4 + $0x58] sm:$0xff] %v525
    %558 = vst [vmem:[%s4 + $0x60] sm:$0xff] %v526
    %559 = vst [vmem:[%s4 + $0x68] sm:$0xff] %v527
    %560 = vst [vmem:[%s4 + $0x70] sm:$0xff] %v528
    %561 = vst [vmem:[%s4 + $0x78] sm:$0xff] %v529
    %562 = vst [vmem:[%s4 + $0x80] sm:$0xff] %v530
    %563 = vst [vmem:[%s4 + $0x88] sm:$0xff] %v531
    %564 = vst [vmem:[%s4 + $0x90] sm:$0xff] %v532
    %565 = vst [vmem:[%s4 + $0x98] sm:$0xff] %v533
    %566 = vst [vmem:[%s4 + $0xa0] sm:$0xff] %v534
    %567 = vst [vmem:[%s4 + $0xa8] sm:$0xff] %v535
    %568 = vst [vmem:[%s4 + $0xb0] sm:$0xff] %v536
    %569 = vst [vmem:[%s4 + $0xb8] sm:$0xff] %v537
    %570 = vst [vmem:[%s4 + $0xc0] sm:$0xff] %v538
    %571 = vst [vmem:[%s4 + $0xc8] sm:$0xff] %v539
    %572 = vst [vmem:[%s4 + $0xd0] sm:$0xff] %v540
    %573 = vst [vmem:[%s4 + $0xd8] sm:$0xff] %v541
    %574 = vst [vmem:[%s4 + $0xe0] sm:$0xff] %v542
    %575 = vst [vmem:[%s4 + $0xe8] sm:$0xff] %v543
    %576 = vst [vmem:[%s4 + $0xf0] sm:$0xff] %v544
    %577 = vst [vmem:[%s4 + $0xf8] sm:$0xff] %v545
  $region25: #{_lambda_.37} parent=0 // pred_fallthru
    _
  // Predicated region
  $region26: #{_lambda_.37} parent=0 // pred_check
    _
  $region27: #{_lambda_.37} parent=0 // pred_check_branch
    %579 = sbr.rel (0) target = $region29
  $region28: #{_lambda_.37} parent=0 // pred_region
    _
  $region29: #{_lambda_.37} parent=0 // pred_fallthru
    _
  // Predicated region
  $region30: #{_lambda_.37} parent=0 // pred_check
    _
  $region31: #{_lambda_.37} parent=0 // pred_check_branch
    %581 = sbr.rel (0) target = $region33
  $region32: #{_lambda_.37} parent=0 // pred_region
    _
  $region33: #{_lambda_.37} parent=0 // pred_fallthru
    _

// kernel: _lambda_.40
$region0: #{_lambda_.40}
  #allocation0 [shape = 'u32[]', space=smem, size = 0x4, offset = 0x4, fixed_abs, tag = 'smem constant byte address 0x4 - core index']
  #allocation1 [shape = 'u32[144,128]{1,0:T(1,128)}', space=vmem, size = 0x12000, scoped, tag = 'internal scratch']
  #allocation2 [shape = 'f32[128,256]{1,0:T(8,128)}', space=vmem, size = 0x20000, scoped, tag = 'scratch operand']
  %s0 = inlined_call_operand.vmem [shape: bf16[128,128], index: 0, kind: input, shape index: {}]
  %s1 = inlined_call_operand.vmem [shape: bf16[128,256], index: 1, kind: input, shape index: {}]
  %s2 = inlined_call_operand.vmem [shape: f32[1,256], index: 2, kind: input, shape index: {}]
  %s3 = inlined_call_operand.vmem [shape: f32[1,256], index: 3, kind: input, shape index: {}]
  %s4 = inlined_call_operand.vmem [shape: f32[128,256], index: 4, kind: input, shape index: {}]
  %s5 = inlined_call_operand.vmem [shape: f32[128,256], index: 5, kind: output, shape index: {}]
  %s6 = sld [smem:[#allocation0]]
  $region38: #{_lambda_.40} parent=0
    _
  %s8 = ssub.s32 1, %s6
  %s9 = scalar_select 0, %s8, %s6
  // Predicated region
  $region2: #{_lambda_.40} parent=0 // pred_check
    _
  $region3: #{_lambda_.40} parent=0 // pred_check_branch
    %11 = sbr.rel (0) target = $region5
  $region4: #{_lambda_.40} parent=0 // pred_region
    _
  $region5: #{_lambda_.40} parent=0 // pred_fallthru
    _
  // Predicated region
  $region6: #{_lambda_.40} parent=0 // pred_check
    _
  $region7: #{_lambda_.40} parent=0 // pred_check_branch
    %13 = sbr.rel (0) target = $region9
  $region8: #{_lambda_.40} parent=0 // pred_region
    _
  $region9: #{_lambda_.40} parent=0 // pred_fallthru
    _
  // Predicated region
  $region10: #{_lambda_.40} parent=0 // pred_check
    _
  $region11: #{_lambda_.40} parent=0 // pred_check_branch
    %15 = sbr.rel (0) target = $region13
  $region12: #{_lambda_.40} parent=0 // pred_region
    _
  $region13: #{_lambda_.40} parent=0 // pred_fallthru
    _
  // Predicated region
  $region14: #{_lambda_.40} parent=0 // pred_check
    _
  $region15: #{_lambda_.40} parent=0 // pred_check_branch
    %17 = sbr.rel (0) target = $region17
  $region16: #{_lambda_.40} parent=0 // pred_region
    _
  $region17: #{_lambda_.40} parent=0 // pred_fallthru
    _
  // Predicated region
  $region18: #{_lambda_.40} parent=0 // pred_check
    _
  $region19: #{_lambda_.40} parent=0 // pred_check_branch
    %19 = sbr.rel (0) target = $region21
  $region20: #{_lambda_.40} parent=0 // pred_region
    _
  $region21: #{_lambda_.40} parent=0 // pred_fallthru
    _
  %p21 = scmp.eq.s32.totalorder 0, 0
  // Predicated region
  $region22: #{_lambda_.40} parent=0 // pred_check
    %p22 = pneg %p21
  $region23: #{_lambda_.40} parent=0 // pred_check_branch
    %24 = sbr.rel (%p22) target = $region25
  $region24: #{_lambda_.40} parent=0 // pred_region
    %25 = vst [vmem:[#allocation2] sm:$0xff] 0.0
    %26 = vst [vmem:[#allocation2 + $0x8] sm:$0xff] 0.0
    %27 = vst [vmem:[#allocation2 + $0x10] sm:$0xff] 0.0
    %28 = vst [vmem:[#allocation2 + $0x18] sm:$0xff] 0.0
    %29 = vst [vmem:[#allocation2 + $0x20] sm:$0xff] 0.0
    %30 = vst [vmem:[#allocation2 + $0x28] sm:$0xff] 0.0
    %31 = vst [vmem:[#allocation2 + $0x30] sm:$0xff] 0.0
    %32 = vst [vmem:[#allocation2 + $0x38] sm:$0xff] 0.0
    %33 = vst [vmem:[#allocation2 + $0x40] sm:$0xff] 0.0
    %34 = vst [vmem:[#allocation2 + $0x48] sm:$0xff] 0.0
    %35 = vst [vmem:[#allocation2 + $0x50] sm:$0xff] 0.0
    %36 = vst [vmem:[#allocation2 + $0x58] sm:$0xff] 0.0
    %37 = vst [vmem:[#allocation2 + $0x60] sm:$0xff] 0.0
    %38 = vst [vmem:[#allocation2 + $0x68] sm:$0xff] 0.0
    %39 = vst [vmem:[#allocation2 + $0x70] sm:$0xff] 0.0
    %40 = vst [vmem:[#allocation2 + $0x78] sm:$0xff] 0.0
    %41 = vst [vmem:[#allocation2 + $0x80] sm:$0xff] 0.0
    %42 = vst [vmem:[#allocation2 + $0x88] sm:$0xff] 0.0
    %43 = vst [vmem:[#allocation2 + $0x90] sm:$0xff] 0.0
    %44 = vst [vmem:[#allocation2 + $0x98] sm:$0xff] 0.0
    %45 = vst [vmem:[#allocation2 + $0xa0] sm:$0xff] 0.0
    %46 = vst [vmem:[#allocation2 + $0xa8] sm:$0xff] 0.0
    %47 = vst [vmem:[#allocation2 + $0xb0] sm:$0xff] 0.0
    %48 = vst [vmem:[#allocation2 + $0xb8] sm:$0xff] 0.0
    %49 = vst [vmem:[#allocation2 + $0xc0] sm:$0xff] 0.0
    %50 = vst [vmem:[#allocation2 + $0xc8] sm:$0xff] 0.0
    %51 = vst [vmem:[#allocation2 + $0xd0] sm:$0xff] 0.0
    %52 = vst [vmem:[#allocation2 + $0xd8] sm:$0xff] 0.0
    %53 = vst [vmem:[#allocation2 + $0xe0] sm:$0xff] 0.0
    %54 = vst [vmem:[#allocation2 + $0xe8] sm:$0xff] 0.0
    %55 = vst [vmem:[#allocation2 + $0xf0] sm:$0xff] 0.0
    %56 = vst [vmem:[#allocation2 + $0xf8] sm:$0xff] 0.0
  $region25: #{_lambda_.40} parent=0 // pred_fallthru
    _
  %v57 = vld [vmem:[#allocation2] sm:$0xff]
  %v58 = vld [vmem:[#allocation2 + $0x8] sm:$0xff]
  %v59 = vld [vmem:[#allocation2 + $0x10] sm:$0xff]
  %v60 = vld [vmem:[#allocation2 + $0x18] sm:$0xff]
  %v61 = vld [vmem:[#allocation2 + $0x20] sm:$0xff]
  %v62 = vld [vmem:[#allocation2 + $0x28] sm:$0xff]
  %v63 = vld [vmem:[#allocation2 + $0x30] sm:$0xff]
  %v64 = vld [vmem:[#allocation2 + $0x38] sm:$0xff]
  %v65 = vld [vmem:[#allocation2 + $0x40] sm:$0xff]
  %v66 = vld [vmem:[#allocation2 + $0x48] sm:$0xff]
  %v67 = vld [vmem:[#allocation2 + $0x50] sm:$0xff]
  %v68 = vld [vmem:[#allocation2 + $0x58] sm:$0xff]
  %v69 = vld [vmem:[#allocation2 + $0x60] sm:$0xff]
  %v70 = vld [vmem:[#allocation2 + $0x68] sm:$0xff]
  %v71 = vld [vmem:[#allocation2 + $0x70] sm:$0xff]
  %v72 = vld [vmem:[#allocation2 + $0x78] sm:$0xff]
  %v73 = vld [vmem:[#allocation2 + $0x80] sm:$0xff]
  %v74 = vld [vmem:[#allocation2 + $0x88] sm:$0xff]
  %v75 = vld [vmem:[#allocation2 + $0x90] sm:$0xff]
  %v76 = vld [vmem:[#allocation2 + $0x98] sm:$0xff]
  %v77 = vld [vmem:[#allocation2 + $0xa0] sm:$0xff]
  %v78 = vld [vmem:[#allocation2 + $0xa8] sm:$0xff]
  %v79 = vld [vmem:[#allocation2 + $0xb0] sm:$0xff]
  %v80 = vld [vmem:[#allocation2 + $0xb8] sm:$0xff]
  %v81 = vld [vmem:[#allocation2 + $0xc0] sm:$0xff]
  %v82 = vld [vmem:[#allocation2 + $0xc8] sm:$0xff]
  %v83 = vld [vmem:[#allocation2 + $0xd0] sm:$0xff]
  %v84 = vld [vmem:[#allocation2 + $0xd8] sm:$0xff]
  %v85 = vld [vmem:[#allocation2 + $0xe0] sm:$0xff]
  %v86 = vld [vmem:[#allocation2 + $0xe8] sm:$0xff]
  %v87 = vld [vmem:[#allocation2 + $0xf0] sm:$0xff]
  %v88 = vld [vmem:[#allocation2 + $0xf8] sm:$0xff]
  %v89 = vld [vmem:[%s0] sm:$0xf]
  %v90 = vld [vmem:[%s0 + $0x4] sm:$0xf]
  %v91 = vld [vmem:[%s0 + $0x8] sm:$0xf]
  %v92 = vld [vmem:[%s0 + $0xc] sm:$0xf]
  %v93 = vld [vmem:[%s0 + $0x10] sm:$0xf]
  %v94 = vld [vmem:[%s0 + $0x14] sm:$0xf]
  %v95 = vld [vmem:[%s0 + $0x18] sm:$0xf]
  %v96 = vld [vmem:[%s0 + $0x1c] sm:$0xf]
  %v97 = vld [vmem:[%s0 + $0x20] sm:$0xf]
  %v98 = vld [vmem:[%s0 + $0x24] sm:$0xf]
  %v99 = vld [vmem:[%s0 + $0x28] sm:$0xf]
  %v100 = vld [vmem:[%s0 + $0x2c] sm:$0xf]
  %v101 = vld [vmem:[%s0 + $0x30] sm:$0xf]
  %v102 = vld [vmem:[%s0 + $0x34] sm:$0xf]
  %v103 = vld [vmem:[%s0 + $0x38] sm:$0xf]
  %v104 = vld [vmem:[%s0 + $0x3c] sm:$0xf]
  %v105 = vld [vmem:[%s1] sm:$0xff]
  %v106 = vld [vmem:[%s1 + $0x8] sm:$0xff]
  %v107 = vld [vmem:[%s1 + $0x10] sm:$0xff]
  %v108 = vld [vmem:[%s1 + $0x18] sm:$0xff]
  %v109 = vld [vmem:[%s1 + $0x20] sm:$0xff]
  %v110 = vld [vmem:[%s1 + $0x28] sm:$0xff]
  %v111 = vld [vmem:[%s1 + $0x30] sm:$0xff]
  %v112 = vld [vmem:[%s1 + $0x38] sm:$0xff]
  %v113 = vld [vmem:[%s1 + $0x40] sm:$0xff]
  %v114 = vld [vmem:[%s1 + $0x48] sm:$0xff]
  %v115 = vld [vmem:[%s1 + $0x50] sm:$0xff]
  %v116 = vld [vmem:[%s1 + $0x58] sm:$0xff]
  %v117 = vld [vmem:[%s1 + $0x60] sm:$0xff]
  %v118 = vld [vmem:[%s1 + $0x68] sm:$0xff]
  %v119 = vld [vmem:[%s1 + $0x70] sm:$0xff]
  %v120 = vld [vmem:[%s1 + $0x78] sm:$0xff]
  %v137 = vunpack.c.l.b16 %v89
  %v138 = vunpack.c.l.b16 %v90
  %v139 = vunpack.c.l.b16 %v91
  %v140 = vunpack.c.l.b16 %v92
  %v141 = vunpack.c.l.b16 %v93
  %v142 = vunpack.c.l.b16 %v94
  %v143 = vunpack.c.l.b16 %v95
  %v144 = vunpack.c.l.b16 %v96
  %v145 = vunpack.c.l.b16 %v97
  %v146 = vunpack.c.l.b16 %v98
  %v147 = vunpack.c.l.b16 %v99
  %v148 = vunpack.c.l.b16 %v100
  %v149 = vunpack.c.l.b16 %v101
  %v150 = vunpack.c.l.b16 %v102
  %v151 = vunpack.c.l.b16 %v103
  %v152 = vunpack.c.l.b16 %v104
  %v153 = vpack.c.b16 %v138, %v137
  %v154 = vpack.c.b16 %v140, %v139
  %v155 = vpack.c.b16 %v142, %v141
  %v156 = vpack.c.b16 %v144, %v143
  %v157 = vpack.c.b16 %v146, %v145
  %v158 = vpack.c.b16 %v148, %v147
  %v159 = vpack.c.b16 %v150, %v149
  %v160 = vpack.c.b16 %v152, %v151
  %v185 = vunpack.c.l.b16 %v105
  %v186 = vunpack.c.h.b16 %v105
  %v187 = vunpack.c.l.b16 %v106
  %v188 = vunpack.c.h.b16 %v106
  %v189 = vunpack.c.l.b16 %v107
  %v190 = vunpack.c.h.b16 %v107
  %v191 = vunpack.c.l.b16 %v108
  %v192 = vunpack.c.h.b16 %v108
  %v193 = vunpack.c.l.b16 %v109
  %v194 = vunpack.c.h.b16 %v109
  %v195 = vunpack.c.l.b16 %v110
  %v196 = vunpack.c.h.b16 %v110
  %v197 = vunpack.c.l.b16 %v111
  %v198 = vunpack.c.h.b16 %v111
  %v199 = vunpack.c.l.b16 %v112
  %v200 = vunpack.c.h.b16 %v112
  %v201 = vunpack.c.l.b16 %v113
  %v202 = vunpack.c.h.b16 %v113
  %v203 = vunpack.c.l.b16 %v114
  %v204 = vunpack.c.h.b16 %v114
  %v205 = vunpack.c.l.b16 %v115
  %v206 = vunpack.c.h.b16 %v115
  %v207 = vunpack.c.l.b16 %v116
  %v208 = vunpack.c.h.b16 %v116
  %v209 = vunpack.c.l.b16 %v117
  %v210 = vunpack.c.h.b16 %v117
  %v211 = vunpack.c.l.b16 %v118
  %v212 = vunpack.c.h.b16 %v118
  %v213 = vunpack.c.l.b16 %v119
  %v214 = vunpack.c.h.b16 %v119
  %v215 = vunpack.c.l.b16 %v120
  %v216 = vunpack.c.h.b16 %v120
  %v217 = vpack.c.b16 %v187, %v185
  %v218 = vpack.c.b16 %v188, %v186
  %v219 = vpack.c.b16 %v191, %v189
  %v220 = vpack.c.b16 %v192, %v190
  %v221 = vpack.c.b16 %v195, %v193
  %v222 = vpack.c.b16 %v196, %v194
  %v223 = vpack.c.b16 %v199, %v197
  %v224 = vpack.c.b16 %v200, %v198
  %v225 = vpack.c.b16 %v203, %v201
  %v226 = vpack.c.b16 %v204, %v202
  %v227 = vpack.c.b16 %v207, %v205
  %v228 = vpack.c.b16 %v208, %v206
  %v229 = vpack.c.b16 %v211, %v209
  %v230 = vpack.c.b16 %v212, %v210
  %v231 = vpack.c.b16 %v215, %v213
  %v232 = vpack.c.b16 %v216, %v214
  %249 = vmatprep.subr.bf16.mxu0 %v218
  %250 = vmatpush1.bf16.msra.mxu0 %v217
  %251 = vmatprep.subr.bf16.mxu0 %v220
  %252 = vmatpush1.bf16.msra.mxu0 %v219
  %253 = vmatprep.subr.bf16.mxu0 %v222
  %254 = vmatpush1.bf16.msra.mxu0 %v221
  %255 = vmatprep.subr.bf16.mxu0 %v224
  %256 = vmatpush1.bf16.msra.mxu0 %v223
  %257 = vmatprep.subr.bf16.mxu0 %v226
  %258 = vmatpush1.bf16.msra.mxu0 %v225
  %259 = vmatprep.subr.bf16.mxu0 %v228
  %260 = vmatpush1.bf16.msra.mxu0 %v227
  %261 = vmatprep.subr.bf16.mxu0 %v230
  %262 = vmatpush1.bf16.msra.mxu0 %v229
  %263 = vmatprep.subr.bf16.mxu0 %v232
  %264 = vmatpush1.bf16.msra.mxu0 %v231
  %265 = vmatprep.subr.bf16.mxu0 0
  %266 = vmatpush1.bf16.msra.mxu0 0
  %267 = vmatprep.subr.bf16.mxu0 0
  %268 = vmatpush1.bf16.msra.mxu0 0
  %269 = vmatprep.subr.bf16.mxu0 0
  %270 = vmatpush1.bf16.msra.mxu0 0
  %271 = vmatprep.subr.bf16.mxu0 0
  %272 = vmatpush1.bf16.msra.mxu0 0
  %273 = vmatprep.subr.bf16.mxu0 0
  %274 = vmatpush1.bf16.msra.mxu0 0
  %275 = vmatprep.subr.bf16.mxu0 0
  %276 = vmatpush1.bf16.msra.mxu0 0
  %277 = vmatprep.subr.bf16.mxu0 0
  %278 = vmatpush1.bf16.msra.mxu0 0
  %279 = vmatprep.subr.bf16.mxu0 0
  %280 = vmatpush1.bf16.msra.mxu0 0
  %281 = vmatprep.mubr.bf16.mxu0 0
  %282 = vmatmul.mubr.bf16.gmra.mrb[0].mxu0 %v153
  %v283 = vpop.f32.mrb[0].mxu0
  %v284 = vadd.f32 0.0, %v283
  %v285 = vpop.f32.mrb[0].mxu0
  %v286 = vadd.f32 0.0, %v285
  %v287 = vpop.f32.mrb[0].mxu0
  %v288 = vadd.f32 0.0, %v287
  %v289 = vpop.f32.mrb[0].mxu0
  %v290 = vadd.f32 0.0, %v289
  %291 = vmatprep.mubr.bf16.mxu0 0
  %292 = vmatmul.mubr.bf16.gmra.mrb[0].mxu0 %v154
  %v293 = vpop.f32.mrb[0].mxu0
  %v294 = vadd.f32 0.0, %v293
  %v295 = vpop.f32.mrb[0].mxu0
  %v296 = vadd.f32 0.0, %v295
  %v297 = vpop.f32.mrb[0].mxu0
  %v298 = vadd.f32 0.0, %v297
  %v299 = vpop.f32.mrb[0].mxu0
  %v300 = vadd.f32 0.0, %v299
  %301 = vmatprep.mubr.bf16.mxu0 0
  %302 = vmatmul.mubr.bf16.gmra.mrb[0].mxu0 %v155
  %v303 = vpop.f32.mrb[0].mxu0
  %v304 = vadd.f32 0.0, %v303
  %v305 = vpop.f32.mrb[0].mxu0
  %v306 = vadd.f32 0.0, %v305
  %v307 = vpop.f32.mrb[0].mxu0
  %v308 = vadd.f32 0.0, %v307
  %v309 = vpop.f32.mrb[0].mxu0
  %v310 = vadd.f32 0.0, %v309
  %311 = vmatprep.mubr.bf16.mxu0 0
  %312 = vmatmul.mubr.bf16.gmra.mrb[0].mxu0 %v156
  %v313 = vpop.f32.mrb[0].mxu0
  %v314 = vadd.f32 0.0, %v313
  %v315 = vpop.f32.mrb[0].mxu0
  %v316 = vadd.f32 0.0, %v315
  %v317 = vpop.f32.mrb[0].mxu0
  %v318 = vadd.f32 0.0, %v317
  %v319 = vpop.f32.mrb[0].mxu0
  %v320 = vadd.f32 0.0, %v319
  %321 = vmatprep.mubr.bf16.mxu0 0
  %322 = vmatmul.mubr.bf16.gmra.mrb[0].mxu0 %v157
  %v323 = vpop.f32.mrb[0].mxu0
  %v324 = vadd.f32 0.0, %v323
  %v325 = vpop.f32.mrb[0].mxu0
  %v326 = vadd.f32 0.0, %v325
  %v327 = vpop.f32.mrb[0].mxu0
  %v328 = vadd.f32 0.0, %v327
  %v329 = vpop.f32.mrb[0].mxu0
  %v330 = vadd.f32 0.0, %v329
  %331 = vmatprep.mubr.bf16.mxu0 0
  %332 = vmatmul.mubr.bf16.gmra.mrb[0].mxu0 %v158
  %v333 = vpop.f32.mrb[0].mxu0
  %v334 = vadd.f32 0.0, %v333
  %v335 = vpop.f32.mrb[0].mxu0
  %v336 = vadd.f32 0.0, %v335
  %v337 = vpop.f32.mrb[0].mxu0
  %v338 = vadd.f32 0.0, %v337
  %v339 = vpop.f32.mrb[0].mxu0
  %v340 = vadd.f32 0.0, %v339
  %341 = vmatprep.mubr.bf16.mxu0 0
  %342 = vmatmul.mubr.bf16.gmra.mrb[0].mxu0 %v159
  %v343 = vpop.f32.mrb[0].mxu0
  %v344 = vadd.f32 0.0, %v343
  %v345 = vpop.f32.mrb[0].mxu0
  %v346 = vadd.f32 0.0, %v345
  %v347 = vpop.f32.mrb[0].mxu0
  %v348 = vadd.f32 0.0, %v347
  %v349 = vpop.f32.mrb[0].mxu0
  %v350 = vadd.f32 0.0, %v349
  %351 = vmatprep.mubr.bf16.mxu0 0
  %352 = vmatmul.mubr.bf16.gmra.mrb[0].mxu0 %v160
  %v353 = vpop.f32.mrb[0].mxu0
  %v354 = vadd.f32 0.0, %v353
  %v355 = vpop.f32.mrb[0].mxu0
  %v356 = vadd.f32 0.0, %v355
  %v357 = vpop.f32.mrb[0].mxu0
  %v358 = vadd.f32 0.0, %v357
  %v359 = vpop.f32.mrb[0].mxu0
  %v360 = vadd.f32 0.0, %v359
  %361 = vdwg.mxu0
  %v362 = vadd.f32 %v57, %v284
  %v363 = vadd.f32 %v58, %v286
  %v364 = vadd.f32 %v59, %v288
  %v365 = vadd.f32 %v60, %v290
  %v366 = vadd.f32 %v61, %v294
  %v367 = vadd.f32 %v62, %v296
  %v368 = vadd.f32 %v63, %v298
  %v369 = vadd.f32 %v64, %v300
  %v370 = vadd.f32 %v65, %v304
  %v371 = vadd.f32 %v66, %v306
  %v372 = vadd.f32 %v67, %v308
  %v373 = vadd.f32 %v68, %v310
  %v374 = vadd.f32 %v69, %v314
  %v375 = vadd.f32 %v70, %v316
  %v376 = vadd.f32 %v71, %v318
  %v377 = vadd.f32 %v72, %v320
  %v378 = vadd.f32 %v73, %v324
  %v379 = vadd.f32 %v74, %v326
  %v380 = vadd.f32 %v75, %v328
  %v381 = vadd.f32 %v76, %v330
  %v382 = vadd.f32 %v77, %v334
  %v383 = vadd.f32 %v78, %v336
  %v384 = vadd.f32 %v79, %v338
  %v385 = vadd.f32 %v80, %v340
  %v386 = vadd.f32 %v81, %v344
  %v387 = vadd.f32 %v82, %v346
  %v388 = vadd.f32 %v83, %v348
  %v389 = vadd.f32 %v84, %v350
  %v390 = vadd.f32 %v85, %v354
  %v391 = vadd.f32 %v86, %v356
  %v392 = vadd.f32 %v87, %v358
  %v393 = vadd.f32 %v88, %v360
  %394 = vst [vmem:[#allocation2] sm:$0xff] %v362
  %395 = vst [vmem:[#allocation2 + $0x8] sm:$0xff] %v363
  %396 = vst [vmem:[#allocation2 + $0x10] sm:$0xff] %v364
  %397 = vst [vmem:[#allocation2 + $0x18] sm:$0xff] %v365
  %398 = vst [vmem:[#allocation2 + $0x20] sm:$0xff] %v366
  %399 = vst [vmem:[#allocation2 + $0x28] sm:$0xff] %v367
  %400 = vst [vmem:[#allocation2 + $0x30] sm:$0xff] %v368
  %401 = vst [vmem:[#allocation2 + $0x38] sm:$0xff] %v369
  %402 = vst [vmem:[#allocation2 + $0x40] sm:$0xff] %v370
  %403 = vst [vmem:[#allocation2 + $0x48] sm:$0xff] %v371
  %404 = vst [vmem:[#allocation2 + $0x50] sm:$0xff] %v372
  %405 = vst [vmem:[#allocation2 + $0x58] sm:$0xff] %v373
  %406 = vst [vmem:[#allocation2 + $0x60] sm:$0xff] %v374
  %407 = vst [vmem:[#allocation2 + $0x68] sm:$0xff] %v375
  %408 = vst [vmem:[#allocation2 + $0x70] sm:$0xff] %v376
  %409 = vst [vmem:[#allocation2 + $0x78] sm:$0xff] %v377
  %410 = vst [vmem:[#allocation2 + $0x80] sm:$0xff] %v378
  %411 = vst [vmem:[#allocation2 + $0x88] sm:$0xff] %v379
  %412 = vst [vmem:[#allocation2 + $0x90] sm:$0xff] %v380
  %413 = vst [vmem:[#allocation2 + $0x98] sm:$0xff] %v381
  %414 = vst [vmem:[#allocation2 + $0xa0] sm:$0xff] %v382
  %415 = vst [vmem:[#allocation2 + $0xa8] sm:$0xff] %v383
  %416 = vst [vmem:[#allocation2 + $0xb0] sm:$0xff] %v384
  %417 = vst [vmem:[#allocation2 + $0xb8] sm:$0xff] %v385
  %418 = vst [vmem:[#allocation2 + $0xc0] sm:$0xff] %v386
  %419 = vst [vmem:[#allocation2 + $0xc8] sm:$0xff] %v387
  %420 = vst [vmem:[#allocation2 + $0xd0] sm:$0xff] %v388
  %421 = vst [vmem:[#allocation2 + $0xd8] sm:$0xff] %v389
  %422 = vst [vmem:[#allocation2 + $0xe0] sm:$0xff] %v390
  %423 = vst [vmem:[#allocation2 + $0xe8] sm:$0xff] %v391
  %424 = vst [vmem:[#allocation2 + $0xf0] sm:$0xff] %v392
  %425 = vst [vmem:[#allocation2 + $0xf8] sm:$0xff] %v393
  // Predicated region
  $region26: #{_lambda_.40} parent=0 // pred_check
    %p426 = pneg %p21
  $region27: #{_lambda_.40} parent=0 // pred_check_branch
    %428 = sbr.rel (%p426) target = $region29
  $region28: #{_lambda_.40} parent=0 // pred_region
    %v429 = vld [vmem:[#allocation2] sm:$0xff]
    %v430 = vld [vmem:[#allocation2 + $0x8] sm:$0xff]
    %v431 = vld [vmem:[#allocation2 + $0x10] sm:$0xff]
    %v432 = vld [vmem:[#allocation2 + $0x18] sm:$0xff]
    %v433 = vld [vmem:[#allocation2 + $0x20] sm:$0xff]
    %v434 = vld [vmem:[#allocation2 + $0x28] sm:$0xff]
    %v435 = vld [vmem:[#allocation2 + $0x30] sm:$0xff]
    %v436 = vld [vmem:[#allocation2 + $0x38] sm:$0xff]
    %v437 = vld [vmem:[#allocation2 + $0x40] sm:$0xff]
    %v438 = vld [vmem:[#allocation2 + $0x48] sm:$0xff]
    %v439 = vld [vmem:[#allocation2 + $0x50] sm:$0xff]
    %v440 = vld [vmem:[#allocation2 + $0x58] sm:$0xff]
    %v441 = vld [vmem:[#allocation2 + $0x60] sm:$0xff]
    %v442 = vld [vmem:[#allocation2 + $0x68] sm:$0xff]
    %v443 = vld [vmem:[#allocation2 + $0x70] sm:$0xff]
    %v444 = vld [vmem:[#allocation2 + $0x78] sm:$0xff]
    %v445 = vld [vmem:[#allocation2 + $0x80] sm:$0xff]
    %v446 = vld [vmem:[#allocation2 + $0x88] sm:$0xff]
    %v447 = vld [vmem:[#allocation2 + $0x90] sm:$0xff]
    %v448 = vld [vmem:[#allocation2 + $0x98] sm:$0xff]
    %v449 = vld [vmem:[#allocation2 + $0xa0] sm:$0xff]
    %v450 = vld [vmem:[#allocation2 + $0xa8] sm:$0xff]
    %v451 = vld [vmem:[#allocation2 + $0xb0] sm:$0xff]
    %v452 = vld [vmem:[#allocation2 + $0xb8] sm:$0xff]
    %v453 = vld [vmem:[#allocation2 + $0xc0] sm:$0xff]
    %v454 = vld [vmem:[#allocation2 + $0xc8] sm:$0xff]
    %v455 = vld [vmem:[#allocation2 + $0xd0] sm:$0xff]
    %v456 = vld [vmem:[#allocation2 + $0xd8] sm:$0xff]
    %v457 = vld [vmem:[#allocation2 + $0xe0] sm:$0xff]
    %v458 = vld [vmem:[#allocation2 + $0xe8] sm:$0xff]
    %v459 = vld [vmem:[#allocation2 + $0xf0] sm:$0xff]
    %v460 = vld [vmem:[#allocation2 + $0xf8] sm:$0xff]
    %v461 = vld [vmem:[%s2] sm:$0x3]
    %v462 = vld [vmem:[%s3] sm:$0x3]
    %v463 = vld [vmem:[%s4] sm:$0xff]
    %v464 = vld [vmem:[%s4 + $0x8] sm:$0xff]
    %v465 = vld [vmem:[%s4 + $0x10] sm:$0xff]
    %v466 = vld [vmem:[%s4 + $0x18] sm:$0xff]
    %v467 = vld [vmem:[%s4 + $0x20] sm:$0xff]
    %v468 = vld [vmem:[%s4 + $0x28] sm:$0xff]
    %v469 = vld [vmem:[%s4 + $0x30] sm:$0xff]
    %v470 = vld [vmem:[%s4 + $0x38] sm:$0xff]
    %v471 = vld [vmem:[%s4 + $0x40] sm:$0xff]
    %v472 = vld [vmem:[%s4 + $0x48] sm:$0xff]
    %v473 = vld [vmem:[%s4 + $0x50] sm:$0xff]
    %v474 = vld [vmem:[%s4 + $0x58] sm:$0xff]
    %v475 = vld [vmem:[%s4 + $0x60] sm:$0xff]
    %v476 = vld [vmem:[%s4 + $0x68] sm:$0xff]
    %v477 = vld [vmem:[%s4 + $0x70] sm:$0xff]
    %v478 = vld [vmem:[%s4 + $0x78] sm:$0xff]
    %v479 = vld [vmem:[%s4 + $0x80] sm:$0xff]
    %v480 = vld [vmem:[%s4 + $0x88] sm:$0xff]
    %v481 = vld [vmem:[%s4 + $0x90] sm:$0xff]
    %v482 = vld [vmem:[%s4 + $0x98] sm:$0xff]
    %v483 = vld [vmem:[%s4 + $0xa0] sm:$0xff]
    %v484 = vld [vmem:[%s4 + $0xa8] sm:$0xff]
    %v485 = vld [vmem:[%s4 + $0xb0] sm:$0xff]
    %v486 = vld [vmem:[%s4 + $0xb8] sm:$0xff]
    %v487 = vld [vmem:[%s4 + $0xc0] sm:$0xff]
    %v488 = vld [vmem:[%s4 + $0xc8] sm:$0xff]
    %v489 = vld [vmem:[%s4 + $0xd0] sm:$0xff]
    %v490 = vld [vmem:[%s4 + $0xd8] sm:$0xff]
    %v491 = vld [vmem:[%s4 + $0xe0] sm:$0xff]
    %v492 = vld [vmem:[%s4 + $0xe8] sm:$0xff]
    %v493 = vld [vmem:[%s4 + $0xf0] sm:$0xff]
    %v494 = vld [vmem:[%s4 + $0xf8] sm:$0xff]
    %v496 = vlaneseq
    %v497 = vshrl.u32 %v496, 7
    %v498 = vsub.s32 0, %v497
    %v499 = vrot.slane %v461, %v498
    %v500 = vlaneseq
    %v501 = vshrl.u32 %v500, 7
    %v502 = vsub.s32 1, %v501
    %v503 = vrot.slane %v461, %v502
    %v506 = vmul.f32 %v429, %v499
    %v507 = vmul.f32 %v430, %v503
    %v508 = vmul.f32 %v431, %v499
    %v509 = vmul.f32 %v432, %v503
    %v510 = vmul.f32 %v433, %v499
    %v511 = vmul.f32 %v434, %v503
    %v512 = vmul.f32 %v435, %v499
    %v513 = vmul.f32 %v436, %v503
    %v514 = vmul.f32 %v437, %v499
    %v515 = vmul.f32 %v438, %v503
    %v516 = vmul.f32 %v439, %v499
    %v517 = vmul.f32 %v440, %v503
    %v518 = vmul.f32 %v441, %v499
    %v519 = vmul.f32 %v442, %v503
    %v520 = vmul.f32 %v443, %v499
    %v521 = vmul.f32 %v444, %v503
    %v522 = vmul.f32 %v445, %v499
    %v523 = vmul.f32 %v446, %v503
    %v524 = vmul.f32 %v447, %v499
    %v525 = vmul.f32 %v448, %v503
    %v526 = vmul.f32 %v449, %v499
    %v527 = vmul.f32 %v450, %v503
    %v528 = vmul.f32 %v451, %v499
    %v529 = vmul.f32 %v452, %v503
    %v530 = vmul.f32 %v453, %v499
    %v531 = vmul.f32 %v454, %v503
    %v532 = vmul.f32 %v455, %v499
    %v533 = vmul.f32 %v456, %v503
    %v534 = vmul.f32 %v457, %v499
    %v535 = vmul.f32 %v458, %v503
    %v536 = vmul.f32 %v459, %v499
    %v537 = vmul.f32 %v460, %v503
    %v539 = vlaneseq
    %v540 = vshrl.u32 %v539, 7
    %v541 = vsub.s32 0, %v540
    %v542 = vrot.slane %v462, %v541
    %v543 = vlaneseq
    %v544 = vshrl.u32 %v543, 7
    %v545 = vsub.s32 1, %v544
    %v546 = vrot.slane %v462, %v545
    %v549 = vadd.f32 %v506, %v542
    %v550 = vadd.f32 %v507, %v546
    %v551 = vadd.f32 %v508, %v542
    %v552 = vadd.f32 %v509, %v546
    %v553 = vadd.f32 %v510, %v542
    %v554 = vadd.f32 %v511, %v546
    %v555 = vadd.f32 %v512, %v542
    %v556 = vadd.f32 %v513, %v546
    %v557 = vadd.f32 %v514, %v542
    %v558 = vadd.f32 %v515, %v546
    %v559 = vadd.f32 %v516, %v542
    %v560 = vadd.f32 %v517, %v546
    %v561 = vadd.f32 %v518, %v542
    %v562 = vadd.f32 %v519, %v546
    %v563 = vadd.f32 %v520, %v542
    %v564 = vadd.f32 %v521, %v546
    %v565 = vadd.f32 %v522, %v542
    %v566 = vadd.f32 %v523, %v546
    %v567 = vadd.f32 %v524, %v542
    %v568 = vadd.f32 %v525, %v546
    %v569 = vadd.f32 %v526, %v542
    %v570 = vadd.f32 %v527, %v546
    %v571 = vadd.f32 %v528, %v542
    %v572 = vadd.f32 %v529, %v546
    %v573 = vadd.f32 %v530, %v542
    %v574 = vadd.f32 %v531, %v546
    %v575 = vadd.f32 %v532, %v542
    %v576 = vadd.f32 %v533, %v546
    %v577 = vadd.f32 %v534, %v542
    %v578 = vadd.f32 %v535, %v546
    %v579 = vadd.f32 %v536, %v542
    %v580 = vadd.f32 %v537, %v546
    %v581 = vadd.f32 %v549, %v463
    %v582 = vadd.f32 %v550, %v464
    %v583 = vadd.f32 %v551, %v465
    %v584 = vadd.f32 %v552, %v466
    %v585 = vadd.f32 %v553, %v467
    %v586 = vadd.f32 %v554, %v468
    %v587 = vadd.f32 %v555, %v469
    %v588 = vadd.f32 %v556, %v470
    %v589 = vadd.f32 %v557, %v471
    %v590 = vadd.f32 %v558, %v472
    %v591 = vadd.f32 %v559, %v473
    %v592 = vadd.f32 %v560, %v474
    %v593 = vadd.f32 %v561, %v475
    %v594 = vadd.f32 %v562, %v476
    %v595 = vadd.f32 %v563, %v477
    %v596 = vadd.f32 %v564, %v478
    %v597 = vadd.f32 %v565, %v479
    %v598 = vadd.f32 %v566, %v480
    %v599 = vadd.f32 %v567, %v481
    %v600 = vadd.f32 %v568, %v482
    %v601 = vadd.f32 %v569, %v483
    %v602 = vadd.f32 %v570, %v484
    %v603 = vadd.f32 %v571, %v485
    %v604 = vadd.f32 %v572, %v486
    %v605 = vadd.f32 %v573, %v487
    %v606 = vadd.f32 %v574, %v488
    %v607 = vadd.f32 %v575, %v489
    %v608 = vadd.f32 %v576, %v490
    %v609 = vadd.f32 %v577, %v491
    %v610 = vadd.f32 %v578, %v492
    %v611 = vadd.f32 %v579, %v493
    %v612 = vadd.f32 %v580, %v494
    %v613 = vmax.f32 %v581, 0.0
    %v614 = vmax.f32 %v582, 0.0
    %v615 = vmax.f32 %v583, 0.0
    %v616 = vmax.f32 %v584, 0.0
    %v617 = vmax.f32 %v585, 0.0
    %v618 = vmax.f32 %v586, 0.0
    %v619 = vmax.f32 %v587, 0.0
    %v620 = vmax.f32 %v588, 0.0
    %v621 = vmax.f32 %v589, 0.0
    %v622 = vmax.f32 %v590, 0.0
    %v623 = vmax.f32 %v591, 0.0
    %v624 = vmax.f32 %v592, 0.0
    %v625 = vmax.f32 %v593, 0.0
    %v626 = vmax.f32 %v594, 0.0
    %v627 = vmax.f32 %v595, 0.0
    %v628 = vmax.f32 %v596, 0.0
    %v629 = vmax.f32 %v597, 0.0
    %v630 = vmax.f32 %v598, 0.0
    %v631 = vmax.f32 %v599, 0.0
    %v632 = vmax.f32 %v600, 0.0
    %v633 = vmax.f32 %v601, 0.0
    %v634 = vmax.f32 %v602, 0.0
    %v635 = vmax.f32 %v603, 0.0
    %v636 = vmax.f32 %v604, 0.0
    %v637 = vmax.f32 %v605, 0.0
    %v638 = vmax.f32 %v606, 0.0
    %v639 = vmax.f32 %v607, 0.0
    %v640 = vmax.f32 %v608, 0.0
    %v641 = vmax.f32 %v609, 0.0
    %v642 = vmax.f32 %v610, 0.0
    %v643 = vmax.f32 %v611, 0.0
    %v644 = vmax.f32 %v612, 0.0
    %645 = vst [vmem:[%s5] sm:$0xff] %v613
    %646 = vst [vmem:[%s5 + $0x8] sm:$0xff] %v614
    %647 = vst [vmem:[%s5 + $0x10] sm:$0xff] %v615
    %648 = vst [vmem:[%s5 + $0x18] sm:$0xff] %v616
    %649 = vst [vmem:[%s5 + $0x20] sm:$0xff] %v617
    %650 = vst [vmem:[%s5 + $0x28] sm:$0xff] %v618
    %651 = vst [vmem:[%s5 + $0x30] sm:$0xff] %v619
    %652 = vst [vmem:[%s5 + $0x38] sm:$0xff] %v620
    %653 = vst [vmem:[%s5 + $0x40] sm:$0xff] %v621
    %654 = vst [vmem:[%s5 + $0x48] sm:$0xff] %v622
    %655 = vst [vmem:[%s5 + $0x50] sm:$0xff] %v623
    %656 = vst [vmem:[%s5 + $0x58] sm:$0xff] %v624
    %657 = vst [vmem:[%s5 + $0x60] sm:$0xff] %v625
    %658 = vst [vmem:[%s5 + $0x68] sm:$0xff] %v626
    %659 = vst [vmem:[%s5 + $0x70] sm:$0xff] %v627
    %660 = vst [vmem:[%s5 + $0x78] sm:$0xff] %v628
    %661 = vst [vmem:[%s5 + $0x80] sm:$0xff] %v629
    %662 = vst [vmem:[%s5 + $0x88] sm:$0xff] %v630
    %663 = vst [vmem:[%s5 + $0x90] sm:$0xff] %v631
    %664 = vst [vmem:[%s5 + $0x98] sm:$0xff] %v632
    %665 = vst [vmem:[%s5 + $0xa0] sm:$0xff] %v633
    %666 = vst [vmem:[%s5 + $0xa8] sm:$0xff] %v634
    %667 = vst [vmem:[%s5 + $0xb0] sm:$0xff] %v635
    %668 = vst [vmem:[%s5 + $0xb8] sm:$0xff] %v636
    %669 = vst [vmem:[%s5 + $0xc0] sm:$0xff] %v637
    %670 = vst [vmem:[%s5 + $0xc8] sm:$0xff] %v638
    %671 = vst [vmem:[%s5 + $0xd0] sm:$0xff] %v639
    %672 = vst [vmem:[%s5 + $0xd8] sm:$0xff] %v640
    %673 = vst [vmem:[%s5 + $0xe0] sm:$0xff] %v641
    %674 = vst [vmem:[%s5 + $0xe8] sm:$0xff] %v642
    %675 = vst [vmem:[%s5 + $0xf0] sm:$0xff] %v643
    %676 = vst [vmem:[%s5 + $0xf8] sm:$0xff] %v644
  $region29: #{_lambda_.40} parent=0 // pred_fallthru
    _
  // Predicated region
  $region30: #{_lambda_.40} parent=0 // pred_check
    _
  $region31: #{_lambda_.40} parent=0 // pred_check_branch
    %678 = sbr.rel (0) target = $region33
  $region32: #{_lambda_.40} parent=0 // pred_region
    _
  $region33: #{_lambda_.40} parent=0 // pred_fallthru
    _
  // Predicated region
  $region34: #{_lambda_.40} parent=0 // pred_check
    _
  $region35: #{_lambda_.40} parent=0 // pred_check_branch
    %680 = sbr.rel (0) target = $region37
  $region36: #{_lambda_.40} parent=0 // pred_region
    _
  $region37: #{_lambda_.40} parent=0 // pred_fallthru
    _

// kernel: _lambda_.41
$region0: #{_lambda_.41}
  #allocation0 [shape = 'u32[]', space=smem, size = 0x4, offset = 0x4, fixed_abs, tag = 'smem constant byte address 0x4 - core index']
  #allocation1 [shape = 'u32[144,128]{1,0:T(1,128)}', space=vmem, size = 0x12000, scoped, tag = 'internal scratch']
  #allocation2 [shape = 'f32[2,256]{1,0:T(2,128)}', space=vmem, size = 0x800, scoped, tag = 'scratch operand']
  %s0 = inlined_call_operand.vmem [shape: f32[2,8,256], index: 0, kind: input, shape index: {}]
  %s1 = inlined_call_operand.vmem [shape: f32[2,256], index: 1, kind: output, shape index: {}]
  %s2 = sld [smem:[#allocation0]]
  $region22: #{_lambda_.41} parent=0
    _
  %s4 = ssub.s32 1, %s2
  %s5 = scalar_select 0, %s4, %s2
  // Predicated region
  $region2: #{_lambda_.41} parent=0 // pred_check
    _
  $region3: #{_lambda_.41} parent=0 // pred_check_branch
    %7 = sbr.rel (0) target = $region5
  $region4: #{_lambda_.41} parent=0 // pred_region
    _
  $region5: #{_lambda_.41} parent=0 // pred_fallthru
    _
  %p8 = scmp.eq.s32.totalorder 0, 0
  // Predicated region
  $region6: #{_lambda_.41} parent=0 // pred_check
    %p9 = pneg %p8
  $region7: #{_lambda_.41} parent=0 // pred_check_branch
    %11 = sbr.rel (%p9) target = $region9
  $region8: #{_lambda_.41} parent=0 // pred_region
    %12 = vst [vmem:[#allocation2] sm:$0xf] 0.0
  $region9: #{_lambda_.41} parent=0 // pred_fallthru
    _
  %v13 = vld [vmem:[#allocation2] sm:$0xf]
  %v14 = vld [vmem:[%s0] sm:$0xff]
  %v15 = vld [vmem:[%s0 + $0x8] sm:$0xff]
  %v16 = vld [vmem:[%s0 + $0x10] sm:$0xff]
  %v17 = vld [vmem:[%s0 + $0x18] sm:$0xff]
  %v18 = vrot.slane %v14, 4
  %v19 = vadd.f32 %v14, %v18
  %v20 = vrot.slane %v19, 2
  %v21 = vadd.f32 %v19, %v20
  %v22 = vrot.slane %v21, 1
  %v23 = vadd.f32 %v21, %v22
  %v24 = vrot.slane %v15, 4
  %v25 = vadd.f32 %v15, %v24
  %v26 = vrot.slane %v25, 2
  %v27 = vadd.f32 %v25, %v26
  %v28 = vrot.slane %v27, 1
  %v29 = vadd.f32 %v27, %v28
  %v30 = vrot.slane %v16, 4
  %v31 = vadd.f32 %v16, %v30
  %v32 = vrot.slane %v31, 2
  %v33 = vadd.f32 %v31, %v32
  %v34 = vrot.slane %v33, 1
  %v35 = vadd.f32 %v33, %v34
  %v36 = vrot.slane %v17, 4
  %v37 = vadd.f32 %v17, %v36
  %v38 = vrot.slane %v37, 2
  %v39 = vadd.f32 %v37, %v38
  %v40 = vrot.slane %v39, 1
  %v41 = vadd.f32 %v39, %v40
  %v46 = vcombine.low %v23, %v29
  %v48 = vunpack.c.l.s4 1983009808
  %v49 = vunpack.c.0.s8 %v48
  %v50 = vlaneseq
  %v51 = vshrl.u32 %v50, 7
  %v52 = vsub.s32 %v49, %v51
  %v53 = vrot.slane %v46, %v52
  %v54 = vcombine.low %v35, %v41
  %v56 = vunpack.c.l.s4 1983009808
  %v57 = vunpack.c.0.s8 %v56
  %v58 = vlaneseq
  %v59 = vshrl.u32 %v58, 7
  %v60 = vsub.s32 %v57, %v59
  %v61 = vrot.slane %v54, %v60
  %vm62 = vcmask 1044484
  %v63 = vsel %vm62, %v53, %v53
  %vm64 = vcmask 1046534
  %v65 = vsel %vm64, %v53, %v63
  %v66 = vrot.slane %v61, 7
  %vm67 = vcmask 1041409
  %v68 = vsel %vm67, %v66, %v65
  %vm69 = vcmask 1043459
  %v70 = vsel %vm69, %v66, %v68
  %vm71 = vcmask 1045509
  %v72 = vsel %vm71, %v66, %v70
  %vm73 = vcmask 1047559
  %v74 = vsel %vm73, %v66, %v72
  %v76 = vadd.f32 %v13, %v74
  %77 = vst [vmem:[#allocation2] sm:$0xf] %v76
  // Predicated region
  $region10: #{_lambda_.41} parent=0 // pred_check
    %p78 = pneg %p8
  $region11: #{_lambda_.41} parent=0 // pred_check_branch
    %80 = sbr.rel (%p78) target = $region13
  $region12: #{_lambda_.41} parent=0 // pred_region
    %v81 = vld [vmem:[#allocation2] sm:$0xf]
    %82 = vst [vmem:[%s1] sm:$0xf] %v81
  $region13: #{_lambda_.41} parent=0 // pred_fallthru
    _
  // Predicated region
  $region14: #{_lambda_.41} parent=0 // pred_check
    _
  $region15: #{_lambda_.41} parent=0 // pred_check_branch
    %84 = sbr.rel (0) target = $region17
  $region16: #{_lambda_.41} parent=0 // pred_region
    _
  $region17: #{_lambda_.41} parent=0 // pred_fallthru
    _
  // Predicated region
  $region18: #{_lambda_.41} parent=0 // pred_check
    _
  $region19: #{_lambda_.41} parent=0 // pred_check_branch
    %86 = sbr.rel (0) target = $region21
  $region20: #{_lambda_.41} parent=0 // pred_region
    _
  $region21: #{_lambda_.41} parent=0 // pred_fallthru
    _

// kernel: _lambda_.42
$region0: #{_lambda_.42}
  #allocation0 [shape = 'u32[]', space=smem, size = 0x4, offset = 0x4, fixed_abs, tag = 'smem constant byte address 0x4 - core index']
  #allocation1 [shape = 'u32[144,128]{1,0:T(1,128)}', space=vmem, size = 0x12000, scoped, tag = 'internal scratch']
  #allocation2 [shape = 'f32[128,256]{1,0:T(8,128)}', space=vmem, size = 0x20000, scoped, tag = 'scratch operand']
  %s0 = inlined_call_operand.vmem [shape: bf16[128,256], index: 0, kind: input, shape index: {}]
  %s1 = inlined_call_operand.vmem [shape: bf16[256,256], index: 1, kind: input, shape index: {}]
  %s2 = inlined_call_operand.vmem [shape: f32[1,256], index: 2, kind: input, shape index: {}]
  %s3 = inlined_call_operand.vmem [shape: f32[1,256], index: 3, kind: input, shape index: {}]
  %s4 = inlined_call_operand.vmem [shape: f32[128,256], index: 4, kind: output, shape index: {}]
  %s5 = sld [smem:[#allocation0]]
  $region34: #{_lambda_.42} parent=0
    _
  %s7 = ssub.s32 1, %s5
  %s8 = scalar_select 0, %s7, %s5
  // Predicated region
  $region2: #{_lambda_.42} parent=0 // pred_check
    _
  $region3: #{_lambda_.42} parent=0 // pred_check_branch
    %10 = sbr.rel (0) target = $region5
  $region4: #{_lambda_.42} parent=0 // pred_region
    _
  $region5: #{_lambda_.42} parent=0 // pred_fallthru
    _
  // Predicated region
  $region6: #{_lambda_.42} parent=0 // pred_check
    _
  $region7: #{_lambda_.42} parent=0 // pred_check_branch
    %12 = sbr.rel (0) target = $region9
  $region8: #{_lambda_.42} parent=0 // pred_region
    _
  $region9: #{_lambda_.42} parent=0 // pred_fallthru
    _
  // Predicated region
  $region10: #{_lambda_.42} parent=0 // pred_check
    _
  $region11: #{_lambda_.42} parent=0 // pred_check_branch
    %14 = sbr.rel (0) target = $region13
  $region12: #{_lambda_.42} parent=0 // pred_region
    _
  $region13: #{_lambda_.42} parent=0 // pred_fallthru
    _
  // Predicated region
  $region14: #{_lambda_.42} parent=0 // pred_check
    _
  $region15: #{_lambda_.42} parent=0 // pred_check_branch
    %16 = sbr.rel (0) target = $region17
  $region16: #{_lambda_.42} parent=0 // pred_region
    _
  $region17: #{_lambda_.42} parent=0 // pred_fallthru
    _
  %p17 = scmp.eq.s32.totalorder 0, 0
  // Predicated region
  $region18: #{_lambda_.42} parent=0 // pred_check
    %p18 = pneg %p17
  $region19: #{_lambda_.42} parent=0 // pred_check_branch
    %20 = sbr.rel (%p18) target = $region21
  $region20: #{_lambda_.42} parent=0 // pred_region
    %21 = vst [vmem:[#allocation2] sm:$0xff] 0.0
    %22 = vst [vmem:[#allocation2 + $0x8] sm:$0xff] 0.0
    %23 = vst [vmem:[#allocation2 + $0x10] sm:$0xff] 0.0
    %24 = vst [vmem:[#allocation2 + $0x18] sm:$0xff] 0.0
    %25 = vst [vmem:[#allocation2 + $0x20] sm:$0xff] 0.0
    %26 = vst [vmem:[#allocation2 + $0x28] sm:$0xff] 0.0
    %27 = vst [vmem:[#allocation2 + $0x30] sm:$0xff] 0.0
    %28 = vst [vmem:[#allocation2 + $0x38] sm:$0xff] 0.0
    %29 = vst [vmem:[#allocation2 + $0x40] sm:$0xff] 0.0
    %30 = vst [vmem:[#allocation2 + $0x48] sm:$0xff] 0.0
    %31 = vst [vmem:[#allocation2 + $0x50] sm:$0xff] 0.0
    %32 = vst [vmem:[#allocation2 + $0x58] sm:$0xff] 0.0
    %33 = vst [vmem:[#allocation2 + $0x60] sm:$0xff] 0.0
    %34 = vst [vmem:[#allocation2 + $0x68] sm:$0xff] 0.0
    %35 = vst [vmem:[#allocation2 + $0x70] sm:$0xff] 0.0
    %36 = vst [vmem:[#allocation2 + $0x78] sm:$0xff] 0.0
    %37 = vst [vmem:[#allocation2 + $0x80] sm:$0xff] 0.0
    %38 = vst [vmem:[#allocation2 + $0x88] sm:$0xff] 0.0
    %39 = vst [vmem:[#allocation2 + $0x90] sm:$0xff] 0.0
    %40 = vst [vmem:[#allocation2 + $0x98] sm:$0xff] 0.0
    %41 = vst [vmem:[#allocation2 + $0xa0] sm:$0xff] 0.0
    %42 = vst [vmem:[#allocation2 + $0xa8] sm:$0xff] 0.0
    %43 = vst [vmem:[#allocation2 + $0xb0] sm:$0xff] 0.0
    %44 = vst [vmem:[#allocation2 + $0xb8] sm:$0xff] 0.0
    %45 = vst [vmem:[#allocation2 + $0xc0] sm:$0xff] 0.0
    %46 = vst [vmem:[#allocation2 + $0xc8] sm:$0xff] 0.0
    %47 = vst [vmem:[#allocation2 + $0xd0] sm:$0xff] 0.0
    %48 = vst [vmem:[#allocation2 + $0xd8] sm:$0xff] 0.0
    %49 = vst [vmem:[#allocation2 + $0xe0] sm:$0xff] 0.0
    %50 = vst [vmem:[#allocation2 + $0xe8] sm:$0xff] 0.0
    %51 = vst [vmem:[#allocation2 + $0xf0] sm:$0xff] 0.0
    %52 = vst [vmem:[#allocation2 + $0xf8] sm:$0xff] 0.0
  $region21: #{_lambda_.42} parent=0 // pred_fallthru
    _
  %v53 = vld [vmem:[#allocation2] sm:$0xff]
  %v54 = vld [vmem:[#allocation2 + $0x8] sm:$0xff]
  %v55 = vld [vmem:[#allocation2 + $0x10] sm:$0xff]
  %v56 = vld [vmem:[#allocation2 + $0x18] sm:$0xff]
  %v57 = vld [vmem:[#allocation2 + $0x20] sm:$0xff]
  %v58 = vld [vmem:[#allocation2 + $0x28] sm:$0xff]
  %v59 = vld [vmem:[#allocation2 + $0x30] sm:$0xff]
  %v60 = vld [vmem:[#allocation2 + $0x38] sm:$0xff]
  %v61 = vld [vmem:[#allocation2 + $0x40] sm:$0xff]
  %v62 = vld [vmem:[#allocation2 + $0x48] sm:$0xff]
  %v63 = vld [vmem:[#allocation2 + $0x50] sm:$0xff]
  %v64 = vld [vmem:[#allocation2 + $0x58] sm:$0xff]
  %v65 = vld [vmem:[#allocation2 + $0x60] sm:$0xff]
  %v66 = vld [vmem:[#allocation2 + $0x68] sm:$0xff]
  %v67 = vld [vmem:[#allocation2 + $0x70] sm:$0xff]
  %v68 = vld [vmem:[#allocation2 + $0x78] sm:$0xff]
  %v69 = vld [vmem:[#allocation2 + $0x80] sm:$0xff]
  %v70 = vld [vmem:[#allocation2 + $0x88] sm:$0xff]
  %v71 = vld [vmem:[#allocation2 + $0x90] sm:$0xff]
  %v72 = vld [vmem:[#allocation2 + $0x98] sm:$0xff]
  %v73 = vld [vmem:[#allocation2 + $0xa0] sm:$0xff]
  %v74 = vld [vmem:[#allocation2 + $0xa8] sm:$0xff]
  %v75 = vld [vmem:[#allocation2 + $0xb0] sm:$0xff]
  %v76 = vld [vmem:[#allocation2 + $0xb8] sm:$0xff]
  %v77 = vld [vmem:[#allocation2 + $0xc0] sm:$0xff]
  %v78 = vld [vmem:[#allocation2 + $0xc8] sm:$0xff]
  %v79 = vld [vmem:[#allocation2 + $0xd0] sm:$0xff]
  %v80 = vld [vmem:[#allocation2 + $0xd8] sm:$0xff]
  %v81 = vld [vmem:[#allocation2 + $0xe0] sm:$0xff]
  %v82 = vld [vmem:[#allocation2 + $0xe8] sm:$0xff]
  %v83 = vld [vmem:[#allocation2 + $0xf0] sm:$0xff]
  %v84 = vld [vmem:[#allocation2 + $0xf8] sm:$0xff]
  %v85 = vld [vmem:[%s0] sm:$0xff]
  %v86 = vld [vmem:[%s0 + $0x8] sm:$0xff]
  %v87 = vld [vmem:[%s0 + $0x10] sm:$0xff]
  %v88 = vld [vmem:[%s0 + $0x18] sm:$0xff]
  %v89 = vld [vmem:[%s0 + $0x20] sm:$0xff]
  %v90 = vld [vmem:[%s0 + $0x28] sm:$0xff]
  %v91 = vld [vmem:[%s0 + $0x30] sm:$0xff]
  %v92 = vld [vmem:[%s0 + $0x38] sm:$0xff]
  %v93 = vld [vmem:[%s0 + $0x40] sm:$0xff]
  %v94 = vld [vmem:[%s0 + $0x48] sm:$0xff]
  %v95 = vld [vmem:[%s0 + $0x50] sm:$0xff]
  %v96 = vld [vmem:[%s0 + $0x58] sm:$0xff]
  %v97 = vld [vmem:[%s0 + $0x60] sm:$0xff]
  %v98 = vld [vmem:[%s0 + $0x68] sm:$0xff]
  %v99 = vld [vmem:[%s0 + $0x70] sm:$0xff]
  %v100 = vld [vmem:[%s0 + $0x78] sm:$0xff]
  %v101 = vld [vmem:[%s1] sm:$0xff]
  %v102 = vld [vmem:[%s1 + $0x8] sm:$0xff]
  %v103 = vld [vmem:[%s1 + $0x10] sm:$0xff]
  %v104 = vld [vmem:[%s1 + $0x18] sm:$0xff]
  %v105 = vld [vmem:[%s1 + $0x20] sm:$0xff]
  %v106 = vld [vmem:[%s1 + $0x28] sm:$0xff]
  %v107 = vld [vmem:[%s1 + $0x30] sm:$0xff]
  %v108 = vld [vmem:[%s1 + $0x38] sm:$0xff]
  %v109 = vld [vmem:[%s1 + $0x40] sm:$0xff]
  %v110 = vld [vmem:[%s1 + $0x48] sm:$0xff]
  %v111 = vld [vmem:[%s1 + $0x50] sm:$0xff]
  %v112 = vld [vmem:[%s1 + $0x58] sm:$0xff]
  %v113 = vld [vmem:[%s1 + $0x60] sm:$0xff]
  %v114 = vld [vmem:[%s1 + $0x68] sm:$0xff]
  %v115 = vld [vmem:[%s1 + $0x70] sm:$0xff]
  %v116 = vld [vmem:[%s1 + $0x78] sm:$0xff]
  %v117 = vld [vmem:[%s1 + $0x80] sm:$0xff]
  %v118 = vld [vmem:[%s1 + $0x88] sm:$0xff]
  %v119 = vld [vmem:[%s1 + $0x90] sm:$0xff]
  %v120 = vld [vmem:[%s1 + $0x98] sm:$0xff]
  %v121 = vld [vmem:[%s1 + $0xa0] sm:$0xff]
  %v122 = vld [vmem:[%s1 + $0xa8] sm:$0xff]
  %v123 = vld [vmem:[%s1 + $0xb0] sm:$0xff]
  %v124 = vld [vmem:[%s1 + $0xb8] sm:$0xff]
  %v125 = vld [vmem:[%s1 + $0xc0] sm:$0xff]
  %v126 = vld [vmem:[%s1 + $0xc8] sm:$0xff]
  %v127 = vld [vmem:[%s1 + $0xd0] sm:$0xff]
  %v128 = vld [vmem:[%s1 + $0xd8] sm:$0xff]
  %v129 = vld [vmem:[%s1 + $0xe0] sm:$0xff]
  %v130 = vld [vmem:[%s1 + $0xe8] sm:$0xff]
  %v131 = vld [vmem:[%s1 + $0xf0] sm:$0xff]
  %v132 = vld [vmem:[%s1 + $0xf8] sm:$0xff]
  %v149 = vunpack.c.l.b16 %v85
  %v150 = vunpack.c.h.b16 %v85
  %v151 = vunpack.c.l.b16 %v86
  %v152 = vunpack.c.h.b16 %v86
  %v153 = vunpack.c.l.b16 %v87
  %v154 = vunpack.c.h.b16 %v87
  %v155 = vunpack.c.l.b16 %v88
  %v156 = vunpack.c.h.b16 %v88
  %v157 = vunpack.c.l.b16 %v89
  %v158 = vunpack.c.h.b16 %v89
  %v159 = vunpack.c.l.b16 %v90
  %v160 = vunpack.c.h.b16 %v90
  %v161 = vunpack.c.l.b16 %v91
  %v162 = vunpack.c.h.b16 %v91
  %v163 = vunpack.c.l.b16 %v92
  %v164 = vunpack.c.h.b16 %v92
  %v165 = vunpack.c.l.b16 %v93
  %v166 = vunpack.c.h.b16 %v93
  %v167 = vunpack.c.l.b16 %v94
  %v168 = vunpack.c.h.b16 %v94
  %v169 = vunpack.c.l.b16 %v95
  %v170 = vunpack.c.h.b16 %v95
  %v171 = vunpack.c.l.b16 %v96
  %v172 = vunpack.c.h.b16 %v96
  %v173 = vunpack.c.l.b16 %v97
  %v174 = vunpack.c.h.b16 %v97
  %v175 = vunpack.c.l.b16 %v98
  %v176 = vunpack.c.h.b16 %v98
  %v177 = vunpack.c.l.b16 %v99
  %v178 = vunpack.c.h.b16 %v99
  %v179 = vunpack.c.l.b16 %v100
  %v180 = vunpack.c.h.b16 %v100
  %v181 = vpack.c.b16 %v151, %v149
  %v182 = vpack.c.b16 %v152, %v150
  %v183 = vpack.c.b16 %v155, %v153
  %v184 = vpack.c.b16 %v156, %v154
  %v185 = vpack.c.b16 %v159, %v157
  %v186 = vpack.c.b16 %v160, %v158
  %v187 = vpack.c.b16 %v163, %v161
  %v188 = vpack.c.b16 %v164, %v162
  %v189 = vpack.c.b16 %v167, %v165
  %v190 = vpack.c.b16 %v168, %v166
  %v191 = vpack.c.b16 %v171, %v169
  %v192 = vpack.c.b16 %v172, %v170
  %v193 = vpack.c.b16 %v175, %v173
  %v194 = vpack.c.b16 %v176, %v174
  %v195 = vpack.c.b16 %v179, %v177
  %v196 = vpack.c.b16 %v180, %v178
  %v245 = vunpack.c.l.b16 %v101
  %v246 = vunpack.c.h.b16 %v101
  %v247 = vunpack.c.l.b16 %v102
  %v248 = vunpack.c.h.b16 %v102
  %v249 = vunpack.c.l.b16 %v103
  %v250 = vunpack.c.h.b16 %v103
  %v251 = vunpack.c.l.b16 %v104
  %v252 = vunpack.c.h.b16 %v104
  %v253 = vunpack.c.l.b16 %v105
  %v254 = vunpack.c.h.b16 %v105
  %v255 = vunpack.c.l.b16 %v106
  %v256 = vunpack.c.h.b16 %v106
  %v257 = vunpack.c.l.b16 %v107
  %v258 = vunpack.c.h.b16 %v107
  %v259 = vunpack.c.l.b16 %v108
  %v260 = vunpack.c.h.b16 %v108
  %v261 = vunpack.c.l.b16 %v109
  %v262 = vunpack.c.h.b16 %v109
  %v263 = vunpack.c.l.b16 %v110
  %v264 = vunpack.c.h.b16 %v110
  %v265 = vunpack.c.l.b16 %v111
  %v266 = vunpack.c.h.b16 %v111
  %v267 = vunpack.c.l.b16 %v112
  %v268 = vunpack.c.h.b16 %v112
  %v269 = vunpack.c.l.b16 %v113
  %v270 = vunpack.c.h.b16 %v113
  %v271 = vunpack.c.l.b16 %v114
  %v272 = vunpack.c.h.b16 %v114
  %v273 = vunpack.c.l.b16 %v115
  %v274 = vunpack.c.h.b16 %v115
  %v275 = vunpack.c.l.b16 %v116
  %v276 = vunpack.c.h.b16 %v116
  %v277 = vunpack.c.l.b16 %v117
  %v278 = vunpack.c.h.b16 %v117
  %v279 = vunpack.c.l.b16 %v118
  %v280 = vunpack.c.h.b16 %v118
  %v281 = vunpack.c.l.b16 %v119
  %v282 = vunpack.c.h.b16 %v119
  %v283 = vunpack.c.l.b16 %v120
  %v284 = vunpack.c.h.b16 %v120
  %v285 = vunpack.c.l.b16 %v121
  %v286 = vunpack.c.h.b16 %v121
  %v287 = vunpack.c.l.b16 %v122
  %v288 = vunpack.c.h.b16 %v122
  %v289 = vunpack.c.l.b16 %v123
  %v290 = vunpack.c.h.b16 %v123
  %v291 = vunpack.c.l.b16 %v124
  %v292 = vunpack.c.h.b16 %v124
  %v293 = vunpack.c.l.b16 %v125
  %v294 = vunpack.c.h.b16 %v125
  %v295 = vunpack.c.l.b16 %v126
  %v296 = vunpack.c.h.b16 %v126
  %v297 = vunpack.c.l.b16 %v127
  %v298 = vunpack.c.h.b16 %v127
  %v299 = vunpack.c.l.b16 %v128
  %v300 = vunpack.c.h.b16 %v128
  %v301 = vunpack.c.l.b16 %v129
  %v302 = vunpack.c.h.b16 %v129
  %v303 = vunpack.c.l.b16 %v130
  %v304 = vunpack.c.h.b16 %v130
  %v305 = vunpack.c.l.b16 %v131
  %v306 = vunpack.c.h.b16 %v131
  %v307 = vunpack.c.l.b16 %v132
  %v308 = vunpack.c.h.b16 %v132
  %v309 = vpack.c.b16 %v247, %v245
  %v310 = vpack.c.b16 %v248, %v246
  %v311 = vpack.c.b16 %v251, %v249
  %v312 = vpack.c.b16 %v252, %v250
  %v313 = vpack.c.b16 %v255, %v253
  %v314 = vpack.c.b16 %v256, %v254
  %v315 = vpack.c.b16 %v259, %v257
  %v316 = vpack.c.b16 %v260, %v258
  %v317 = vpack.c.b16 %v263, %v261
  %v318 = vpack.c.b16 %v264, %v262
  %v319 = vpack.c.b16 %v267, %v265
  %v320 = vpack.c.b16 %v268, %v266
  %v321 = vpack.c.b16 %v271, %v269
  %v322 = vpack.c.b16 %v272, %v270
  %v323 = vpack.c.b16 %v275, %v273
  %v324 = vpack.c.b16 %v276, %v274
  %v325 = vpack.c.b16 %v279, %v277
  %v326 = vpack.c.b16 %v280, %v278
  %v327 = vpack.c.b16 %v283, %v281
  %v328 = vpack.c.b16 %v284, %v282
  %v329 = vpack.c.b16 %v287, %v285
  %v330 = vpack.c.b16 %v288, %v286
  %v331 = vpack.c.b16 %v291, %v289
  %v332 = vpack.c.b16 %v292, %v290
  %v333 = vpack.c.b16 %v295, %v293
  %v334 = vpack.c.b16 %v296, %v294
  %v335 = vpack.c.b16 %v299, %v297
  %v336 = vpack.c.b16 %v300, %v298
  %v337 = vpack.c.b16 %v303, %v301
  %v338 = vpack.c.b16 %v304, %v302
  %v339 = vpack.c.b16 %v307, %v305
  %v340 = vpack.c.b16 %v308, %v306
  %373 = vmatprep.subr.bf16.mxu0 %v310
  %374 = vmatpush1.bf16.msra.mxu0 %v309
  %375 = vmatprep.subr.bf16.mxu0 %v312
  %376 = vmatpush1.bf16.msra.mxu0 %v311
  %377 = vmatprep.subr.bf16.mxu0 %v314
  %378 = vmatpush1.bf16.msra.mxu0 %v313
  %379 = vmatprep.subr.bf16.mxu0 %v316
  %380 = vmatpush1.bf16.msra.mxu0 %v315
  %381 = vmatprep.subr.bf16.mxu0 %v318
  %382 = vmatpush1.bf16.msra.mxu0 %v317
  %383 = vmatprep.subr.bf16.mxu0 %v320
  %384 = vmatpush1.bf16.msra.mxu0 %v319
  %385 = vmatprep.subr.bf16.mxu0 %v322
  %386 = vmatpush1.bf16.msra.mxu0 %v321
  %387 = vmatprep.subr.bf16.mxu0 %v324
  %388 = vmatpush1.bf16.msra.mxu0 %v323
  %389 = vmatprep.subr.bf16.mxu0 %v326
  %390 = vmatpush1.bf16.msra.mxu0 %v325
  %391 = vmatprep.subr.bf16.mxu0 %v328
  %392 = vmatpush1.bf16.msra.mxu0 %v327
  %393 = vmatprep.subr.bf16.mxu0 %v330
  %394 = vmatpush1.bf16.msra.mxu0 %v329
  %395 = vmatprep.subr.bf16.mxu0 %v332
  %396 = vmatpush1.bf16.msra.mxu0 %v331
  %397 = vmatprep.subr.bf16.mxu0 %v334
  %398 = vmatpush1.bf16.msra.mxu0 %v333
  %399 = vmatprep.subr.bf16.mxu0 %v336
  %400 = vmatpush1.bf16.msra.mxu0 %v335
  %401 = vmatprep.subr.bf16.mxu0 %v338
  %402 = vmatpush1.bf16.msra.mxu0 %v337
  %403 = vmatprep.subr.bf16.mxu0 %v340
  %404 = vmatpush1.bf16.msra.mxu0 %v339
  %405 = vmatprep.mubr.bf16.mxu0 %v182
  %406 = vmatmul.mubr.bf16.gmra.mrb[0].mxu0 %v181
  %v407 = vpop.f32.mrb[0].mxu0
  %v408 = vadd.f32 0.0, %v407
  %v409 = vpop.f32.mrb[0].mxu0
  %v410 = vadd.f32 0.0, %v409
  %v411 = vpop.f32.mrb[0].mxu0
  %v412 = vadd.f32 0.0, %v411
  %v413 = vpop.f32.mrb[0].mxu0
  %v414 = vadd.f32 0.0, %v413
  %415 = vmatprep.mubr.bf16.mxu0 %v184
  %416 = vmatmul.mubr.bf16.gmra.mrb[0].mxu0 %v183
  %v417 = vpop.f32.mrb[0].mxu0
  %v418 = vadd.f32 0.0, %v417
  %v419 = vpop.f32.mrb[0].mxu0
  %v420 = vadd.f32 0.0, %v419
  %v421 = vpop.f32.mrb[0].mxu0
  %v422 = vadd.f32 0.0, %v421
  %v423 = vpop.f32.mrb[0].mxu0
  %v424 = vadd.f32 0.0, %v423
  %425 = vmatprep.mubr.bf16.mxu0 %v186
  %426 = vmatmul.mubr.bf16.gmra.mrb[0].mxu0 %v185
  %v427 = vpop.f32.mrb[0].mxu0
  %v428 = vadd.f32 0.0, %v427
  %v429 = vpop.f32.mrb[0].mxu0
  %v430 = vadd.f32 0.0, %v429
  %v431 = vpop.f32.mrb[0].mxu0
  %v432 = vadd.f32 0.0, %v431
  %v433 = vpop.f32.mrb[0].mxu0
  %v434 = vadd.f32 0.0, %v433
  %435 = vmatprep.mubr.bf16.mxu0 %v188
  %436 = vmatmul.mubr.bf16.gmra.mrb[0].mxu0 %v187
  %v437 = vpop.f32.mrb[0].mxu0
  %v438 = vadd.f32 0.0, %v437
  %v439 = vpop.f32.mrb[0].mxu0
  %v440 = vadd.f32 0.0, %v439
  %v441 = vpop.f32.mrb[0].mxu0
  %v442 = vadd.f32 0.0, %v441
  %v443 = vpop.f32.mrb[0].mxu0
  %v444 = vadd.f32 0.0, %v443
  %445 = vmatprep.mubr.bf16.mxu0 %v190
  %446 = vmatmul.mubr.bf16.gmra.mrb[0].mxu0 %v189
  %v447 = vpop.f32.mrb[0].mxu0
  %v448 = vadd.f32 0.0, %v447
  %v449 = vpop.f32.mrb[0].mxu0
  %v450 = vadd.f32 0.0, %v449
  %v451 = vpop.f32.mrb[0].mxu0
  %v452 = vadd.f32 0.0, %v451
  %v453 = vpop.f32.mrb[0].mxu0
  %v454 = vadd.f32 0.0, %v453
  %455 = vmatprep.mubr.bf16.mxu0 %v192
  %456 = vmatmul.mubr.bf16.gmra.mrb[0].mxu0 %v191
  %v457 = vpop.f32.mrb[0].mxu0
  %v458 = vadd.f32 0.0, %v457
  %v459 = vpop.f32.mrb[0].mxu0
  %v460 = vadd.f32 0.0, %v459
  %v461 = vpop.f32.mrb[0].mxu0
  %v462 = vadd.f32 0.0, %v461
  %v463 = vpop.f32.mrb[0].mxu0
  %v464 = vadd.f32 0.0, %v463
  %465 = vmatprep.mubr.bf16.mxu0 %v194
  %466 = vmatmul.mubr.bf16.gmra.mrb[0].mxu0 %v193
  %v467 = vpop.f32.mrb[0].mxu0
  %v468 = vadd.f32 0.0, %v467
  %v469 = vpop.f32.mrb[0].mxu0
  %v470 = vadd.f32 0.0, %v469
  %v471 = vpop.f32.mrb[0].mxu0
  %v472 = vadd.f32 0.0, %v471
  %v473 = vpop.f32.mrb[0].mxu0
  %v474 = vadd.f32 0.0, %v473
  %475 = vmatprep.mubr.bf16.mxu0 %v196
  %476 = vmatmul.mubr.bf16.gmra.mrb[0].mxu0 %v195
  %v477 = vpop.f32.mrb[0].mxu0
  %v478 = vadd.f32 0.0, %v477
  %v479 = vpop.f32.mrb[0].mxu0
  %v480 = vadd.f32 0.0, %v479
  %v481 = vpop.f32.mrb[0].mxu0
  %v482 = vadd.f32 0.0, %v481
  %v483 = vpop.f32.mrb[0].mxu0
  %v484 = vadd.f32 0.0, %v483
  %485 = vdwg.mxu0
  %v486 = vadd.f32 %v53, %v408
  %v487 = vadd.f32 %v54, %v410
  %v488 = vadd.f32 %v55, %v412
  %v489 = vadd.f32 %v56, %v414
  %v490 = vadd.f32 %v57, %v418
  %v491 = vadd.f32 %v58, %v420
  %v492 = vadd.f32 %v59, %v422
  %v493 = vadd.f32 %v60, %v424
  %v494 = vadd.f32 %v61, %v428
  %v495 = vadd.f32 %v62, %v430
  %v496 = vadd.f32 %v63, %v432
  %v497 = vadd.f32 %v64, %v434
  %v498 = vadd.f32 %v65, %v438
  %v499 = vadd.f32 %v66, %v440
  %v500 = vadd.f32 %v67, %v442
  %v501 = vadd.f32 %v68, %v444
  %v502 = vadd.f32 %v69, %v448
  %v503 = vadd.f32 %v70, %v450
  %v504 = vadd.f32 %v71, %v452
  %v505 = vadd.f32 %v72, %v454
  %v506 = vadd.f32 %v73, %v458
  %v507 = vadd.f32 %v74, %v460
  %v508 = vadd.f32 %v75, %v462
  %v509 = vadd.f32 %v76, %v464
  %v510 = vadd.f32 %v77, %v468
  %v511 = vadd.f32 %v78, %v470
  %v512 = vadd.f32 %v79, %v472
  %v513 = vadd.f32 %v80, %v474
  %v514 = vadd.f32 %v81, %v478
  %v515 = vadd.f32 %v82, %v480
  %v516 = vadd.f32 %v83, %v482
  %v517 = vadd.f32 %v84, %v484
  %518 = vst [vmem:[#allocation2] sm:$0xff] %v486
  %519 = vst [vmem:[#allocation2 + $0x8] sm:$0xff] %v487
  %520 = vst [vmem:[#allocation2 + $0x10] sm:$0xff] %v488
  %521 = vst [vmem:[#allocation2 + $0x18] sm:$0xff] %v489
  %522 = vst [vmem:[#allocation2 + $0x20] sm:$0xff] %v490
  %523 = vst [vmem:[#allocation2 + $0x28] sm:$0xff] %v491
  %524 = vst [vmem:[#allocation2 + $0x30] sm:$0xff] %v492
  %525 = vst [vmem:[#allocation2 + $0x38] sm:$0xff] %v493
  %526 = vst [vmem:[#allocation2 + $0x40] sm:$0xff] %v494
  %527 = vst [vmem:[#allocation2 + $0x48] sm:$0xff] %v495
  %528 = vst [vmem:[#allocation2 + $0x50] sm:$0xff] %v496
  %529 = vst [vmem:[#allocation2 + $0x58] sm:$0xff] %v497
  %530 = vst [vmem:[#allocation2 + $0x60] sm:$0xff] %v498
  %531 = vst [vmem:[#allocation2 + $0x68] sm:$0xff] %v499
  %532 = vst [vmem:[#allocation2 + $0x70] sm:$0xff] %v500
  %533 = vst [vmem:[#allocation2 + $0x78] sm:$0xff] %v501
  %534 = vst [vmem:[#allocation2 + $0x80] sm:$0xff] %v502
  %535 = vst [vmem:[#allocation2 + $0x88] sm:$0xff] %v503
  %536 = vst [vmem:[#allocation2 + $0x90] sm:$0xff] %v504
  %537 = vst [vmem:[#allocation2 + $0x98] sm:$0xff] %v505
  %538 = vst [vmem:[#allocation2 + $0xa0] sm:$0xff] %v506
  %539 = vst [vmem:[#allocation2 + $0xa8] sm:$0xff] %v507
  %540 = vst [vmem:[#allocation2 + $0xb0] sm:$0xff] %v508
  %541 = vst [vmem:[#allocation2 + $0xb8] sm:$0xff] %v509
  %542 = vst [vmem:[#allocation2 + $0xc0] sm:$0xff] %v510
  %543 = vst [vmem:[#allocation2 + $0xc8] sm:$0xff] %v511
  %544 = vst [vmem:[#allocation2 + $0xd0] sm:$0xff] %v512
  %545 = vst [vmem:[#allocation2 + $0xd8] sm:$0xff] %v513
  %546 = vst [vmem:[#allocation2 + $0xe0] sm:$0xff] %v514
  %547 = vst [vmem:[#allocation2 + $0xe8] sm:$0xff] %v515
  %548 = vst [vmem:[#allocation2 + $0xf0] sm:$0xff] %v516
  %549 = vst [vmem:[#allocation2 + $0xf8] sm:$0xff] %v517
  // Predicated region
  $region22: #{_lambda_.42} parent=0 // pred_check
    %p550 = pneg %p17
  $region23: #{_lambda_.42} parent=0 // pred_check_branch
    %552 = sbr.rel (%p550) target = $region25
  $region24: #{_lambda_.42} parent=0 // pred_region
    %v553 = vld [vmem:[#allocation2] sm:$0xff]
    %v554 = vld [vmem:[#allocation2 + $0x8] sm:$0xff]
    %v555 = vld [vmem:[#allocation2 + $0x10] sm:$0xff]
    %v556 = vld [vmem:[#allocation2 + $0x18] sm:$0xff]
    %v557 = vld [vmem:[#allocation2 + $0x20] sm:$0xff]
    %v558 = vld [vmem:[#allocation2 + $0x28] sm:$0xff]
    %v559 = vld [vmem:[#allocation2 + $0x30] sm:$0xff]
    %v560 = vld [vmem:[#allocation2 + $0x38] sm:$0xff]
    %v561 = vld [vmem:[#allocation2 + $0x40] sm:$0xff]
    %v562 = vld [vmem:[#allocation2 + $0x48] sm:$0xff]
    %v563 = vld [vmem:[#allocation2 + $0x50] sm:$0xff]
    %v564 = vld [vmem:[#allocation2 + $0x58] sm:$0xff]
    %v565 = vld [vmem:[#allocation2 + $0x60] sm:$0xff]
    %v566 = vld [vmem:[#allocation2 + $0x68] sm:$0xff]
    %v567 = vld [vmem:[#allocation2 + $0x70] sm:$0xff]
    %v568 = vld [vmem:[#allocation2 + $0x78] sm:$0xff]
    %v569 = vld [vmem:[#allocation2 + $0x80] sm:$0xff]
    %v570 = vld [vmem:[#allocation2 + $0x88] sm:$0xff]
    %v571 = vld [vmem:[#allocation2 + $0x90] sm:$0xff]
    %v572 = vld [vmem:[#allocation2 + $0x98] sm:$0xff]
    %v573 = vld [vmem:[#allocation2 + $0xa0] sm:$0xff]
    %v574 = vld [vmem:[#allocation2 + $0xa8] sm:$0xff]
    %v575 = vld [vmem:[#allocation2 + $0xb0] sm:$0xff]
    %v576 = vld [vmem:[#allocation2 + $0xb8] sm:$0xff]
    %v577 = vld [vmem:[#allocation2 + $0xc0] sm:$0xff]
    %v578 = vld [vmem:[#allocation2 + $0xc8] sm:$0xff]
    %v579 = vld [vmem:[#allocation2 + $0xd0] sm:$0xff]
    %v580 = vld [vmem:[#allocation2 + $0xd8] sm:$0xff]
    %v581 = vld [vmem:[#allocation2 + $0xe0] sm:$0xff]
    %v582 = vld [vmem:[#allocation2 + $0xe8] sm:$0xff]
    %v583 = vld [vmem:[#allocation2 + $0xf0] sm:$0xff]
    %v584 = vld [vmem:[#allocation2 + $0xf8] sm:$0xff]
    %v585 = vld [vmem:[%s2] sm:$0x3]
    %v586 = vld [vmem:[%s3] sm:$0x3]
    %v588 = vlaneseq
    %v589 = vshrl.u32 %v588, 7
    %v590 = vsub.s32 0, %v589
    %v591 = vrot.slane %v585, %v590
    %v592 = vlaneseq
    %v593 = vshrl.u32 %v592, 7
    %v594 = vsub.s32 1, %v593
    %v595 = vrot.slane %v585, %v594
    %v598 = vmul.f32 %v553, %v591
    %v599 = vmul.f32 %v554, %v595
    %v600 = vmul.f32 %v555, %v591
    %v601 = vmul.f32 %v556, %v595
    %v602 = vmul.f32 %v557, %v591
    %v603 = vmul.f32 %v558, %v595
    %v604 = vmul.f32 %v559, %v591
    %v605 = vmul.f32 %v560, %v595
    %v606 = vmul.f32 %v561, %v591
    %v607 = vmul.f32 %v562, %v595
    %v608 = vmul.f32 %v563, %v591
    %v609 = vmul.f32 %v564, %v595
    %v610 = vmul.f32 %v565, %v591
    %v611 = vmul.f32 %v566, %v595
    %v612 = vmul.f32 %v567, %v591
    %v613 = vmul.f32 %v568, %v595
    %v614 = vmul.f32 %v569, %v591
    %v615 = vmul.f32 %v570, %v595
    %v616 = vmul.f32 %v571, %v591
    %v617 = vmul.f32 %v572, %v595
    %v618 = vmul.f32 %v573, %v591
    %v619 = vmul.f32 %v574, %v595
    %v620 = vmul.f32 %v575, %v591
    %v621 = vmul.f32 %v576, %v595
    %v622 = vmul.f32 %v577, %v591
    %v623 = vmul.f32 %v578, %v595
    %v624 = vmul.f32 %v579, %v591
    %v625 = vmul.f32 %v580, %v595
    %v626 = vmul.f32 %v581, %v591
    %v627 = vmul.f32 %v582, %v595
    %v628 = vmul.f32 %v583, %v591
    %v629 = vmul.f32 %v584, %v595
    %v631 = vlaneseq
    %v632 = vshrl.u32 %v631, 7
    %v633 = vsub.s32 0, %v632
    %v634 = vrot.slane %v586, %v633
    %v635 = vlaneseq
    %v636 = vshrl.u32 %v635, 7
    %v637 = vsub.s32 1, %v636
    %v638 = vrot.slane %v586, %v637
    %v641 = vadd.f32 %v598, %v634
    %v642 = vadd.f32 %v599, %v638
    %v643 = vadd.f32 %v600, %v634
    %v644 = vadd.f32 %v601, %v638
    %v645 = vadd.f32 %v602, %v634
    %v646 = vadd.f32 %v603, %v638
    %v647 = vadd.f32 %v604, %v634
    %v648 = vadd.f32 %v605, %v638
    %v649 = vadd.f32 %v606, %v634
    %v650 = vadd.f32 %v607, %v638
    %v651 = vadd.f32 %v608, %v634
    %v652 = vadd.f32 %v609, %v638
    %v653 = vadd.f32 %v610, %v634
    %v654 = vadd.f32 %v611, %v638
    %v655 = vadd.f32 %v612, %v634
    %v656 = vadd.f32 %v613, %v638
    %v657 = vadd.f32 %v614, %v634
    %v658 = vadd.f32 %v615, %v638
    %v659 = vadd.f32 %v616, %v634
    %v660 = vadd.f32 %v617, %v638
    %v661 = vadd.f32 %v618, %v634
    %v662 = vadd.f32 %v619, %v638
    %v663 = vadd.f32 %v620, %v634
    %v664 = vadd.f32 %v621, %v638
    %v665 = vadd.f32 %v622, %v634
    %v666 = vadd.f32 %v623, %v638
    %v667 = vadd.f32 %v624, %v634
    %v668 = vadd.f32 %v625, %v638
    %v669 = vadd.f32 %v626, %v634
    %v670 = vadd.f32 %v627, %v638
    %v671 = vadd.f32 %v628, %v634
    %v672 = vadd.f32 %v629, %v638
    %v673 = vmax.f32 %v641, 0.0
    %v674 = vmax.f32 %v642, 0.0
    %v675 = vmax.f32 %v643, 0.0
    %v676 = vmax.f32 %v644, 0.0
    %v677 = vmax.f32 %v645, 0.0
    %v678 = vmax.f32 %v646, 0.0
    %v679 = vmax.f32 %v647, 0.0
    %v680 = vmax.f32 %v648, 0.0
    %v681 = vmax.f32 %v649, 0.0
    %v682 = vmax.f32 %v650, 0.0
    %v683 = vmax.f32 %v651, 0.0
    %v684 = vmax.f32 %v652, 0.0
    %v685 = vmax.f32 %v653, 0.0
    %v686 = vmax.f32 %v654, 0.0
    %v687 = vmax.f32 %v655, 0.0
    %v688 = vmax.f32 %v656, 0.0
    %v689 = vmax.f32 %v657, 0.0
    %v690 = vmax.f32 %v658, 0.0
    %v691 = vmax.f32 %v659, 0.0
    %v692 = vmax.f32 %v660, 0.0
    %v693 = vmax.f32 %v661, 0.0
    %v694 = vmax.f32 %v662, 0.0
    %v695 = vmax.f32 %v663, 0.0
    %v696 = vmax.f32 %v664, 0.0
    %v697 = vmax.f32 %v665, 0.0
    %v698 = vmax.f32 %v666, 0.0
    %v699 = vmax.f32 %v667, 0.0
    %v700 = vmax.f32 %v668, 0.0
    %v701 = vmax.f32 %v669, 0.0
    %v702 = vmax.f32 %v670, 0.0
    %v703 = vmax.f32 %v671, 0.0
    %v704 = vmax.f32 %v672, 0.0
    %705 = vst [vmem:[%s4] sm:$0xff] %v673
    %706 = vst [vmem:[%s4 + $0x8] sm:$0xff] %v674
    %707 = vst [vmem:[%s4 + $0x10] sm:$0xff] %v675
    %708 = vst [vmem:[%s4 + $0x18] sm:$0xff] %v676
    %709 = vst [vmem:[%s4 + $0x20] sm:$0xff] %v677
    %710 = vst [vmem:[%s4 + $0x28] sm:$0xff] %v678
    %711 = vst [vmem:[%s4 + $0x30] sm:$0xff] %v679
    %712 = vst [vmem:[%s4 + $0x38] sm:$0xff] %v680
    %713 = vst [vmem:[%s4 + $0x40] sm:$0xff] %v681
    %714 = vst [vmem:[%s4 + $0x48] sm:$0xff] %v682
    %715 = vst [vmem:[%s4 + $0x50] sm:$0xff] %v683
    %716 = vst [vmem:[%s4 + $0x58] sm:$0xff] %v684
    %717 = vst [vmem:[%s4 + $0x60] sm:$0xff] %v685
    %718 = vst [vmem:[%s4 + $0x68] sm:$0xff] %v686
    %719 = vst [vmem:[%s4 + $0x70] sm:$0xff] %v687
    %720 = vst [vmem:[%s4 + $0x78] sm:$0xff] %v688
    %721 = vst [vmem:[%s4 + $0x80] sm:$0xff] %v689
    %722 = vst [vmem:[%s4 + $0x88] sm:$0xff] %v690
    %723 = vst [vmem:[%s4 + $0x90] sm:$0xff] %v691
    %724 = vst [vmem:[%s4 + $0x98] sm:$0xff] %v692
    %725 = vst [vmem:[%s4 + $0xa0] sm:$0xff] %v693
    %726 = vst [vmem:[%s4 + $0xa8] sm:$0xff] %v694
    %727 = vst [vmem:[%s4 + $0xb0] sm:$0xff] %v695
    %728 = vst [vmem:[%s4 + $0xb8] sm:$0xff] %v696
    %729 = vst [vmem:[%s4 + $0xc0] sm:$0xff] %v697
    %730 = vst [vmem:[%s4 + $0xc8] sm:$0xff] %v698
    %731 = vst [vmem:[%s4 + $0xd0] sm:$0xff] %v699
    %732 = vst [vmem:[%s4 + $0xd8] sm:$0xff] %v700
    %733 = vst [vmem:[%s4 + $0xe0] sm:$0xff] %v701
    %734 = vst [vmem:[%s4 + $0xe8] sm:$0xff] %v702
    %735 = vst [vmem:[%s4 + $0xf0] sm:$0xff] %v703
    %736 = vst [vmem:[%s4 + $0xf8] sm:$0xff] %v704
  $region25: #{_lambda_.42} parent=0 // pred_fallthru
    _
  // Predicated region
  $region26: #{_lambda_.42} parent=0 // pred_check
    _
  $region27: #{_lambda_.42} parent=0 // pred_check_branch
    %738 = sbr.rel (0) target = $region29
  $region28: #{_lambda_.42} parent=0 // pred_region
    _
  $region29: #{_lambda_.42} parent=0 // pred_fallthru
    _
  // Predicated region
  $region30: #{_lambda_.42} parent=0 // pred_check
    _
  $region31: #{_lambda_.42} parent=0 // pred_check_branch
    %740 = sbr.rel (0) target = $region33
  $region32: #{_lambda_.42} parent=0 // pred_region
    _
  $region33: #{_lambda_.42} parent=0 // pred_fallthru
    _

// kernel: _lambda_.43
$region0: #{_lambda_.43}
  #allocation0 [shape = 'u32[]', space=smem, size = 0x4, offset = 0x4, fixed_abs, tag = 'smem constant byte address 0x4 - core index']
  #allocation1 [shape = 'u32[144,128]{1,0:T(1,128)}', space=vmem, size = 0x12000, scoped, tag = 'internal scratch']
  #allocation2 [shape = 'f32[128,128]{1,0:T(8,128)}', space=vmem, size = 0x10000, scoped, tag = 'scratch operand']
  %s0 = inlined_call_operand.vmem [shape: bf16[128,256], index: 0, kind: input, shape index: {}]
  %s1 = inlined_call_operand.vmem [shape: bf16[256,128], index: 1, kind: input, shape index: {}]
  %s2 = inlined_call_operand.vmem [shape: f32[1,128], index: 2, kind: input, shape index: {}]
  %s3 = inlined_call_operand.vmem [shape: f32[1,128], index: 3, kind: input, shape index: {}]
  %s4 = inlined_call_operand.vmem [shape: f32[128,128], index: 4, kind: output, shape index: {}]
  %s5 = sld [smem:[#allocation0]]
  $region34: #{_lambda_.43} parent=0
    _
  %s7 = ssub.s32 1, %s5
  %s8 = scalar_select 0, %s7, %s5
  // Predicated region
  $region2: #{_lambda_.43} parent=0 // pred_check
    _
  $region3: #{_lambda_.43} parent=0 // pred_check_branch
    %10 = sbr.rel (0) target = $region5
  $region4: #{_lambda_.43} parent=0 // pred_region
    _
  $region5: #{_lambda_.43} parent=0 // pred_fallthru
    _
  // Predicated region
  $region6: #{_lambda_.43} parent=0 // pred_check
    _
  $region7: #{_lambda_.43} parent=0 // pred_check_branch
    %12 = sbr.rel (0) target = $region9
  $region8: #{_lambda_.43} parent=0 // pred_region
    _
  $region9: #{_lambda_.43} parent=0 // pred_fallthru
    _
  // Predicated region
  $region10: #{_lambda_.43} parent=0 // pred_check
    _
  $region11: #{_lambda_.43} parent=0 // pred_check_branch
    %14 = sbr.rel (0) target = $region13
  $region12: #{_lambda_.43} parent=0 // pred_region
    _
  $region13: #{_lambda_.43} parent=0 // pred_fallthru
    _
  // Predicated region
  $region14: #{_lambda_.43} parent=0 // pred_check
    _
  $region15: #{_lambda_.43} parent=0 // pred_check_branch
    %16 = sbr.rel (0) target = $region17
  $region16: #{_lambda_.43} parent=0 // pred_region
    _
  $region17: #{_lambda_.43} parent=0 // pred_fallthru
    _
  %p18 = scmp.eq.s32.totalorder 0, 0
  // Predicated region
  $region18: #{_lambda_.43} parent=0 // pred_check
    %p19 = pneg %p18
  $region19: #{_lambda_.43} parent=0 // pred_check_branch
    %21 = sbr.rel (%p19) target = $region21
  $region20: #{_lambda_.43} parent=0 // pred_region
    %22 = vst [vmem:[#allocation2] sm:$0xff] 0.0
    %23 = vst [vmem:[#allocation2 + $0x8] sm:$0xff] 0.0
    %24 = vst [vmem:[#allocation2 + $0x10] sm:$0xff] 0.0
    %25 = vst [vmem:[#allocation2 + $0x18] sm:$0xff] 0.0
    %26 = vst [vmem:[#allocation2 + $0x20] sm:$0xff] 0.0
    %27 = vst [vmem:[#allocation2 + $0x28] sm:$0xff] 0.0
    %28 = vst [vmem:[#allocation2 + $0x30] sm:$0xff] 0.0
    %29 = vst [vmem:[#allocation2 + $0x38] sm:$0xff] 0.0
    %30 = vst [vmem:[#allocation2 + $0x40] sm:$0xff] 0.0
    %31 = vst [vmem:[#allocation2 + $0x48] sm:$0xff] 0.0
    %32 = vst [vmem:[#allocation2 + $0x50] sm:$0xff] 0.0
    %33 = vst [vmem:[#allocation2 + $0x58] sm:$0xff] 0.0
    %34 = vst [vmem:[#allocation2 + $0x60] sm:$0xff] 0.0
    %35 = vst [vmem:[#allocation2 + $0x68] sm:$0xff] 0.0
    %36 = vst [vmem:[#allocation2 + $0x70] sm:$0xff] 0.0
    %37 = vst [vmem:[#allocation2 + $0x78] sm:$0xff] 0.0
  $region21: #{_lambda_.43} parent=0 // pred_fallthru
    _
  %v38 = vld [vmem:[#allocation2] sm:$0xff]
  %v39 = vld [vmem:[#allocation2 + $0x8] sm:$0xff]
  %v40 = vld [vmem:[#allocation2 + $0x10] sm:$0xff]
  %v41 = vld [vmem:[#allocation2 + $0x18] sm:$0xff]
  %v42 = vld [vmem:[#allocation2 + $0x20] sm:$0xff]
  %v43 = vld [vmem:[#allocation2 + $0x28] sm:$0xff]
  %v44 = vld [vmem:[#allocation2 + $0x30] sm:$0xff]
  %v45 = vld [vmem:[#allocation2 + $0x38] sm:$0xff]
  %v46 = vld [vmem:[#allocation2 + $0x40] sm:$0xff]
  %v47 = vld [vmem:[#allocation2 + $0x48] sm:$0xff]
  %v48 = vld [vmem:[#allocation2 + $0x50] sm:$0xff]
  %v49 = vld [vmem:[#allocation2 + $0x58] sm:$0xff]
  %v50 = vld [vmem:[#allocation2 + $0x60] sm:$0xff]
  %v51 = vld [vmem:[#allocation2 + $0x68] sm:$0xff]
  %v52 = vld [vmem:[#allocation2 + $0x70] sm:$0xff]
  %v53 = vld [vmem:[#allocation2 + $0x78] sm:$0xff]
  %v54 = vld [vmem:[%s0] sm:$0xff]
  %v55 = vld [vmem:[%s0 + $0x8] sm:$0xff]
  %v56 = vld [vmem:[%s0 + $0x10] sm:$0xff]
  %v57 = vld [vmem:[%s0 + $0x18] sm:$0xff]
  %v58 = vld [vmem:[%s0 + $0x20] sm:$0xff]
  %v59 = vld [vmem:[%s0 + $0x28] sm:$0xff]
  %v60 = vld [vmem:[%s0 + $0x30] sm:$0xff]
  %v61 = vld [vmem:[%s0 + $0x38] sm:$0xff]
  %v62 = vld [vmem:[%s0 + $0x40] sm:$0xff]
  %v63 = vld [vmem:[%s0 + $0x48] sm:$0xff]
  %v64 = vld [vmem:[%s0 + $0x50] sm:$0xff]
  %v65 = vld [vmem:[%s0 + $0x58] sm:$0xff]
  %v66 = vld [vmem:[%s0 + $0x60] sm:$0xff]
  %v67 = vld [vmem:[%s0 + $0x68] sm:$0xff]
  %v68 = vld [vmem:[%s0 + $0x70] sm:$0xff]
  %v69 = vld [vmem:[%s0 + $0x78] sm:$0xff]
  %v70 = vld [vmem:[%s1] sm:$0xf]
  %v71 = vld [vmem:[%s1 + $0x4] sm:$0xf]
  %v72 = vld [vmem:[%s1 + $0x8] sm:$0xf]
  %v73 = vld [vmem:[%s1 + $0xc] sm:$0xf]
  %v74 = vld [vmem:[%s1 + $0x10] sm:$0xf]
  %v75 = vld [vmem:[%s1 + $0x14] sm:$0xf]
  %v76 = vld [vmem:[%s1 + $0x18] sm:$0xf]
  %v77 = vld [vmem:[%s1 + $0x1c] sm:$0xf]
  %v78 = vld [vmem:[%s1 + $0x20] sm:$0xf]
  %v79 = vld [vmem:[%s1 + $0x24] sm:$0xf]
  %v80 = vld [vmem:[%s1 + $0x28] sm:$0xf]
  %v81 = vld [vmem:[%s1 + $0x2c] sm:$0xf]
  %v82 = vld [vmem:[%s1 + $0x30] sm:$0xf]
  %v83 = vld [vmem:[%s1 + $0x34] sm:$0xf]
  %v84 = vld [vmem:[%s1 + $0x38] sm:$0xf]
  %v85 = vld [vmem:[%s1 + $0x3c] sm:$0xf]
  %v86 = vld [vmem:[%s1 + $0x40] sm:$0xf]
  %v87 = vld [vmem:[%s1 + $0x44] sm:$0xf]
  %v88 = vld [vmem:[%s1 + $0x48] sm:$0xf]
  %v89 = vld [vmem:[%s1 + $0x4c] sm:$0xf]
  %v90 = vld [vmem:[%s1 + $0x50] sm:$0xf]
  %v91 = vld [vmem:[%s1 + $0x54] sm:$0xf]
  %v92 = vld [vmem:[%s1 + $0x58] sm:$0xf]
  %v93 = vld [vmem:[%s1 + $0x5c] sm:$0xf]
  %v94 = vld [vmem:[%s1 + $0x60] sm:$0xf]
  %v95 = vld [vmem:[%s1 + $0x64] sm:$0xf]
  %v96 = vld [vmem:[%s1 + $0x68] sm:$0xf]
  %v97 = vld [vmem:[%s1 + $0x6c] sm:$0xf]
  %v98 = vld [vmem:[%s1 + $0x70] sm:$0xf]
  %v99 = vld [vmem:[%s1 + $0x74] sm:$0xf]
  %v100 = vld [vmem:[%s1 + $0x78] sm:$0xf]
  %v101 = vld [vmem:[%s1 + $0x7c] sm:$0xf]
  %v118 = vunpack.c.l.b16 %v54
  %v119 = vunpack.c.h.b16 %v54
  %v120 = vunpack.c.l.b16 %v55
  %v121 = vunpack.c.h.b16 %v55
  %v122 = vunpack.c.l.b16 %v56
  %v123 = vunpack.c.h.b16 %v56
  %v124 = vunpack.c.l.b16 %v57
  %v125 = vunpack.c.h.b16 %v57
  %v126 = vunpack.c.l.b16 %v58
  %v127 = vunpack.c.h.b16 %v58
  %v128 = vunpack.c.l.b16 %v59
  %v129 = vunpack.c.h.b16 %v59
  %v130 = vunpack.c.l.b16 %v60
  %v131 = vunpack.c.h.b16 %v60
  %v132 = vunpack.c.l.b16 %v61
  %v133 = vunpack.c.h.b16 %v61
  %v134 = vunpack.c.l.b16 %v62
  %v135 = vunpack.c.h.b16 %v62
  %v136 = vunpack.c.l.b16 %v63
  %v137 = vunpack.c.h.b16 %v63
  %v138 = vunpack.c.l.b16 %v64
  %v139 = vunpack.c.h.b16 %v64
  %v140 = vunpack.c.l.b16 %v65
  %v141 = vunpack.c.h.b16 %v65
  %v142 = vunpack.c.l.b16 %v66
  %v143 = vunpack.c.h.b16 %v66
  %v144 = vunpack.c.l.b16 %v67
  %v145 = vunpack.c.h.b16 %v67
  %v146 = vunpack.c.l.b16 %v68
  %v147 = vunpack.c.h.b16 %v68
  %v148 = vunpack.c.l.b16 %v69
  %v149 = vunpack.c.h.b16 %v69
  %v150 = vpack.c.b16 %v120, %v118
  %v151 = vpack.c.b16 %v121, %v119
  %v152 = vpack.c.b16 %v124, %v122
  %v153 = vpack.c.b16 %v125, %v123
  %v154 = vpack.c.b16 %v128, %v126
  %v155 = vpack.c.b16 %v129, %v127
  %v156 = vpack.c.b16 %v132, %v130
  %v157 = vpack.c.b16 %v133, %v131
  %v158 = vpack.c.b16 %v136, %v134
  %v159 = vpack.c.b16 %v137, %v135
  %v160 = vpack.c.b16 %v140, %v138
  %v161 = vpack.c.b16 %v141, %v139
  %v162 = vpack.c.b16 %v144, %v142
  %v163 = vpack.c.b16 %v145, %v143
  %v164 = vpack.c.b16 %v148, %v146
  %v165 = vpack.c.b16 %v149, %v147
  %v214 = vunpack.c.l.b16 %v70
  %v215 = vunpack.c.l.b16 %v71
  %v216 = vunpack.c.l.b16 %v72
  %v217 = vunpack.c.l.b16 %v73
  %v218 = vunpack.c.l.b16 %v74
  %v219 = vunpack.c.l.b16 %v75
  %v220 = vunpack.c.l.b16 %v76
  %v221 = vunpack.c.l.b16 %v77
  %v222 = vunpack.c.l.b16 %v78
  %v223 = vunpack.c.l.b16 %v79
  %v224 = vunpack.c.l.b16 %v80
  %v225 = vunpack.c.l.b16 %v81
  %v226 = vunpack.c.l.b16 %v82
  %v227 = vunpack.c.l.b16 %v83
  %v228 = vunpack.c.l.b16 %v84
  %v229 = vunpack.c.l.b16 %v85
  %v230 = vunpack.c.l.b16 %v86
  %v231 = vunpack.c.l.b16 %v87
  %v232 = vunpack.c.l.b16 %v88
  %v233 = vunpack.c.l.b16 %v89
  %v234 = vunpack.c.l.b16 %v90
  %v235 = vunpack.c.l.b16 %v91
  %v236 = vunpack.c.l.b16 %v92
  %v237 = vunpack.c.l.b16 %v93
  %v238 = vunpack.c.l.b16 %v94
  %v239 = vunpack.c.l.b16 %v95
  %v240 = vunpack.c.l.b16 %v96
  %v241 = vunpack.c.l.b16 %v97
  %v242 = vunpack.c.l.b16 %v98
  %v243 = vunpack.c.l.b16 %v99
  %v244 = vunpack.c.l.b16 %v100
  %v245 = vunpack.c.l.b16 %v101
  %v246 = vpack.c.b16 %v215, %v214
  %v247 = vpack.c.b16 %v217, %v216
  %v248 = vpack.c.b16 %v219, %v218
  %v249 = vpack.c.b16 %v221, %v220
  %v250 = vpack.c.b16 %v223, %v222
  %v251 = vpack.c.b16 %v225, %v224
  %v252 = vpack.c.b16 %v227, %v226
  %v253 = vpack.c.b16 %v229, %v228
  %v254 = vpack.c.b16 %v231, %v230
  %v255 = vpack.c.b16 %v233, %v232
  %v256 = vpack.c.b16 %v235, %v234
  %v257 = vpack.c.b16 %v237, %v236
  %v258 = vpack.c.b16 %v239, %v238
  %v259 = vpack.c.b16 %v241, %v240
  %v260 = vpack.c.b16 %v243, %v242
  %v261 = vpack.c.b16 %v245, %v244
  %278 = vmatprep.subr.bf16.mxu0 0
  %279 = vmatpush1.bf16.msra.mxu0 %v246
  %280 = vmatprep.subr.bf16.mxu0 0
  %281 = vmatpush1.bf16.msra.mxu0 %v247
  %282 = vmatprep.subr.bf16.mxu0 0
  %283 = vmatpush1.bf16.msra.mxu0 %v248
  %284 = vmatprep.subr.bf16.mxu0 0
  %285 = vmatpush1.bf16.msra.mxu0 %v249
  %286 = vmatprep.subr.bf16.mxu0 0
  %287 = vmatpush1.bf16.msra.mxu0 %v250
  %288 = vmatprep.subr.bf16.mxu0 0
  %289 = vmatpush1.bf16.msra.mxu0 %v251
  %290 = vmatprep.subr.bf16.mxu0 0
  %291 = vmatpush1.bf16.msra.mxu0 %v252
  %292 = vmatprep.subr.bf16.mxu0 0
  %293 = vmatpush1.bf16.msra.mxu0 %v253
  %294 = vmatprep.subr.bf16.mxu0 0
  %295 = vmatpush1.bf16.msra.mxu0 %v254
  %296 = vmatprep.subr.bf16.mxu0 0
  %297 = vmatpush1.bf16.msra.mxu0 %v255
  %298 = vmatprep.subr.bf16.mxu0 0
  %299 = vmatpush1.bf16.msra.mxu0 %v256
  %300 = vmatprep.subr.bf16.mxu0 0
  %301 = vmatpush1.bf16.msra.mxu0 %v257
  %302 = vmatprep.subr.bf16.mxu0 0
  %303 = vmatpush1.bf16.msra.mxu0 %v258
  %304 = vmatprep.subr.bf16.mxu0 0
  %305 = vmatpush1.bf16.msra.mxu0 %v259
  %306 = vmatprep.subr.bf16.mxu0 0
  %307 = vmatpush1.bf16.msra.mxu0 %v260
  %308 = vmatprep.subr.bf16.mxu0 0
  %309 = vmatpush1.bf16.msra.mxu0 %v261
  %310 = vmatprep.mubr.bf16.mxu0 %v151
  %311 = vmatmul.mubr.bf16.gmra.mrb[0].mxu0 %v150
  %v312 = vpop.f32.mrb[0].mxu0
  %v313 = vadd.f32 0.0, %v312
  %v314 = vpop.f32.mrb[0].mxu0
  %v315 = vpop.f32.mrb[0].mxu0
  %v316 = vadd.f32 0.0, %v315
  %v317 = vpop.f32.mrb[0].mxu0
  %318 = vmatprep.mubr.bf16.mxu0 %v153
  %319 = vmatmul.mubr.bf16.gmra.mrb[0].mxu0 %v152
  %v320 = vpop.f32.mrb[0].mxu0
  %v321 = vadd.f32 0.0, %v320
  %v322 = vpop.f32.mrb[0].mxu0
  %v323 = vpop.f32.mrb[0].mxu0
  %v324 = vadd.f32 0.0, %v323
  %v325 = vpop.f32.mrb[0].mxu0
  %326 = vmatprep.mubr.bf16.mxu0 %v155
  %327 = vmatmul.mubr.bf16.gmra.mrb[0].mxu0 %v154
  %v328 = vpop.f32.mrb[0].mxu0
  %v329 = vadd.f32 0.0, %v328
  %v330 = vpop.f32.mrb[0].mxu0
  %v331 = vpop.f32.mrb[0].mxu0
  %v332 = vadd.f32 0.0, %v331
  %v333 = vpop.f32.mrb[0].mxu0
  %334 = vmatprep.mubr.bf16.mxu0 %v157
  %335 = vmatmul.mubr.bf16.gmra.mrb[0].mxu0 %v156
  %v336 = vpop.f32.mrb[0].mxu0
  %v337 = vadd.f32 0.0, %v336
  %v338 = vpop.f32.mrb[0].mxu0
  %v339 = vpop.f32.mrb[0].mxu0
  %v340 = vadd.f32 0.0, %v339
  %v341 = vpop.f32.mrb[0].mxu0
  %342 = vmatprep.mubr.bf16.mxu0 %v159
  %343 = vmatmul.mubr.bf16.gmra.mrb[0].mxu0 %v158
  %v344 = vpop.f32.mrb[0].mxu0
  %v345 = vadd.f32 0.0, %v344
  %v346 = vpop.f32.mrb[0].mxu0
  %v347 = vpop.f32.mrb[0].mxu0
  %v348 = vadd.f32 0.0, %v347
  %v349 = vpop.f32.mrb[0].mxu0
  %350 = vmatprep.mubr.bf16.mxu0 %v161
  %351 = vmatmul.mubr.bf16.gmra.mrb[0].mxu0 %v160
  %v352 = vpop.f32.mrb[0].mxu0
  %v353 = vadd.f32 0.0, %v352
  %v354 = vpop.f32.mrb[0].mxu0
  %v355 = vpop.f32.mrb[0].mxu0
  %v356 = vadd.f32 0.0, %v355
  %v357 = vpop.f32.mrb[0].mxu0
  %358 = vmatprep.mubr.bf16.mxu0 %v163
  %359 = vmatmul.mubr.bf16.gmra.mrb[0].mxu0 %v162
  %v360 = vpop.f32.mrb[0].mxu0
  %v361 = vadd.f32 0.0, %v360
  %v362 = vpop.f32.mrb[0].mxu0
  %v363 = vpop.f32.mrb[0].mxu0
  %v364 = vadd.f32 0.0, %v363
  %v365 = vpop.f32.mrb[0].mxu0
  %366 = vmatprep.mubr.bf16.mxu0 %v165
  %367 = vmatmul.mubr.bf16.gmra.mrb[0].mxu0 %v164
  %v368 = vpop.f32.mrb[0].mxu0
  %v369 = vadd.f32 0.0, %v368
  %v370 = vpop.f32.mrb[0].mxu0
  %v371 = vpop.f32.mrb[0].mxu0
  %v372 = vadd.f32 0.0, %v371
  %v373 = vpop.f32.mrb[0].mxu0
  %374 = vdwg.mxu0
  %v375 = vadd.f32 %v38, %v313
  %v376 = vadd.f32 %v39, %v316
  %v377 = vadd.f32 %v40, %v321
  %v378 = vadd.f32 %v41, %v324
  %v379 = vadd.f32 %v42, %v329
  %v380 = vadd.f32 %v43, %v332
  %v381 = vadd.f32 %v44, %v337
  %v382 = vadd.f32 %v45, %v340
  %v383 = vadd.f32 %v46, %v345
  %v384 = vadd.f32 %v47, %v348
  %v385 = vadd.f32 %v48, %v353
  %v386 = vadd.f32 %v49, %v356
  %v387 = vadd.f32 %v50, %v361
  %v388 = vadd.f32 %v51, %v364
  %v389 = vadd.f32 %v52, %v369
  %v390 = vadd.f32 %v53, %v372
  %391 = vst [vmem:[#allocation2] sm:$0xff] %v375
  %392 = vst [vmem:[#allocation2 + $0x8] sm:$0xff] %v376
  %393 = vst [vmem:[#allocation2 + $0x10] sm:$0xff] %v377
  %394 = vst [vmem:[#allocation2 + $0x18] sm:$0xff] %v378
  %395 = vst [vmem:[#allocation2 + $0x20] sm:$0xff] %v379
  %396 = vst [vmem:[#allocation2 + $0x28] sm:$0xff] %v380
  %397 = vst [vmem:[#allocation2 + $0x30] sm:$0xff] %v381
  %398 = vst [vmem:[#allocation2 + $0x38] sm:$0xff] %v382
  %399 = vst [vmem:[#allocation2 + $0x40] sm:$0xff] %v383
  %400 = vst [vmem:[#allocation2 + $0x48] sm:$0xff] %v384
  %401 = vst [vmem:[#allocation2 + $0x50] sm:$0xff] %v385
  %402 = vst [vmem:[#allocation2 + $0x58] sm:$0xff] %v386
  %403 = vst [vmem:[#allocation2 + $0x60] sm:$0xff] %v387
  %404 = vst [vmem:[#allocation2 + $0x68] sm:$0xff] %v388
  %405 = vst [vmem:[#allocation2 + $0x70] sm:$0xff] %v389
  %406 = vst [vmem:[#allocation2 + $0x78] sm:$0xff] %v390
  // Predicated region
  $region22: #{_lambda_.43} parent=0 // pred_check
    %p407 = pneg %p18
  $region23: #{_lambda_.43} parent=0 // pred_check_branch
    %409 = sbr.rel (%p407) target = $region25
  $region24: #{_lambda_.43} parent=0 // pred_region
    %v410 = vld [vmem:[#allocation2] sm:$0xff]
    %v411 = vld [vmem:[#allocation2 + $0x8] sm:$0xff]
    %v412 = vld [vmem:[#allocation2 + $0x10] sm:$0xff]
    %v413 = vld [vmem:[#allocation2 + $0x18] sm:$0xff]
    %v414 = vld [vmem:[#allocation2 + $0x20] sm:$0xff]
    %v415 = vld [vmem:[#allocation2 + $0x28] sm:$0xff]
    %v416 = vld [vmem:[#allocation2 + $0x30] sm:$0xff]
    %v417 = vld [vmem:[#allocation2 + $0x38] sm:$0xff]
    %v418 = vld [vmem:[#allocation2 + $0x40] sm:$0xff]
    %v419 = vld [vmem:[#allocation2 + $0x48] sm:$0xff]
    %v420 = vld [vmem:[#allocation2 + $0x50] sm:$0xff]
    %v421 = vld [vmem:[#allocation2 + $0x58] sm:$0xff]
    %v422 = vld [vmem:[#allocation2 + $0x60] sm:$0xff]
    %v423 = vld [vmem:[#allocation2 + $0x68] sm:$0xff]
    %v424 = vld [vmem:[#allocation2 + $0x70] sm:$0xff]
    %v425 = vld [vmem:[#allocation2 + $0x78] sm:$0xff]
    %v426 = vld [vmem:[%s2] sm:$0x1]
    %v427 = vld [vmem:[%s3] sm:$0x1]
    %v429 = vlaneseq
    %v430 = vshrl.u32 %v429, 7
    %v431 = vsub.s32 0, %v430
    %v432 = vrot.slane %v426, %v431
    %v434 = vmul.f32 %v410, %v432
    %v435 = vmul.f32 %v411, %v432
    %v436 = vmul.f32 %v412, %v432
    %v437 = vmul.f32 %v413, %v432
    %v438 = vmul.f32 %v414, %v432
    %v439 = vmul.f32 %v415, %v432
    %v440 = vmul.f32 %v416, %v432
    %v441 = vmul.f32 %v417, %v432
    %v442 = vmul.f32 %v418, %v432
    %v443 = vmul.f32 %v419, %v432
    %v444 = vmul.f32 %v420, %v432
    %v445 = vmul.f32 %v421, %v432
    %v446 = vmul.f32 %v422, %v432
    %v447 = vmul.f32 %v423, %v432
    %v448 = vmul.f32 %v424, %v432
    %v449 = vmul.f32 %v425, %v432
    %v451 = vlaneseq
    %v452 = vshrl.u32 %v451, 7
    %v453 = vsub.s32 0, %v452
    %v454 = vrot.slane %v427, %v453
    %v456 = vadd.f32 %v434, %v454
    %v457 = vadd.f32 %v435, %v454
    %v458 = vadd.f32 %v436, %v454
    %v459 = vadd.f32 %v437, %v454
    %v460 = vadd.f32 %v438, %v454
    %v461 = vadd.f32 %v439, %v454
    %v462 = vadd.f32 %v440, %v454
    %v463 = vadd.f32 %v441, %v454
    %v464 = vadd.f32 %v442, %v454
    %v465 = vadd.f32 %v443, %v454
    %v466 = vadd.f32 %v444, %v454
    %v467 = vadd.f32 %v445, %v454
    %v468 = vadd.f32 %v446, %v454
    %v469 = vadd.f32 %v447, %v454
    %v470 = vadd.f32 %v448, %v454
    %v471 = vadd.f32 %v449, %v454
    %472 = vst [vmem:[%s4] sm:$0xff] %v456
    %473 = vst [vmem:[%s4 + $0x8] sm:$0xff] %v457
    %474 = vst [vmem:[%s4 + $0x10] sm:$0xff] %v458
    %475 = vst [vmem:[%s4 + $0x18] sm:$0xff] %v459
    %476 = vst [vmem:[%s4 + $0x20] sm:$0xff] %v460
    %477 = vst [vmem:[%s4 + $0x28] sm:$0xff] %v461
    %478 = vst [vmem:[%s4 + $0x30] sm:$0xff] %v462
    %479 = vst [vmem:[%s4 + $0x38] sm:$0xff] %v463
    %480 = vst [vmem:[%s4 + $0x40] sm:$0xff] %v464
    %481 = vst [vmem:[%s4 + $0x48] sm:$0xff] %v465
    %482 = vst [vmem:[%s4 + $0x50] sm:$0xff] %v466
    %483 = vst [vmem:[%s4 + $0x58] sm:$0xff] %v467
    %484 = vst [vmem:[%s4 + $0x60] sm:$0xff] %v468
    %485 = vst [vmem:[%s4 + $0x68] sm:$0xff] %v469
    %486 = vst [vmem:[%s4 + $0x70] sm:$0xff] %v470
    %487 = vst [vmem:[%s4 + $0x78] sm:$0xff] %v471
  $region25: #{_lambda_.43} parent=0 // pred_fallthru
    _
  // Predicated region
  $region26: #{_lambda_.43} parent=0 // pred_check
    _
  $region27: #{_lambda_.43} parent=0 // pred_check_branch
    %489 = sbr.rel (0) target = $region29
  $region28: #{_lambda_.43} parent=0 // pred_region
    _
  $region29: #{_lambda_.43} parent=0 // pred_fallthru
    _
  // Predicated region
  $region30: #{_lambda_.43} parent=0 // pred_check
    _
  $region31: #{_lambda_.43} parent=0 // pred_check_branch
    %491 = sbr.rel (0) target = $region33
  $region32: #{_lambda_.43} parent=0 // pred_region
    _
  $region33: #{_lambda_.43} parent=0 // pred_fallthru
    _

// kernel: _lambda_.45
$region0: #{_lambda_.45}
  #allocation0 [shape = 'u32[]', space=smem, size = 0x4, offset = 0x4, fixed_abs, tag = 'smem constant byte address 0x4 - core index']
  #allocation1 [shape = 'u32[144,128]{1,0:T(1,128)}', space=vmem, size = 0x12000, scoped, tag = 'internal scratch']
  #allocation2 [shape = 'f32[128,128]{1,0:T(8,128)}', space=vmem, size = 0x10000, scoped, tag = 'scratch operand']
  %s0 = inlined_call_operand.vmem [shape: bf16[128,256], index: 0, kind: input, shape index: {}]
  %s1 = inlined_call_operand.vmem [shape: bf16[256,128], index: 1, kind: input, shape index: {}]
  %s2 = inlined_call_operand.vmem [shape: f32[1,128], index: 2, kind: input, shape index: {}]
  %s3 = inlined_call_operand.vmem [shape: f32[1,128], index: 3, kind: input, shape index: {}]
  %s4 = inlined_call_operand.vmem [shape: f32[128,128], index: 4, kind: output, shape index: {}]
  %s5 = sld [smem:[#allocation0]]
  $region34: #{_lambda_.45} parent=0
    _
  %s7 = ssub.s32 1, %s5
  %s8 = scalar_select 0, %s7, %s5
  // Predicated region
  $region2: #{_lambda_.45} parent=0 // pred_check
    _
  $region3: #{_lambda_.45} parent=0 // pred_check_branch
    %10 = sbr.rel (0) target = $region5
  $region4: #{_lambda_.45} parent=0 // pred_region
    _
  $region5: #{_lambda_.45} parent=0 // pred_fallthru
    _
  // Predicated region
  $region6: #{_lambda_.45} parent=0 // pred_check
    _
  $region7: #{_lambda_.45} parent=0 // pred_check_branch
    %12 = sbr.rel (0) target = $region9
  $region8: #{_lambda_.45} parent=0 // pred_region
    _
  $region9: #{_lambda_.45} parent=0 // pred_fallthru
    _
  // Predicated region
  $region10: #{_lambda_.45} parent=0 // pred_check
    _
  $region11: #{_lambda_.45} parent=0 // pred_check_branch
    %14 = sbr.rel (0) target = $region13
  $region12: #{_lambda_.45} parent=0 // pred_region
    _
  $region13: #{_lambda_.45} parent=0 // pred_fallthru
    _
  // Predicated region
  $region14: #{_lambda_.45} parent=0 // pred_check
    _
  $region15: #{_lambda_.45} parent=0 // pred_check_branch
    %16 = sbr.rel (0) target = $region17
  $region16: #{_lambda_.45} parent=0 // pred_region
    _
  $region17: #{_lambda_.45} parent=0 // pred_fallthru
    _
  %p18 = scmp.eq.s32.totalorder 0, 0
  // Predicated region
  $region18: #{_lambda_.45} parent=0 // pred_check
    %p19 = pneg %p18
  $region19: #{_lambda_.45} parent=0 // pred_check_branch
    %21 = sbr.rel (%p19) target = $region21
  $region20: #{_lambda_.45} parent=0 // pred_region
    %22 = vst [vmem:[#allocation2] sm:$0xff] 0.0
    %23 = vst [vmem:[#allocation2 + $0x8] sm:$0xff] 0.0
    %24 = vst [vmem:[#allocation2 + $0x10] sm:$0xff] 0.0
    %25 = vst [vmem:[#allocation2 + $0x18] sm:$0xff] 0.0
    %26 = vst [vmem:[#allocation2 + $0x20] sm:$0xff] 0.0
    %27 = vst [vmem:[#allocation2 + $0x28] sm:$0xff] 0.0
    %28 = vst [vmem:[#allocation2 + $0x30] sm:$0xff] 0.0
    %29 = vst [vmem:[#allocation2 + $0x38] sm:$0xff] 0.0
    %30 = vst [vmem:[#allocation2 + $0x40] sm:$0xff] 0.0
    %31 = vst [vmem:[#allocation2 + $0x48] sm:$0xff] 0.0
    %32 = vst [vmem:[#allocation2 + $0x50] sm:$0xff] 0.0
    %33 = vst [vmem:[#allocation2 + $0x58] sm:$0xff] 0.0
    %34 = vst [vmem:[#allocation2 + $0x60] sm:$0xff] 0.0
    %35 = vst [vmem:[#allocation2 + $0x68] sm:$0xff] 0.0
    %36 = vst [vmem:[#allocation2 + $0x70] sm:$0xff] 0.0
    %37 = vst [vmem:[#allocation2 + $0x78] sm:$0xff] 0.0
  $region21: #{_lambda_.45} parent=0 // pred_fallthru
    _
  %v38 = vld [vmem:[#allocation2] sm:$0xff]
  %v39 = vld [vmem:[#allocation2 + $0x8] sm:$0xff]
  %v40 = vld [vmem:[#allocation2 + $0x10] sm:$0xff]
  %v41 = vld [vmem:[#allocation2 + $0x18] sm:$0xff]
  %v42 = vld [vmem:[#allocation2 + $0x20] sm:$0xff]
  %v43 = vld [vmem:[#allocation2 + $0x28] sm:$0xff]
  %v44 = vld [vmem:[#allocation2 + $0x30] sm:$0xff]
  %v45 = vld [vmem:[#allocation2 + $0x38] sm:$0xff]
  %v46 = vld [vmem:[#allocation2 + $0x40] sm:$0xff]
  %v47 = vld [vmem:[#allocation2 + $0x48] sm:$0xff]
  %v48 = vld [vmem:[#allocation2 + $0x50] sm:$0xff]
  %v49 = vld [vmem:[#allocation2 + $0x58] sm:$0xff]
  %v50 = vld [vmem:[#allocation2 + $0x60] sm:$0xff]
  %v51 = vld [vmem:[#allocation2 + $0x68] sm:$0xff]
  %v52 = vld [vmem:[#allocation2 + $0x70] sm:$0xff]
  %v53 = vld [vmem:[#allocation2 + $0x78] sm:$0xff]
  %v54 = vld [vmem:[%s0] sm:$0xff]
  %v55 = vld [vmem:[%s0 + $0x8] sm:$0xff]
  %v56 = vld [vmem:[%s0 + $0x10] sm:$0xff]
  %v57 = vld [vmem:[%s0 + $0x18] sm:$0xff]
  %v58 = vld [vmem:[%s0 + $0x20] sm:$0xff]
  %v59 = vld [vmem:[%s0 + $0x28] sm:$0xff]
  %v60 = vld [vmem:[%s0 + $0x30] sm:$0xff]
  %v61 = vld [vmem:[%s0 + $0x38] sm:$0xff]
  %v62 = vld [vmem:[%s0 + $0x40] sm:$0xff]
  %v63 = vld [vmem:[%s0 + $0x48] sm:$0xff]
  %v64 = vld [vmem:[%s0 + $0x50] sm:$0xff]
  %v65 = vld [vmem:[%s0 + $0x58] sm:$0xff]
  %v66 = vld [vmem:[%s0 + $0x60] sm:$0xff]
  %v67 = vld [vmem:[%s0 + $0x68] sm:$0xff]
  %v68 = vld [vmem:[%s0 + $0x70] sm:$0xff]
  %v69 = vld [vmem:[%s0 + $0x78] sm:$0xff]
  %v70 = vld [vmem:[%s1] sm:$0xf]
  %v71 = vld [vmem:[%s1 + $0x4] sm:$0xf]
  %v72 = vld [vmem:[%s1 + $0x8] sm:$0xf]
  %v73 = vld [vmem:[%s1 + $0xc] sm:$0xf]
  %v74 = vld [vmem:[%s1 + $0x10] sm:$0xf]
  %v75 = vld [vmem:[%s1 + $0x14] sm:$0xf]
  %v76 = vld [vmem:[%s1 + $0x18] sm:$0xf]
  %v77 = vld [vmem:[%s1 + $0x1c] sm:$0xf]
  %v78 = vld [vmem:[%s1 + $0x20] sm:$0xf]
  %v79 = vld [vmem:[%s1 + $0x24] sm:$0xf]
  %v80 = vld [vmem:[%s1 + $0x28] sm:$0xf]
  %v81 = vld [vmem:[%s1 + $0x2c] sm:$0xf]
  %v82 = vld [vmem:[%s1 + $0x30] sm:$0xf]
  %v83 = vld [vmem:[%s1 + $0x34] sm:$0xf]
  %v84 = vld [vmem:[%s1 + $0x38] sm:$0xf]
  %v85 = vld [vmem:[%s1 + $0x3c] sm:$0xf]
  %v86 = vld [vmem:[%s1 + $0x40] sm:$0xf]
  %v87 = vld [vmem:[%s1 + $0x44] sm:$0xf]
  %v88 = vld [vmem:[%s1 + $0x48] sm:$0xf]
  %v89 = vld [vmem:[%s1 + $0x4c] sm:$0xf]
  %v90 = vld [vmem:[%s1 + $0x50] sm:$0xf]
  %v91 = vld [vmem:[%s1 + $0x54] sm:$0xf]
  %v92 = vld [vmem:[%s1 + $0x58] sm:$0xf]
  %v93 = vld [vmem:[%s1 + $0x5c] sm:$0xf]
  %v94 = vld [vmem:[%s1 + $0x60] sm:$0xf]
  %v95 = vld [vmem:[%s1 + $0x64] sm:$0xf]
  %v96 = vld [vmem:[%s1 + $0x68] sm:$0xf]
  %v97 = vld [vmem:[%s1 + $0x6c] sm:$0xf]
  %v98 = vld [vmem:[%s1 + $0x70] sm:$0xf]
  %v99 = vld [vmem:[%s1 + $0x74] sm:$0xf]
  %v100 = vld [vmem:[%s1 + $0x78] sm:$0xf]
  %v101 = vld [vmem:[%s1 + $0x7c] sm:$0xf]
  %v118 = vunpack.c.l.b16 %v54
  %v119 = vunpack.c.h.b16 %v54
  %v120 = vunpack.c.l.b16 %v55
  %v121 = vunpack.c.h.b16 %v55
  %v122 = vunpack.c.l.b16 %v56
  %v123 = vunpack.c.h.b16 %v56
  %v124 = vunpack.c.l.b16 %v57
  %v125 = vunpack.c.h.b16 %v57
  %v126 = vunpack.c.l.b16 %v58
  %v127 = vunpack.c.h.b16 %v58
  %v128 = vunpack.c.l.b16 %v59
  %v129 = vunpack.c.h.b16 %v59
  %v130 = vunpack.c.l.b16 %v60
  %v131 = vunpack.c.h.b16 %v60
  %v132 = vunpack.c.l.b16 %v61
  %v133 = vunpack.c.h.b16 %v61
  %v134 = vunpack.c.l.b16 %v62
  %v135 = vunpack.c.h.b16 %v62
  %v136 = vunpack.c.l.b16 %v63
  %v137 = vunpack.c.h.b16 %v63
  %v138 = vunpack.c.l.b16 %v64
  %v139 = vunpack.c.h.b16 %v64
  %v140 = vunpack.c.l.b16 %v65
  %v141 = vunpack.c.h.b16 %v65
  %v142 = vunpack.c.l.b16 %v66
  %v143 = vunpack.c.h.b16 %v66
  %v144 = vunpack.c.l.b16 %v67
  %v145 = vunpack.c.h.b16 %v67
  %v146 = vunpack.c.l.b16 %v68
  %v147 = vunpack.c.h.b16 %v68
  %v148 = vunpack.c.l.b16 %v69
  %v149 = vunpack.c.h.b16 %v69
  %v150 = vpack.c.b16 %v120, %v118
  %v151 = vpack.c.b16 %v121, %v119
  %v152 = vpack.c.b16 %v124, %v122
  %v153 = vpack.c.b16 %v125, %v123
  %v154 = vpack.c.b16 %v128, %v126
  %v155 = vpack.c.b16 %v129, %v127
  %v156 = vpack.c.b16 %v132, %v130
  %v157 = vpack.c.b16 %v133, %v131
  %v158 = vpack.c.b16 %v136, %v134
  %v159 = vpack.c.b16 %v137, %v135
  %v160 = vpack.c.b16 %v140, %v138
  %v161 = vpack.c.b16 %v141, %v139
  %v162 = vpack.c.b16 %v144, %v142
  %v163 = vpack.c.b16 %v145, %v143
  %v164 = vpack.c.b16 %v148, %v146
  %v165 = vpack.c.b16 %v149, %v147
  %v214 = vunpack.c.l.b16 %v70
  %v215 = vunpack.c.l.b16 %v71
  %v216 = vunpack.c.l.b16 %v72
  %v217 = vunpack.c.l.b16 %v73
  %v218 = vunpack.c.l.b16 %v74
  %v219 = vunpack.c.l.b16 %v75
  %v220 = vunpack.c.l.b16 %v76
  %v221 = vunpack.c.l.b16 %v77
  %v222 = vunpack.c.l.b16 %v78
  %v223 = vunpack.c.l.b16 %v79
  %v224 = vunpack.c.l.b16 %v80
  %v225 = vunpack.c.l.b16 %v81
  %v226 = vunpack.c.l.b16 %v82
  %v227 = vunpack.c.l.b16 %v83
  %v228 = vunpack.c.l.b16 %v84
  %v229 = vunpack.c.l.b16 %v85
  %v230 = vunpack.c.l.b16 %v86
  %v231 = vunpack.c.l.b16 %v87
  %v232 = vunpack.c.l.b16 %v88
  %v233 = vunpack.c.l.b16 %v89
  %v234 = vunpack.c.l.b16 %v90
  %v235 = vunpack.c.l.b16 %v91
  %v236 = vunpack.c.l.b16 %v92
  %v237 = vunpack.c.l.b16 %v93
  %v238 = vunpack.c.l.b16 %v94
  %v239 = vunpack.c.l.b16 %v95
  %v240 = vunpack.c.l.b16 %v96
  %v241 = vunpack.c.l.b16 %v97
  %v242 = vunpack.c.l.b16 %v98
  %v243 = vunpack.c.l.b16 %v99
  %v244 = vunpack.c.l.b16 %v100
  %v245 = vunpack.c.l.b16 %v101
  %v246 = vpack.c.b16 %v215, %v214
  %v247 = vpack.c.b16 %v217, %v216
  %v248 = vpack.c.b16 %v219, %v218
  %v249 = vpack.c.b16 %v221, %v220
  %v250 = vpack.c.b16 %v223, %v222
  %v251 = vpack.c.b16 %v225, %v224
  %v252 = vpack.c.b16 %v227, %v226
  %v253 = vpack.c.b16 %v229, %v228
  %v254 = vpack.c.b16 %v231, %v230
  %v255 = vpack.c.b16 %v233, %v232
  %v256 = vpack.c.b16 %v235, %v234
  %v257 = vpack.c.b16 %v237, %v236
  %v258 = vpack.c.b16 %v239, %v238
  %v259 = vpack.c.b16 %v241, %v240
  %v260 = vpack.c.b16 %v243, %v242
  %v261 = vpack.c.b16 %v245, %v244
  %278 = vmatprep.subr.bf16.mxu0 0
  %279 = vmatpush1.bf16.msra.mxu0 %v246
  %280 = vmatprep.subr.bf16.mxu0 0
  %281 = vmatpush1.bf16.msra.mxu0 %v247
  %282 = vmatprep.subr.bf16.mxu0 0
  %283 = vmatpush1.bf16.msra.mxu0 %v248
  %284 = vmatprep.subr.bf16.mxu0 0
  %285 = vmatpush1.bf16.msra.mxu0 %v249
  %286 = vmatprep.subr.bf16.mxu0 0
  %287 = vmatpush1.bf16.msra.mxu0 %v250
  %288 = vmatprep.subr.bf16.mxu0 0
  %289 = vmatpush1.bf16.msra.mxu0 %v251
  %290 = vmatprep.subr.bf16.mxu0 0
  %291 = vmatpush1.bf16.msra.mxu0 %v252
  %292 = vmatprep.subr.bf16.mxu0 0
  %293 = vmatpush1.bf16.msra.mxu0 %v253
  %294 = vmatprep.subr.bf16.mxu0 0
  %295 = vmatpush1.bf16.msra.mxu0 %v254
  %296 = vmatprep.subr.bf16.mxu0 0
  %297 = vmatpush1.bf16.msra.mxu0 %v255
  %298 = vmatprep.subr.bf16.mxu0 0
  %299 = vmatpush1.bf16.msra.mxu0 %v256
  %300 = vmatprep.subr.bf16.mxu0 0
  %301 = vmatpush1.bf16.msra.mxu0 %v257
  %302 = vmatprep.subr.bf16.mxu0 0
  %303 = vmatpush1.bf16.msra.mxu0 %v258
  %304 = vmatprep.subr.bf16.mxu0 0
  %305 = vmatpush1.bf16.msra.mxu0 %v259
  %306 = vmatprep.subr.bf16.mxu0 0
  %307 = vmatpush1.bf16.msra.mxu0 %v260
  %308 = vmatprep.subr.bf16.mxu0 0
  %309 = vmatpush1.bf16.msra.mxu0 %v261
  %310 = vmatprep.mubr.bf16.mxu0 %v151
  %311 = vmatmul.mubr.bf16.gmra.mrb[0].mxu0 %v150
  %v312 = vpop.f32.mrb[0].mxu0
  %v313 = vadd.f32 0.0, %v312
  %v314 = vpop.f32.mrb[0].mxu0
  %v315 = vpop.f32.mrb[0].mxu0
  %v316 = vadd.f32 0.0, %v315
  %v317 = vpop.f32.mrb[0].mxu0
  %318 = vmatprep.mubr.bf16.mxu0 %v153
  %319 = vmatmul.mubr.bf16.gmra.mrb[0].mxu0 %v152
  %v320 = vpop.f32.mrb[0].mxu0
  %v321 = vadd.f32 0.0, %v320
  %v322 = vpop.f32.mrb[0].mxu0
  %v323 = vpop.f32.mrb[0].mxu0
  %v324 = vadd.f32 0.0, %v323
  %v325 = vpop.f32.mrb[0].mxu0
  %326 = vmatprep.mubr.bf16.mxu0 %v155
  %327 = vmatmul.mubr.bf16.gmra.mrb[0].mxu0 %v154
  %v328 = vpop.f32.mrb[0].mxu0
  %v329 = vadd.f32 0.0, %v328
  %v330 = vpop.f32.mrb[0].mxu0
  %v331 = vpop.f32.mrb[0].mxu0
  %v332 = vadd.f32 0.0, %v331
  %v333 = vpop.f32.mrb[0].mxu0
  %334 = vmatprep.mubr.bf16.mxu0 %v157
  %335 = vmatmul.mubr.bf16.gmra.mrb[0].mxu0 %v156
  %v336 = vpop.f32.mrb[0].mxu0
  %v337 = vadd.f32 0.0, %v336
  %v338 = vpop.f32.mrb[0].mxu0
  %v339 = vpop.f32.mrb[0].mxu0
  %v340 = vadd.f32 0.0, %v339
  %v341 = vpop.f32.mrb[0].mxu0
  %342 = vmatprep.mubr.bf16.mxu0 %v159
  %343 = vmatmul.mubr.bf16.gmra.mrb[0].mxu0 %v158
  %v344 = vpop.f32.mrb[0].mxu0
  %v345 = vadd.f32 0.0, %v344
  %v346 = vpop.f32.mrb[0].mxu0
  %v347 = vpop.f32.mrb[0].mxu0
  %v348 = vadd.f32 0.0, %v347
  %v349 = vpop.f32.mrb[0].mxu0
  %350 = vmatprep.mubr.bf16.mxu0 %v161
  %351 = vmatmul.mubr.bf16.gmra.mrb[0].mxu0 %v160
  %v352 = vpop.f32.mrb[0].mxu0
  %v353 = vadd.f32 0.0, %v352
  %v354 = vpop.f32.mrb[0].mxu0
  %v355 = vpop.f32.mrb[0].mxu0
  %v356 = vadd.f32 0.0, %v355
  %v357 = vpop.f32.mrb[0].mxu0
  %358 = vmatprep.mubr.bf16.mxu0 %v163
  %359 = vmatmul.mubr.bf16.gmra.mrb[0].mxu0 %v162
  %v360 = vpop.f32.mrb[0].mxu0
  %v361 = vadd.f32 0.0, %v360
  %v362 = vpop.f32.mrb[0].mxu0
  %v363 = vpop.f32.mrb[0].mxu0
  %v364 = vadd.f32 0.0, %v363
  %v365 = vpop.f32.mrb[0].mxu0
  %366 = vmatprep.mubr.bf16.mxu0 %v165
  %367 = vmatmul.mubr.bf16.gmra.mrb[0].mxu0 %v164
  %v368 = vpop.f32.mrb[0].mxu0
  %v369 = vadd.f32 0.0, %v368
  %v370 = vpop.f32.mrb[0].mxu0
  %v371 = vpop.f32.mrb[0].mxu0
  %v372 = vadd.f32 0.0, %v371
  %v373 = vpop.f32.mrb[0].mxu0
  %374 = vdwg.mxu0
  %v375 = vadd.f32 %v38, %v313
  %v376 = vadd.f32 %v39, %v316
  %v377 = vadd.f32 %v40, %v321
  %v378 = vadd.f32 %v41, %v324
  %v379 = vadd.f32 %v42, %v329
  %v380 = vadd.f32 %v43, %v332
  %v381 = vadd.f32 %v44, %v337
  %v382 = vadd.f32 %v45, %v340
  %v383 = vadd.f32 %v46, %v345
  %v384 = vadd.f32 %v47, %v348
  %v385 = vadd.f32 %v48, %v353
  %v386 = vadd.f32 %v49, %v356
  %v387 = vadd.f32 %v50, %v361
  %v388 = vadd.f32 %v51, %v364
  %v389 = vadd.f32 %v52, %v369
  %v390 = vadd.f32 %v53, %v372
  %391 = vst [vmem:[#allocation2] sm:$0xff] %v375
  %392 = vst [vmem:[#allocation2 + $0x8] sm:$0xff] %v376
  %393 = vst [vmem:[#allocation2 + $0x10] sm:$0xff] %v377
  %394 = vst [vmem:[#allocation2 + $0x18] sm:$0xff] %v378
  %395 = vst [vmem:[#allocation2 + $0x20] sm:$0xff] %v379
  %396 = vst [vmem:[#allocation2 + $0x28] sm:$0xff] %v380
  %397 = vst [vmem:[#allocation2 + $0x30] sm:$0xff] %v381
  %398 = vst [vmem:[#allocation2 + $0x38] sm:$0xff] %v382
  %399 = vst [vmem:[#allocation2 + $0x40] sm:$0xff] %v383
  %400 = vst [vmem:[#allocation2 + $0x48] sm:$0xff] %v384
  %401 = vst [vmem:[#allocation2 + $0x50] sm:$0xff] %v385
  %402 = vst [vmem:[#allocation2 + $0x58] sm:$0xff] %v386
  %403 = vst [vmem:[#allocation2 + $0x60] sm:$0xff] %v387
  %404 = vst [vmem:[#allocation2 + $0x68] sm:$0xff] %v388
  %405 = vst [vmem:[#allocation2 + $0x70] sm:$0xff] %v389
  %406 = vst [vmem:[#allocation2 + $0x78] sm:$0xff] %v390
  // Predicated region
  $region22: #{_lambda_.45} parent=0 // pred_check
    %p407 = pneg %p18
  $region23: #{_lambda_.45} parent=0 // pred_check_branch
    %409 = sbr.rel (%p407) target = $region25
  $region24: #{_lambda_.45} parent=0 // pred_region
    %v410 = vld [vmem:[#allocation2] sm:$0xff]
    %v411 = vld [vmem:[#allocation2 + $0x8] sm:$0xff]
    %v412 = vld [vmem:[#allocation2 + $0x10] sm:$0xff]
    %v413 = vld [vmem:[#allocation2 + $0x18] sm:$0xff]
    %v414 = vld [vmem:[#allocation2 + $0x20] sm:$0xff]
    %v415 = vld [vmem:[#allocation2 + $0x28] sm:$0xff]
    %v416 = vld [vmem:[#allocation2 + $0x30] sm:$0xff]
    %v417 = vld [vmem:[#allocation2 + $0x38] sm:$0xff]
    %v418 = vld [vmem:[#allocation2 + $0x40] sm:$0xff]
    %v419 = vld [vmem:[#allocation2 + $0x48] sm:$0xff]
    %v420 = vld [vmem:[#allocation2 + $0x50] sm:$0xff]
    %v421 = vld [vmem:[#allocation2 + $0x58] sm:$0xff]
    %v422 = vld [vmem:[#allocation2 + $0x60] sm:$0xff]
    %v423 = vld [vmem:[#allocation2 + $0x68] sm:$0xff]
    %v424 = vld [vmem:[#allocation2 + $0x70] sm:$0xff]
    %v425 = vld [vmem:[#allocation2 + $0x78] sm:$0xff]
    %v426 = vld [vmem:[%s2] sm:$0x1]
    %v427 = vld [vmem:[%s3] sm:$0x1]
    %v429 = vlaneseq
    %v430 = vshrl.u32 %v429, 7
    %v431 = vsub.s32 0, %v430
    %v432 = vrot.slane %v426, %v431
    %v434 = vmul.f32 %v410, %v432
    %v435 = vmul.f32 %v411, %v432
    %v436 = vmul.f32 %v412, %v432
    %v437 = vmul.f32 %v413, %v432
    %v438 = vmul.f32 %v414, %v432
    %v439 = vmul.f32 %v415, %v432
    %v440 = vmul.f32 %v416, %v432
    %v441 = vmul.f32 %v417, %v432
    %v442 = vmul.f32 %v418, %v432
    %v443 = vmul.f32 %v419, %v432
    %v444 = vmul.f32 %v420, %v432
    %v445 = vmul.f32 %v421, %v432
    %v446 = vmul.f32 %v422, %v432
    %v447 = vmul.f32 %v423, %v432
    %v448 = vmul.f32 %v424, %v432
    %v449 = vmul.f32 %v425, %v432
    %v451 = vlaneseq
    %v452 = vshrl.u32 %v451, 7
    %v453 = vsub.s32 0, %v452
    %v454 = vrot.slane %v427, %v453
    %v456 = vadd.f32 %v434, %v454
    %v457 = vadd.f32 %v435, %v454
    %v458 = vadd.f32 %v436, %v454
    %v459 = vadd.f32 %v437, %v454
    %v460 = vadd.f32 %v438, %v454
    %v461 = vadd.f32 %v439, %v454
    %v462 = vadd.f32 %v440, %v454
    %v463 = vadd.f32 %v441, %v454
    %v464 = vadd.f32 %v442, %v454
    %v465 = vadd.f32 %v443, %v454
    %v466 = vadd.f32 %v444, %v454
    %v467 = vadd.f32 %v445, %v454
    %v468 = vadd.f32 %v446, %v454
    %v469 = vadd.f32 %v447, %v454
    %v470 = vadd.f32 %v448, %v454
    %v471 = vadd.f32 %v449, %v454
    %v472 = vxor.u32 %v456, 2147483648
    %v473 = vxor.u32 %v457, 2147483648
    %v474 = vxor.u32 %v458, 2147483648
    %v475 = vxor.u32 %v459, 2147483648
    %v476 = vxor.u32 %v460, 2147483648
    %v477 = vxor.u32 %v461, 2147483648
    %v478 = vxor.u32 %v462, 2147483648
    %v479 = vxor.u32 %v463, 2147483648
    %v480 = vxor.u32 %v464, 2147483648
    %v481 = vxor.u32 %v465, 2147483648
    %v482 = vxor.u32 %v466, 2147483648
    %v483 = vxor.u32 %v467, 2147483648
    %v484 = vxor.u32 %v468, 2147483648
    %v485 = vxor.u32 %v469, 2147483648
    %v486 = vxor.u32 %v470, 2147483648
    %v487 = vxor.u32 %v471, 2147483648
    %v488 = vmul.f32 %v472, 1.442695
    %v489 = vpow.pop %v488
    %v490 = vmul.f32 %v473, 1.442695
    %v491 = vpow.pop %v490
    %v492 = vmul.f32 %v474, 1.442695
    %v493 = vpow.pop %v492
    %v494 = vmul.f32 %v475, 1.442695
    %v495 = vpow.pop %v494
    %v496 = vmul.f32 %v476, 1.442695
    %v497 = vpow.pop %v496
    %v498 = vmul.f32 %v477, 1.442695
    %v499 = vpow.pop %v498
    %v500 = vmul.f32 %v478, 1.442695
    %v501 = vpow.pop %v500
    %v502 = vmul.f32 %v479, 1.442695
    %v503 = vpow.pop %v502
    %v504 = vmul.f32 %v480, 1.442695
    %v505 = vpow.pop %v504
    %v506 = vmul.f32 %v481, 1.442695
    %v507 = vpow.pop %v506
    %v508 = vmul.f32 %v482, 1.442695
    %v509 = vpow.pop %v508
    %v510 = vmul.f32 %v483, 1.442695
    %v511 = vpow.pop %v510
    %v512 = vmul.f32 %v484, 1.442695
    %v513 = vpow.pop %v512
    %v514 = vmul.f32 %v485, 1.442695
    %v515 = vpow.pop %v514
    %v516 = vmul.f32 %v486, 1.442695
    %v517 = vpow.pop %v516
    %v518 = vmul.f32 %v487, 1.442695
    %v519 = vpow.pop %v518
    %v520 = vadd.f32 %v489, 1.0
    %v521 = vadd.f32 %v491, 1.0
    %v522 = vadd.f32 %v493, 1.0
    %v523 = vadd.f32 %v495, 1.0
    %v524 = vadd.f32 %v497, 1.0
    %v525 = vadd.f32 %v499, 1.0
    %v526 = vadd.f32 %v501, 1.0
    %v527 = vadd.f32 %v503, 1.0
    %v528 = vadd.f32 %v505, 1.0
    %v529 = vadd.f32 %v507, 1.0
    %v530 = vadd.f32 %v509, 1.0
    %v531 = vadd.f32 %v511, 1.0
    %v532 = vadd.f32 %v513, 1.0
    %v533 = vadd.f32 %v515, 1.0
    %v534 = vadd.f32 %v517, 1.0
    %v535 = vadd.f32 %v519, 1.0
    %v536 = vrcp.pop %v520
    %v537 = vmul.f32 1.0, %v536
    %v538 = vrcp.pop %v521
    %v539 = vmul.f32 1.0, %v538
    %v540 = vrcp.pop %v522
    %v541 = vmul.f32 1.0, %v540
    %v542 = vrcp.pop %v523
    %v543 = vmul.f32 1.0, %v542
    %v544 = vrcp.pop %v524
    %v545 = vmul.f32 1.0, %v544
    %v546 = vrcp.pop %v525
    %v547 = vmul.f32 1.0, %v546
    %v548 = vrcp.pop %v526
    %v549 = vmul.f32 1.0, %v548
    %v550 = vrcp.pop %v527
    %v551 = vmul.f32 1.0, %v550
    %v552 = vrcp.pop %v528
    %v553 = vmul.f32 1.0, %v552
    %v554 = vrcp.pop %v529
    %v555 = vmul.f32 1.0, %v554
    %v556 = vrcp.pop %v530
    %v557 = vmul.f32 1.0, %v556
    %v558 = vrcp.pop %v531
    %v559 = vmul.f32 1.0, %v558
    %v560 = vrcp.pop %v532
    %v561 = vmul.f32 1.0, %v560
    %v562 = vrcp.pop %v533
    %v563 = vmul.f32 1.0, %v562
    %v564 = vrcp.pop %v534
    %v565 = vmul.f32 1.0, %v564
    %v566 = vrcp.pop %v535
    %v567 = vmul.f32 1.0, %v566
    %568 = vst [vmem:[%s4] sm:$0xff] %v537
    %569 = vst [vmem:[%s4 + $0x8] sm:$0xff] %v539
    %570 = vst [vmem:[%s4 + $0x10] sm:$0xff] %v541
    %571 = vst [vmem:[%s4 + $0x18] sm:$0xff] %v543
    %572 = vst [vmem:[%s4 + $0x20] sm:$0xff] %v545
    %573 = vst [vmem:[%s4 + $0x28] sm:$0xff] %v547
    %574 = vst [vmem:[%s4 + $0x30] sm:$0xff] %v549
    %575 = vst [vmem:[%s4 + $0x38] sm:$0xff] %v551
    %576 = vst [vmem:[%s4 + $0x40] sm:$0xff] %v553
    %577 = vst [vmem:[%s4 + $0x48] sm:$0xff] %v555
    %578 = vst [vmem:[%s4 + $0x50] sm:$0xff] %v557
    %579 = vst [vmem:[%s4 + $0x58] sm:$0xff] %v559
    %580 = vst [vmem:[%s4 + $0x60] sm:$0xff] %v561
    %581 = vst [vmem:[%s4 + $0x68] sm:$0xff] %v563
    %582 = vst [vmem:[%s4 + $0x70] sm:$0xff] %v565
    %583 = vst [vmem:[%s4 + $0x78] sm:$0xff] %v567
  $region25: #{_lambda_.45} parent=0 // pred_fallthru
    _
  // Predicated region
  $region26: #{_lambda_.45} parent=0 // pred_check
    _
  $region27: #{_lambda_.45} parent=0 // pred_check_branch
    %585 = sbr.rel (0) target = $region29
  $region28: #{_lambda_.45} parent=0 // pred_region
    _
  $region29: #{_lambda_.45} parent=0 // pred_fallthru
    _
  // Predicated region
  $region30: #{_lambda_.45} parent=0 // pred_check
    _
  $region31: #{_lambda_.45} parent=0 // pred_check_branch
    %587 = sbr.rel (0) target = $region33
  $region32: #{_lambda_.45} parent=0 // pred_region
    _
  $region33: #{_lambda_.45} parent=0 // pred_fallthru
    _

</llo_original>
